<compile_context>
chip_gen: v6e
topology: v6e:2x2x1
jax: 0.10.0
libtpu: 0.0.40
codegen_flags: <defaults>
</compile_context>

<pallas_src>
import functools
import math

import jax
import jax.numpy as jnp
from jax.experimental import pallas as pl
from jax.experimental.pallas import tpu as pltpu


# ---------------------------------------------------------------------------
# Helpers
# ---------------------------------------------------------------------------

def _pick_block(outer, inner_rows, channels, *, budget_bytes=8 << 20, max_rows=4096):
    """Largest divisor g of `outer` whose per-block f32 working set fits the budget.

    Per-grid-step estimate (all f32):
      * x / ste / out tiles, double-buffered by the pipeline  -> 6 * rows * C
      * fused qkv projection result                           -> 3 * rows * C
      * merged-head accumulator / out1                        -> 2 * rows * C
      * per-head scores + probabilities                       -> 2 * g * S * S
    """
    best = 1
    for g in range(1, outer + 1):
        if outer % g:
            continue
        rows = g * inner_rows
        if rows > max_rows:
            continue
        est = 4 * rows * (11 * channels) + 4 * 2 * g * inner_rows * inner_rows
        if est <= budget_bytes:
            best = g
    return best


# ---------------------------------------------------------------------------
# Fused attention branch kernel:  QKV proj -> multi-head attention -> out proj
# ---------------------------------------------------------------------------

def fused_attention(x, ste, p, K, d):
    """x, ste: [B, G, S, C] channels-last.  Attention over S for every (b, g, head).

    Returns [B, G, S, C] channels-last (C = K * d).  Spatial attention uses
    (G, S) = (T, N); temporal attention uses the same kernel on (G, S) = (N, T).
    """
    B, G, S, C = x.shape
    assert C == K * d
    wq, bq = p["q"]
    wk, bk = p["k"]
    wv, bv = p["v"]
    w1, b1 = p["out1"]
    w2, b2 = p["out2"]
    assert wq.shape[0] == 2 * C  # FC consumes concat([X, STE]) along channels

    # Fold 1/sqrt(d) into the Q projection (relu is positively homogeneous) and fuse
    # the three projections into one [2C, 3C] weight so the kernel issues two wide
    # MXU matmuls instead of six narrow ones.
    scale = 1.0 / math.sqrt(d)
    wqkv = jnp.concatenate([wq * scale, wk, wv], axis=1)                 # [2C, 3C]
    bqkv = jnp.concatenate([bq * scale, bk, bv], axis=0).reshape(1, 3 * C)

    GB = _pick_block(G, S, C)
    grid = (B, G // GB)

    def kernel(x_ref, ste_ref, wqkv_r, bqkv_r, w1_r, b1_r, w2_r, b2_r, o_ref):
        rows = GB * S
        xr = x_ref[0].reshape(rows, C)
        sr = ste_ref[0].reshape(rows, C)

        # concat([x, ste]) @ W  ==  x @ W[:C] + ste @ W[C:]   (no lane concat)
        w = wqkv_r[...]
        qkv = jnp.dot(xr, w[:C, :], preferred_element_type=jnp.float32)
        qkv = qkv + jnp.dot(sr, w[C:, :], preferred_element_type=jnp.float32)
        qkv = jnp.maximum(qkv + bqkv_r[...], 0.0)                        # relu

        q = qkv[:, 0 * C:1 * C].reshape(GB, S, C)   # already scaled by 1/sqrt(d)
        k = qkv[:, 1 * C:2 * C].reshape(GB, S, C)
        v = qkv[:, 2 * C:3 * C].reshape(GB, S, C)

        w1v = w1_r[...]
        acc = None
        for h in range(K):                          # static unroll over heads
            sl = slice(h * d, (h + 1) * d)
            qh, kh, vh = q[..., sl], k[..., sl], v[..., sl]
            sc = jnp.einsum("gnc,gmc->gnm", qh, kh,
                            preferred_element_type=jnp.float32)
            sc = sc - jnp.max(sc, axis=-1, keepdims=True)
            e = jnp.exp(sc)
            pr = e * pl.reciprocal(jnp.sum(e, axis=-1, keepdims=True), approx=True)
            oh = jnp.einsum("gnm,gmc->gnc", pr, vh,
                            preferred_element_type=jnp.float32)
            # merged-head out1:  o_merged @ W1 == sum_h o_h @ W1[h*d:(h+1)*d]
            part = jnp.dot(oh.reshape(rows, d), w1v[sl, :],
                           preferred_element_type=jnp.float32)
            acc = part if acc is None else acc + part

        o1 = jnp.maximum(acc + b1_r[...], 0.0)
        o2 = jnp.dot(o1, w2_r[...], preferred_element_type=jnp.float32) + b2_r[...]
        o_ref[0] = o2.reshape(GB, S, C).astype(o_ref.dtype)

    def _data_spec():
        return pl.BlockSpec((1, GB, S, C), lambda b, g: (b, g, 0, 0))

    def _full_spec(shape):
        return pl.BlockSpec(shape, lambda b, g: (0,) * len(shape))

    args = (x, ste, wqkv, bqkv, w1, b1.reshape(1, C), w2, b2.reshape(1, C))
    in_specs = [_data_spec(), _data_spec()] + [_full_spec(a.shape) for a in args[2:]]

    return pl.pallas_call(
        kernel,
        out_shape=jax.ShapeDtypeStruct((B, G, S, C), jnp.float32),
        grid=grid,
        in_specs=in_specs,
        out_specs=_data_spec(),
        compiler_params=pltpu.CompilerParams(
            dimension_semantics=("parallel", "parallel")),
    )(*args)


# ---------------------------------------------------------------------------
# Fused gated-fusion kernel:  ZS/ZT proj -> sigmoid gate -> out1/out2
# ---------------------------------------------------------------------------

def fused_gate(hs, ht, p):
    """hs, ht: [B, T, N, C] channels-last attention-branch outputs (requires N == C,
    the only regime where the reference module is well-formed).

    Returns g2 of shape [B, T, C, C] with g2[b, t, c, q] equal to the GF out_mapping
    (pre-residual) value at NCHW position [b, q, c, t].
    """
    B, T, N, C = hs.shape
    assert N == C
    wxs, bxs = p["xs"]
    wxt, bxt = p["xt"]
    w1, b1 = p["out1"]
    w2, b2 = p["out2"]

    TB = _pick_block(T, N, C)
    grid = (B, T // TB)
    bz = (bxs + bxt).reshape(1, C)

    def kernel(hs_ref, ht_ref, wxs_r, wxt_r, bz_r, w1_r, b1_r, w2_r, b2_r, o_ref):
        rows = TB * C
        # [TB, N, C] -> [TB, C, N] -> [(t, c), n]: the module's NCHW-vs-NHWC quirk,
        # done in VMEM (last-two-dims transpose) instead of an HBM pass.
        hs_t = jnp.transpose(hs_ref[0], (0, 2, 1)).reshape(rows, N)
        ht_t = jnp.transpose(ht_ref[0], (0, 2, 1)).reshape(rows, N)
        zsum = (jnp.dot(hs_t, wxs_r[...], preferred_element_type=jnp.float32)
                + jnp.dot(ht_t, wxt_r[...], preferred_element_type=jnp.float32)
                + bz_r[...])
        z = 0.5 * (jnp.tanh(0.5 * zsum) + 1.0)      # stable sigmoid, tanh on EUP
        hg = z * hs_t + (1.0 - z) * ht_t
        g1 = jnp.maximum(
            jnp.dot(hg, w1_r[...], preferred_element_type=jnp.float32) + b1_r[...], 0.0)
        g2 = jnp.dot(g1, w2_r[...], preferred_element_type=jnp.float32) + b2_r[...]
        o_ref[0] = g2.reshape(TB, C, C).astype(o_ref.dtype)

    def _data_spec():
        return pl.BlockSpec((1, TB, N, C), lambda b, t: (b, t, 0, 0))

    def _full_spec(shape):
        return pl.BlockSpec(shape, lambda b, t: (0,) * len(shape))

    args = (hs, ht, wxs, wxt, bz, w1, b1.reshape(1, C), w2, b2.reshape(1, C))
    in_specs = [_data_spec(), _data_spec()] + [_full_spec(a.shape) for a in args[2:]]

    return pl.pallas_call(
        kernel,
        out_shape=jax.ShapeDtypeStruct((B, T, C, C), jnp.float32),
        grid=grid,
        in_specs=in_specs,
        out_specs=pl.BlockSpec((1, TB, C, C), lambda b, t: (b, t, 0, 0)),
        compiler_params=pltpu.CompilerParams(
            dimension_semantics=("parallel", "parallel")),
    )(*args)


# ---------------------------------------------------------------------------
# STAttBlock forward (Pallas path)
# ---------------------------------------------------------------------------

@functools.partial(jax.jit, static_argnames=("K", "d"))
def st_att_block(X, STE, params, *, K, d):
    B, T, N, D = X.shape
    assert T == N == D, "the reference module only shape-checks when T == N == D"

    # Spatial branch: attention over N per (b, t, head).
    HS = fused_attention(X, STE, params["SA"], K, d)                  # [B, T, N, D]

    # Temporal branch: same fused kernel on [B, N, T, D]-permuted inputs
    # (attention over T per (b, n, head)); permute the result back.
    # TODO(synk): these permutes stay in XLA; an in-kernel version needs a
    # major-axis permute of sub-vreg 3-D tiles with no guaranteed Mosaic lowering.
    Xn = jnp.transpose(X, (0, 2, 1, 3))
    Sn = jnp.transpose(STE, (0, 2, 1, 3))
    HT = jnp.transpose(fused_attention(Xn, Sn, params["TA"], K, d), (0, 2, 1, 3))

    # Gated fusion + out mapping.
    G2 = fused_gate(HS, HT, params["GF"])                             # [B, T, D, D]

    # Residual:  out[b, q, c, t] = G2[b, t, c, q] + X[b, q, c, t].
    # TODO(synk): this final axis permute + residual add stays in (fused) XLA; doing it
    # in-kernel would need a minor-axis 3-D permute (costly relayout) for no HBM win.
    return jnp.transpose(G2, (0, 3, 2, 1)) + X


# ---------------------------------------------------------------------------
# Pure-JAX reference (mirrors the PyTorch module under the same FC convention)
# ---------------------------------------------------------------------------

def _ref_fc(x, layers, acts, residual_flat=None):
    B_, A1, A2, Cin = x.shape
    h = x.reshape(-1, Cin)
    for (w, b), act in zip(layers, acts):
        h = h @ w + b
        if act == "relu":
            h = jnp.maximum(h, 0.0)
    if residual_flat is not None:
        h = h + residual_flat
    Cout = layers[-1][0].shape[1]
    return h.reshape(B_, A1, A2, Cout).transpose(0, 3, 1, 2)  # NCHW output


def _ref_split_heads(x, K, d):
    B_, T_, N_, _ = x.shape
    return x.reshape(B_, T_, N_, K, d).transpose(3, 0, 1, 2, 4).reshape(K * B_, T_, N_, d)


def _ref_merge_heads(x, K, B_):
    _, T_, N_, d_ = x.shape
    return x.reshape(K, B_, T_, N_, d_).transpose(1, 2, 3, 0, 4).reshape(B_, T_, N_, K * d_)


def _ref_attention(q, k, v, scale):
    s = jnp.einsum("gnd,gmd->gnm", q, k) * scale
    p = jax.nn.softmax(s, axis=-1)
    return jnp.einsum("gnm,gmd->gnd", p, v)


def _ref_spatial(X, STE, p, K, d, B_):
    Xc = jnp.concatenate([X, STE], axis=-1)
    q = _ref_fc(Xc, [p["q"]], ["relu"]).transpose(0, 2, 3, 1)
    k = _ref_fc(Xc, [p["k"]], ["relu"]).transpose(0, 2, 3, 1)
    v = _ref_fc(Xc, [p["v"]], ["relu"]).transpose(0, 2, 3, 1)
    q = _ref_split_heads(q, K, d)
    k = _ref_split_heads(k, K, d)
    v = _ref_split_heads(v, K, d)
    KB, T_, N_, dd = q.shape
    o = _ref_attention(q.reshape(KB * T_, N_, dd), k.reshape(KB * T_, N_, dd),
                       v.reshape(KB * T_, N_, dd), 1.0 / math.sqrt(d))
    o = _ref_merge_heads(o.reshape(KB, T_, N_, dd), K, B_)
    return _ref_fc(o, [p["out1"], p["out2"]], ["relu", None])


def _ref_temporal(X, STE, p, K, d, B_):
    Xc = jnp.concatenate([X, STE], axis=-1)
    q = _ref_fc(Xc, [p["q"]], ["relu"]).transpose(0, 2, 3, 1)
    k = _ref_fc(Xc, [p["k"]], ["relu"]).transpose(0, 2, 3, 1)
    v = _ref_fc(Xc, [p["v"]], ["relu"]).transpose(0, 2, 3, 1)
    q = _ref_split_heads(q, K, d).transpose(0, 2, 1, 3)
    k = _ref_split_heads(k, K, d).transpose(0, 2, 1, 3)
    v = _ref_split_heads(v, K, d).transpose(0, 2, 1, 3)
    KB, N_, T_, dd = q.shape
    o = _ref_attention(q.reshape(KB * N_, T_, dd), k.reshape(KB * N_, T_, dd),
                       v.reshape(KB * N_, T_, dd), 1.0 / math.sqrt(d))
    o = o.reshape(KB, N_, T_, dd).transpose(0, 2, 1, 3)
    o = _ref_merge_heads(o, K, B_)
    return _ref_fc(o, [p["out1"], p["out2"]], ["relu", None])


def _ref_gate(XS, XT, p, residual):
    ZS = _ref_fc(XS, [p["xs"]], [None])
    ZT = _ref_fc(XT, [p["xt"]], [None])
    z = jax.nn.sigmoid(ZS + ZT).transpose(0, 2, 3, 1)
    H = z * XS + (1.0 - z) * XT
    Cout = p["out2"][0].shape[1]
    res_flat = residual.transpose(0, 2, 3, 1).reshape(-1, Cout)
    return _ref_fc(H, [p["out1"], p["out2"]], ["relu", None], residual_flat=res_flat)


def st_att_block_reference(X, STE, params, K, d, B_):
    HS = _ref_spatial(X, STE, params["SA"], K, d, B_)
    HT = _ref_temporal(X, STE, params["TA"], K, d, B_)
    return _ref_gate(HS, HT, params["GF"], residual=X)   # == X + GF(HS, HT)


# ---------------------------------------------------------------------------
# Deterministic parameter init
# ---------------------------------------------------------------------------

def _layer(key, cin, cout):
    kw, kb = jax.random.split(key)
    w = jax.random.normal(kw, (cin, cout), jnp.float32) / math.sqrt(cin)
    b = jax.random.normal(kb, (cout,), jnp.float32) * 0.01
    return (w, b)


def init_params(key, x_dim, D):
    keys = jax.random.split(key, 14)

    def attn(ks):
        return {"q": _layer(ks[0], x_dim, D), "k": _layer(ks[1], x_dim, D),
                "v": _layer(ks[2], x_dim, D), "out1": _layer(ks[3], D, D),
                "out2": _layer(ks[4], D, D)}

    return {
        "SA": attn(keys[0:5]),
        "TA": attn(keys[5:10]),
        "GF": {"xs": _layer(keys[10], D, D), "xt": _layer(keys[11], D, D),
               "out1": _layer(keys[12], D, D), "out2": _layer(keys[13], D, D)},
    }


# ---------------------------------------------------------------------------

if __name__ == "__main__":
    B, K, d = 2, 2, 8
    D = K * d                 # 16
    T = N = D                 # composed PyTorch module only shape-checks for T == N == D
    x_dim = 2 * D

    key = jax.random.PRNGKey(0)
    kx, kste, kp = jax.random.split(key, 3)
    X = jax.random.normal(kx, (B, T, N, D), jnp.float32)
    STE = jax.random.normal(kste, (B, T, N, D), jnp.float32)
    params = init_params(kp, x_dim, D)

    out = st_att_block(X, STE, params, K=K, d=d)
    out = jax.block_until_ready(out)
    assert out.shape == (B, T, N, D), out.shape
    assert bool(jnp.all(jnp.isfinite(out)))

    with jax.default_matmul_precision("highest"):
        ref = st_att_block_reference(X, STE, params, K, d, B)
    err = float(jnp.max(jnp.abs(out - ref)))
    assert err < 1e-1, f"mismatch vs reference: max abs err = {err}"

    print("KERNEL_OK")
</pallas_src>

<mosaic_0001>
module attributes {stable_mosaic.version = 11 : i64} {
  func.func @kernel(%arg0: i32, %arg1: i32, %arg2: memref<1x16x16x16xf32, #tpu.memory_space<vmem>>, %arg3: memref<1x16x16x16xf32, #tpu.memory_space<vmem>>, %arg4: memref<32x48xf32, #tpu.memory_space<vmem>>, %arg5: memref<1x48xf32, #tpu.memory_space<vmem>>, %arg6: memref<16x16xf32, #tpu.memory_space<vmem>>, %arg7: memref<1x16xf32, #tpu.memory_space<vmem>>, %arg8: memref<16x16xf32, #tpu.memory_space<vmem>>, %arg9: memref<1x16xf32, #tpu.memory_space<vmem>>, %arg10: memref<1x16x16x16xf32, #tpu.memory_space<vmem>>) attributes {dimension_semantics = [#tpu.dimension_semantics<parallel>, #tpu.dimension_semantics<parallel>], iteration_bounds = array<i64: 2, 1>, scalar_prefetch = 0 : i64, scratch_operands = 0 : i64, tpu.core_type = #tpu.core_type<tc>, window_params = [{transform_indices = @transform_0, window_bounds = array<i64: 1, 16, 16, 16>}, {transform_indices = @transform_1, window_bounds = array<i64: 1, 16, 16, 16>}, {pipeline_mode = #tpu.pipeline_mode<synchronous>, transform_indices = @transform_2, window_bounds = array<i64: 32, 48>}, {pipeline_mode = #tpu.pipeline_mode<synchronous>, transform_indices = @transform_3, window_bounds = array<i64: 1, 48>}, {pipeline_mode = #tpu.pipeline_mode<synchronous>, transform_indices = @transform_4, window_bounds = array<i64: 16, 16>}, {pipeline_mode = #tpu.pipeline_mode<synchronous>, transform_indices = @transform_5, window_bounds = array<i64: 1, 16>}, {pipeline_mode = #tpu.pipeline_mode<synchronous>, transform_indices = @transform_6, window_bounds = array<i64: 16, 16>}, {pipeline_mode = #tpu.pipeline_mode<synchronous>, transform_indices = @transform_7, window_bounds = array<i64: 1, 16>}, {transform_indices = @transform_8, window_bounds = array<i64: 1, 16, 16, 16>}]} {
    %c0 = arith.constant 0 : index
    %c0_0 = arith.constant 0 : index
    %c0_1 = arith.constant 0 : index
    %c0_2 = arith.constant 0 : index
    %0 = vector.load %arg2[%c0, %c0_0, %c0_1, %c0_2] : memref<1x16x16x16xf32, #tpu.memory_space<vmem>>, vector<1x16x16x16xf32>
    %1 = vector.shape_cast %0 : vector<1x16x16x16xf32> to vector<16x16x16xf32>
    %2 = vector.shape_cast %1 : vector<16x16x16xf32> to vector<256x16xf32>
    %c0_3 = arith.constant 0 : index
    %c0_4 = arith.constant 0 : index
    %c0_5 = arith.constant 0 : index
    %c0_6 = arith.constant 0 : index
    %3 = vector.load %arg3[%c0_3, %c0_4, %c0_5, %c0_6] : memref<1x16x16x16xf32, #tpu.memory_space<vmem>>, vector<1x16x16x16xf32>
    %4 = vector.shape_cast %3 : vector<1x16x16x16xf32> to vector<16x16x16xf32>
    %5 = vector.shape_cast %4 : vector<16x16x16xf32> to vector<256x16xf32>
    %c0_7 = arith.constant 0 : index
    %c0_8 = arith.constant 0 : index
    %6 = vector.load %arg4[%c0_7, %c0_8] : memref<32x48xf32, #tpu.memory_space<vmem>>, vector<32x48xf32>
    %7 = vector.extract_strided_slice %6 {offsets = [0, 0], sizes = [16, 48], strides = [1, 1]} : vector<32x48xf32> to vector<16x48xf32>
    %cst = arith.constant dense<0.000000e+00> : vector<256x48xf32>
    %8 = tpu.matmul %2, %7, %cst {dimension_numbers = #tpu.dot_dimension_numbers<[1], [0], [0], [1], [0, 0, 1, 1], [], []>} : vector<256x16xf32>, vector<16x48xf32>, vector<256x48xf32> -> vector<256x48xf32>
    %9 = vector.extract_strided_slice %6 {offsets = [16, 0], sizes = [16, 48], strides = [1, 1]} : vector<32x48xf32> to vector<16x48xf32>
    %cst_9 = arith.constant dense<0.000000e+00> : vector<256x48xf32>
    %10 = tpu.matmul %5, %9, %cst_9 {dimension_numbers = #tpu.dot_dimension_numbers<[1], [0], [0], [1], [0, 0, 1, 1], [], []>} : vector<256x16xf32>, vector<16x48xf32>, vector<256x48xf32> -> vector<256x48xf32>
    %11 = arith.addf %8, %10 : vector<256x48xf32>
    %c0_10 = arith.constant 0 : index
    %c0_11 = arith.constant 0 : index
    %12 = vector.load %arg5[%c0_10, %c0_11] : memref<1x48xf32, #tpu.memory_space<vmem>>, vector<1x48xf32>
    %13 = vector.broadcast %12 : vector<1x48xf32> to vector<256x48xf32>
    %14 = arith.addf %11, %13 : vector<256x48xf32>
    %cst_12 = arith.constant 0.000000e+00 : f32
    %15 = vector.broadcast %cst_12 : f32 to vector<256x48xf32>
    %16 = arith.maximumf %14, %15 : vector<256x48xf32>
    %17 = vector.extract_strided_slice %16 {offsets = [0, 0], sizes = [256, 16], strides = [1, 1]} : vector<256x48xf32> to vector<256x16xf32>
    %18 = vector.shape_cast %17 : vector<256x16xf32> to vector<16x16x16xf32>
    %19 = vector.extract_strided_slice %16 {offsets = [0, 16], sizes = [256, 16], strides = [1, 1]} : vector<256x48xf32> to vector<256x16xf32>
    %20 = vector.shape_cast %19 : vector<256x16xf32> to vector<16x16x16xf32>
    %21 = vector.extract_strided_slice %16 {offsets = [0, 32], sizes = [256, 16], strides = [1, 1]} : vector<256x48xf32> to vector<256x16xf32>
    %22 = vector.shape_cast %21 : vector<256x16xf32> to vector<16x16x16xf32>
    %c0_13 = arith.constant 0 : index
    %c0_14 = arith.constant 0 : index
    %23 = vector.load %arg6[%c0_13, %c0_14] : memref<16x16xf32, #tpu.memory_space<vmem>>, vector<16x16xf32>
    %24 = vector.extract_strided_slice %18 {offsets = [0, 0, 0], sizes = [16, 16, 8], strides = [1, 1, 1]} : vector<16x16x16xf32> to vector<16x16x8xf32>
    %25 = vector.extract_strided_slice %20 {offsets = [0, 0, 0], sizes = [16, 16, 8], strides = [1, 1, 1]} : vector<16x16x16xf32> to vector<16x16x8xf32>
    %26 = vector.extract_strided_slice %22 {offsets = [0, 0, 0], sizes = [16, 16, 8], strides = [1, 1, 1]} : vector<16x16x16xf32> to vector<16x16x8xf32>
    "tpu.trace_start"() <{level = 10 : i32, message = "gnc,gmc->gnm"}> : () -> ()
    %cst_15 = arith.constant dense<0.000000e+00> : vector<16x16x16xf32>
    %27 = tpu.matmul %24, %25, %cst_15 {dimension_numbers = #tpu.dot_dimension_numbers<[2], [2], [1], [1], [0, 0, 0, 1, 1, 1], [0], [0]>} : vector<16x16x8xf32>, vector<16x16x8xf32>, vector<16x16x16xf32> -> vector<16x16x16xf32>
    "tpu.trace_stop"() : () -> ()
    %cst_16 = arith.constant dense<0xFF800000> : vector<16x16xf32>
    %28 = vector.multi_reduction <maximumf>, %27, %cst_16 [2] : vector<16x16x16xf32> to vector<16x16xf32>
    %29 = vector.shape_cast %28 : vector<16x16xf32> to vector<16x16x1xf32>
    %30 = vector.broadcast %29 : vector<16x16x1xf32> to vector<16x16x16xf32>
    %31 = arith.subf %27, %30 : vector<16x16x16xf32>
    %32 = math.exp %31 : vector<16x16x16xf32>
    %cst_17 = arith.constant dense<0.000000e+00> : vector<16x16xf32>
    %33 = vector.multi_reduction <add>, %32, %cst_17 [2] : vector<16x16x16xf32> to vector<16x16xf32>
    %34 = vector.shape_cast %33 : vector<16x16xf32> to vector<16x16x1xf32>
    %35 = tpu.reciprocal %34 {approx = true} : vector<16x16x1xf32> -> vector<16x16x1xf32>
    %36 = vector.broadcast %35 : vector<16x16x1xf32> to vector<16x16x16xf32>
    %37 = arith.mulf %32, %36 : vector<16x16x16xf32>
    "tpu.trace_start"() <{level = 10 : i32, message = "gnm,gmc->gnc"}> : () -> ()
    %cst_18 = arith.constant dense<0.000000e+00> : vector<16x16x8xf32>
    %38 = tpu.matmul %37, %26, %cst_18 {dimension_numbers = #tpu.dot_dimension_numbers<[2], [1], [1], [2], [0, 0, 0, 1, 1, 2], [0], [0]>} : vector<16x16x16xf32>, vector<16x16x8xf32>, vector<16x16x8xf32> -> vector<16x16x8xf32>
    "tpu.trace_stop"() : () -> ()
    %39 = vector.shape_cast %38 : vector<16x16x8xf32> to vector<256x8xf32>
    %40 = vector.extract_strided_slice %23 {offsets = [0, 0], sizes = [8, 16], strides = [1, 1]} : vector<16x16xf32> to vector<8x16xf32>
    %cst_19 = arith.constant dense<0.000000e+00> : vector<256x16xf32>
    %41 = tpu.matmul %39, %40, %cst_19 {dimension_numbers = #tpu.dot_dimension_numbers<[1], [0], [0], [1], [0, 0, 1, 1], [], []>} : vector<256x8xf32>, vector<8x16xf32>, vector<256x16xf32> -> vector<256x16xf32>
    %42 = vector.extract_strided_slice %18 {offsets = [0, 0, 8], sizes = [16, 16, 8], strides = [1, 1, 1]} : vector<16x16x16xf32> to vector<16x16x8xf32>
    %43 = vector.extract_strided_slice %20 {offsets = [0, 0, 8], sizes = [16, 16, 8], strides = [1, 1, 1]} : vector<16x16x16xf32> to vector<16x16x8xf32>
    %44 = vector.extract_strided_slice %22 {offsets = [0, 0, 8], sizes = [16, 16, 8], strides = [1, 1, 1]} : vector<16x16x16xf32> to vector<16x16x8xf32>
    "tpu.trace_start"() <{level = 10 : i32, message = "gnc,gmc->gnm"}> : () -> ()
    %cst_20 = arith.constant dense<0.000000e+00> : vector<16x16x16xf32>
    %45 = tpu.matmul %42, %43, %cst_20 {dimension_numbers = #tpu.dot_dimension_numbers<[2], [2], [1], [1], [0, 0, 0, 1, 1, 1], [0], [0]>} : vector<16x16x8xf32>, vector<16x16x8xf32>, vector<16x16x16xf32> -> vector<16x16x16xf32>
    "tpu.trace_stop"() : () -> ()
    %cst_21 = arith.constant dense<0xFF800000> : vector<16x16xf32>
    %46 = vector.multi_reduction <maximumf>, %45, %cst_21 [2] : vector<16x16x16xf32> to vector<16x16xf32>
    %47 = vector.shape_cast %46 : vector<16x16xf32> to vector<16x16x1xf32>
    %48 = vector.broadcast %47 : vector<16x16x1xf32> to vector<16x16x16xf32>
    %49 = arith.subf %45, %48 : vector<16x16x16xf32>
    %50 = math.exp %49 : vector<16x16x16xf32>
    %cst_22 = arith.constant dense<0.000000e+00> : vector<16x16xf32>
    %51 = vector.multi_reduction <add>, %50, %cst_22 [2] : vector<16x16x16xf32> to vector<16x16xf32>
    %52 = vector.shape_cast %51 : vector<16x16xf32> to vector<16x16x1xf32>
    %53 = tpu.reciprocal %52 {approx = true} : vector<16x16x1xf32> -> vector<16x16x1xf32>
    %54 = vector.broadcast %53 : vector<16x16x1xf32> to vector<16x16x16xf32>
    %55 = arith.mulf %50, %54 : vector<16x16x16xf32>
    "tpu.trace_start"() <{level = 10 : i32, message = "gnm,gmc->gnc"}> : () -> ()
    %cst_23 = arith.constant dense<0.000000e+00> : vector<16x16x8xf32>
    %56 = tpu.matmul %55, %44, %cst_23 {dimension_numbers = #tpu.dot_dimension_numbers<[2], [1], [1], [2], [0, 0, 0, 1, 1, 2], [0], [0]>} : vector<16x16x16xf32>, vector<16x16x8xf32>, vector<16x16x8xf32> -> vector<16x16x8xf32>
    "tpu.trace_stop"() : () -> ()
    %57 = vector.shape_cast %56 : vector<16x16x8xf32> to vector<256x8xf32>
    %58 = vector.extract_strided_slice %23 {offsets = [8, 0], sizes = [8, 16], strides = [1, 1]} : vector<16x16xf32> to vector<8x16xf32>
    %cst_24 = arith.constant dense<0.000000e+00> : vector<256x16xf32>
    %59 = tpu.matmul %57, %58, %cst_24 {dimension_numbers = #tpu.dot_dimension_numbers<[1], [0], [0], [1], [0, 0, 1, 1], [], []>} : vector<256x8xf32>, vector<8x16xf32>, vector<256x16xf32> -> vector<256x16xf32>
    %60 = arith.addf %41, %59 : vector<256x16xf32>
    %c0_25 = arith.constant 0 : index
    %c0_26 = arith.constant 0 : index
    %61 = vector.load %arg7[%c0_25, %c0_26] : memref<1x16xf32, #tpu.memory_space<vmem>>, vector<1x16xf32>
    %62 = vector.broadcast %61 : vector<1x16xf32> to vector<256x16xf32>
    %63 = arith.addf %60, %62 : vector<256x16xf32>
    %cst_27 = arith.constant 0.000000e+00 : f32
    %64 = vector.broadcast %cst_27 : f32 to vector<256x16xf32>
    %65 = arith.maximumf %63, %64 : vector<256x16xf32>
    %c0_28 = arith.constant 0 : index
    %c0_29 = arith.constant 0 : index
    %66 = vector.load %arg8[%c0_28, %c0_29] : memref<16x16xf32, #tpu.memory_space<vmem>>, vector<16x16xf32>
    %cst_30 = arith.constant dense<0.000000e+00> : vector<256x16xf32>
    %67 = tpu.matmul %65, %66, %cst_30 {dimension_numbers = #tpu.dot_dimension_numbers<[1], [0], [0], [1], [0, 0, 1, 1], [], []>} : vector<256x16xf32>, vector<16x16xf32>, vector<256x16xf32> -> vector<256x16xf32>
    %c0_31 = arith.constant 0 : index
    %c0_32 = arith.constant 0 : index
    %68 = vector.load %arg9[%c0_31, %c0_32] : memref<1x16xf32, #tpu.memory_space<vmem>>, vector<1x16xf32>
    %69 = vector.broadcast %68 : vector<1x16xf32> to vector<256x16xf32>
    %70 = arith.addf %67, %69 : vector<256x16xf32>
    %71 = vector.shape_cast %70 : vector<256x16xf32> to vector<16x16x16xf32>
    %c0_33 = arith.constant 0 : index
    %c0_34 = arith.constant 0 : index
    %c0_35 = arith.constant 0 : index
    %c0_36 = arith.constant 0 : index
    %72 = vector.load %arg10[%c0_33, %c0_34, %c0_35, %c0_36] : memref<1x16x16x16xf32, #tpu.memory_space<vmem>>, vector<1x16x16x16xf32>
    %73 = vector.shape_cast %72 : vector<1x16x16x16xf32> to vector<16x16x16xf32>
    %74 = vector.shape_cast %71 : vector<16x16x16xf32> to vector<1x16x16x16xf32>
    tpu.vector_store %arg10[%c0_33, %c0_34, %c0_35, %c0_36], %74 {strides = array<i32>} : memref<1x16x16x16xf32, #tpu.memory_space<vmem>>, vector<1x16x16x16xf32>,
    return
  }
  func.func @transform_0(%arg0: i32, %arg1: i32) -> (i32, i32, i32, i32) {
    %c0_i32 = arith.constant 0 : i32
    %c0_i32_0 = arith.constant 0 : i32
    %c0_i32_1 = arith.constant 0 : i32
    return %arg0, %arg1, %c0_i32, %c0_i32_0 : i32, i32, i32, i32
  }
  func.func @transform_1(%arg0: i32, %arg1: i32) -> (i32, i32, i32, i32) {
    %c0_i32 = arith.constant 0 : i32
    %c0_i32_0 = arith.constant 0 : i32
    %c0_i32_1 = arith.constant 0 : i32
    return %arg0, %arg1, %c0_i32, %c0_i32_0 : i32, i32, i32, i32
  }
  func.func @transform_2(%arg0: i32, %arg1: i32) -> (i32, i32) {
    %c0_i32 = arith.constant 0 : i32
    %c0_i32_0 = arith.constant 0 : i32
    %c0_i32_1 = arith.constant 0 : i32
    return %c0_i32, %c0_i32_0 : i32, i32
  }
  func.func @transform_3(%arg0: i32, %arg1: i32) -> (i32, i32) {
    %c0_i32 = arith.constant 0 : i32
    %c0_i32_0 = arith.constant 0 : i32
    %c0_i32_1 = arith.constant 0 : i32
    return %c0_i32, %c0_i32_0 : i32, i32
  }
  func.func @transform_4(%arg0: i32, %arg1: i32) -> (i32, i32) {
    %c0_i32 = arith.constant 0 : i32
    %c0_i32_0 = arith.constant 0 : i32
    %c0_i32_1 = arith.constant 0 : i32
    return %c0_i32, %c0_i32_0 : i32, i32
  }
  func.func @transform_5(%arg0: i32, %arg1: i32) -> (i32, i32) {
    %c0_i32 = arith.constant 0 : i32
    %c0_i32_0 = arith.constant 0 : i32
    %c0_i32_1 = arith.constant 0 : i32
    return %c0_i32, %c0_i32_0 : i32, i32
  }
  func.func @transform_6(%arg0: i32, %arg1: i32) -> (i32, i32) {
    %c0_i32 = arith.constant 0 : i32
    %c0_i32_0 = arith.constant 0 : i32
    %c0_i32_1 = arith.constant 0 : i32
    return %c0_i32, %c0_i32_0 : i32, i32
  }
  func.func @transform_7(%arg0: i32, %arg1: i32) -> (i32, i32) {
    %c0_i32 = arith.constant 0 : i32
    %c0_i32_0 = arith.constant 0 : i32
    %c0_i32_1 = arith.constant 0 : i32
    return %c0_i32, %c0_i32_0 : i32, i32
  }
  func.func @transform_8(%arg0: i32, %arg1: i32) -> (i32, i32, i32, i32) {
    %c0_i32 = arith.constant 0 : i32
    %c0_i32_0 = arith.constant 0 : i32
    %c0_i32_1 = arith.constant 0 : i32
    return %arg0, %arg1, %c0_i32, %c0_i32_0 : i32, i32, i32, i32
  }
}

module attributes {stable_mosaic.version = 11 : i64} {
  func.func @kernel(%arg0: i32, %arg1: i32, %arg2: memref<1x16x16x16xf32, #tpu.memory_space<vmem>>, %arg3: memref<1x16x16x16xf32, #tpu.memory_space<vmem>>, %arg4: memref<16x16xf32, #tpu.memory_space<vmem>>, %arg5: memref<16x16xf32, #tpu.memory_space<vmem>>, %arg6: memref<1x16xf32, #tpu.memory_space<vmem>>, %arg7: memref<16x16xf32, #tpu.memory_space<vmem>>, %arg8: memref<1x16xf32, #tpu.memory_space<vmem>>, %arg9: memref<16x16xf32, #tpu.memory_space<vmem>>, %arg10: memref<1x16xf32, #tpu.memory_space<vmem>>, %arg11: memref<1x16x16x16xf32, #tpu.memory_space<vmem>>) attributes {dimension_semantics = [#tpu.dimension_semantics<parallel>, #tpu.dimension_semantics<parallel>], iteration_bounds = array<i64: 2, 1>, scalar_prefetch = 0 : i64, scratch_operands = 0 : i64, tpu.core_type = #tpu.core_type<tc>, window_params = [{transform_indices = @transform_0, window_bounds = array<i64: 1, 16, 16, 16>}, {transform_indices = @transform_1, window_bounds = array<i64: 1, 16, 16, 16>}, {pipeline_mode = #tpu.pipeline_mode<synchronous>, transform_indices = @transform_2, window_bounds = array<i64: 16, 16>}, {pipeline_mode = #tpu.pipeline_mode<synchronous>, transform_indices = @transform_3, window_bounds = array<i64: 16, 16>}, {pipeline_mode = #tpu.pipeline_mode<synchronous>, transform_indices = @transform_4, window_bounds = array<i64: 1, 16>}, {pipeline_mode = #tpu.pipeline_mode<synchronous>, transform_indices = @transform_5, window_bounds = array<i64: 16, 16>}, {pipeline_mode = #tpu.pipeline_mode<synchronous>, transform_indices = @transform_6, window_bounds = array<i64: 1, 16>}, {pipeline_mode = #tpu.pipeline_mode<synchronous>, transform_indices = @transform_7, window_bounds = array<i64: 16, 16>}, {pipeline_mode = #tpu.pipeline_mode<synchronous>, transform_indices = @transform_8, window_bounds = array<i64: 1, 16>}, {transform_indices = @transform_9, window_bounds = array<i64: 1, 16, 16, 16>}]} {
    %c0 = arith.constant 0 : index
    %c0_0 = arith.constant 0 : index
    %c0_1 = arith.constant 0 : index
    %c0_2 = arith.constant 0 : index
    %0 = vector.load %arg2[%c0, %c0_0, %c0_1, %c0_2] : memref<1x16x16x16xf32, #tpu.memory_space<vmem>>, vector<1x16x16x16xf32>
    %1 = vector.shape_cast %0 : vector<1x16x16x16xf32> to vector<16x16x16xf32>
    %2 = tpu.transpose %1, [0, 2, 1] : vector<16x16x16xf32> -> vector<16x16x16xf32>
    %3 = vector.shape_cast %2 : vector<16x16x16xf32> to vector<256x16xf32>
    %c0_3 = arith.constant 0 : index
    %c0_4 = arith.constant 0 : index
    %c0_5 = arith.constant 0 : index
    %c0_6 = arith.constant 0 : index
    %4 = vector.load %arg3[%c0_3, %c0_4, %c0_5, %c0_6] : memref<1x16x16x16xf32, #tpu.memory_space<vmem>>, vector<1x16x16x16xf32>
    %5 = vector.shape_cast %4 : vector<1x16x16x16xf32> to vector<16x16x16xf32>
    %6 = tpu.transpose %5, [0, 2, 1] : vector<16x16x16xf32> -> vector<16x16x16xf32>
    %7 = vector.shape_cast %6 : vector<16x16x16xf32> to vector<256x16xf32>
    %c0_7 = arith.constant 0 : index
    %c0_8 = arith.constant 0 : index
    %8 = vector.load %arg4[%c0_7, %c0_8] : memref<16x16xf32, #tpu.memory_space<vmem>>, vector<16x16xf32>
    %cst = arith.constant dense<0.000000e+00> : vector<256x16xf32>
    %9 = tpu.matmul %3, %8, %cst {dimension_numbers = #tpu.dot_dimension_numbers<[1], [0], [0], [1], [0, 0, 1, 1], [], []>} : vector<256x16xf32>, vector<16x16xf32>, vector<256x16xf32> -> vector<256x16xf32>
    %c0_9 = arith.constant 0 : index
    %c0_10 = arith.constant 0 : index
    %10 = vector.load %arg5[%c0_9, %c0_10] : memref<16x16xf32, #tpu.memory_space<vmem>>, vector<16x16xf32>
    %cst_11 = arith.constant dense<0.000000e+00> : vector<256x16xf32>
    %11 = tpu.matmul %7, %10, %cst_11 {dimension_numbers = #tpu.dot_dimension_numbers<[1], [0], [0], [1], [0, 0, 1, 1], [], []>} : vector<256x16xf32>, vector<16x16xf32>, vector<256x16xf32> -> vector<256x16xf32>
    %12 = arith.addf %9, %11 : vector<256x16xf32>
    %c0_12 = arith.constant 0 : index
    %c0_13 = arith.constant 0 : index
    %13 = vector.load %arg6[%c0_12, %c0_13] : memref<1x16xf32, #tpu.memory_space<vmem>>, vector<1x16xf32>
    %14 = vector.broadcast %13 : vector<1x16xf32> to vector<256x16xf32>
    %15 = arith.addf %12, %14 : vector<256x16xf32>
    %cst_14 = arith.constant 5.000000e-01 : f32
    %16 = vector.broadcast %cst_14 : f32 to vector<256x16xf32>
    %17 = arith.mulf %16, %15 : vector<256x16xf32>
    %18 = math.tanh %17 : vector<256x16xf32>
    %cst_15 = arith.constant 1.000000e+00 : f32
    %19 = vector.broadcast %cst_15 : f32 to vector<256x16xf32>
    %20 = arith.addf %18, %19 : vector<256x16xf32>
    %cst_16 = arith.constant 5.000000e-01 : f32
    %21 = vector.broadcast %cst_16 : f32 to vector<256x16xf32>
    %22 = arith.mulf %21, %20 : vector<256x16xf32>
    %23 = arith.mulf %22, %3 : vector<256x16xf32>
    %cst_17 = arith.constant 1.000000e+00 : f32
    %24 = vector.broadcast %cst_17 : f32 to vector<256x16xf32>
    %25 = arith.subf %24, %22 : vector<256x16xf32>
    %26 = arith.mulf %25, %7 : vector<256x16xf32>
    %27 = arith.addf %23, %26 : vector<256x16xf32>
    %c0_18 = arith.constant 0 : index
    %c0_19 = arith.constant 0 : index
    %28 = vector.load %arg7[%c0_18, %c0_19] : memref<16x16xf32, #tpu.memory_space<vmem>>, vector<16x16xf32>
    %cst_20 = arith.constant dense<0.000000e+00> : vector<256x16xf32>
    %29 = tpu.matmul %27, %28, %cst_20 {dimension_numbers = #tpu.dot_dimension_numbers<[1], [0], [0], [1], [0, 0, 1, 1], [], []>} : vector<256x16xf32>, vector<16x16xf32>, vector<256x16xf32> -> vector<256x16xf32>
    %c0_21 = arith.constant 0 : index
    %c0_22 = arith.constant 0 : index
    %30 = vector.load %arg8[%c0_21, %c0_22] : memref<1x16xf32, #tpu.memory_space<vmem>>, vector<1x16xf32>
    %31 = vector.broadcast %30 : vector<1x16xf32> to vector<256x16xf32>
    %32 = arith.addf %29, %31 : vector<256x16xf32>
    %cst_23 = arith.constant 0.000000e+00 : f32
    %33 = vector.broadcast %cst_23 : f32 to vector<256x16xf32>
    %34 = arith.maximumf %32, %33 : vector<256x16xf32>
    %c0_24 = arith.constant 0 : index
    %c0_25 = arith.constant 0 : index
    %35 = vector.load %arg9[%c0_24, %c0_25] : memref<16x16xf32, #tpu.memory_space<vmem>>, vector<16x16xf32>
    %cst_26 = arith.constant dense<0.000000e+00> : vector<256x16xf32>
    %36 = tpu.matmul %34, %35, %cst_26 {dimension_numbers = #tpu.dot_dimension_numbers<[1], [0], [0], [1], [0, 0, 1, 1], [], []>} : vector<256x16xf32>, vector<16x16xf32>, vector<256x16xf32> -> vector<256x16xf32>
    %c0_27 = arith.constant 0 : index
    %c0_28 = arith.constant 0 : index
    %37 = vector.load %arg10[%c0_27, %c0_28] : memref<1x16xf32, #tpu.memory_space<vmem>>, vector<1x16xf32>
    %38 = vector.broadcast %37 : vector<1x16xf32> to vector<256x16xf32>
    %39 = arith.addf %36, %38 : vector<256x16xf32>
    %40 = vector.shape_cast %39 : vector<256x16xf32> to vector<16x16x16xf32>
    %c0_29 = arith.constant 0 : index
    %c0_30 = arith.constant 0 : index
    %c0_31 = arith.constant 0 : index
    %c0_32 = arith.constant 0 : index
    %41 = vector.load %arg11[%c0_29, %c0_30, %c0_31, %c0_32] : memref<1x16x16x16xf32, #tpu.memory_space<vmem>>, vector<1x16x16x16xf32>
    %42 = vector.shape_cast %41 : vector<1x16x16x16xf32> to vector<16x16x16xf32>
    %43 = vector.shape_cast %40 : vector<16x16x16xf32> to vector<1x16x16x16xf32>
    tpu.vector_store %arg11[%c0_29, %c0_30, %c0_31, %c0_32], %43 {strides = array<i32>} : memref<1x16x16x16xf32, #tpu.memory_space<vmem>>, vector<1x16x16x16xf32>,
    return
  }
  func.func @transform_0(%arg0: i32, %arg1: i32) -> (i32, i32, i32, i32) {
    %c0_i32 = arith.constant 0 : i32
    %c0_i32_0 = arith.constant 0 : i32
    %c0_i32_1 = arith.constant 0 : i32
    return %arg0, %arg1, %c0_i32, %c0_i32_0 : i32, i32, i32, i32
  }
  func.func @transform_1(%arg0: i32, %arg1: i32) -> (i32, i32, i32, i32) {
    %c0_i32 = arith.constant 0 : i32
    %c0_i32_0 = arith.constant 0 : i32
    %c0_i32_1 = arith.constant 0 : i32
    return %arg0, %arg1, %c0_i32, %c0_i32_0 : i32, i32, i32, i32
  }
  func.func @transform_2(%arg0: i32, %arg1: i32) -> (i32, i32) {
    %c0_i32 = arith.constant 0 : i32
    %c0_i32_0 = arith.constant 0 : i32
    %c0_i32_1 = arith.constant 0 : i32
    return %c0_i32, %c0_i32_0 : i32, i32
  }
  func.func @transform_3(%arg0: i32, %arg1: i32) -> (i32, i32) {
    %c0_i32 = arith.constant 0 : i32
    %c0_i32_0 = arith.constant 0 : i32
    %c0_i32_1 = arith.constant 0 : i32
    return %c0_i32, %c0_i32_0 : i32, i32
  }
  func.func @transform_4(%arg0: i32, %arg1: i32) -> (i32, i32) {
    %c0_i32 = arith.constant 0 : i32
    %c0_i32_0 = arith.constant 0 : i32
    %c0_i32_1 = arith.constant 0 : i32
    return %c0_i32, %c0_i32_0 : i32, i32
  }
  func.func @transform_5(%arg0: i32, %arg1: i32) -> (i32, i32) {
    %c0_i32 = arith.constant 0 : i32
    %c0_i32_0 = arith.constant 0 : i32
    %c0_i32_1 = arith.constant 0 : i32
    return %c0_i32, %c0_i32_0 : i32, i32
  }
  func.func @transform_6(%arg0: i32, %arg1: i32) -> (i32, i32) {
    %c0_i32 = arith.constant 0 : i32
    %c0_i32_0 = arith.constant 0 : i32
    %c0_i32_1 = arith.constant 0 : i32
    return %c0_i32, %c0_i32_0 : i32, i32
  }
  func.func @transform_7(%arg0: i32, %arg1: i32) -> (i32, i32) {
    %c0_i32 = arith.constant 0 : i32
    %c0_i32_0 = arith.constant 0 : i32
    %c0_i32_1 = arith.constant 0 : i32
    return %c0_i32, %c0_i32_0 : i32, i32
  }
  func.func @transform_8(%arg0: i32, %arg1: i32) -> (i32, i32) {
    %c0_i32 = arith.constant 0 : i32
    %c0_i32_0 = arith.constant 0 : i32
    %c0_i32_1 = arith.constant 0 : i32
    return %c0_i32, %c0_i32_0 : i32, i32
  }
  func.func @transform_9(%arg0: i32, %arg1: i32) -> (i32, i32, i32, i32) {
    %c0_i32 = arith.constant 0 : i32
    %c0_i32_0 = arith.constant 0 : i32
    %c0_i32_1 = arith.constant 0 : i32
    return %arg0, %arg1, %c0_i32, %c0_i32_0 : i32, i32, i32, i32
  }
}

</mosaic_0001>

<llo_original>
// kernel: st_att_block.5
$region0: #{st_att_block.5}
  #allocation0 [shape = 'u32[]', space=smem, size = 0x4, offset = 0x4, fixed_abs, tag = 'smem constant byte address 0x4 - core index']
  #allocation1 [shape = 'u32[144,128]{1,0:T(1,128)}', space=vmem, size = 0x12000, scoped, tag = 'internal scratch']
  %s0 = inlined_call_operand.vmem [shape: f32[2,16,16,16], index: 0, kind: input, shape index: {}]
  %s1 = inlined_call_operand.vmem [shape: f32[2,16,16,16], index: 1, kind: input, shape index: {}]
  %s2 = inlined_call_operand.vmem [shape: f32[16,16], index: 2, kind: input, shape index: {}]
  %s3 = inlined_call_operand.vmem [shape: f32[16,16], index: 3, kind: input, shape index: {}]
  %s4 = inlined_call_operand.vmem [shape: f32[1,16], index: 4, kind: input, shape index: {}]
  %s5 = inlined_call_operand.vmem [shape: f32[16,16], index: 5, kind: input, shape index: {}]
  %s6 = inlined_call_operand.vmem [shape: f32[1,16], index: 6, kind: input, shape index: {}]
  %s7 = inlined_call_operand.vmem [shape: f32[16,16], index: 7, kind: input, shape index: {}]
  %s8 = inlined_call_operand.vmem [shape: f32[1,16], index: 8, kind: input, shape index: {}]
  %s9 = inlined_call_operand.vmem [shape: f32[2,16,16,16], index: 9, kind: output, shape index: {}]
  %s10 = sld [smem:[#allocation0]]
  $region69: #{st_att_block.5} parent=0
    _
  %s12 = ssub.s32 1, %s10
  %s13 = scalar_select 0, %s12, %s10
  loop: start=0, step=1, limit=4
  $region2: #{st_att_block.5} parent=0 // loop_pre_header
    _
  $region3: #{st_att_block.5} parent=0 // loop_header
    %s15 = sphi 0, %s19
    %p16 = scmp.ge.s32.totalorder %s15, 4
    %s22 = sphi 0, %s34
    %s23 = sphi 0, %s30
    %s24 = sphi 0, %s22
    %s25 = sphi 0, %s23
    %s26 = sphi 0, %s24
    %s27 = sphi 0, %s25
    %s39 = sphi 0, %s41
    %s42 = sphi 0, %s39
    %s43 = sphi 0, %s42
    %s59 = sphi 0, %s43
    %s67 = sphi 0, %s69
    %s70 = sphi 0, %s67
    %s71 = sphi 0, %s70
    %s87 = sphi 0, %s71
    %s91 = sphi 0, %s91
    %s93 = sphi 0, %s91
    %s94 = sphi 0, %s93
    %s108 = sphi 0, %s94
    %s112 = sphi 0, %s112
    %s114 = sphi 0, %s112
    %s115 = sphi 0, %s114
    %s129 = sphi 0, %s115
    %s133 = sphi 0, %s133
    %s135 = sphi 0, %s133
    %s136 = sphi 0, %s135
    %s150 = sphi 0, %s136
    %s154 = sphi 0, %s154
    %s156 = sphi 0, %s154
    %s157 = sphi 0, %s156
    %s171 = sphi 0, %s157
    %s175 = sphi 0, %s175
    %s177 = sphi 0, %s175
    %s178 = sphi 0, %s177
    %s192 = sphi 0, %s178
    %s196 = sphi 0, %s196
    %s198 = sphi 0, %s196
    %s199 = sphi 0, %s198
    %s213 = sphi 0, %s199
    %s217 = sphi 0, %s217
    %s219 = sphi 0, %s217
    %s220 = sphi 0, %s219
    %s234 = sphi 0, %s220
    %s242 = sphi 0, %s244
    %s245 = sphi 0, %s242
    %s246 = sphi 0, %s245
    %s262 = sphi 0, %s246
  $region4: #{st_att_block.5} parent=0 // loop_header_branch
    %18 = sbr.rel (%p16) target = $region8
  $region5: #{st_att_block.5} parent=0 // loop_body
    %s20 = ssub.s32 %s15, 1
    %s21 = ssub.s32 %s15, 2
    %s28 = sadd.s32 1, %s23
    %p29 = scmp.ge.s32.totalorder %s28, 1
    %s30 = scalar_select %p29, 0, %s28
    %s31 = sadd.s32 1, %s22
    %s32 = scalar_select %p29, %s31, %s22
    %p33 = scmp.ge.s32.totalorder %s32, 2
    %s34 = scalar_select %p33, 0, %s32
    %s35 = ssub.s32 %s22, %s34
    %s36 = ssub.s32 %s23, %s30
    %s37 = sor.u32 %s35, %s36
    %p38 = scmp.eq.s32.totalorder %s37, 0
    %s40 = sadd.s32 %s39, 1
    %s41 = scalar_select %p38, %s39, %s40
    %p44 = pneg %p38
    %p45 = scmp.eq.s32.totalorder %s15, 1
    %p46 = por %p44, %p45
    %p47 = scmp.ne.s32.totalorder %s39, %s42
    %p48 = scmp.eq.s32.totalorder %s15, 0
    %p49 = por %p47, %p48
    %p50 = scmp.ne.s32.totalorder %s39, %s42
    %p51 = scmp.eq.s32.totalorder %s20, 1
    %p52 = por %p50, %p51
    %p53 = scmp.ne.s32.totalorder %s42, %s43
    %p54 = scmp.eq.s32.totalorder %s20, 0
    %p55 = por %p53, %p54
    %p56 = scmp.ne.s32.totalorder %s42, %s43
    %p57 = scmp.eq.s32.totalorder %s21, 1
    %p58 = por %p56, %p57
    %p60 = scmp.ne.s32.totalorder %s43, %s59
    %p61 = scmp.eq.s32.totalorder %s21, 0
    %p62 = por %p60, %p61
    %s63 = ssub.s32 %s22, %s34
    %s64 = ssub.s32 %s23, %s30
    %s65 = sor.u32 %s63, %s64
    %p66 = scmp.eq.s32.totalorder %s65, 0
    %s68 = sadd.s32 %s67, 1
    %s69 = scalar_select %p66, %s67, %s68
    %p72 = pneg %p66
    %p73 = scmp.eq.s32.totalorder %s15, 1
    %p74 = por %p72, %p73
    %p75 = scmp.ne.s32.totalorder %s67, %s70
    %p76 = scmp.eq.s32.totalorder %s15, 0
    %p77 = por %p75, %p76
    %p78 = scmp.ne.s32.totalorder %s67, %s70
    %p79 = scmp.eq.s32.totalorder %s20, 1
    %p80 = por %p78, %p79
    %p81 = scmp.ne.s32.totalorder %s70, %s71
    %p82 = scmp.eq.s32.totalorder %s20, 0
    %p83 = por %p81, %p82
    %p84 = scmp.ne.s32.totalorder %s70, %s71
    %p85 = scmp.eq.s32.totalorder %s21, 1
    %p86 = por %p84, %p85
    %p88 = scmp.ne.s32.totalorder %s71, %s87
    %p89 = scmp.eq.s32.totalorder %s21, 0
    %p90 = por %p88, %p89
    %s92 = sadd.s32 %s91, 1
    %p95 = scmp.eq.s32.totalorder %s15, 1
    %p96 = scmp.ne.s32.totalorder %s91, %s93
    %p97 = scmp.eq.s32.totalorder %s15, 0
    %p98 = por %p96, %p97
    %p99 = scmp.ne.s32.totalorder %s91, %s93
    %p100 = scmp.eq.s32.totalorder %s20, 1
    %p101 = por %p99, %p100
    %p102 = scmp.ne.s32.totalorder %s93, %s94
    %p103 = scmp.eq.s32.totalorder %s20, 0
    %p104 = por %p102, %p103
    %p105 = scmp.ne.s32.totalorder %s93, %s94
    %p106 = scmp.eq.s32.totalorder %s21, 1
    %p107 = por %p105, %p106
    %p109 = scmp.ne.s32.totalorder %s94, %s108
    %p110 = scmp.eq.s32.totalorder %s21, 0
    %p111 = por %p109, %p110
    %s113 = sadd.s32 %s112, 1
    %p116 = scmp.eq.s32.totalorder %s15, 1
    %p117 = scmp.ne.s32.totalorder %s112, %s114
    %p118 = scmp.eq.s32.totalorder %s15, 0
    %p119 = por %p117, %p118
    %p120 = scmp.ne.s32.totalorder %s112, %s114
    %p121 = scmp.eq.s32.totalorder %s20, 1
    %p122 = por %p120, %p121
    %p123 = scmp.ne.s32.totalorder %s114, %s115
    %p124 = scmp.eq.s32.totalorder %s20, 0
    %p125 = por %p123, %p124
    %p126 = scmp.ne.s32.totalorder %s114, %s115
    %p127 = scmp.eq.s32.totalorder %s21, 1
    %p128 = por %p126, %p127
    %p130 = scmp.ne.s32.totalorder %s115, %s129
    %p131 = scmp.eq.s32.totalorder %s21, 0
    %p132 = por %p130, %p131
    %s134 = sadd.s32 %s133, 1
    %p137 = scmp.eq.s32.totalorder %s15, 1
    %p138 = scmp.ne.s32.totalorder %s133, %s135
    %p139 = scmp.eq.s32.totalorder %s15, 0
    %p140 = por %p138, %p139
    %p141 = scmp.ne.s32.totalorder %s133, %s135
    %p142 = scmp.eq.s32.totalorder %s20, 1
    %p143 = por %p141, %p142
    %p144 = scmp.ne.s32.totalorder %s135, %s136
    %p145 = scmp.eq.s32.totalorder %s20, 0
    %p146 = por %p144, %p145
    %p147 = scmp.ne.s32.totalorder %s135, %s136
    %p148 = scmp.eq.s32.totalorder %s21, 1
    %p149 = por %p147, %p148
    %p151 = scmp.ne.s32.totalorder %s136, %s150
    %p152 = scmp.eq.s32.totalorder %s21, 0
    %p153 = por %p151, %p152
    %s155 = sadd.s32 %s154, 1
    %p158 = scmp.eq.s32.totalorder %s15, 1
    %p159 = scmp.ne.s32.totalorder %s154, %s156
    %p160 = scmp.eq.s32.totalorder %s15, 0
    %p161 = por %p159, %p160
    %p162 = scmp.ne.s32.totalorder %s154, %s156
    %p163 = scmp.eq.s32.totalorder %s20, 1
    %p164 = por %p162, %p163
    %p165 = scmp.ne.s32.totalorder %s156, %s157
    %p166 = scmp.eq.s32.totalorder %s20, 0
    %p167 = por %p165, %p166
    %p168 = scmp.ne.s32.totalorder %s156, %s157
    %p169 = scmp.eq.s32.totalorder %s21, 1
    %p170 = por %p168, %p169
    %p172 = scmp.ne.s32.totalorder %s157, %s171
    %p173 = scmp.eq.s32.totalorder %s21, 0
    %p174 = por %p172, %p173
    %s176 = sadd.s32 %s175, 1
    %p179 = scmp.eq.s32.totalorder %s15, 1
    %p180 = scmp.ne.s32.totalorder %s175, %s177
    %p181 = scmp.eq.s32.totalorder %s15, 0
    %p182 = por %p180, %p181
    %p183 = scmp.ne.s32.totalorder %s175, %s177
    %p184 = scmp.eq.s32.totalorder %s20, 1
    %p185 = por %p183, %p184
    %p186 = scmp.ne.s32.totalorder %s177, %s178
    %p187 = scmp.eq.s32.totalorder %s20, 0
    %p188 = por %p186, %p187
    %p189 = scmp.ne.s32.totalorder %s177, %s178
    %p190 = scmp.eq.s32.totalorder %s21, 1
    %p191 = por %p189, %p190
    %p193 = scmp.ne.s32.totalorder %s178, %s192
    %p194 = scmp.eq.s32.totalorder %s21, 0
    %p195 = por %p193, %p194
    %s197 = sadd.s32 %s196, 1
    %p200 = scmp.eq.s32.totalorder %s15, 1
    %p201 = scmp.ne.s32.totalorder %s196, %s198
    %p202 = scmp.eq.s32.totalorder %s15, 0
    %p203 = por %p201, %p202
    %p204 = scmp.ne.s32.totalorder %s196, %s198
    %p205 = scmp.eq.s32.totalorder %s20, 1
    %p206 = por %p204, %p205
    %p207 = scmp.ne.s32.totalorder %s198, %s199
    %p208 = scmp.eq.s32.totalorder %s20, 0
    %p209 = por %p207, %p208
    %p210 = scmp.ne.s32.totalorder %s198, %s199
    %p211 = scmp.eq.s32.totalorder %s21, 1
    %p212 = por %p210, %p211
    %p214 = scmp.ne.s32.totalorder %s199, %s213
    %p215 = scmp.eq.s32.totalorder %s21, 0
    %p216 = por %p214, %p215
    %s218 = sadd.s32 %s217, 1
    %p221 = scmp.eq.s32.totalorder %s15, 1
    %p222 = scmp.ne.s32.totalorder %s217, %s219
    %p223 = scmp.eq.s32.totalorder %s15, 0
    %p224 = por %p222, %p223
    %p225 = scmp.ne.s32.totalorder %s217, %s219
    %p226 = scmp.eq.s32.totalorder %s20, 1
    %p227 = por %p225, %p226
    %p228 = scmp.ne.s32.totalorder %s219, %s220
    %p229 = scmp.eq.s32.totalorder %s20, 0
    %p230 = por %p228, %p229
    %p231 = scmp.ne.s32.totalorder %s219, %s220
    %p232 = scmp.eq.s32.totalorder %s21, 1
    %p233 = por %p231, %p232
    %p235 = scmp.ne.s32.totalorder %s220, %s234
    %p236 = scmp.eq.s32.totalorder %s21, 0
    %p237 = por %p235, %p236
    %s238 = ssub.s32 %s22, %s34
    %s239 = ssub.s32 %s23, %s30
    %s240 = sor.u32 %s238, %s239
    %p241 = scmp.eq.s32.totalorder %s240, 0
    %s243 = sadd.s32 %s242, 1
    %s244 = scalar_select %p241, %s242, %s243
    %p247 = pneg %p241
    %p248 = scmp.eq.s32.totalorder %s15, 1
    %p249 = por %p247, %p248
    %p250 = scmp.ne.s32.totalorder %s242, %s245
    %p251 = scmp.eq.s32.totalorder %s15, 0
    %p252 = por %p250, %p251
    %p253 = scmp.ne.s32.totalorder %s242, %s245
    %p254 = scmp.eq.s32.totalorder %s20, 1
    %p255 = por %p253, %p254
    %p256 = scmp.ne.s32.totalorder %s245, %s246
    %p257 = scmp.eq.s32.totalorder %s20, 0
    %p258 = por %p256, %p257
    %p259 = scmp.ne.s32.totalorder %s245, %s246
    %p260 = scmp.eq.s32.totalorder %s21, 1
    %p261 = por %p259, %p260
    %p263 = scmp.ne.s32.totalorder %s246, %s262
    %p264 = scmp.eq.s32.totalorder %s21, 0
    %p265 = por %p263, %p264
    %p266 = scmp.le.s32.totalorder 1, %s15
    %p267 = scmp.lt.s32.totalorder %s15, 3
    %p268 = pnand %p266, %p267
    %p269 = pneg %p268
    // Predicated region
    $region9: #{st_att_block.5} parent=5 // pred_check
      _
    $region10: #{st_att_block.5} parent=5 // pred_check_branch
      %271 = sbr.rel (%p268) target = $region12
    $region11: #{st_att_block.5} parent=5 // pred_region
      %s272 = ssub.s32 %s15, 1
      // Predicated region
      $region13: #{st_att_block.5} parent=11 // pred_check
        %p273 = pneg %p104
      $region14: #{st_att_block.5} parent=11 // pred_check_branch
        %275 = sbr.rel (%p273) target = $region16
      $region15: #{st_att_block.5} parent=11 // pred_region
        _
      $region16: #{st_att_block.5} parent=11 // pred_fallthru
        _
      // Predicated region
      $region17: #{st_att_block.5} parent=11 // pred_check
        %p276 = pneg %p125
      $region18: #{st_att_block.5} parent=11 // pred_check_branch
        %278 = sbr.rel (%p276) target = $region20
      $region19: #{st_att_block.5} parent=11 // pred_region
        _
      $region20: #{st_att_block.5} parent=11 // pred_fallthru
        _
      // Predicated region
      $region21: #{st_att_block.5} parent=11 // pred_check
        %p279 = pneg %p146
      $region22: #{st_att_block.5} parent=11 // pred_check_branch
        %281 = sbr.rel (%p279) target = $region24
      $region23: #{st_att_block.5} parent=11 // pred_region
        _
      $region24: #{st_att_block.5} parent=11 // pred_fallthru
        _
      // Predicated region
      $region25: #{st_att_block.5} parent=11 // pred_check
        %p282 = pneg %p167
      $region26: #{st_att_block.5} parent=11 // pred_check_branch
        %284 = sbr.rel (%p282) target = $region28
      $region27: #{st_att_block.5} parent=11 // pred_region
        _
      $region28: #{st_att_block.5} parent=11 // pred_fallthru
        _
      // Predicated region
      $region29: #{st_att_block.5} parent=11 // pred_check
        %p285 = pneg %p188
      $region30: #{st_att_block.5} parent=11 // pred_check_branch
        %287 = sbr.rel (%p285) target = $region32
      $region31: #{st_att_block.5} parent=11 // pred_region
        _
      $region32: #{st_att_block.5} parent=11 // pred_fallthru
        _
      // Predicated region
      $region33: #{st_att_block.5} parent=11 // pred_check
        %p288 = pneg %p209
      $region34: #{st_att_block.5} parent=11 // pred_check_branch
        %290 = sbr.rel (%p288) target = $region36
      $region35: #{st_att_block.5} parent=11 // pred_region
        _
      $region36: #{st_att_block.5} parent=11 // pred_fallthru
        _
      // Predicated region
      $region37: #{st_att_block.5} parent=11 // pred_check
        %p291 = pneg %p230
      $region38: #{st_att_block.5} parent=11 // pred_check_branch
        %293 = sbr.rel (%p291) target = $region40
      $region39: #{st_att_block.5} parent=11 // pred_region
        _
      $region40: #{st_att_block.5} parent=11 // pred_fallthru
        _
    $region12: #{st_att_block.5} parent=5 // pred_fallthru
      _
    %p294 = scmp.lt.s32.totalorder %s15, 2
    // Predicated region
    $region41: #{st_att_block.5} parent=5 // pred_check
      %p295 = pneg %p294
    $region42: #{st_att_block.5} parent=5 // pred_check_branch
      %297 = sbr.rel (%p295) target = $region44
    $region43: #{st_att_block.5} parent=5 // pred_region
      // Predicated region
      $region45: #{st_att_block.5} parent=43 // pred_check
        %p298 = pneg %p49
      $region46: #{st_att_block.5} parent=43 // pred_check_branch
        %300 = sbr.rel (%p298) target = $region48
      $region47: #{st_att_block.5} parent=43 // pred_region
        %s301 = smul.u32 16, %s23
        %p302 = scmp.lt.s32.totalorder %s22, 1
        %s303 = scalar_select %p302, %s22, 1
        %p304 = scmp.lt.s32.totalorder %s301, 15
        %s305 = scalar_select %p304, %s301, 15
        %s306 = smul.addr %s305, 2
        %s307 = smul.addr %s303, 32
        %s308 = sadd.s32 %s306, %s307
        %s309 = smul.addr %s308, 8
        %s310 = scalar_lea.vmem %s0, %s309
        %s311 = smul.u32 16, %s23
      $region48: #{st_att_block.5} parent=43 // pred_fallthru
        _
      // Predicated region
      $region49: #{st_att_block.5} parent=43 // pred_check
        %p312 = pneg %p77
      $region50: #{st_att_block.5} parent=43 // pred_check_branch
        %314 = sbr.rel (%p312) target = $region52
      $region51: #{st_att_block.5} parent=43 // pred_region
        %s315 = smul.u32 16, %s23
        %p316 = scmp.lt.s32.totalorder %s22, 1
        %s317 = scalar_select %p316, %s22, 1
        %p318 = scmp.lt.s32.totalorder %s315, 15
        %s319 = scalar_select %p318, %s315, 15
        %s320 = smul.addr %s319, 2
        %s321 = smul.addr %s317, 32
        %s322 = sadd.s32 %s320, %s321
        %s323 = smul.addr %s322, 8
        %s324 = scalar_lea.vmem %s1, %s323
        %s325 = smul.u32 16, %s23
      $region52: #{st_att_block.5} parent=43 // pred_fallthru
        _
    $region44: #{st_att_block.5} parent=5 // pred_fallthru
      _
    %p326 = scmp.le.s32.totalorder 1, %s15
    %p327 = scmp.lt.s32.totalorder %s15, 3
    %p328 = pnand %p326, %p327
    %p329 = pneg %p328
    // Predicated region
    $region53: #{st_att_block.5} parent=5 // pred_check
      _
    $region54: #{st_att_block.5} parent=5 // pred_check_branch
      %331 = sbr.rel (%p328) target = $region56
    $region55: #{st_att_block.5} parent=5 // pred_region
      %s332 = ssub.s32 %s15, 1
      %s333 = smul.u32 16, %s25
      %p334 = scmp.lt.s32.totalorder %s24, 1
      %s335 = scalar_select %p334, %s24, 1
      %p336 = scmp.lt.s32.totalorder %s333, 15
      %s337 = scalar_select %p336, %s333, 15
      %s338 = smul.addr %s337, 2
      %s339 = smul.addr %s335, 32
      %s340 = sadd.s32 %s338, %s339
      %s341 = smul.addr %s340, 8
      %s342 = scalar_lea.vmem %s0, %s341
      %p343 = pneg %p55
      %p344 = pneg %p52
      %s345 = smul.u32 16, %s25
      %p346 = scmp.lt.s32.totalorder %s24, 1
      %s347 = scalar_select %p346, %s24, 1
      %p348 = scmp.lt.s32.totalorder %s345, 15
      %s349 = scalar_select %p348, %s345, 15
      %s350 = smul.addr %s349, 2
      %s351 = smul.addr %s347, 32
      %s352 = sadd.s32 %s350, %s351
      %s353 = smul.addr %s352, 8
      %s354 = scalar_lea.vmem %s1, %s353
      %p355 = pneg %p83
      %p356 = pneg %p80
      %p357 = pneg %p104
      %p358 = pneg %p101
      %p359 = pneg %p125
      %p360 = pneg %p122
      %p361 = pneg %p146
      %p362 = pneg %p143
      %p363 = pneg %p167
      %p364 = pneg %p164
      %p365 = pneg %p188
      %p366 = pneg %p185
      %p367 = pneg %p209
      %p368 = pneg %p206
      %p369 = pneg %p230
      %p370 = pneg %p227
      %p371 = pneg %p258
      %p372 = pneg %p255
      %s373 = smul.u32 16, %s25
      %p374 = scmp.lt.s32.totalorder %s24, 1
      %s375 = scalar_select %p374, %s24, 1
      %p376 = scmp.lt.s32.totalorder %s373, 15
      %s377 = scalar_select %p376, %s373, 15
      %s378 = smul.addr %s377, 2
      %s379 = smul.addr %s375, 32
      %s380 = sadd.s32 %s378, %s379
      %s381 = smul.addr %s380, 8
      %s382 = scalar_lea.vmem %s9, %s381
      %s383 = smul.u32 16, %s25
      %p384 = scmp.lt.s32.totalorder %s24, 1
      %s385 = scalar_select %p384, %s24, 1
      %p386 = scmp.lt.s32.totalorder %s383, 15
      %s387 = scalar_select %p386, %s383, 15
      %s388 = smul.addr %s387, 2
      %s389 = smul.addr %s385, 32
      %s390 = sadd.s32 %s388, %s389
      %s391 = smul.addr %s390, 8
      %s392 = scalar_lea.vmem %s0, %s391
      %s393 = smul.u32 16, %s25
      %s394 = smul.u32 16, %s25
      %p395 = scmp.lt.s32.totalorder %s24, 1
      %s396 = scalar_select %p395, %s24, 1
      %p397 = scmp.lt.s32.totalorder %s394, 15
      %s398 = scalar_select %p397, %s394, 15
      %s399 = smul.addr %s398, 2
      %s400 = smul.addr %s396, 32
      %s401 = sadd.s32 %s399, %s400
      %s402 = smul.addr %s401, 8
      %s403 = scalar_lea.vmem %s1, %s402
      %s404 = smul.u32 16, %s25
      %s405 = smul.u32 16, %s25
      %p406 = scmp.lt.s32.totalorder %s24, 1
      %s407 = scalar_select %p406, %s24, 1
      %p408 = scmp.lt.s32.totalorder %s405, 15
      %s409 = scalar_select %p408, %s405, 15
      %s410 = smul.addr %s409, 2
      %s411 = smul.addr %s407, 32
      %s412 = sadd.s32 %s410, %s411
      %s413 = smul.addr %s412, 8
      %s414 = scalar_lea.vmem %s9, %s413
      %s415 = smul.u32 16, %s25
      %v416 = vld [vmem:[%s392] sm:$0xff]
      %v417 = vld [vmem:[%s392 + $0x8] sm:$0xff]
      %v418 = vld [vmem:[%s392 + $0x10] sm:$0xff]
      %v419 = vld [vmem:[%s392 + $0x18] sm:$0xff]
      %v420 = vld [vmem:[%s392 + $0x20] sm:$0xff]
      %v421 = vld [vmem:[%s392 + $0x28] sm:$0xff]
      %v422 = vld [vmem:[%s392 + $0x30] sm:$0xff]
      %v423 = vld [vmem:[%s392 + $0x38] sm:$0xff]
      %v424 = vld [vmem:[%s392 + $0x40] sm:$0xff]
      %v425 = vld [vmem:[%s392 + $0x48] sm:$0xff]
      %v426 = vld [vmem:[%s392 + $0x50] sm:$0xff]
      %v427 = vld [vmem:[%s392 + $0x58] sm:$0xff]
      %v428 = vld [vmem:[%s392 + $0x60] sm:$0xff]
      %v429 = vld [vmem:[%s392 + $0x68] sm:$0xff]
      %v430 = vld [vmem:[%s392 + $0x70] sm:$0xff]
      %v431 = vld [vmem:[%s392 + $0x78] sm:$0xff]
      %v432 = vld [vmem:[%s392 + $0x80] sm:$0xff]
      %v433 = vld [vmem:[%s392 + $0x88] sm:$0xff]
      %v434 = vld [vmem:[%s392 + $0x90] sm:$0xff]
      %v435 = vld [vmem:[%s392 + $0x98] sm:$0xff]
      %v436 = vld [vmem:[%s392 + $0xa0] sm:$0xff]
      %v437 = vld [vmem:[%s392 + $0xa8] sm:$0xff]
      %v438 = vld [vmem:[%s392 + $0xb0] sm:$0xff]
      %v439 = vld [vmem:[%s392 + $0xb8] sm:$0xff]
      %v440 = vld [vmem:[%s392 + $0xc0] sm:$0xff]
      %v441 = vld [vmem:[%s392 + $0xc8] sm:$0xff]
      %v442 = vld [vmem:[%s392 + $0xd0] sm:$0xff]
      %v443 = vld [vmem:[%s392 + $0xd8] sm:$0xff]
      %v444 = vld [vmem:[%s392 + $0xe0] sm:$0xff]
      %v445 = vld [vmem:[%s392 + $0xe8] sm:$0xff]
      %v446 = vld [vmem:[%s392 + $0xf0] sm:$0xff]
      %v447 = vld [vmem:[%s392 + $0xf8] sm:$0xff]
      %448 = vxpose.xlu0.b32.start [1/16] %v416, 128
      %449 = vxpose.xlu0.b32.cont [2/16] %v417, 128
      %450 = vxpose.xlu0.b32.cont [3/16] 0.0, 128
      %451 = vxpose.xlu0.b32.cont [4/16] 0.0, 128
      %452 = vxpose.xlu0.b32.cont [5/16] 0.0, 128
      %453 = vxpose.xlu0.b32.cont [6/16] 0.0, 128
      %454 = vxpose.xlu0.b32.cont [7/16] 0.0, 128
      %455 = vxpose.xlu0.b32.cont [8/16] 0.0, 128
      %456 = vxpose.xlu0.b32.cont [9/16] 0.0, 128
      %457 = vxpose.xlu0.b32.cont [10/16] 0.0, 128
      %458 = vxpose.xlu0.b32.cont [11/16] 0.0, 128
      %459 = vxpose.xlu0.b32.cont [12/16] 0.0, 128
      %460 = vxpose.xlu0.b32.cont [13/16] 0.0, 128
      %461 = vxpose.xlu0.b32.cont [14/16] 0.0, 128
      %462 = vxpose.xlu0.b32.cont [15/16] 0.0, 128
      %463 = vxpose.xlu0.b32.end [16/16] 0.0, 128
      %v464 = vpop.trf.xlu0
      %v465 = vpop.trf.xlu0
      %v466 = vpop.trf.xlu0
      %v467 = vpop.trf.xlu0
      %v468 = vpop.trf.xlu0
      %v469 = vpop.trf.xlu0
      %v470 = vpop.trf.xlu0
      %v471 = vpop.trf.xlu0
      %v472 = vpop.trf.xlu0
      %v473 = vpop.trf.xlu0
      %v474 = vpop.trf.xlu0
      %v475 = vpop.trf.xlu0
      %v476 = vpop.trf.xlu0
      %v477 = vpop.trf.xlu0
      %v478 = vpop.trf.xlu0
      %v479 = vpop.trf.xlu0
      %480 = vxpose.xlu0.b32.start [1/16] %v418, 128
      %481 = vxpose.xlu0.b32.cont [2/16] %v419, 128
      %482 = vxpose.xlu0.b32.cont [3/16] 0.0, 128
      %483 = vxpose.xlu0.b32.cont [4/16] 0.0, 128
      %484 = vxpose.xlu0.b32.cont [5/16] 0.0, 128
      %485 = vxpose.xlu0.b32.cont [6/16] 0.0, 128
      %486 = vxpose.xlu0.b32.cont [7/16] 0.0, 128
      %487 = vxpose.xlu0.b32.cont [8/16] 0.0, 128
      %488 = vxpose.xlu0.b32.cont [9/16] 0.0, 128
      %489 = vxpose.xlu0.b32.cont [10/16] 0.0, 128
      %490 = vxpose.xlu0.b32.cont [11/16] 0.0, 128
      %491 = vxpose.xlu0.b32.cont [12/16] 0.0, 128
      %492 = vxpose.xlu0.b32.cont [13/16] 0.0, 128
      %493 = vxpose.xlu0.b32.cont [14/16] 0.0, 128
      %494 = vxpose.xlu0.b32.cont [15/16] 0.0, 128
      %495 = vxpose.xlu0.b32.end [16/16] 0.0, 128
      %v496 = vpop.trf.xlu0
      %v497 = vpop.trf.xlu0
      %v498 = vpop.trf.xlu0
      %v499 = vpop.trf.xlu0
      %v500 = vpop.trf.xlu0
      %v501 = vpop.trf.xlu0
      %v502 = vpop.trf.xlu0
      %v503 = vpop.trf.xlu0
      %v504 = vpop.trf.xlu0
      %v505 = vpop.trf.xlu0
      %v506 = vpop.trf.xlu0
      %v507 = vpop.trf.xlu0
      %v508 = vpop.trf.xlu0
      %v509 = vpop.trf.xlu0
      %v510 = vpop.trf.xlu0
      %v511 = vpop.trf.xlu0
      %512 = vxpose.xlu0.b32.start [1/16] %v420, 128
      %513 = vxpose.xlu0.b32.cont [2/16] %v421, 128
      %514 = vxpose.xlu0.b32.cont [3/16] 0.0, 128
      %515 = vxpose.xlu0.b32.cont [4/16] 0.0, 128
      %516 = vxpose.xlu0.b32.cont [5/16] 0.0, 128
      %517 = vxpose.xlu0.b32.cont [6/16] 0.0, 128
      %518 = vxpose.xlu0.b32.cont [7/16] 0.0, 128
      %519 = vxpose.xlu0.b32.cont [8/16] 0.0, 128
      %520 = vxpose.xlu0.b32.cont [9/16] 0.0, 128
      %521 = vxpose.xlu0.b32.cont [10/16] 0.0, 128
      %522 = vxpose.xlu0.b32.cont [11/16] 0.0, 128
      %523 = vxpose.xlu0.b32.cont [12/16] 0.0, 128
      %524 = vxpose.xlu0.b32.cont [13/16] 0.0, 128
      %525 = vxpose.xlu0.b32.cont [14/16] 0.0, 128
      %526 = vxpose.xlu0.b32.cont [15/16] 0.0, 128
      %527 = vxpose.xlu0.b32.end [16/16] 0.0, 128
      %v528 = vpop.trf.xlu0
      %v529 = vpop.trf.xlu0
      %v530 = vpop.trf.xlu0
      %v531 = vpop.trf.xlu0
      %v532 = vpop.trf.xlu0
      %v533 = vpop.trf.xlu0
      %v534 = vpop.trf.xlu0
      %v535 = vpop.trf.xlu0
      %v536 = vpop.trf.xlu0
      %v537 = vpop.trf.xlu0
      %v538 = vpop.trf.xlu0
      %v539 = vpop.trf.xlu0
      %v540 = vpop.trf.xlu0
      %v541 = vpop.trf.xlu0
      %v542 = vpop.trf.xlu0
      %v543 = vpop.trf.xlu0
      %544 = vxpose.xlu0.b32.start [1/16] %v422, 128
      %545 = vxpose.xlu0.b32.cont [2/16] %v423, 128
      %546 = vxpose.xlu0.b32.cont [3/16] 0.0, 128
      %547 = vxpose.xlu0.b32.cont [4/16] 0.0, 128
      %548 = vxpose.xlu0.b32.cont [5/16] 0.0, 128
      %549 = vxpose.xlu0.b32.cont [6/16] 0.0, 128
      %550 = vxpose.xlu0.b32.cont [7/16] 0.0, 128
      %551 = vxpose.xlu0.b32.cont [8/16] 0.0, 128
      %552 = vxpose.xlu0.b32.cont [9/16] 0.0, 128
      %553 = vxpose.xlu0.b32.cont [10/16] 0.0, 128
      %554 = vxpose.xlu0.b32.cont [11/16] 0.0, 128
      %555 = vxpose.xlu0.b32.cont [12/16] 0.0, 128
      %556 = vxpose.xlu0.b32.cont [13/16] 0.0, 128
      %557 = vxpose.xlu0.b32.cont [14/16] 0.0, 128
      %558 = vxpose.xlu0.b32.cont [15/16] 0.0, 128
      %559 = vxpose.xlu0.b32.end [16/16] 0.0, 128
      %v560 = vpop.trf.xlu0
      %v561 = vpop.trf.xlu0
      %v562 = vpop.trf.xlu0
      %v563 = vpop.trf.xlu0
      %v564 = vpop.trf.xlu0
      %v565 = vpop.trf.xlu0
      %v566 = vpop.trf.xlu0
      %v567 = vpop.trf.xlu0
      %v568 = vpop.trf.xlu0
      %v569 = vpop.trf.xlu0
      %v570 = vpop.trf.xlu0
      %v571 = vpop.trf.xlu0
      %v572 = vpop.trf.xlu0
      %v573 = vpop.trf.xlu0
      %v574 = vpop.trf.xlu0
      %v575 = vpop.trf.xlu0
      %576 = vxpose.xlu0.b32.start [1/16] %v424, 128
      %577 = vxpose.xlu0.b32.cont [2/16] %v425, 128
      %578 = vxpose.xlu0.b32.cont [3/16] 0.0, 128
      %579 = vxpose.xlu0.b32.cont [4/16] 0.0, 128
      %580 = vxpose.xlu0.b32.cont [5/16] 0.0, 128
      %581 = vxpose.xlu0.b32.cont [6/16] 0.0, 128
      %582 = vxpose.xlu0.b32.cont [7/16] 0.0, 128
      %583 = vxpose.xlu0.b32.cont [8/16] 0.0, 128
      %584 = vxpose.xlu0.b32.cont [9/16] 0.0, 128
      %585 = vxpose.xlu0.b32.cont [10/16] 0.0, 128
      %586 = vxpose.xlu0.b32.cont [11/16] 0.0, 128
      %587 = vxpose.xlu0.b32.cont [12/16] 0.0, 128
      %588 = vxpose.xlu0.b32.cont [13/16] 0.0, 128
      %589 = vxpose.xlu0.b32.cont [14/16] 0.0, 128
      %590 = vxpose.xlu0.b32.cont [15/16] 0.0, 128
      %591 = vxpose.xlu0.b32.end [16/16] 0.0, 128
      %v592 = vpop.trf.xlu0
      %v593 = vpop.trf.xlu0
      %v594 = vpop.trf.xlu0
      %v595 = vpop.trf.xlu0
      %v596 = vpop.trf.xlu0
      %v597 = vpop.trf.xlu0
      %v598 = vpop.trf.xlu0
      %v599 = vpop.trf.xlu0
      %v600 = vpop.trf.xlu0
      %v601 = vpop.trf.xlu0
      %v602 = vpop.trf.xlu0
      %v603 = vpop.trf.xlu0
      %v604 = vpop.trf.xlu0
      %v605 = vpop.trf.xlu0
      %v606 = vpop.trf.xlu0
      %v607 = vpop.trf.xlu0
      %608 = vxpose.xlu0.b32.start [1/16] %v426, 128
      %609 = vxpose.xlu0.b32.cont [2/16] %v427, 128
      %610 = vxpose.xlu0.b32.cont [3/16] 0.0, 128
      %611 = vxpose.xlu0.b32.cont [4/16] 0.0, 128
      %612 = vxpose.xlu0.b32.cont [5/16] 0.0, 128
      %613 = vxpose.xlu0.b32.cont [6/16] 0.0, 128
      %614 = vxpose.xlu0.b32.cont [7/16] 0.0, 128
      %615 = vxpose.xlu0.b32.cont [8/16] 0.0, 128
      %616 = vxpose.xlu0.b32.cont [9/16] 0.0, 128
      %617 = vxpose.xlu0.b32.cont [10/16] 0.0, 128
      %618 = vxpose.xlu0.b32.cont [11/16] 0.0, 128
      %619 = vxpose.xlu0.b32.cont [12/16] 0.0, 128
      %620 = vxpose.xlu0.b32.cont [13/16] 0.0, 128
      %621 = vxpose.xlu0.b32.cont [14/16] 0.0, 128
      %622 = vxpose.xlu0.b32.cont [15/16] 0.0, 128
      %623 = vxpose.xlu0.b32.end [16/16] 0.0, 128
      %v624 = vpop.trf.xlu0
      %v625 = vpop.trf.xlu0
      %v626 = vpop.trf.xlu0
      %v627 = vpop.trf.xlu0
      %v628 = vpop.trf.xlu0
      %v629 = vpop.trf.xlu0
      %v630 = vpop.trf.xlu0
      %v631 = vpop.trf.xlu0
      %v632 = vpop.trf.xlu0
      %v633 = vpop.trf.xlu0
      %v634 = vpop.trf.xlu0
      %v635 = vpop.trf.xlu0
      %v636 = vpop.trf.xlu0
      %v637 = vpop.trf.xlu0
      %v638 = vpop.trf.xlu0
      %v639 = vpop.trf.xlu0
      %640 = vxpose.xlu0.b32.start [1/16] %v428, 128
      %641 = vxpose.xlu0.b32.cont [2/16] %v429, 128
      %642 = vxpose.xlu0.b32.cont [3/16] 0.0, 128
      %643 = vxpose.xlu0.b32.cont [4/16] 0.0, 128
      %644 = vxpose.xlu0.b32.cont [5/16] 0.0, 128
      %645 = vxpose.xlu0.b32.cont [6/16] 0.0, 128
      %646 = vxpose.xlu0.b32.cont [7/16] 0.0, 128
      %647 = vxpose.xlu0.b32.cont [8/16] 0.0, 128
      %648 = vxpose.xlu0.b32.cont [9/16] 0.0, 128
      %649 = vxpose.xlu0.b32.cont [10/16] 0.0, 128
      %650 = vxpose.xlu0.b32.cont [11/16] 0.0, 128
      %651 = vxpose.xlu0.b32.cont [12/16] 0.0, 128
      %652 = vxpose.xlu0.b32.cont [13/16] 0.0, 128
      %653 = vxpose.xlu0.b32.cont [14/16] 0.0, 128
      %654 = vxpose.xlu0.b32.cont [15/16] 0.0, 128
      %655 = vxpose.xlu0.b32.end [16/16] 0.0, 128
      %v656 = vpop.trf.xlu0
      %v657 = vpop.trf.xlu0
      %v658 = vpop.trf.xlu0
      %v659 = vpop.trf.xlu0
      %v660 = vpop.trf.xlu0
      %v661 = vpop.trf.xlu0
      %v662 = vpop.trf.xlu0
      %v663 = vpop.trf.xlu0
      %v664 = vpop.trf.xlu0
      %v665 = vpop.trf.xlu0
      %v666 = vpop.trf.xlu0
      %v667 = vpop.trf.xlu0
      %v668 = vpop.trf.xlu0
      %v669 = vpop.trf.xlu0
      %v670 = vpop.trf.xlu0
      %v671 = vpop.trf.xlu0
      %672 = vxpose.xlu0.b32.start [1/16] %v430, 128
      %673 = vxpose.xlu0.b32.cont [2/16] %v431, 128
      %674 = vxpose.xlu0.b32.cont [3/16] 0.0, 128
      %675 = vxpose.xlu0.b32.cont [4/16] 0.0, 128
      %676 = vxpose.xlu0.b32.cont [5/16] 0.0, 128
      %677 = vxpose.xlu0.b32.cont [6/16] 0.0, 128
      %678 = vxpose.xlu0.b32.cont [7/16] 0.0, 128
      %679 = vxpose.xlu0.b32.cont [8/16] 0.0, 128
      %680 = vxpose.xlu0.b32.cont [9/16] 0.0, 128
      %681 = vxpose.xlu0.b32.cont [10/16] 0.0, 128
      %682 = vxpose.xlu0.b32.cont [11/16] 0.0, 128
      %683 = vxpose.xlu0.b32.cont [12/16] 0.0, 128
      %684 = vxpose.xlu0.b32.cont [13/16] 0.0, 128
      %685 = vxpose.xlu0.b32.cont [14/16] 0.0, 128
      %686 = vxpose.xlu0.b32.cont [15/16] 0.0, 128
      %687 = vxpose.xlu0.b32.end [16/16] 0.0, 128
      %v688 = vpop.trf.xlu0
      %v689 = vpop.trf.xlu0
      %v690 = vpop.trf.xlu0
      %v691 = vpop.trf.xlu0
      %v692 = vpop.trf.xlu0
      %v693 = vpop.trf.xlu0
      %v694 = vpop.trf.xlu0
      %v695 = vpop.trf.xlu0
      %v696 = vpop.trf.xlu0
      %v697 = vpop.trf.xlu0
      %v698 = vpop.trf.xlu0
      %v699 = vpop.trf.xlu0
      %v700 = vpop.trf.xlu0
      %v701 = vpop.trf.xlu0
      %v702 = vpop.trf.xlu0
      %v703 = vpop.trf.xlu0
      %704 = vxpose.xlu0.b32.start [1/16] %v432, 128
      %705 = vxpose.xlu0.b32.cont [2/16] %v433, 128
      %706 = vxpose.xlu0.b32.cont [3/16] 0.0, 128
      %707 = vxpose.xlu0.b32.cont [4/16] 0.0, 128
      %708 = vxpose.xlu0.b32.cont [5/16] 0.0, 128
      %709 = vxpose.xlu0.b32.cont [6/16] 0.0, 128
      %710 = vxpose.xlu0.b32.cont [7/16] 0.0, 128
      %711 = vxpose.xlu0.b32.cont [8/16] 0.0, 128
      %712 = vxpose.xlu0.b32.cont [9/16] 0.0, 128
      %713 = vxpose.xlu0.b32.cont [10/16] 0.0, 128
      %714 = vxpose.xlu0.b32.cont [11/16] 0.0, 128
      %715 = vxpose.xlu0.b32.cont [12/16] 0.0, 128
      %716 = vxpose.xlu0.b32.cont [13/16] 0.0, 128
      %717 = vxpose.xlu0.b32.cont [14/16] 0.0, 128
      %718 = vxpose.xlu0.b32.cont [15/16] 0.0, 128
      %719 = vxpose.xlu0.b32.end [16/16] 0.0, 128
      %v720 = vpop.trf.xlu0
      %v721 = vpop.trf.xlu0
      %v722 = vpop.trf.xlu0
      %v723 = vpop.trf.xlu0
      %v724 = vpop.trf.xlu0
      %v725 = vpop.trf.xlu0
      %v726 = vpop.trf.xlu0
      %v727 = vpop.trf.xlu0
      %v728 = vpop.trf.xlu0
      %v729 = vpop.trf.xlu0
      %v730 = vpop.trf.xlu0
      %v731 = vpop.trf.xlu0
      %v732 = vpop.trf.xlu0
      %v733 = vpop.trf.xlu0
      %v734 = vpop.trf.xlu0
      %v735 = vpop.trf.xlu0
      %736 = vxpose.xlu0.b32.start [1/16] %v434, 128
      %737 = vxpose.xlu0.b32.cont [2/16] %v435, 128
      %738 = vxpose.xlu0.b32.cont [3/16] 0.0, 128
      %739 = vxpose.xlu0.b32.cont [4/16] 0.0, 128
      %740 = vxpose.xlu0.b32.cont [5/16] 0.0, 128
      %741 = vxpose.xlu0.b32.cont [6/16] 0.0, 128
      %742 = vxpose.xlu0.b32.cont [7/16] 0.0, 128
      %743 = vxpose.xlu0.b32.cont [8/16] 0.0, 128
      %744 = vxpose.xlu0.b32.cont [9/16] 0.0, 128
      %745 = vxpose.xlu0.b32.cont [10/16] 0.0, 128
      %746 = vxpose.xlu0.b32.cont [11/16] 0.0, 128
      %747 = vxpose.xlu0.b32.cont [12/16] 0.0, 128
      %748 = vxpose.xlu0.b32.cont [13/16] 0.0, 128
      %749 = vxpose.xlu0.b32.cont [14/16] 0.0, 128
      %750 = vxpose.xlu0.b32.cont [15/16] 0.0, 128
      %751 = vxpose.xlu0.b32.end [16/16] 0.0, 128
      %v752 = vpop.trf.xlu0
      %v753 = vpop.trf.xlu0
      %v754 = vpop.trf.xlu0
      %v755 = vpop.trf.xlu0
      %v756 = vpop.trf.xlu0
      %v757 = vpop.trf.xlu0
      %v758 = vpop.trf.xlu0
      %v759 = vpop.trf.xlu0
      %v760 = vpop.trf.xlu0
      %v761 = vpop.trf.xlu0
      %v762 = vpop.trf.xlu0
      %v763 = vpop.trf.xlu0
      %v764 = vpop.trf.xlu0
      %v765 = vpop.trf.xlu0
      %v766 = vpop.trf.xlu0
      %v767 = vpop.trf.xlu0
      %768 = vxpose.xlu0.b32.start [1/16] %v436, 128
      %769 = vxpose.xlu0.b32.cont [2/16] %v437, 128
      %770 = vxpose.xlu0.b32.cont [3/16] 0.0, 128
      %771 = vxpose.xlu0.b32.cont [4/16] 0.0, 128
      %772 = vxpose.xlu0.b32.cont [5/16] 0.0, 128
      %773 = vxpose.xlu0.b32.cont [6/16] 0.0, 128
      %774 = vxpose.xlu0.b32.cont [7/16] 0.0, 128
      %775 = vxpose.xlu0.b32.cont [8/16] 0.0, 128
      %776 = vxpose.xlu0.b32.cont [9/16] 0.0, 128
      %777 = vxpose.xlu0.b32.cont [10/16] 0.0, 128
      %778 = vxpose.xlu0.b32.cont [11/16] 0.0, 128
      %779 = vxpose.xlu0.b32.cont [12/16] 0.0, 128
      %780 = vxpose.xlu0.b32.cont [13/16] 0.0, 128
      %781 = vxpose.xlu0.b32.cont [14/16] 0.0, 128
      %782 = vxpose.xlu0.b32.cont [15/16] 0.0, 128
      %783 = vxpose.xlu0.b32.end [16/16] 0.0, 128
      %v784 = vpop.trf.xlu0
      %v785 = vpop.trf.xlu0
      %v786 = vpop.trf.xlu0
      %v787 = vpop.trf.xlu0
      %v788 = vpop.trf.xlu0
      %v789 = vpop.trf.xlu0
      %v790 = vpop.trf.xlu0
      %v791 = vpop.trf.xlu0
      %v792 = vpop.trf.xlu0
      %v793 = vpop.trf.xlu0
      %v794 = vpop.trf.xlu0
      %v795 = vpop.trf.xlu0
      %v796 = vpop.trf.xlu0
      %v797 = vpop.trf.xlu0
      %v798 = vpop.trf.xlu0
      %v799 = vpop.trf.xlu0
      %800 = vxpose.xlu0.b32.start [1/16] %v438, 128
      %801 = vxpose.xlu0.b32.cont [2/16] %v439, 128
      %802 = vxpose.xlu0.b32.cont [3/16] 0.0, 128
      %803 = vxpose.xlu0.b32.cont [4/16] 0.0, 128
      %804 = vxpose.xlu0.b32.cont [5/16] 0.0, 128
      %805 = vxpose.xlu0.b32.cont [6/16] 0.0, 128
      %806 = vxpose.xlu0.b32.cont [7/16] 0.0, 128
      %807 = vxpose.xlu0.b32.cont [8/16] 0.0, 128
      %808 = vxpose.xlu0.b32.cont [9/16] 0.0, 128
      %809 = vxpose.xlu0.b32.cont [10/16] 0.0, 128
      %810 = vxpose.xlu0.b32.cont [11/16] 0.0, 128
      %811 = vxpose.xlu0.b32.cont [12/16] 0.0, 128
      %812 = vxpose.xlu0.b32.cont [13/16] 0.0, 128
      %813 = vxpose.xlu0.b32.cont [14/16] 0.0, 128
      %814 = vxpose.xlu0.b32.cont [15/16] 0.0, 128
      %815 = vxpose.xlu0.b32.end [16/16] 0.0, 128
      %v816 = vpop.trf.xlu0
      %v817 = vpop.trf.xlu0
      %v818 = vpop.trf.xlu0
      %v819 = vpop.trf.xlu0
      %v820 = vpop.trf.xlu0
      %v821 = vpop.trf.xlu0
      %v822 = vpop.trf.xlu0
      %v823 = vpop.trf.xlu0
      %v824 = vpop.trf.xlu0
      %v825 = vpop.trf.xlu0
      %v826 = vpop.trf.xlu0
      %v827 = vpop.trf.xlu0
      %v828 = vpop.trf.xlu0
      %v829 = vpop.trf.xlu0
      %v830 = vpop.trf.xlu0
      %v831 = vpop.trf.xlu0
      %832 = vxpose.xlu0.b32.start [1/16] %v440, 128
      %833 = vxpose.xlu0.b32.cont [2/16] %v441, 128
      %834 = vxpose.xlu0.b32.cont [3/16] 0.0, 128
      %835 = vxpose.xlu0.b32.cont [4/16] 0.0, 128
      %836 = vxpose.xlu0.b32.cont [5/16] 0.0, 128
      %837 = vxpose.xlu0.b32.cont [6/16] 0.0, 128
      %838 = vxpose.xlu0.b32.cont [7/16] 0.0, 128
      %839 = vxpose.xlu0.b32.cont [8/16] 0.0, 128
      %840 = vxpose.xlu0.b32.cont [9/16] 0.0, 128
      %841 = vxpose.xlu0.b32.cont [10/16] 0.0, 128
      %842 = vxpose.xlu0.b32.cont [11/16] 0.0, 128
      %843 = vxpose.xlu0.b32.cont [12/16] 0.0, 128
      %844 = vxpose.xlu0.b32.cont [13/16] 0.0, 128
      %845 = vxpose.xlu0.b32.cont [14/16] 0.0, 128
      %846 = vxpose.xlu0.b32.cont [15/16] 0.0, 128
      %847 = vxpose.xlu0.b32.end [16/16] 0.0, 128
      %v848 = vpop.trf.xlu0
      %v849 = vpop.trf.xlu0
      %v850 = vpop.trf.xlu0
      %v851 = vpop.trf.xlu0
      %v852 = vpop.trf.xlu0
      %v853 = vpop.trf.xlu0
      %v854 = vpop.trf.xlu0
      %v855 = vpop.trf.xlu0
      %v856 = vpop.trf.xlu0
      %v857 = vpop.trf.xlu0
      %v858 = vpop.trf.xlu0
      %v859 = vpop.trf.xlu0
      %v860 = vpop.trf.xlu0
      %v861 = vpop.trf.xlu0
      %v862 = vpop.trf.xlu0
      %v863 = vpop.trf.xlu0
      %864 = vxpose.xlu0.b32.start [1/16] %v442, 128
      %865 = vxpose.xlu0.b32.cont [2/16] %v443, 128
      %866 = vxpose.xlu0.b32.cont [3/16] 0.0, 128
      %867 = vxpose.xlu0.b32.cont [4/16] 0.0, 128
      %868 = vxpose.xlu0.b32.cont [5/16] 0.0, 128
      %869 = vxpose.xlu0.b32.cont [6/16] 0.0, 128
      %870 = vxpose.xlu0.b32.cont [7/16] 0.0, 128
      %871 = vxpose.xlu0.b32.cont [8/16] 0.0, 128
      %872 = vxpose.xlu0.b32.cont [9/16] 0.0, 128
      %873 = vxpose.xlu0.b32.cont [10/16] 0.0, 128
      %874 = vxpose.xlu0.b32.cont [11/16] 0.0, 128
      %875 = vxpose.xlu0.b32.cont [12/16] 0.0, 128
      %876 = vxpose.xlu0.b32.cont [13/16] 0.0, 128
      %877 = vxpose.xlu0.b32.cont [14/16] 0.0, 128
      %878 = vxpose.xlu0.b32.cont [15/16] 0.0, 128
      %879 = vxpose.xlu0.b32.end [16/16] 0.0, 128
      %v880 = vpop.trf.xlu0
      %v881 = vpop.trf.xlu0
      %v882 = vpop.trf.xlu0
      %v883 = vpop.trf.xlu0
      %v884 = vpop.trf.xlu0
      %v885 = vpop.trf.xlu0
      %v886 = vpop.trf.xlu0
      %v887 = vpop.trf.xlu0
      %v888 = vpop.trf.xlu0
      %v889 = vpop.trf.xlu0
      %v890 = vpop.trf.xlu0
      %v891 = vpop.trf.xlu0
      %v892 = vpop.trf.xlu0
      %v893 = vpop.trf.xlu0
      %v894 = vpop.trf.xlu0
      %v895 = vpop.trf.xlu0
      %896 = vxpose.xlu0.b32.start [1/16] %v444, 128
      %897 = vxpose.xlu0.b32.cont [2/16] %v445, 128
      %898 = vxpose.xlu0.b32.cont [3/16] 0.0, 128
      %899 = vxpose.xlu0.b32.cont [4/16] 0.0, 128
      %900 = vxpose.xlu0.b32.cont [5/16] 0.0, 128
      %901 = vxpose.xlu0.b32.cont [6/16] 0.0, 128
      %902 = vxpose.xlu0.b32.cont [7/16] 0.0, 128
      %903 = vxpose.xlu0.b32.cont [8/16] 0.0, 128
      %904 = vxpose.xlu0.b32.cont [9/16] 0.0, 128
      %905 = vxpose.xlu0.b32.cont [10/16] 0.0, 128
      %906 = vxpose.xlu0.b32.cont [11/16] 0.0, 128
      %907 = vxpose.xlu0.b32.cont [12/16] 0.0, 128
      %908 = vxpose.xlu0.b32.cont [13/16] 0.0, 128
      %909 = vxpose.xlu0.b32.cont [14/16] 0.0, 128
      %910 = vxpose.xlu0.b32.cont [15/16] 0.0, 128
      %911 = vxpose.xlu0.b32.end [16/16] 0.0, 128
      %v912 = vpop.trf.xlu0
      %v913 = vpop.trf.xlu0
      %v914 = vpop.trf.xlu0
      %v915 = vpop.trf.xlu0
      %v916 = vpop.trf.xlu0
      %v917 = vpop.trf.xlu0
      %v918 = vpop.trf.xlu0
      %v919 = vpop.trf.xlu0
      %v920 = vpop.trf.xlu0
      %v921 = vpop.trf.xlu0
      %v922 = vpop.trf.xlu0
      %v923 = vpop.trf.xlu0
      %v924 = vpop.trf.xlu0
      %v925 = vpop.trf.xlu0
      %v926 = vpop.trf.xlu0
      %v927 = vpop.trf.xlu0
      %928 = vxpose.xlu0.b32.start [1/16] %v446, 128
      %929 = vxpose.xlu0.b32.cont [2/16] %v447, 128
      %930 = vxpose.xlu0.b32.cont [3/16] 0.0, 128
      %931 = vxpose.xlu0.b32.cont [4/16] 0.0, 128
      %932 = vxpose.xlu0.b32.cont [5/16] 0.0, 128
      %933 = vxpose.xlu0.b32.cont [6/16] 0.0, 128
      %934 = vxpose.xlu0.b32.cont [7/16] 0.0, 128
      %935 = vxpose.xlu0.b32.cont [8/16] 0.0, 128
      %936 = vxpose.xlu0.b32.cont [9/16] 0.0, 128
      %937 = vxpose.xlu0.b32.cont [10/16] 0.0, 128
      %938 = vxpose.xlu0.b32.cont [11/16] 0.0, 128
      %939 = vxpose.xlu0.b32.cont [12/16] 0.0, 128
      %940 = vxpose.xlu0.b32.cont [13/16] 0.0, 128
      %941 = vxpose.xlu0.b32.cont [14/16] 0.0, 128
      %942 = vxpose.xlu0.b32.cont [15/16] 0.0, 128
      %943 = vxpose.xlu0.b32.end [16/16] 0.0, 128
      %v944 = vpop.trf.xlu0
      %v945 = vpop.trf.xlu0
      %v946 = vpop.trf.xlu0
      %v947 = vpop.trf.xlu0
      %v948 = vpop.trf.xlu0
      %v949 = vpop.trf.xlu0
      %v950 = vpop.trf.xlu0
      %v951 = vpop.trf.xlu0
      %v952 = vpop.trf.xlu0
      %v953 = vpop.trf.xlu0
      %v954 = vpop.trf.xlu0
      %v955 = vpop.trf.xlu0
      %v956 = vpop.trf.xlu0
      %v957 = vpop.trf.xlu0
      %v958 = vpop.trf.xlu0
      %v959 = vpop.trf.xlu0
      %v960 = vld [vmem:[%s403] sm:$0xff]
      %v961 = vld [vmem:[%s403 + $0x8] sm:$0xff]
      %v962 = vld [vmem:[%s403 + $0x10] sm:$0xff]
      %v963 = vld [vmem:[%s403 + $0x18] sm:$0xff]
      %v964 = vld [vmem:[%s403 + $0x20] sm:$0xff]
      %v965 = vld [vmem:[%s403 + $0x28] sm:$0xff]
      %v966 = vld [vmem:[%s403 + $0x30] sm:$0xff]
      %v967 = vld [vmem:[%s403 + $0x38] sm:$0xff]
      %v968 = vld [vmem:[%s403 + $0x40] sm:$0xff]
      %v969 = vld [vmem:[%s403 + $0x48] sm:$0xff]
      %v970 = vld [vmem:[%s403 + $0x50] sm:$0xff]
      %v971 = vld [vmem:[%s403 + $0x58] sm:$0xff]
      %v972 = vld [vmem:[%s403 + $0x60] sm:$0xff]
      %v973 = vld [vmem:[%s403 + $0x68] sm:$0xff]
      %v974 = vld [vmem:[%s403 + $0x70] sm:$0xff]
      %v975 = vld [vmem:[%s403 + $0x78] sm:$0xff]
      %v976 = vld [vmem:[%s403 + $0x80] sm:$0xff]
      %v977 = vld [vmem:[%s403 + $0x88] sm:$0xff]
      %v978 = vld [vmem:[%s403 + $0x90] sm:$0xff]
      %v979 = vld [vmem:[%s403 + $0x98] sm:$0xff]
      %v980 = vld [vmem:[%s403 + $0xa0] sm:$0xff]
      %v981 = vld [vmem:[%s403 + $0xa8] sm:$0xff]
      %v982 = vld [vmem:[%s403 + $0xb0] sm:$0xff]
      %v983 = vld [vmem:[%s403 + $0xb8] sm:$0xff]
      %v984 = vld [vmem:[%s403 + $0xc0] sm:$0xff]
      %v985 = vld [vmem:[%s403 + $0xc8] sm:$0xff]
      %v986 = vld [vmem:[%s403 + $0xd0] sm:$0xff]
      %v987 = vld [vmem:[%s403 + $0xd8] sm:$0xff]
      %v988 = vld [vmem:[%s403 + $0xe0] sm:$0xff]
      %v989 = vld [vmem:[%s403 + $0xe8] sm:$0xff]
      %v990 = vld [vmem:[%s403 + $0xf0] sm:$0xff]
      %v991 = vld [vmem:[%s403 + $0xf8] sm:$0xff]
      %992 = vxpose.xlu0.b32.start [1/16] %v960, 128
      %993 = vxpose.xlu0.b32.cont [2/16] %v961, 128
      %994 = vxpose.xlu0.b32.cont [3/16] 0.0, 128
      %995 = vxpose.xlu0.b32.cont [4/16] 0.0, 128
      %996 = vxpose.xlu0.b32.cont [5/16] 0.0, 128
      %997 = vxpose.xlu0.b32.cont [6/16] 0.0, 128
      %998 = vxpose.xlu0.b32.cont [7/16] 0.0, 128
      %999 = vxpose.xlu0.b32.cont [8/16] 0.0, 128
      %1000 = vxpose.xlu0.b32.cont [9/16] 0.0, 128
      %1001 = vxpose.xlu0.b32.cont [10/16] 0.0, 128
      %1002 = vxpose.xlu0.b32.cont [11/16] 0.0, 128
      %1003 = vxpose.xlu0.b32.cont [12/16] 0.0, 128
      %1004 = vxpose.xlu0.b32.cont [13/16] 0.0, 128
      %1005 = vxpose.xlu0.b32.cont [14/16] 0.0, 128
      %1006 = vxpose.xlu0.b32.cont [15/16] 0.0, 128
      %1007 = vxpose.xlu0.b32.end [16/16] 0.0, 128
      %v1008 = vpop.trf.xlu0
      %v1009 = vpop.trf.xlu0
      %v1010 = vpop.trf.xlu0
      %v1011 = vpop.trf.xlu0
      %v1012 = vpop.trf.xlu0
      %v1013 = vpop.trf.xlu0
      %v1014 = vpop.trf.xlu0
      %v1015 = vpop.trf.xlu0
      %v1016 = vpop.trf.xlu0
      %v1017 = vpop.trf.xlu0
      %v1018 = vpop.trf.xlu0
      %v1019 = vpop.trf.xlu0
      %v1020 = vpop.trf.xlu0
      %v1021 = vpop.trf.xlu0
      %v1022 = vpop.trf.xlu0
      %v1023 = vpop.trf.xlu0
      %1024 = vxpose.xlu0.b32.start [1/16] %v962, 128
      %1025 = vxpose.xlu0.b32.cont [2/16] %v963, 128
      %1026 = vxpose.xlu0.b32.cont [3/16] 0.0, 128
      %1027 = vxpose.xlu0.b32.cont [4/16] 0.0, 128
      %1028 = vxpose.xlu0.b32.cont [5/16] 0.0, 128
      %1029 = vxpose.xlu0.b32.cont [6/16] 0.0, 128
      %1030 = vxpose.xlu0.b32.cont [7/16] 0.0, 128
      %1031 = vxpose.xlu0.b32.cont [8/16] 0.0, 128
      %1032 = vxpose.xlu0.b32.cont [9/16] 0.0, 128
      %1033 = vxpose.xlu0.b32.cont [10/16] 0.0, 128
      %1034 = vxpose.xlu0.b32.cont [11/16] 0.0, 128
      %1035 = vxpose.xlu0.b32.cont [12/16] 0.0, 128
      %1036 = vxpose.xlu0.b32.cont [13/16] 0.0, 128
      %1037 = vxpose.xlu0.b32.cont [14/16] 0.0, 128
      %1038 = vxpose.xlu0.b32.cont [15/16] 0.0, 128
      %1039 = vxpose.xlu0.b32.end [16/16] 0.0, 128
      %v1040 = vpop.trf.xlu0
      %v1041 = vpop.trf.xlu0
      %v1042 = vpop.trf.xlu0
      %v1043 = vpop.trf.xlu0
      %v1044 = vpop.trf.xlu0
      %v1045 = vpop.trf.xlu0
      %v1046 = vpop.trf.xlu0
      %v1047 = vpop.trf.xlu0
      %v1048 = vpop.trf.xlu0
      %v1049 = vpop.trf.xlu0
      %v1050 = vpop.trf.xlu0
      %v1051 = vpop.trf.xlu0
      %v1052 = vpop.trf.xlu0
      %v1053 = vpop.trf.xlu0
      %v1054 = vpop.trf.xlu0
      %v1055 = vpop.trf.xlu0
      %1056 = vxpose.xlu0.b32.start [1/16] %v964, 128
      %1057 = vxpose.xlu0.b32.cont [2/16] %v965, 128
      %1058 = vxpose.xlu0.b32.cont [3/16] 0.0, 128
      %1059 = vxpose.xlu0.b32.cont [4/16] 0.0, 128
      %1060 = vxpose.xlu0.b32.cont [5/16] 0.0, 128
      %1061 = vxpose.xlu0.b32.cont [6/16] 0.0, 128
      %1062 = vxpose.xlu0.b32.cont [7/16] 0.0, 128
      %1063 = vxpose.xlu0.b32.cont [8/16] 0.0, 128
      %1064 = vxpose.xlu0.b32.cont [9/16] 0.0, 128
      %1065 = vxpose.xlu0.b32.cont [10/16] 0.0, 128
      %1066 = vxpose.xlu0.b32.cont [11/16] 0.0, 128
      %1067 = vxpose.xlu0.b32.cont [12/16] 0.0, 128
      %1068 = vxpose.xlu0.b32.cont [13/16] 0.0, 128
      %1069 = vxpose.xlu0.b32.cont [14/16] 0.0, 128
      %1070 = vxpose.xlu0.b32.cont [15/16] 0.0, 128
      %1071 = vxpose.xlu0.b32.end [16/16] 0.0, 128
      %v1072 = vpop.trf.xlu0
      %v1073 = vpop.trf.xlu0
      %v1074 = vpop.trf.xlu0
      %v1075 = vpop.trf.xlu0
      %v1076 = vpop.trf.xlu0
      %v1077 = vpop.trf.xlu0
      %v1078 = vpop.trf.xlu0
      %v1079 = vpop.trf.xlu0
      %v1080 = vpop.trf.xlu0
      %v1081 = vpop.trf.xlu0
      %v1082 = vpop.trf.xlu0
      %v1083 = vpop.trf.xlu0
      %v1084 = vpop.trf.xlu0
      %v1085 = vpop.trf.xlu0
      %v1086 = vpop.trf.xlu0
      %v1087 = vpop.trf.xlu0
      %1088 = vxpose.xlu0.b32.start [1/16] %v966, 128
      %1089 = vxpose.xlu0.b32.cont [2/16] %v967, 128
      %1090 = vxpose.xlu0.b32.cont [3/16] 0.0, 128
      %1091 = vxpose.xlu0.b32.cont [4/16] 0.0, 128
      %1092 = vxpose.xlu0.b32.cont [5/16] 0.0, 128
      %1093 = vxpose.xlu0.b32.cont [6/16] 0.0, 128
      %1094 = vxpose.xlu0.b32.cont [7/16] 0.0, 128
      %1095 = vxpose.xlu0.b32.cont [8/16] 0.0, 128
      %1096 = vxpose.xlu0.b32.cont [9/16] 0.0, 128
      %1097 = vxpose.xlu0.b32.cont [10/16] 0.0, 128
      %1098 = vxpose.xlu0.b32.cont [11/16] 0.0, 128
      %1099 = vxpose.xlu0.b32.cont [12/16] 0.0, 128
      %1100 = vxpose.xlu0.b32.cont [13/16] 0.0, 128
      %1101 = vxpose.xlu0.b32.cont [14/16] 0.0, 128
      %1102 = vxpose.xlu0.b32.cont [15/16] 0.0, 128
      %1103 = vxpose.xlu0.b32.end [16/16] 0.0, 128
      %v1104 = vpop.trf.xlu0
      %v1105 = vpop.trf.xlu0
      %v1106 = vpop.trf.xlu0
      %v1107 = vpop.trf.xlu0
      %v1108 = vpop.trf.xlu0
      %v1109 = vpop.trf.xlu0
      %v1110 = vpop.trf.xlu0
      %v1111 = vpop.trf.xlu0
      %v1112 = vpop.trf.xlu0
      %v1113 = vpop.trf.xlu0
      %v1114 = vpop.trf.xlu0
      %v1115 = vpop.trf.xlu0
      %v1116 = vpop.trf.xlu0
      %v1117 = vpop.trf.xlu0
      %v1118 = vpop.trf.xlu0
      %v1119 = vpop.trf.xlu0
      %1120 = vxpose.xlu0.b32.start [1/16] %v968, 128
      %1121 = vxpose.xlu0.b32.cont [2/16] %v969, 128
      %1122 = vxpose.xlu0.b32.cont [3/16] 0.0, 128
      %1123 = vxpose.xlu0.b32.cont [4/16] 0.0, 128
      %1124 = vxpose.xlu0.b32.cont [5/16] 0.0, 128
      %1125 = vxpose.xlu0.b32.cont [6/16] 0.0, 128
      %1126 = vxpose.xlu0.b32.cont [7/16] 0.0, 128
      %1127 = vxpose.xlu0.b32.cont [8/16] 0.0, 128
      %1128 = vxpose.xlu0.b32.cont [9/16] 0.0, 128
      %1129 = vxpose.xlu0.b32.cont [10/16] 0.0, 128
      %1130 = vxpose.xlu0.b32.cont [11/16] 0.0, 128
      %1131 = vxpose.xlu0.b32.cont [12/16] 0.0, 128
      %1132 = vxpose.xlu0.b32.cont [13/16] 0.0, 128
      %1133 = vxpose.xlu0.b32.cont [14/16] 0.0, 128
      %1134 = vxpose.xlu0.b32.cont [15/16] 0.0, 128
      %1135 = vxpose.xlu0.b32.end [16/16] 0.0, 128
      %v1136 = vpop.trf.xlu0
      %v1137 = vpop.trf.xlu0
      %v1138 = vpop.trf.xlu0
      %v1139 = vpop.trf.xlu0
      %v1140 = vpop.trf.xlu0
      %v1141 = vpop.trf.xlu0
      %v1142 = vpop.trf.xlu0
      %v1143 = vpop.trf.xlu0
      %v1144 = vpop.trf.xlu0
      %v1145 = vpop.trf.xlu0
      %v1146 = vpop.trf.xlu0
      %v1147 = vpop.trf.xlu0
      %v1148 = vpop.trf.xlu0
      %v1149 = vpop.trf.xlu0
      %v1150 = vpop.trf.xlu0
      %v1151 = vpop.trf.xlu0
      %1152 = vxpose.xlu0.b32.start [1/16] %v970, 128
      %1153 = vxpose.xlu0.b32.cont [2/16] %v971, 128
      %1154 = vxpose.xlu0.b32.cont [3/16] 0.0, 128
      %1155 = vxpose.xlu0.b32.cont [4/16] 0.0, 128
      %1156 = vxpose.xlu0.b32.cont [5/16] 0.0, 128
      %1157 = vxpose.xlu0.b32.cont [6/16] 0.0, 128
      %1158 = vxpose.xlu0.b32.cont [7/16] 0.0, 128
      %1159 = vxpose.xlu0.b32.cont [8/16] 0.0, 128
      %1160 = vxpose.xlu0.b32.cont [9/16] 0.0, 128
      %1161 = vxpose.xlu0.b32.cont [10/16] 0.0, 128
      %1162 = vxpose.xlu0.b32.cont [11/16] 0.0, 128
      %1163 = vxpose.xlu0.b32.cont [12/16] 0.0, 128
      %1164 = vxpose.xlu0.b32.cont [13/16] 0.0, 128
      %1165 = vxpose.xlu0.b32.cont [14/16] 0.0, 128
      %1166 = vxpose.xlu0.b32.cont [15/16] 0.0, 128
      %1167 = vxpose.xlu0.b32.end [16/16] 0.0, 128
      %v1168 = vpop.trf.xlu0
      %v1169 = vpop.trf.xlu0
      %v1170 = vpop.trf.xlu0
      %v1171 = vpop.trf.xlu0
      %v1172 = vpop.trf.xlu0
      %v1173 = vpop.trf.xlu0
      %v1174 = vpop.trf.xlu0
      %v1175 = vpop.trf.xlu0
      %v1176 = vpop.trf.xlu0
      %v1177 = vpop.trf.xlu0
      %v1178 = vpop.trf.xlu0
      %v1179 = vpop.trf.xlu0
      %v1180 = vpop.trf.xlu0
      %v1181 = vpop.trf.xlu0
      %v1182 = vpop.trf.xlu0
      %v1183 = vpop.trf.xlu0
      %1184 = vxpose.xlu0.b32.start [1/16] %v972, 128
      %1185 = vxpose.xlu0.b32.cont [2/16] %v973, 128
      %1186 = vxpose.xlu0.b32.cont [3/16] 0.0, 128
      %1187 = vxpose.xlu0.b32.cont [4/16] 0.0, 128
      %1188 = vxpose.xlu0.b32.cont [5/16] 0.0, 128
      %1189 = vxpose.xlu0.b32.cont [6/16] 0.0, 128
      %1190 = vxpose.xlu0.b32.cont [7/16] 0.0, 128
      %1191 = vxpose.xlu0.b32.cont [8/16] 0.0, 128
      %1192 = vxpose.xlu0.b32.cont [9/16] 0.0, 128
      %1193 = vxpose.xlu0.b32.cont [10/16] 0.0, 128
      %1194 = vxpose.xlu0.b32.cont [11/16] 0.0, 128
      %1195 = vxpose.xlu0.b32.cont [12/16] 0.0, 128
      %1196 = vxpose.xlu0.b32.cont [13/16] 0.0, 128
      %1197 = vxpose.xlu0.b32.cont [14/16] 0.0, 128
      %1198 = vxpose.xlu0.b32.cont [15/16] 0.0, 128
      %1199 = vxpose.xlu0.b32.end [16/16] 0.0, 128
      %v1200 = vpop.trf.xlu0
      %v1201 = vpop.trf.xlu0
      %v1202 = vpop.trf.xlu0
      %v1203 = vpop.trf.xlu0
      %v1204 = vpop.trf.xlu0
      %v1205 = vpop.trf.xlu0
      %v1206 = vpop.trf.xlu0
      %v1207 = vpop.trf.xlu0
      %v1208 = vpop.trf.xlu0
      %v1209 = vpop.trf.xlu0
      %v1210 = vpop.trf.xlu0
      %v1211 = vpop.trf.xlu0
      %v1212 = vpop.trf.xlu0
      %v1213 = vpop.trf.xlu0
      %v1214 = vpop.trf.xlu0
      %v1215 = vpop.trf.xlu0
      %1216 = vxpose.xlu0.b32.start [1/16] %v974, 128
      %1217 = vxpose.xlu0.b32.cont [2/16] %v975, 128
      %1218 = vxpose.xlu0.b32.cont [3/16] 0.0, 128
      %1219 = vxpose.xlu0.b32.cont [4/16] 0.0, 128
      %1220 = vxpose.xlu0.b32.cont [5/16] 0.0, 128
      %1221 = vxpose.xlu0.b32.cont [6/16] 0.0, 128
      %1222 = vxpose.xlu0.b32.cont [7/16] 0.0, 128
      %1223 = vxpose.xlu0.b32.cont [8/16] 0.0, 128
      %1224 = vxpose.xlu0.b32.cont [9/16] 0.0, 128
      %1225 = vxpose.xlu0.b32.cont [10/16] 0.0, 128
      %1226 = vxpose.xlu0.b32.cont [11/16] 0.0, 128
      %1227 = vxpose.xlu0.b32.cont [12/16] 0.0, 128
      %1228 = vxpose.xlu0.b32.cont [13/16] 0.0, 128
      %1229 = vxpose.xlu0.b32.cont [14/16] 0.0, 128
      %1230 = vxpose.xlu0.b32.cont [15/16] 0.0, 128
      %1231 = vxpose.xlu0.b32.end [16/16] 0.0, 128
      %v1232 = vpop.trf.xlu0
      %v1233 = vpop.trf.xlu0
      %v1234 = vpop.trf.xlu0
      %v1235 = vpop.trf.xlu0
      %v1236 = vpop.trf.xlu0
      %v1237 = vpop.trf.xlu0
      %v1238 = vpop.trf.xlu0
      %v1239 = vpop.trf.xlu0
      %v1240 = vpop.trf.xlu0
      %v1241 = vpop.trf.xlu0
      %v1242 = vpop.trf.xlu0
      %v1243 = vpop.trf.xlu0
      %v1244 = vpop.trf.xlu0
      %v1245 = vpop.trf.xlu0
      %v1246 = vpop.trf.xlu0
      %v1247 = vpop.trf.xlu0
      %1248 = vxpose.xlu0.b32.start [1/16] %v976, 128
      %1249 = vxpose.xlu0.b32.cont [2/16] %v977, 128
      %1250 = vxpose.xlu0.b32.cont [3/16] 0.0, 128
      %1251 = vxpose.xlu0.b32.cont [4/16] 0.0, 128
      %1252 = vxpose.xlu0.b32.cont [5/16] 0.0, 128
      %1253 = vxpose.xlu0.b32.cont [6/16] 0.0, 128
      %1254 = vxpose.xlu0.b32.cont [7/16] 0.0, 128
      %1255 = vxpose.xlu0.b32.cont [8/16] 0.0, 128
      %1256 = vxpose.xlu0.b32.cont [9/16] 0.0, 128
      %1257 = vxpose.xlu0.b32.cont [10/16] 0.0, 128
      %1258 = vxpose.xlu0.b32.cont [11/16] 0.0, 128
      %1259 = vxpose.xlu0.b32.cont [12/16] 0.0, 128
      %1260 = vxpose.xlu0.b32.cont [13/16] 0.0, 128
      %1261 = vxpose.xlu0.b32.cont [14/16] 0.0, 128
      %1262 = vxpose.xlu0.b32.cont [15/16] 0.0, 128
      %1263 = vxpose.xlu0.b32.end [16/16] 0.0, 128
      %v1264 = vpop.trf.xlu0
      %v1265 = vpop.trf.xlu0
      %v1266 = vpop.trf.xlu0
      %v1267 = vpop.trf.xlu0
      %v1268 = vpop.trf.xlu0
      %v1269 = vpop.trf.xlu0
      %v1270 = vpop.trf.xlu0
      %v1271 = vpop.trf.xlu0
      %v1272 = vpop.trf.xlu0
      %v1273 = vpop.trf.xlu0
      %v1274 = vpop.trf.xlu0
      %v1275 = vpop.trf.xlu0
      %v1276 = vpop.trf.xlu0
      %v1277 = vpop.trf.xlu0
      %v1278 = vpop.trf.xlu0
      %v1279 = vpop.trf.xlu0
      %1280 = vxpose.xlu0.b32.start [1/16] %v978, 128
      %1281 = vxpose.xlu0.b32.cont [2/16] %v979, 128
      %1282 = vxpose.xlu0.b32.cont [3/16] 0.0, 128
      %1283 = vxpose.xlu0.b32.cont [4/16] 0.0, 128
      %1284 = vxpose.xlu0.b32.cont [5/16] 0.0, 128
      %1285 = vxpose.xlu0.b32.cont [6/16] 0.0, 128
      %1286 = vxpose.xlu0.b32.cont [7/16] 0.0, 128
      %1287 = vxpose.xlu0.b32.cont [8/16] 0.0, 128
      %1288 = vxpose.xlu0.b32.cont [9/16] 0.0, 128
      %1289 = vxpose.xlu0.b32.cont [10/16] 0.0, 128
      %1290 = vxpose.xlu0.b32.cont [11/16] 0.0, 128
      %1291 = vxpose.xlu0.b32.cont [12/16] 0.0, 128
      %1292 = vxpose.xlu0.b32.cont [13/16] 0.0, 128
      %1293 = vxpose.xlu0.b32.cont [14/16] 0.0, 128
      %1294 = vxpose.xlu0.b32.cont [15/16] 0.0, 128
      %1295 = vxpose.xlu0.b32.end [16/16] 0.0, 128
      %v1296 = vpop.trf.xlu0
      %v1297 = vpop.trf.xlu0
      %v1298 = vpop.trf.xlu0
      %v1299 = vpop.trf.xlu0
      %v1300 = vpop.trf.xlu0
      %v1301 = vpop.trf.xlu0
      %v1302 = vpop.trf.xlu0
      %v1303 = vpop.trf.xlu0
      %v1304 = vpop.trf.xlu0
      %v1305 = vpop.trf.xlu0
      %v1306 = vpop.trf.xlu0
      %v1307 = vpop.trf.xlu0
      %v1308 = vpop.trf.xlu0
      %v1309 = vpop.trf.xlu0
      %v1310 = vpop.trf.xlu0
      %v1311 = vpop.trf.xlu0
      %1312 = vxpose.xlu0.b32.start [1/16] %v980, 128
      %1313 = vxpose.xlu0.b32.cont [2/16] %v981, 128
      %1314 = vxpose.xlu0.b32.cont [3/16] 0.0, 128
      %1315 = vxpose.xlu0.b32.cont [4/16] 0.0, 128
      %1316 = vxpose.xlu0.b32.cont [5/16] 0.0, 128
      %1317 = vxpose.xlu0.b32.cont [6/16] 0.0, 128
      %1318 = vxpose.xlu0.b32.cont [7/16] 0.0, 128
      %1319 = vxpose.xlu0.b32.cont [8/16] 0.0, 128
      %1320 = vxpose.xlu0.b32.cont [9/16] 0.0, 128
      %1321 = vxpose.xlu0.b32.cont [10/16] 0.0, 128
      %1322 = vxpose.xlu0.b32.cont [11/16] 0.0, 128
      %1323 = vxpose.xlu0.b32.cont [12/16] 0.0, 128
      %1324 = vxpose.xlu0.b32.cont [13/16] 0.0, 128
      %1325 = vxpose.xlu0.b32.cont [14/16] 0.0, 128
      %1326 = vxpose.xlu0.b32.cont [15/16] 0.0, 128
      %1327 = vxpose.xlu0.b32.end [16/16] 0.0, 128
      %v1328 = vpop.trf.xlu0
      %v1329 = vpop.trf.xlu0
      %v1330 = vpop.trf.xlu0
      %v1331 = vpop.trf.xlu0
      %v1332 = vpop.trf.xlu0
      %v1333 = vpop.trf.xlu0
      %v1334 = vpop.trf.xlu0
      %v1335 = vpop.trf.xlu0
      %v1336 = vpop.trf.xlu0
      %v1337 = vpop.trf.xlu0
      %v1338 = vpop.trf.xlu0
      %v1339 = vpop.trf.xlu0
      %v1340 = vpop.trf.xlu0
      %v1341 = vpop.trf.xlu0
      %v1342 = vpop.trf.xlu0
      %v1343 = vpop.trf.xlu0
      %1344 = vxpose.xlu0.b32.start [1/16] %v982, 128
      %1345 = vxpose.xlu0.b32.cont [2/16] %v983, 128
      %1346 = vxpose.xlu0.b32.cont [3/16] 0.0, 128
      %1347 = vxpose.xlu0.b32.cont [4/16] 0.0, 128
      %1348 = vxpose.xlu0.b32.cont [5/16] 0.0, 128
      %1349 = vxpose.xlu0.b32.cont [6/16] 0.0, 128
      %1350 = vxpose.xlu0.b32.cont [7/16] 0.0, 128
      %1351 = vxpose.xlu0.b32.cont [8/16] 0.0, 128
      %1352 = vxpose.xlu0.b32.cont [9/16] 0.0, 128
      %1353 = vxpose.xlu0.b32.cont [10/16] 0.0, 128
      %1354 = vxpose.xlu0.b32.cont [11/16] 0.0, 128
      %1355 = vxpose.xlu0.b32.cont [12/16] 0.0, 128
      %1356 = vxpose.xlu0.b32.cont [13/16] 0.0, 128
      %1357 = vxpose.xlu0.b32.cont [14/16] 0.0, 128
      %1358 = vxpose.xlu0.b32.cont [15/16] 0.0, 128
      %1359 = vxpose.xlu0.b32.end [16/16] 0.0, 128
      %v1360 = vpop.trf.xlu0
      %v1361 = vpop.trf.xlu0
      %v1362 = vpop.trf.xlu0
      %v1363 = vpop.trf.xlu0
      %v1364 = vpop.trf.xlu0
      %v1365 = vpop.trf.xlu0
      %v1366 = vpop.trf.xlu0
      %v1367 = vpop.trf.xlu0
      %v1368 = vpop.trf.xlu0
      %v1369 = vpop.trf.xlu0
      %v1370 = vpop.trf.xlu0
      %v1371 = vpop.trf.xlu0
      %v1372 = vpop.trf.xlu0
      %v1373 = vpop.trf.xlu0
      %v1374 = vpop.trf.xlu0
      %v1375 = vpop.trf.xlu0
      %1376 = vxpose.xlu0.b32.start [1/16] %v984, 128
      %1377 = vxpose.xlu0.b32.cont [2/16] %v985, 128
      %1378 = vxpose.xlu0.b32.cont [3/16] 0.0, 128
      %1379 = vxpose.xlu0.b32.cont [4/16] 0.0, 128
      %1380 = vxpose.xlu0.b32.cont [5/16] 0.0, 128
      %1381 = vxpose.xlu0.b32.cont [6/16] 0.0, 128
      %1382 = vxpose.xlu0.b32.cont [7/16] 0.0, 128
      %1383 = vxpose.xlu0.b32.cont [8/16] 0.0, 128
      %1384 = vxpose.xlu0.b32.cont [9/16] 0.0, 128
      %1385 = vxpose.xlu0.b32.cont [10/16] 0.0, 128
      %1386 = vxpose.xlu0.b32.cont [11/16] 0.0, 128
      %1387 = vxpose.xlu0.b32.cont [12/16] 0.0, 128
      %1388 = vxpose.xlu0.b32.cont [13/16] 0.0, 128
      %1389 = vxpose.xlu0.b32.cont [14/16] 0.0, 128
      %1390 = vxpose.xlu0.b32.cont [15/16] 0.0, 128
      %1391 = vxpose.xlu0.b32.end [16/16] 0.0, 128
      %v1392 = vpop.trf.xlu0
      %v1393 = vpop.trf.xlu0
      %v1394 = vpop.trf.xlu0
      %v1395 = vpop.trf.xlu0
      %v1396 = vpop.trf.xlu0
      %v1397 = vpop.trf.xlu0
      %v1398 = vpop.trf.xlu0
      %v1399 = vpop.trf.xlu0
      %v1400 = vpop.trf.xlu0
      %v1401 = vpop.trf.xlu0
      %v1402 = vpop.trf.xlu0
      %v1403 = vpop.trf.xlu0
      %v1404 = vpop.trf.xlu0
      %v1405 = vpop.trf.xlu0
      %v1406 = vpop.trf.xlu0
      %v1407 = vpop.trf.xlu0
      %1408 = vxpose.xlu0.b32.start [1/16] %v986, 128
      %1409 = vxpose.xlu0.b32.cont [2/16] %v987, 128
      %1410 = vxpose.xlu0.b32.cont [3/16] 0.0, 128
      %1411 = vxpose.xlu0.b32.cont [4/16] 0.0, 128
      %1412 = vxpose.xlu0.b32.cont [5/16] 0.0, 128
      %1413 = vxpose.xlu0.b32.cont [6/16] 0.0, 128
      %1414 = vxpose.xlu0.b32.cont [7/16] 0.0, 128
      %1415 = vxpose.xlu0.b32.cont [8/16] 0.0, 128
      %1416 = vxpose.xlu0.b32.cont [9/16] 0.0, 128
      %1417 = vxpose.xlu0.b32.cont [10/16] 0.0, 128
      %1418 = vxpose.xlu0.b32.cont [11/16] 0.0, 128
      %1419 = vxpose.xlu0.b32.cont [12/16] 0.0, 128
      %1420 = vxpose.xlu0.b32.cont [13/16] 0.0, 128
      %1421 = vxpose.xlu0.b32.cont [14/16] 0.0, 128
      %1422 = vxpose.xlu0.b32.cont [15/16] 0.0, 128
      %1423 = vxpose.xlu0.b32.end [16/16] 0.0, 128
      %v1424 = vpop.trf.xlu0
      %v1425 = vpop.trf.xlu0
      %v1426 = vpop.trf.xlu0
      %v1427 = vpop.trf.xlu0
      %v1428 = vpop.trf.xlu0
      %v1429 = vpop.trf.xlu0
      %v1430 = vpop.trf.xlu0
      %v1431 = vpop.trf.xlu0
      %v1432 = vpop.trf.xlu0
      %v1433 = vpop.trf.xlu0
      %v1434 = vpop.trf.xlu0
      %v1435 = vpop.trf.xlu0
      %v1436 = vpop.trf.xlu0
      %v1437 = vpop.trf.xlu0
      %v1438 = vpop.trf.xlu0
      %v1439 = vpop.trf.xlu0
      %1440 = vxpose.xlu0.b32.start [1/16] %v988, 128
      %1441 = vxpose.xlu0.b32.cont [2/16] %v989, 128
      %1442 = vxpose.xlu0.b32.cont [3/16] 0.0, 128
      %1443 = vxpose.xlu0.b32.cont [4/16] 0.0, 128
      %1444 = vxpose.xlu0.b32.cont [5/16] 0.0, 128
      %1445 = vxpose.xlu0.b32.cont [6/16] 0.0, 128
      %1446 = vxpose.xlu0.b32.cont [7/16] 0.0, 128
      %1447 = vxpose.xlu0.b32.cont [8/16] 0.0, 128
      %1448 = vxpose.xlu0.b32.cont [9/16] 0.0, 128
      %1449 = vxpose.xlu0.b32.cont [10/16] 0.0, 128
      %1450 = vxpose.xlu0.b32.cont [11/16] 0.0, 128
      %1451 = vxpose.xlu0.b32.cont [12/16] 0.0, 128
      %1452 = vxpose.xlu0.b32.cont [13/16] 0.0, 128
      %1453 = vxpose.xlu0.b32.cont [14/16] 0.0, 128
      %1454 = vxpose.xlu0.b32.cont [15/16] 0.0, 128
      %1455 = vxpose.xlu0.b32.end [16/16] 0.0, 128
      %v1456 = vpop.trf.xlu0
      %v1457 = vpop.trf.xlu0
      %v1458 = vpop.trf.xlu0
      %v1459 = vpop.trf.xlu0
      %v1460 = vpop.trf.xlu0
      %v1461 = vpop.trf.xlu0
      %v1462 = vpop.trf.xlu0
      %v1463 = vpop.trf.xlu0
      %v1464 = vpop.trf.xlu0
      %v1465 = vpop.trf.xlu0
      %v1466 = vpop.trf.xlu0
      %v1467 = vpop.trf.xlu0
      %v1468 = vpop.trf.xlu0
      %v1469 = vpop.trf.xlu0
      %v1470 = vpop.trf.xlu0
      %v1471 = vpop.trf.xlu0
      %1472 = vxpose.xlu0.b32.start [1/16] %v990, 128
      %1473 = vxpose.xlu0.b32.cont [2/16] %v991, 128
      %1474 = vxpose.xlu0.b32.cont [3/16] 0.0, 128
      %1475 = vxpose.xlu0.b32.cont [4/16] 0.0, 128
      %1476 = vxpose.xlu0.b32.cont [5/16] 0.0, 128
      %1477 = vxpose.xlu0.b32.cont [6/16] 0.0, 128
      %1478 = vxpose.xlu0.b32.cont [7/16] 0.0, 128
      %1479 = vxpose.xlu0.b32.cont [8/16] 0.0, 128
      %1480 = vxpose.xlu0.b32.cont [9/16] 0.0, 128
      %1481 = vxpose.xlu0.b32.cont [10/16] 0.0, 128
      %1482 = vxpose.xlu0.b32.cont [11/16] 0.0, 128
      %1483 = vxpose.xlu0.b32.cont [12/16] 0.0, 128
      %1484 = vxpose.xlu0.b32.cont [13/16] 0.0, 128
      %1485 = vxpose.xlu0.b32.cont [14/16] 0.0, 128
      %1486 = vxpose.xlu0.b32.cont [15/16] 0.0, 128
      %1487 = vxpose.xlu0.b32.end [16/16] 0.0, 128
      %v1488 = vpop.trf.xlu0
      %v1489 = vpop.trf.xlu0
      %v1490 = vpop.trf.xlu0
      %v1491 = vpop.trf.xlu0
      %v1492 = vpop.trf.xlu0
      %v1493 = vpop.trf.xlu0
      %v1494 = vpop.trf.xlu0
      %v1495 = vpop.trf.xlu0
      %v1496 = vpop.trf.xlu0
      %v1497 = vpop.trf.xlu0
      %v1498 = vpop.trf.xlu0
      %v1499 = vpop.trf.xlu0
      %v1500 = vpop.trf.xlu0
      %v1501 = vpop.trf.xlu0
      %v1502 = vpop.trf.xlu0
      %v1503 = vpop.trf.xlu0
      %v1504 = vld [vmem:[%s2] sm:$0xff]
      %v1505 = vld [vmem:[%s2 + $0x8] sm:$0xff]
      %v1506 = vld [vmem:[%s3] sm:$0xff]
      %v1507 = vld [vmem:[%s3 + $0x8] sm:$0xff]
      %vm1508 = vcmask 130048
      %v1510 = vsel %vm1508, %v1008, 0
      %v1513 = vsel %vm1508, %v1009, 0
      %v1516 = vsel %vm1508, %v1040, 0
      %v1519 = vsel %vm1508, %v1041, 0
      %v1522 = vsel %vm1508, %v1072, 0
      %v1525 = vsel %vm1508, %v1073, 0
      %v1528 = vsel %vm1508, %v1104, 0
      %v1531 = vsel %vm1508, %v1105, 0
      %v1534 = vsel %vm1508, %v1136, 0
      %v1537 = vsel %vm1508, %v1137, 0
      %v1540 = vsel %vm1508, %v1168, 0
      %v1543 = vsel %vm1508, %v1169, 0
      %v1546 = vsel %vm1508, %v1200, 0
      %v1549 = vsel %vm1508, %v1201, 0
      %v1552 = vsel %vm1508, %v1232, 0
      %v1555 = vsel %vm1508, %v1233, 0
      %v1558 = vsel %vm1508, %v1264, 0
      %v1561 = vsel %vm1508, %v1265, 0
      %v1564 = vsel %vm1508, %v1296, 0
      %v1567 = vsel %vm1508, %v1297, 0
      %v1570 = vsel %vm1508, %v1328, 0
      %v1573 = vsel %vm1508, %v1329, 0
      %v1576 = vsel %vm1508, %v1360, 0
      %v1579 = vsel %vm1508, %v1361, 0
      %v1582 = vsel %vm1508, %v1392, 0
      %v1585 = vsel %vm1508, %v1393, 0
      %v1588 = vsel %vm1508, %v1424, 0
      %v1591 = vsel %vm1508, %v1425, 0
      %v1594 = vsel %vm1508, %v1456, 0
      %v1597 = vsel %vm1508, %v1457, 0
      %v1600 = vsel %vm1508, %v1488, 0
      %v1603 = vsel %vm1508, %v1489, 0
      %1605 = vmatprep.subr.mxu0 0.0
      %1606 = vmatpush1.msra.mxu0 0.0
      %1607 = vmatprep.subr.mxu0 0.0
      %1608 = vmatpush1.msra.mxu0 0.0
      %1609 = vmatprep.subr.mxu0 0.0
      %1610 = vmatpush1.msra.mxu0 0.0
      %1611 = vmatprep.subr.mxu0 0.0
      %1612 = vmatpush1.msra.mxu0 0.0
      %1613 = vmatprep.subr.mxu0 0.0
      %1614 = vmatpush1.msra.mxu0 0.0
      %1615 = vmatprep.subr.mxu0 0.0
      %1616 = vmatpush1.msra.mxu0 0.0
      %1617 = vmatprep.subr.mxu0 0.0
      %1618 = vmatpush1.msra.mxu0 0.0
      %1619 = vmatprep.subr.mxu0 0.0
      %1620 = vmatpush1.msra.mxu0 0.0
      %1621 = vmatprep.subr.mxu0 0.0
      %1622 = vmatpush1.msra.mxu0 0.0
      %1623 = vmatprep.subr.mxu0 0.0
      %1624 = vmatpush1.msra.mxu0 0.0
      %1625 = vmatprep.subr.mxu0 0.0
      %1626 = vmatpush1.msra.mxu0 0.0
      %1627 = vmatprep.subr.mxu0 0.0
      %1628 = vmatpush1.msra.mxu0 0.0
      %1629 = vmatprep.subr.mxu0 0.0
      %1630 = vmatpush1.msra.mxu0 0.0
      %1631 = vmatprep.subr.mxu0 0.0
      %1632 = vmatpush1.msra.mxu0 0.0
      %1633 = vmatprep.subr.mxu0 0.0
      %1634 = vmatpush1.msra.mxu0 %v1507
      %1635 = vmatprep.subr.mxu0 0.0
      %1636 = vmatpush1.msra.mxu0 %v1506
      %1637 = vmatprep.subr.mxu0 0.0
      %1638 = vmatpush2.msra.mxu0 0.0
      %1639 = vmatprep.subr.mxu0 0.0
      %1640 = vmatpush2.msra.mxu0 0.0
      %1641 = vmatprep.subr.mxu0 0.0
      %1642 = vmatpush2.msra.mxu0 0.0
      %1643 = vmatprep.subr.mxu0 0.0
      %1644 = vmatpush2.msra.mxu0 0.0
      %1645 = vmatprep.subr.mxu0 0.0
      %1646 = vmatpush2.msra.mxu0 0.0
      %1647 = vmatprep.subr.mxu0 0.0
      %1648 = vmatpush2.msra.mxu0 0.0
      %1649 = vmatprep.subr.mxu0 0.0
      %1650 = vmatpush2.msra.mxu0 0.0
      %1651 = vmatprep.subr.mxu0 0.0
      %1652 = vmatpush2.msra.mxu0 0.0
      %1653 = vmatprep.subr.mxu0 0.0
      %1654 = vmatpush2.msra.mxu0 0.0
      %1655 = vmatprep.subr.mxu0 0.0
      %1656 = vmatpush2.msra.mxu0 0.0
      %1657 = vmatprep.subr.mxu0 0.0
      %1658 = vmatpush2.msra.mxu0 0.0
      %1659 = vmatprep.subr.mxu0 0.0
      %1660 = vmatpush2.msra.mxu0 0.0
      %1661 = vmatprep.subr.mxu0 0.0
      %1662 = vmatpush2.msra.mxu0 0.0
      %1663 = vmatprep.subr.mxu0 0.0
      %1664 = vmatpush2.msra.mxu0 0.0
      %1665 = vmatprep.subr.mxu0 0.0
      %1666 = vmatpush2.msra.mxu0 0.0
      %1667 = vmatprep.subr.mxu0 0.0
      %1668 = vmatpush2.msra.mxu0 0.0
      %1669 = vmatprep.mubr.f32.mxu0 0.0
      %1670 = vmatmul.mubr.f32.gmra.mxu0 %v1510
      %v1671 = vpop.f32.mrf.mxu0
      %v1672 = vadd.f32 0.0, %v1671
      %v1673 = vpop.f32.mrf.mxu0
      %1674 = vmatprep.mubr.f32.mxu0 0.0
      %1675 = vmatmul.mubr.f32.gmra.mxu0 %v1513
      %v1676 = vpop.f32.mrf.mxu0
      %v1677 = vadd.f32 0.0, %v1676
      %v1678 = vpop.f32.mrf.mxu0
      %1679 = vmatprep.mubr.f32.mxu0 0.0
      %1680 = vmatmul.mubr.f32.gmra.mxu0 %v1516
      %v1681 = vpop.f32.mrf.mxu0
      %v1682 = vadd.f32 0.0, %v1681
      %v1683 = vpop.f32.mrf.mxu0
      %1684 = vmatprep.mubr.f32.mxu0 0.0
      %1685 = vmatmul.mubr.f32.gmra.mxu0 %v1519
      %v1686 = vpop.f32.mrf.mxu0
      %v1687 = vadd.f32 0.0, %v1686
      %v1688 = vpop.f32.mrf.mxu0
      %1689 = vmatprep.mubr.f32.mxu0 0.0
      %1690 = vmatmul.mubr.f32.gmra.mxu0 %v1522
      %v1691 = vpop.f32.mrf.mxu0
      %v1692 = vadd.f32 0.0, %v1691
      %v1693 = vpop.f32.mrf.mxu0
      %1694 = vmatprep.mubr.f32.mxu0 0.0
      %1695 = vmatmul.mubr.f32.gmra.mxu0 %v1525
      %v1696 = vpop.f32.mrf.mxu0
      %v1697 = vadd.f32 0.0, %v1696
      %v1698 = vpop.f32.mrf.mxu0
      %1699 = vmatprep.mubr.f32.mxu0 0.0
      %1700 = vmatmul.mubr.f32.gmra.mxu0 %v1528
      %v1701 = vpop.f32.mrf.mxu0
      %v1702 = vadd.f32 0.0, %v1701
      %v1703 = vpop.f32.mrf.mxu0
      %1704 = vmatprep.mubr.f32.mxu0 0.0
      %1705 = vmatmul.mubr.f32.gmra.mxu0 %v1531
      %v1706 = vpop.f32.mrf.mxu0
      %v1707 = vadd.f32 0.0, %v1706
      %v1708 = vpop.f32.mrf.mxu0
      %1709 = vmatprep.mubr.f32.mxu0 0.0
      %1710 = vmatmul.mubr.f32.gmra.mxu0 %v1534
      %v1711 = vpop.f32.mrf.mxu0
      %v1712 = vadd.f32 0.0, %v1711
      %v1713 = vpop.f32.mrf.mxu0
      %1714 = vmatprep.mubr.f32.mxu0 0.0
      %1715 = vmatmul.mubr.f32.gmra.mxu0 %v1537
      %v1716 = vpop.f32.mrf.mxu0
      %v1717 = vadd.f32 0.0, %v1716
      %v1718 = vpop.f32.mrf.mxu0
      %1719 = vmatprep.mubr.f32.mxu0 0.0
      %1720 = vmatmul.mubr.f32.gmra.mxu0 %v1540
      %v1721 = vpop.f32.mrf.mxu0
      %v1722 = vadd.f32 0.0, %v1721
      %v1723 = vpop.f32.mrf.mxu0
      %1724 = vmatprep.mubr.f32.mxu0 0.0
      %1725 = vmatmul.mubr.f32.gmra.mxu0 %v1543
      %v1726 = vpop.f32.mrf.mxu0
      %v1727 = vadd.f32 0.0, %v1726
      %v1728 = vpop.f32.mrf.mxu0
      %1729 = vmatprep.mubr.f32.mxu0 0.0
      %1730 = vmatmul.mubr.f32.gmra.mxu0 %v1546
      %v1731 = vpop.f32.mrf.mxu0
      %v1732 = vadd.f32 0.0, %v1731
      %v1733 = vpop.f32.mrf.mxu0
      %1734 = vmatprep.mubr.f32.mxu0 0.0
      %1735 = vmatmul.mubr.f32.gmra.mxu0 %v1549
      %v1736 = vpop.f32.mrf.mxu0
      %v1737 = vadd.f32 0.0, %v1736
      %v1738 = vpop.f32.mrf.mxu0
      %1739 = vmatprep.mubr.f32.mxu0 0.0
      %1740 = vmatmul.mubr.f32.gmra.mxu0 %v1552
      %v1741 = vpop.f32.mrf.mxu0
      %v1742 = vadd.f32 0.0, %v1741
      %v1743 = vpop.f32.mrf.mxu0
      %1744 = vmatprep.mubr.f32.mxu0 0.0
      %1745 = vmatmul.mubr.f32.gmra.mxu0 %v1555
      %v1746 = vpop.f32.mrf.mxu0
      %v1747 = vadd.f32 0.0, %v1746
      %v1748 = vpop.f32.mrf.mxu0
      %1749 = vmatprep.mubr.f32.mxu0 0.0
      %1750 = vmatmul.mubr.f32.gmra.mxu0 %v1558
      %v1751 = vpop.f32.mrf.mxu0
      %v1752 = vadd.f32 0.0, %v1751
      %v1753 = vpop.f32.mrf.mxu0
      %1754 = vmatprep.mubr.f32.mxu0 0.0
      %1755 = vmatmul.mubr.f32.gmra.mxu0 %v1561
      %v1756 = vpop.f32.mrf.mxu0
      %v1757 = vadd.f32 0.0, %v1756
      %v1758 = vpop.f32.mrf.mxu0
      %1759 = vmatprep.mubr.f32.mxu0 0.0
      %1760 = vmatmul.mubr.f32.gmra.mxu0 %v1564
      %v1761 = vpop.f32.mrf.mxu0
      %v1762 = vadd.f32 0.0, %v1761
      %v1763 = vpop.f32.mrf.mxu0
      %1764 = vmatprep.mubr.f32.mxu0 0.0
      %1765 = vmatmul.mubr.f32.gmra.mxu0 %v1567
      %v1766 = vpop.f32.mrf.mxu0
      %v1767 = vadd.f32 0.0, %v1766
      %v1768 = vpop.f32.mrf.mxu0
      %1769 = vmatprep.mubr.f32.mxu0 0.0
      %1770 = vmatmul.mubr.f32.gmra.mxu0 %v1570
      %v1771 = vpop.f32.mrf.mxu0
      %v1772 = vadd.f32 0.0, %v1771
      %v1773 = vpop.f32.mrf.mxu0
      %1774 = vmatprep.mubr.f32.mxu0 0.0
      %1775 = vmatmul.mubr.f32.gmra.mxu0 %v1573
      %v1776 = vpop.f32.mrf.mxu0
      %v1777 = vadd.f32 0.0, %v1776
      %v1778 = vpop.f32.mrf.mxu0
      %1779 = vmatprep.mubr.f32.mxu0 0.0
      %1780 = vmatmul.mubr.f32.gmra.mxu0 %v1576
      %v1781 = vpop.f32.mrf.mxu0
      %v1782 = vadd.f32 0.0, %v1781
      %v1783 = vpop.f32.mrf.mxu0
      %1784 = vmatprep.mubr.f32.mxu0 0.0
      %1785 = vmatmul.mubr.f32.gmra.mxu0 %v1579
      %v1786 = vpop.f32.mrf.mxu0
      %v1787 = vadd.f32 0.0, %v1786
      %v1788 = vpop.f32.mrf.mxu0
      %1789 = vmatprep.mubr.f32.mxu0 0.0
      %1790 = vmatmul.mubr.f32.gmra.mxu0 %v1582
      %v1791 = vpop.f32.mrf.mxu0
      %v1792 = vadd.f32 0.0, %v1791
      %v1793 = vpop.f32.mrf.mxu0
      %1794 = vmatprep.mubr.f32.mxu0 0.0
      %1795 = vmatmul.mubr.f32.gmra.mxu0 %v1585
      %v1796 = vpop.f32.mrf.mxu0
      %v1797 = vadd.f32 0.0, %v1796
      %v1798 = vpop.f32.mrf.mxu0
      %1799 = vmatprep.mubr.f32.mxu0 0.0
      %1800 = vmatmul.mubr.f32.gmra.mxu0 %v1588
      %v1801 = vpop.f32.mrf.mxu0
      %v1802 = vadd.f32 0.0, %v1801
      %v1803 = vpop.f32.mrf.mxu0
      %1804 = vmatprep.mubr.f32.mxu0 0.0
      %1805 = vmatmul.mubr.f32.gmra.mxu0 %v1591
      %v1806 = vpop.f32.mrf.mxu0
      %v1807 = vadd.f32 0.0, %v1806
      %v1808 = vpop.f32.mrf.mxu0
      %1809 = vmatprep.mubr.f32.mxu0 0.0
      %1810 = vmatmul.mubr.f32.gmra.mxu0 %v1594
      %v1811 = vpop.f32.mrf.mxu0
      %v1812 = vadd.f32 0.0, %v1811
      %v1813 = vpop.f32.mrf.mxu0
      %1814 = vmatprep.mubr.f32.mxu0 0.0
      %1815 = vmatmul.mubr.f32.gmra.mxu0 %v1597
      %v1816 = vpop.f32.mrf.mxu0
      %v1817 = vadd.f32 0.0, %v1816
      %v1818 = vpop.f32.mrf.mxu0
      %1819 = vmatprep.mubr.f32.mxu0 0.0
      %1820 = vmatmul.mubr.f32.gmra.mxu0 %v1600
      %v1821 = vpop.f32.mrf.mxu0
      %v1822 = vadd.f32 0.0, %v1821
      %v1823 = vpop.f32.mrf.mxu0
      %1824 = vmatprep.mubr.f32.mxu0 0.0
      %1825 = vmatmul.mubr.f32.gmra.mxu0 %v1603
      %v1826 = vpop.f32.mrf.mxu0
      %v1827 = vadd.f32 0.0, %v1826
      %v1828 = vpop.f32.mrf.mxu0
      %1829 = vdwg.mxu0
      %v1831 = vsel %vm1508, %v464, 0
      %v1834 = vsel %vm1508, %v465, 0
      %v1837 = vsel %vm1508, %v496, 0
      %v1840 = vsel %vm1508, %v497, 0
      %v1843 = vsel %vm1508, %v528, 0
      %v1846 = vsel %vm1508, %v529, 0
      %v1849 = vsel %vm1508, %v560, 0
      %v1852 = vsel %vm1508, %v561, 0
      %v1855 = vsel %vm1508, %v592, 0
      %v1858 = vsel %vm1508, %v593, 0
      %v1861 = vsel %vm1508, %v624, 0
      %v1864 = vsel %vm1508, %v625, 0
      %v1867 = vsel %vm1508, %v656, 0
      %v1870 = vsel %vm1508, %v657, 0
      %v1873 = vsel %vm1508, %v688, 0
      %v1876 = vsel %vm1508, %v689, 0
      %v1879 = vsel %vm1508, %v720, 0
      %v1882 = vsel %vm1508, %v721, 0
      %v1885 = vsel %vm1508, %v752, 0
      %v1888 = vsel %vm1508, %v753, 0
      %v1891 = vsel %vm1508, %v784, 0
      %v1894 = vsel %vm1508, %v785, 0
      %v1897 = vsel %vm1508, %v816, 0
      %v1900 = vsel %vm1508, %v817, 0
      %v1903 = vsel %vm1508, %v848, 0
      %v1906 = vsel %vm1508, %v849, 0
      %v1909 = vsel %vm1508, %v880, 0
      %v1912 = vsel %vm1508, %v881, 0
      %v1915 = vsel %vm1508, %v912, 0
      %v1918 = vsel %vm1508, %v913, 0
      %v1921 = vsel %vm1508, %v944, 0
      %v1924 = vsel %vm1508, %v945, 0
      %1926 = vmatprep.subr.mxu0 0.0
      %1927 = vmatpush1.msra.mxu0 0.0
      %1928 = vmatprep.subr.mxu0 0.0
      %1929 = vmatpush1.msra.mxu0 0.0
      %1930 = vmatprep.subr.mxu0 0.0
      %1931 = vmatpush1.msra.mxu0 0.0
      %1932 = vmatprep.subr.mxu0 0.0
      %1933 = vmatpush1.msra.mxu0 0.0
      %1934 = vmatprep.subr.mxu0 0.0
      %1935 = vmatpush1.msra.mxu0 0.0
      %1936 = vmatprep.subr.mxu0 0.0
      %1937 = vmatpush1.msra.mxu0 0.0
      %1938 = vmatprep.subr.mxu0 0.0
      %1939 = vmatpush1.msra.mxu0 0.0
      %1940 = vmatprep.subr.mxu0 0.0
      %1941 = vmatpush1.msra.mxu0 0.0
      %1942 = vmatprep.subr.mxu0 0.0
      %1943 = vmatpush1.msra.mxu0 0.0
      %1944 = vmatprep.subr.mxu0 0.0
      %1945 = vmatpush1.msra.mxu0 0.0
      %1946 = vmatprep.subr.mxu0 0.0
      %1947 = vmatpush1.msra.mxu0 0.0
      %1948 = vmatprep.subr.mxu0 0.0
      %1949 = vmatpush1.msra.mxu0 0.0
      %1950 = vmatprep.subr.mxu0 0.0
      %1951 = vmatpush1.msra.mxu0 0.0
      %1952 = vmatprep.subr.mxu0 0.0
      %1953 = vmatpush1.msra.mxu0 0.0
      %1954 = vmatprep.subr.mxu0 0.0
      %1955 = vmatpush1.msra.mxu0 %v1505
      %1956 = vmatprep.subr.mxu0 0.0
      %1957 = vmatpush1.msra.mxu0 %v1504
      %1958 = vmatprep.subr.mxu0 0.0
      %1959 = vmatpush2.msra.mxu0 0.0
      %1960 = vmatprep.subr.mxu0 0.0
      %1961 = vmatpush2.msra.mxu0 0.0
      %1962 = vmatprep.subr.mxu0 0.0
      %1963 = vmatpush2.msra.mxu0 0.0
      %1964 = vmatprep.subr.mxu0 0.0
      %1965 = vmatpush2.msra.mxu0 0.0
      %1966 = vmatprep.subr.mxu0 0.0
      %1967 = vmatpush2.msra.mxu0 0.0
      %1968 = vmatprep.subr.mxu0 0.0
      %1969 = vmatpush2.msra.mxu0 0.0
      %1970 = vmatprep.subr.mxu0 0.0
      %1971 = vmatpush2.msra.mxu0 0.0
      %1972 = vmatprep.subr.mxu0 0.0
      %1973 = vmatpush2.msra.mxu0 0.0
      %1974 = vmatprep.subr.mxu0 0.0
      %1975 = vmatpush2.msra.mxu0 0.0
      %1976 = vmatprep.subr.mxu0 0.0
      %1977 = vmatpush2.msra.mxu0 0.0
      %1978 = vmatprep.subr.mxu0 0.0
      %1979 = vmatpush2.msra.mxu0 0.0
      %1980 = vmatprep.subr.mxu0 0.0
      %1981 = vmatpush2.msra.mxu0 0.0
      %1982 = vmatprep.subr.mxu0 0.0
      %1983 = vmatpush2.msra.mxu0 0.0
      %1984 = vmatprep.subr.mxu0 0.0
      %1985 = vmatpush2.msra.mxu0 0.0
      %1986 = vmatprep.subr.mxu0 0.0
      %1987 = vmatpush2.msra.mxu0 0.0
      %1988 = vmatprep.subr.mxu0 0.0
      %1989 = vmatpush2.msra.mxu0 0.0
      %1990 = vmatprep.mubr.f32.mxu0 0.0
      %1991 = vmatmul.mubr.f32.gmra.mxu0 %v1831
      %v1992 = vpop.f32.mrf.mxu0
      %v1993 = vadd.f32 %v1672, %v1992
      %v1994 = vpop.f32.mrf.mxu0
      %1995 = vmatprep.mubr.f32.mxu0 0.0
      %1996 = vmatmul.mubr.f32.gmra.mxu0 %v1834
      %v1997 = vpop.f32.mrf.mxu0
      %v1998 = vadd.f32 %v1677, %v1997
      %v1999 = vpop.f32.mrf.mxu0
      %2000 = vmatprep.mubr.f32.mxu0 0.0
      %2001 = vmatmul.mubr.f32.gmra.mxu0 %v1837
      %v2002 = vpop.f32.mrf.mxu0
      %v2003 = vadd.f32 %v1682, %v2002
      %v2004 = vpop.f32.mrf.mxu0
      %2005 = vmatprep.mubr.f32.mxu0 0.0
      %2006 = vmatmul.mubr.f32.gmra.mxu0 %v1840
      %v2007 = vpop.f32.mrf.mxu0
      %v2008 = vadd.f32 %v1687, %v2007
      %v2009 = vpop.f32.mrf.mxu0
      %2010 = vmatprep.mubr.f32.mxu0 0.0
      %2011 = vmatmul.mubr.f32.gmra.mxu0 %v1843
      %v2012 = vpop.f32.mrf.mxu0
      %v2013 = vadd.f32 %v1692, %v2012
      %v2014 = vpop.f32.mrf.mxu0
      %2015 = vmatprep.mubr.f32.mxu0 0.0
      %2016 = vmatmul.mubr.f32.gmra.mxu0 %v1846
      %v2017 = vpop.f32.mrf.mxu0
      %v2018 = vadd.f32 %v1697, %v2017
      %v2019 = vpop.f32.mrf.mxu0
      %2020 = vmatprep.mubr.f32.mxu0 0.0
      %2021 = vmatmul.mubr.f32.gmra.mxu0 %v1849
      %v2022 = vpop.f32.mrf.mxu0
      %v2023 = vadd.f32 %v1702, %v2022
      %v2024 = vpop.f32.mrf.mxu0
      %2025 = vmatprep.mubr.f32.mxu0 0.0
      %2026 = vmatmul.mubr.f32.gmra.mxu0 %v1852
      %v2027 = vpop.f32.mrf.mxu0
      %v2028 = vadd.f32 %v1707, %v2027
      %v2029 = vpop.f32.mrf.mxu0
      %2030 = vmatprep.mubr.f32.mxu0 0.0
      %2031 = vmatmul.mubr.f32.gmra.mxu0 %v1855
      %v2032 = vpop.f32.mrf.mxu0
      %v2033 = vadd.f32 %v1712, %v2032
      %v2034 = vpop.f32.mrf.mxu0
      %2035 = vmatprep.mubr.f32.mxu0 0.0
      %2036 = vmatmul.mubr.f32.gmra.mxu0 %v1858
      %v2037 = vpop.f32.mrf.mxu0
      %v2038 = vadd.f32 %v1717, %v2037
      %v2039 = vpop.f32.mrf.mxu0
      %2040 = vmatprep.mubr.f32.mxu0 0.0
      %2041 = vmatmul.mubr.f32.gmra.mxu0 %v1861
      %v2042 = vpop.f32.mrf.mxu0
      %v2043 = vadd.f32 %v1722, %v2042
      %v2044 = vpop.f32.mrf.mxu0
      %2045 = vmatprep.mubr.f32.mxu0 0.0
      %2046 = vmatmul.mubr.f32.gmra.mxu0 %v1864
      %v2047 = vpop.f32.mrf.mxu0
      %v2048 = vadd.f32 %v1727, %v2047
      %v2049 = vpop.f32.mrf.mxu0
      %2050 = vmatprep.mubr.f32.mxu0 0.0
      %2051 = vmatmul.mubr.f32.gmra.mxu0 %v1867
      %v2052 = vpop.f32.mrf.mxu0
      %v2053 = vadd.f32 %v1732, %v2052
      %v2054 = vpop.f32.mrf.mxu0
      %2055 = vmatprep.mubr.f32.mxu0 0.0
      %2056 = vmatmul.mubr.f32.gmra.mxu0 %v1870
      %v2057 = vpop.f32.mrf.mxu0
      %v2058 = vadd.f32 %v1737, %v2057
      %v2059 = vpop.f32.mrf.mxu0
      %2060 = vmatprep.mubr.f32.mxu0 0.0
      %2061 = vmatmul.mubr.f32.gmra.mxu0 %v1873
      %v2062 = vpop.f32.mrf.mxu0
      %v2063 = vadd.f32 %v1742, %v2062
      %v2064 = vpop.f32.mrf.mxu0
      %2065 = vmatprep.mubr.f32.mxu0 0.0
      %2066 = vmatmul.mubr.f32.gmra.mxu0 %v1876
      %v2067 = vpop.f32.mrf.mxu0
      %v2068 = vadd.f32 %v1747, %v2067
      %v2069 = vpop.f32.mrf.mxu0
      %2070 = vmatprep.mubr.f32.mxu0 0.0
      %2071 = vmatmul.mubr.f32.gmra.mxu0 %v1879
      %v2072 = vpop.f32.mrf.mxu0
      %v2073 = vadd.f32 %v1752, %v2072
      %v2074 = vpop.f32.mrf.mxu0
      %2075 = vmatprep.mubr.f32.mxu0 0.0
      %2076 = vmatmul.mubr.f32.gmra.mxu0 %v1882
      %v2077 = vpop.f32.mrf.mxu0
      %v2078 = vadd.f32 %v1757, %v2077
      %v2079 = vpop.f32.mrf.mxu0
      %2080 = vmatprep.mubr.f32.mxu0 0.0
      %2081 = vmatmul.mubr.f32.gmra.mxu0 %v1885
      %v2082 = vpop.f32.mrf.mxu0
      %v2083 = vadd.f32 %v1762, %v2082
      %v2084 = vpop.f32.mrf.mxu0
      %2085 = vmatprep.mubr.f32.mxu0 0.0
      %2086 = vmatmul.mubr.f32.gmra.mxu0 %v1888
      %v2087 = vpop.f32.mrf.mxu0
      %v2088 = vadd.f32 %v1767, %v2087
      %v2089 = vpop.f32.mrf.mxu0
      %2090 = vmatprep.mubr.f32.mxu0 0.0
      %2091 = vmatmul.mubr.f32.gmra.mxu0 %v1891
      %v2092 = vpop.f32.mrf.mxu0
      %v2093 = vadd.f32 %v1772, %v2092
      %v2094 = vpop.f32.mrf.mxu0
      %2095 = vmatprep.mubr.f32.mxu0 0.0
      %2096 = vmatmul.mubr.f32.gmra.mxu0 %v1894
      %v2097 = vpop.f32.mrf.mxu0
      %v2098 = vadd.f32 %v1777, %v2097
      %v2099 = vpop.f32.mrf.mxu0
      %2100 = vmatprep.mubr.f32.mxu0 0.0
      %2101 = vmatmul.mubr.f32.gmra.mxu0 %v1897
      %v2102 = vpop.f32.mrf.mxu0
      %v2103 = vadd.f32 %v1782, %v2102
      %v2104 = vpop.f32.mrf.mxu0
      %2105 = vmatprep.mubr.f32.mxu0 0.0
      %2106 = vmatmul.mubr.f32.gmra.mxu0 %v1900
      %v2107 = vpop.f32.mrf.mxu0
      %v2108 = vadd.f32 %v1787, %v2107
      %v2109 = vpop.f32.mrf.mxu0
      %2110 = vmatprep.mubr.f32.mxu0 0.0
      %2111 = vmatmul.mubr.f32.gmra.mxu0 %v1903
      %v2112 = vpop.f32.mrf.mxu0
      %v2113 = vadd.f32 %v1792, %v2112
      %v2114 = vpop.f32.mrf.mxu0
      %2115 = vmatprep.mubr.f32.mxu0 0.0
      %2116 = vmatmul.mubr.f32.gmra.mxu0 %v1906
      %v2117 = vpop.f32.mrf.mxu0
      %v2118 = vadd.f32 %v1797, %v2117
      %v2119 = vpop.f32.mrf.mxu0
      %2120 = vmatprep.mubr.f32.mxu0 0.0
      %2121 = vmatmul.mubr.f32.gmra.mxu0 %v1909
      %v2122 = vpop.f32.mrf.mxu0
      %v2123 = vadd.f32 %v1802, %v2122
      %v2124 = vpop.f32.mrf.mxu0
      %2125 = vmatprep.mubr.f32.mxu0 0.0
      %2126 = vmatmul.mubr.f32.gmra.mxu0 %v1912
      %v2127 = vpop.f32.mrf.mxu0
      %v2128 = vadd.f32 %v1807, %v2127
      %v2129 = vpop.f32.mrf.mxu0
      %2130 = vmatprep.mubr.f32.mxu0 0.0
      %2131 = vmatmul.mubr.f32.gmra.mxu0 %v1915
      %v2132 = vpop.f32.mrf.mxu0
      %v2133 = vadd.f32 %v1812, %v2132
      %v2134 = vpop.f32.mrf.mxu0
      %2135 = vmatprep.mubr.f32.mxu0 0.0
      %2136 = vmatmul.mubr.f32.gmra.mxu0 %v1918
      %v2137 = vpop.f32.mrf.mxu0
      %v2138 = vadd.f32 %v1817, %v2137
      %v2139 = vpop.f32.mrf.mxu0
      %2140 = vmatprep.mubr.f32.mxu0 0.0
      %2141 = vmatmul.mubr.f32.gmra.mxu0 %v1921
      %v2142 = vpop.f32.mrf.mxu0
      %v2143 = vadd.f32 %v1822, %v2142
      %v2144 = vpop.f32.mrf.mxu0
      %2145 = vmatprep.mubr.f32.mxu0 0.0
      %2146 = vmatmul.mubr.f32.gmra.mxu0 %v1924
      %v2147 = vpop.f32.mrf.mxu0
      %v2148 = vadd.f32 %v1827, %v2147
      %v2149 = vpop.f32.mrf.mxu0
      %2150 = vdwg.mxu0
      %v2151 = vld [vmem:[%s4] sm:$0x1]
      %v2153 = vlaneseq
      %v2154 = vshrl.u32 %v2153, 7
      %v2155 = vsub.s32 0, %v2154
      %v2156 = vrot.slane %v2151, %v2155
      %v2158 = vadd.f32 %v1993, %v2156
      %v2159 = vadd.f32 %v1998, %v2156
      %v2160 = vadd.f32 %v2003, %v2156
      %v2161 = vadd.f32 %v2008, %v2156
      %v2162 = vadd.f32 %v2013, %v2156
      %v2163 = vadd.f32 %v2018, %v2156
      %v2164 = vadd.f32 %v2023, %v2156
      %v2165 = vadd.f32 %v2028, %v2156
      %v2166 = vadd.f32 %v2033, %v2156
      %v2167 = vadd.f32 %v2038, %v2156
      %v2168 = vadd.f32 %v2043, %v2156
      %v2169 = vadd.f32 %v2048, %v2156
      %v2170 = vadd.f32 %v2053, %v2156
      %v2171 = vadd.f32 %v2058, %v2156
      %v2172 = vadd.f32 %v2063, %v2156
      %v2173 = vadd.f32 %v2068, %v2156
      %v2174 = vadd.f32 %v2073, %v2156
      %v2175 = vadd.f32 %v2078, %v2156
      %v2176 = vadd.f32 %v2083, %v2156
      %v2177 = vadd.f32 %v2088, %v2156
      %v2178 = vadd.f32 %v2093, %v2156
      %v2179 = vadd.f32 %v2098, %v2156
      %v2180 = vadd.f32 %v2103, %v2156
      %v2181 = vadd.f32 %v2108, %v2156
      %v2182 = vadd.f32 %v2113, %v2156
      %v2183 = vadd.f32 %v2118, %v2156
      %v2184 = vadd.f32 %v2123, %v2156
      %v2185 = vadd.f32 %v2128, %v2156
      %v2186 = vadd.f32 %v2133, %v2156
      %v2187 = vadd.f32 %v2138, %v2156
      %v2188 = vadd.f32 %v2143, %v2156
      %v2189 = vadd.f32 %v2148, %v2156
      %v2190 = vmul.f32 %v2158, 0.5
      %v2191 = vmul.f32 %v2159, 0.5
      %v2192 = vmul.f32 %v2160, 0.5
      %v2193 = vmul.f32 %v2161, 0.5
      %v2194 = vmul.f32 %v2162, 0.5
      %v2195 = vmul.f32 %v2163, 0.5
      %v2196 = vmul.f32 %v2164, 0.5
      %v2197 = vmul.f32 %v2165, 0.5
      %v2198 = vmul.f32 %v2166, 0.5
      %v2199 = vmul.f32 %v2167, 0.5
      %v2200 = vmul.f32 %v2168, 0.5
      %v2201 = vmul.f32 %v2169, 0.5
      %v2202 = vmul.f32 %v2170, 0.5
      %v2203 = vmul.f32 %v2171, 0.5
      %v2204 = vmul.f32 %v2172, 0.5
      %v2205 = vmul.f32 %v2173, 0.5
      %v2206 = vmul.f32 %v2174, 0.5
      %v2207 = vmul.f32 %v2175, 0.5
      %v2208 = vmul.f32 %v2176, 0.5
      %v2209 = vmul.f32 %v2177, 0.5
      %v2210 = vmul.f32 %v2178, 0.5
      %v2211 = vmul.f32 %v2179, 0.5
      %v2212 = vmul.f32 %v2180, 0.5
      %v2213 = vmul.f32 %v2181, 0.5
      %v2214 = vmul.f32 %v2182, 0.5
      %v2215 = vmul.f32 %v2183, 0.5
      %v2216 = vmul.f32 %v2184, 0.5
      %v2217 = vmul.f32 %v2185, 0.5
      %v2218 = vmul.f32 %v2186, 0.5
      %v2219 = vmul.f32 %v2187, 0.5
      %v2220 = vmul.f32 %v2188, 0.5
      %v2221 = vmul.f32 %v2189, 0.5
      %v2222 = vtanh.pop %v2190
      %v2223 = vtanh.pop %v2191
      %v2224 = vtanh.pop %v2192
      %v2225 = vtanh.pop %v2193
      %v2226 = vtanh.pop %v2194
      %v2227 = vtanh.pop %v2195
      %v2228 = vtanh.pop %v2196
      %v2229 = vtanh.pop %v2197
      %v2230 = vtanh.pop %v2198
      %v2231 = vtanh.pop %v2199
      %v2232 = vtanh.pop %v2200
      %v2233 = vtanh.pop %v2201
      %v2234 = vtanh.pop %v2202
      %v2235 = vtanh.pop %v2203
      %v2236 = vtanh.pop %v2204
      %v2237 = vtanh.pop %v2205
      %v2238 = vtanh.pop %v2206
      %v2239 = vtanh.pop %v2207
      %v2240 = vtanh.pop %v2208
      %v2241 = vtanh.pop %v2209
      %v2242 = vtanh.pop %v2210
      %v2243 = vtanh.pop %v2211
      %v2244 = vtanh.pop %v2212
      %v2245 = vtanh.pop %v2213
      %v2246 = vtanh.pop %v2214
      %v2247 = vtanh.pop %v2215
      %v2248 = vtanh.pop %v2216
      %v2249 = vtanh.pop %v2217
      %v2250 = vtanh.pop %v2218
      %v2251 = vtanh.pop %v2219
      %v2252 = vtanh.pop %v2220
      %v2253 = vtanh.pop %v2221
      %v2254 = vadd.f32 %v2222, 1.0
      %v2255 = vadd.f32 %v2223, 1.0
      %v2256 = vadd.f32 %v2224, 1.0
      %v2257 = vadd.f32 %v2225, 1.0
      %v2258 = vadd.f32 %v2226, 1.0
      %v2259 = vadd.f32 %v2227, 1.0
      %v2260 = vadd.f32 %v2228, 1.0
      %v2261 = vadd.f32 %v2229, 1.0
      %v2262 = vadd.f32 %v2230, 1.0
      %v2263 = vadd.f32 %v2231, 1.0
      %v2264 = vadd.f32 %v2232, 1.0
      %v2265 = vadd.f32 %v2233, 1.0
      %v2266 = vadd.f32 %v2234, 1.0
      %v2267 = vadd.f32 %v2235, 1.0
      %v2268 = vadd.f32 %v2236, 1.0
      %v2269 = vadd.f32 %v2237, 1.0
      %v2270 = vadd.f32 %v2238, 1.0
      %v2271 = vadd.f32 %v2239, 1.0
      %v2272 = vadd.f32 %v2240, 1.0
      %v2273 = vadd.f32 %v2241, 1.0
      %v2274 = vadd.f32 %v2242, 1.0
      %v2275 = vadd.f32 %v2243, 1.0
      %v2276 = vadd.f32 %v2244, 1.0
      %v2277 = vadd.f32 %v2245, 1.0
      %v2278 = vadd.f32 %v2246, 1.0
      %v2279 = vadd.f32 %v2247, 1.0
      %v2280 = vadd.f32 %v2248, 1.0
      %v2281 = vadd.f32 %v2249, 1.0
      %v2282 = vadd.f32 %v2250, 1.0
      %v2283 = vadd.f32 %v2251, 1.0
      %v2284 = vadd.f32 %v2252, 1.0
      %v2285 = vadd.f32 %v2253, 1.0
      %v2286 = vmul.f32 %v2254, 0.5
      %v2287 = vmul.f32 %v2255, 0.5
      %v2288 = vmul.f32 %v2256, 0.5
      %v2289 = vmul.f32 %v2257, 0.5
      %v2290 = vmul.f32 %v2258, 0.5
      %v2291 = vmul.f32 %v2259, 0.5
      %v2292 = vmul.f32 %v2260, 0.5
      %v2293 = vmul.f32 %v2261, 0.5
      %v2294 = vmul.f32 %v2262, 0.5
      %v2295 = vmul.f32 %v2263, 0.5
      %v2296 = vmul.f32 %v2264, 0.5
      %v2297 = vmul.f32 %v2265, 0.5
      %v2298 = vmul.f32 %v2266, 0.5
      %v2299 = vmul.f32 %v2267, 0.5
      %v2300 = vmul.f32 %v2268, 0.5
      %v2301 = vmul.f32 %v2269, 0.5
      %v2302 = vmul.f32 %v2270, 0.5
      %v2303 = vmul.f32 %v2271, 0.5
      %v2304 = vmul.f32 %v2272, 0.5
      %v2305 = vmul.f32 %v2273, 0.5
      %v2306 = vmul.f32 %v2274, 0.5
      %v2307 = vmul.f32 %v2275, 0.5
      %v2308 = vmul.f32 %v2276, 0.5
      %v2309 = vmul.f32 %v2277, 0.5
      %v2310 = vmul.f32 %v2278, 0.5
      %v2311 = vmul.f32 %v2279, 0.5
      %v2312 = vmul.f32 %v2280, 0.5
      %v2313 = vmul.f32 %v2281, 0.5
      %v2314 = vmul.f32 %v2282, 0.5
      %v2315 = vmul.f32 %v2283, 0.5
      %v2316 = vmul.f32 %v2284, 0.5
      %v2317 = vmul.f32 %v2285, 0.5
      %v2318 = vmul.f32 %v2286, %v464
      %v2319 = vmul.f32 %v2287, %v465
      %v2320 = vmul.f32 %v2288, %v496
      %v2321 = vmul.f32 %v2289, %v497
      %v2322 = vmul.f32 %v2290, %v528
      %v2323 = vmul.f32 %v2291, %v529
      %v2324 = vmul.f32 %v2292, %v560
      %v2325 = vmul.f32 %v2293, %v561
      %v2326 = vmul.f32 %v2294, %v592
      %v2327 = vmul.f32 %v2295, %v593
      %v2328 = vmul.f32 %v2296, %v624
      %v2329 = vmul.f32 %v2297, %v625
      %v2330 = vmul.f32 %v2298, %v656
      %v2331 = vmul.f32 %v2299, %v657
      %v2332 = vmul.f32 %v2300, %v688
      %v2333 = vmul.f32 %v2301, %v689
      %v2334 = vmul.f32 %v2302, %v720
      %v2335 = vmul.f32 %v2303, %v721
      %v2336 = vmul.f32 %v2304, %v752
      %v2337 = vmul.f32 %v2305, %v753
      %v2338 = vmul.f32 %v2306, %v784
      %v2339 = vmul.f32 %v2307, %v785
      %v2340 = vmul.f32 %v2308, %v816
      %v2341 = vmul.f32 %v2309, %v817
      %v2342 = vmul.f32 %v2310, %v848
      %v2343 = vmul.f32 %v2311, %v849
      %v2344 = vmul.f32 %v2312, %v880
      %v2345 = vmul.f32 %v2313, %v881
      %v2346 = vmul.f32 %v2314, %v912
      %v2347 = vmul.f32 %v2315, %v913
      %v2348 = vmul.f32 %v2316, %v944
      %v2349 = vmul.f32 %v2317, %v945
      %v2350 = vsub.f32 1.0, %v2286
      %v2351 = vsub.f32 1.0, %v2287
      %v2352 = vsub.f32 1.0, %v2288
      %v2353 = vsub.f32 1.0, %v2289
      %v2354 = vsub.f32 1.0, %v2290
      %v2355 = vsub.f32 1.0, %v2291
      %v2356 = vsub.f32 1.0, %v2292
      %v2357 = vsub.f32 1.0, %v2293
      %v2358 = vsub.f32 1.0, %v2294
      %v2359 = vsub.f32 1.0, %v2295
      %v2360 = vsub.f32 1.0, %v2296
      %v2361 = vsub.f32 1.0, %v2297
      %v2362 = vsub.f32 1.0, %v2298
      %v2363 = vsub.f32 1.0, %v2299
      %v2364 = vsub.f32 1.0, %v2300
      %v2365 = vsub.f32 1.0, %v2301
      %v2366 = vsub.f32 1.0, %v2302
      %v2367 = vsub.f32 1.0, %v2303
      %v2368 = vsub.f32 1.0, %v2304
      %v2369 = vsub.f32 1.0, %v2305
      %v2370 = vsub.f32 1.0, %v2306
      %v2371 = vsub.f32 1.0, %v2307
      %v2372 = vsub.f32 1.0, %v2308
      %v2373 = vsub.f32 1.0, %v2309
      %v2374 = vsub.f32 1.0, %v2310
      %v2375 = vsub.f32 1.0, %v2311
      %v2376 = vsub.f32 1.0, %v2312
      %v2377 = vsub.f32 1.0, %v2313
      %v2378 = vsub.f32 1.0, %v2314
      %v2379 = vsub.f32 1.0, %v2315
      %v2380 = vsub.f32 1.0, %v2316
      %v2381 = vsub.f32 1.0, %v2317
      %v2382 = vmul.f32 %v2350, %v1008
      %v2383 = vmul.f32 %v2351, %v1009
      %v2384 = vmul.f32 %v2352, %v1040
      %v2385 = vmul.f32 %v2353, %v1041
      %v2386 = vmul.f32 %v2354, %v1072
      %v2387 = vmul.f32 %v2355, %v1073
      %v2388 = vmul.f32 %v2356, %v1104
      %v2389 = vmul.f32 %v2357, %v1105
      %v2390 = vmul.f32 %v2358, %v1136
      %v2391 = vmul.f32 %v2359, %v1137
      %v2392 = vmul.f32 %v2360, %v1168
      %v2393 = vmul.f32 %v2361, %v1169
      %v2394 = vmul.f32 %v2362, %v1200
      %v2395 = vmul.f32 %v2363, %v1201
      %v2396 = vmul.f32 %v2364, %v1232
      %v2397 = vmul.f32 %v2365, %v1233
      %v2398 = vmul.f32 %v2366, %v1264
      %v2399 = vmul.f32 %v2367, %v1265
      %v2400 = vmul.f32 %v2368, %v1296
      %v2401 = vmul.f32 %v2369, %v1297
      %v2402 = vmul.f32 %v2370, %v1328
      %v2403 = vmul.f32 %v2371, %v1329
      %v2404 = vmul.f32 %v2372, %v1360
      %v2405 = vmul.f32 %v2373, %v1361
      %v2406 = vmul.f32 %v2374, %v1392
      %v2407 = vmul.f32 %v2375, %v1393
      %v2408 = vmul.f32 %v2376, %v1424
      %v2409 = vmul.f32 %v2377, %v1425
      %v2410 = vmul.f32 %v2378, %v1456
      %v2411 = vmul.f32 %v2379, %v1457
      %v2412 = vmul.f32 %v2380, %v1488
      %v2413 = vmul.f32 %v2381, %v1489
      %v2414 = vadd.f32 %v2318, %v2382
      %v2415 = vadd.f32 %v2319, %v2383
      %v2416 = vadd.f32 %v2320, %v2384
      %v2417 = vadd.f32 %v2321, %v2385
      %v2418 = vadd.f32 %v2322, %v2386
      %v2419 = vadd.f32 %v2323, %v2387
      %v2420 = vadd.f32 %v2324, %v2388
      %v2421 = vadd.f32 %v2325, %v2389
      %v2422 = vadd.f32 %v2326, %v2390
      %v2423 = vadd.f32 %v2327, %v2391
      %v2424 = vadd.f32 %v2328, %v2392
      %v2425 = vadd.f32 %v2329, %v2393
      %v2426 = vadd.f32 %v2330, %v2394
      %v2427 = vadd.f32 %v2331, %v2395
      %v2428 = vadd.f32 %v2332, %v2396
      %v2429 = vadd.f32 %v2333, %v2397
      %v2430 = vadd.f32 %v2334, %v2398
      %v2431 = vadd.f32 %v2335, %v2399
      %v2432 = vadd.f32 %v2336, %v2400
      %v2433 = vadd.f32 %v2337, %v2401
      %v2434 = vadd.f32 %v2338, %v2402
      %v2435 = vadd.f32 %v2339, %v2403
      %v2436 = vadd.f32 %v2340, %v2404
      %v2437 = vadd.f32 %v2341, %v2405
      %v2438 = vadd.f32 %v2342, %v2406
      %v2439 = vadd.f32 %v2343, %v2407
      %v2440 = vadd.f32 %v2344, %v2408
      %v2441 = vadd.f32 %v2345, %v2409
      %v2442 = vadd.f32 %v2346, %v2410
      %v2443 = vadd.f32 %v2347, %v2411
      %v2444 = vadd.f32 %v2348, %v2412
      %v2445 = vadd.f32 %v2349, %v2413
      %v2446 = vld [vmem:[%s5] sm:$0xff]
      %v2447 = vld [vmem:[%s5 + $0x8] sm:$0xff]
      %v2448 = vld [vmem:[%s6] sm:$0x1]
      %v2450 = vlaneseq
      %v2451 = vshrl.u32 %v2450, 7
      %v2452 = vsub.s32 0, %v2451
      %v2453 = vrot.slane %v2448, %v2452
      %v2456 = vsel %vm1508, %v2414, 0
      %v2459 = vsel %vm1508, %v2415, 0
      %v2462 = vsel %vm1508, %v2416, 0
      %v2465 = vsel %vm1508, %v2417, 0
      %v2468 = vsel %vm1508, %v2418, 0
      %v2471 = vsel %vm1508, %v2419, 0
      %v2474 = vsel %vm1508, %v2420, 0
      %v2477 = vsel %vm1508, %v2421, 0
      %v2480 = vsel %vm1508, %v2422, 0
      %v2483 = vsel %vm1508, %v2423, 0
      %v2486 = vsel %vm1508, %v2424, 0
      %v2489 = vsel %vm1508, %v2425, 0
      %v2492 = vsel %vm1508, %v2426, 0
      %v2495 = vsel %vm1508, %v2427, 0
      %v2498 = vsel %vm1508, %v2428, 0
      %v2501 = vsel %vm1508, %v2429, 0
      %v2504 = vsel %vm1508, %v2430, 0
      %v2507 = vsel %vm1508, %v2431, 0
      %v2510 = vsel %vm1508, %v2432, 0
      %v2513 = vsel %vm1508, %v2433, 0
      %v2516 = vsel %vm1508, %v2434, 0
      %v2519 = vsel %vm1508, %v2435, 0
      %v2522 = vsel %vm1508, %v2436, 0
      %v2525 = vsel %vm1508, %v2437, 0
      %v2528 = vsel %vm1508, %v2438, 0
      %v2531 = vsel %vm1508, %v2439, 0
      %v2534 = vsel %vm1508, %v2440, 0
      %v2537 = vsel %vm1508, %v2441, 0
      %v2540 = vsel %vm1508, %v2442, 0
      %v2543 = vsel %vm1508, %v2443, 0
      %v2546 = vsel %vm1508, %v2444, 0
      %v2549 = vsel %vm1508, %v2445, 0
      %2551 = vmatprep.subr.mxu0 0.0
      %2552 = vmatpush1.msra.mxu0 0.0
      %2553 = vmatprep.subr.mxu0 0.0
      %2554 = vmatpush1.msra.mxu0 0.0
      %2555 = vmatprep.subr.mxu0 0.0
      %2556 = vmatpush1.msra.mxu0 0.0
      %2557 = vmatprep.subr.mxu0 0.0
      %2558 = vmatpush1.msra.mxu0 0.0
      %2559 = vmatprep.subr.mxu0 0.0
      %2560 = vmatpush1.msra.mxu0 0.0
      %2561 = vmatprep.subr.mxu0 0.0
      %2562 = vmatpush1.msra.mxu0 0.0
      %2563 = vmatprep.subr.mxu0 0.0
      %2564 = vmatpush1.msra.mxu0 0.0
      %2565 = vmatprep.subr.mxu0 0.0
      %2566 = vmatpush1.msra.mxu0 0.0
      %2567 = vmatprep.subr.mxu0 0.0
      %2568 = vmatpush1.msra.mxu0 0.0
      %2569 = vmatprep.subr.mxu0 0.0
      %2570 = vmatpush1.msra.mxu0 0.0
      %2571 = vmatprep.subr.mxu0 0.0
      %2572 = vmatpush1.msra.mxu0 0.0
      %2573 = vmatprep.subr.mxu0 0.0
      %2574 = vmatpush1.msra.mxu0 0.0
      %2575 = vmatprep.subr.mxu0 0.0
      %2576 = vmatpush1.msra.mxu0 0.0
      %2577 = vmatprep.subr.mxu0 0.0
      %2578 = vmatpush1.msra.mxu0 0.0
      %2579 = vmatprep.subr.mxu0 0.0
      %2580 = vmatpush1.msra.mxu0 %v2447
      %2581 = vmatprep.subr.mxu0 0.0
      %2582 = vmatpush1.msra.mxu0 %v2446
      %2583 = vmatprep.subr.mxu0 0.0
      %2584 = vmatpush2.msra.mxu0 0.0
      %2585 = vmatprep.subr.mxu0 0.0
      %2586 = vmatpush2.msra.mxu0 0.0
      %2587 = vmatprep.subr.mxu0 0.0
      %2588 = vmatpush2.msra.mxu0 0.0
      %2589 = vmatprep.subr.mxu0 0.0
      %2590 = vmatpush2.msra.mxu0 0.0
      %2591 = vmatprep.subr.mxu0 0.0
      %2592 = vmatpush2.msra.mxu0 0.0
      %2593 = vmatprep.subr.mxu0 0.0
      %2594 = vmatpush2.msra.mxu0 0.0
      %2595 = vmatprep.subr.mxu0 0.0
      %2596 = vmatpush2.msra.mxu0 0.0
      %2597 = vmatprep.subr.mxu0 0.0
      %2598 = vmatpush2.msra.mxu0 0.0
      %2599 = vmatprep.subr.mxu0 0.0
      %2600 = vmatpush2.msra.mxu0 0.0
      %2601 = vmatprep.subr.mxu0 0.0
      %2602 = vmatpush2.msra.mxu0 0.0
      %2603 = vmatprep.subr.mxu0 0.0
      %2604 = vmatpush2.msra.mxu0 0.0
      %2605 = vmatprep.subr.mxu0 0.0
      %2606 = vmatpush2.msra.mxu0 0.0
      %2607 = vmatprep.subr.mxu0 0.0
      %2608 = vmatpush2.msra.mxu0 0.0
      %2609 = vmatprep.subr.mxu0 0.0
      %2610 = vmatpush2.msra.mxu0 0.0
      %2611 = vmatprep.subr.mxu0 0.0
      %2612 = vmatpush2.msra.mxu0 0.0
      %2613 = vmatprep.subr.mxu0 0.0
      %2614 = vmatpush2.msra.mxu0 0.0
      %2615 = vmatprep.mubr.f32.mxu0 0.0
      %2616 = vmatmul.mubr.f32.gmra.mxu0 %v2456
      %v2617 = vpop.f32.mrf.mxu0
      %v2618 = vadd.f32 %v2453, %v2617
      %v2619 = vpop.f32.mrf.mxu0
      %2620 = vmatprep.mubr.f32.mxu0 0.0
      %2621 = vmatmul.mubr.f32.gmra.mxu0 %v2459
      %v2622 = vpop.f32.mrf.mxu0
      %v2623 = vadd.f32 %v2453, %v2622
      %v2624 = vpop.f32.mrf.mxu0
      %2625 = vmatprep.mubr.f32.mxu0 0.0
      %2626 = vmatmul.mubr.f32.gmra.mxu0 %v2462
      %v2627 = vpop.f32.mrf.mxu0
      %v2628 = vadd.f32 %v2453, %v2627
      %v2629 = vpop.f32.mrf.mxu0
      %2630 = vmatprep.mubr.f32.mxu0 0.0
      %2631 = vmatmul.mubr.f32.gmra.mxu0 %v2465
      %v2632 = vpop.f32.mrf.mxu0
      %v2633 = vadd.f32 %v2453, %v2632
      %v2634 = vpop.f32.mrf.mxu0
      %2635 = vmatprep.mubr.f32.mxu0 0.0
      %2636 = vmatmul.mubr.f32.gmra.mxu0 %v2468
      %v2637 = vpop.f32.mrf.mxu0
      %v2638 = vadd.f32 %v2453, %v2637
      %v2639 = vpop.f32.mrf.mxu0
      %2640 = vmatprep.mubr.f32.mxu0 0.0
      %2641 = vmatmul.mubr.f32.gmra.mxu0 %v2471
      %v2642 = vpop.f32.mrf.mxu0
      %v2643 = vadd.f32 %v2453, %v2642
      %v2644 = vpop.f32.mrf.mxu0
      %2645 = vmatprep.mubr.f32.mxu0 0.0
      %2646 = vmatmul.mubr.f32.gmra.mxu0 %v2474
      %v2647 = vpop.f32.mrf.mxu0
      %v2648 = vadd.f32 %v2453, %v2647
      %v2649 = vpop.f32.mrf.mxu0
      %2650 = vmatprep.mubr.f32.mxu0 0.0
      %2651 = vmatmul.mubr.f32.gmra.mxu0 %v2477
      %v2652 = vpop.f32.mrf.mxu0
      %v2653 = vadd.f32 %v2453, %v2652
      %v2654 = vpop.f32.mrf.mxu0
      %2655 = vmatprep.mubr.f32.mxu0 0.0
      %2656 = vmatmul.mubr.f32.gmra.mxu0 %v2480
      %v2657 = vpop.f32.mrf.mxu0
      %v2658 = vadd.f32 %v2453, %v2657
      %v2659 = vpop.f32.mrf.mxu0
      %2660 = vmatprep.mubr.f32.mxu0 0.0
      %2661 = vmatmul.mubr.f32.gmra.mxu0 %v2483
      %v2662 = vpop.f32.mrf.mxu0
      %v2663 = vadd.f32 %v2453, %v2662
      %v2664 = vpop.f32.mrf.mxu0
      %2665 = vmatprep.mubr.f32.mxu0 0.0
      %2666 = vmatmul.mubr.f32.gmra.mxu0 %v2486
      %v2667 = vpop.f32.mrf.mxu0
      %v2668 = vadd.f32 %v2453, %v2667
      %v2669 = vpop.f32.mrf.mxu0
      %2670 = vmatprep.mubr.f32.mxu0 0.0
      %2671 = vmatmul.mubr.f32.gmra.mxu0 %v2489
      %v2672 = vpop.f32.mrf.mxu0
      %v2673 = vadd.f32 %v2453, %v2672
      %v2674 = vpop.f32.mrf.mxu0
      %2675 = vmatprep.mubr.f32.mxu0 0.0
      %2676 = vmatmul.mubr.f32.gmra.mxu0 %v2492
      %v2677 = vpop.f32.mrf.mxu0
      %v2678 = vadd.f32 %v2453, %v2677
      %v2679 = vpop.f32.mrf.mxu0
      %2680 = vmatprep.mubr.f32.mxu0 0.0
      %2681 = vmatmul.mubr.f32.gmra.mxu0 %v2495
      %v2682 = vpop.f32.mrf.mxu0
      %v2683 = vadd.f32 %v2453, %v2682
      %v2684 = vpop.f32.mrf.mxu0
      %2685 = vmatprep.mubr.f32.mxu0 0.0
      %2686 = vmatmul.mubr.f32.gmra.mxu0 %v2498
      %v2687 = vpop.f32.mrf.mxu0
      %v2688 = vadd.f32 %v2453, %v2687
      %v2689 = vpop.f32.mrf.mxu0
      %2690 = vmatprep.mubr.f32.mxu0 0.0
      %2691 = vmatmul.mubr.f32.gmra.mxu0 %v2501
      %v2692 = vpop.f32.mrf.mxu0
      %v2693 = vadd.f32 %v2453, %v2692
      %v2694 = vpop.f32.mrf.mxu0
      %2695 = vmatprep.mubr.f32.mxu0 0.0
      %2696 = vmatmul.mubr.f32.gmra.mxu0 %v2504
      %v2697 = vpop.f32.mrf.mxu0
      %v2698 = vadd.f32 %v2453, %v2697
      %v2699 = vpop.f32.mrf.mxu0
      %2700 = vmatprep.mubr.f32.mxu0 0.0
      %2701 = vmatmul.mubr.f32.gmra.mxu0 %v2507
      %v2702 = vpop.f32.mrf.mxu0
      %v2703 = vadd.f32 %v2453, %v2702
      %v2704 = vpop.f32.mrf.mxu0
      %2705 = vmatprep.mubr.f32.mxu0 0.0
      %2706 = vmatmul.mubr.f32.gmra.mxu0 %v2510
      %v2707 = vpop.f32.mrf.mxu0
      %v2708 = vadd.f32 %v2453, %v2707
      %v2709 = vpop.f32.mrf.mxu0
      %2710 = vmatprep.mubr.f32.mxu0 0.0
      %2711 = vmatmul.mubr.f32.gmra.mxu0 %v2513
      %v2712 = vpop.f32.mrf.mxu0
      %v2713 = vadd.f32 %v2453, %v2712
      %v2714 = vpop.f32.mrf.mxu0
      %2715 = vmatprep.mubr.f32.mxu0 0.0
      %2716 = vmatmul.mubr.f32.gmra.mxu0 %v2516
      %v2717 = vpop.f32.mrf.mxu0
      %v2718 = vadd.f32 %v2453, %v2717
      %v2719 = vpop.f32.mrf.mxu0
      %2720 = vmatprep.mubr.f32.mxu0 0.0
      %2721 = vmatmul.mubr.f32.gmra.mxu0 %v2519
      %v2722 = vpop.f32.mrf.mxu0
      %v2723 = vadd.f32 %v2453, %v2722
      %v2724 = vpop.f32.mrf.mxu0
      %2725 = vmatprep.mubr.f32.mxu0 0.0
      %2726 = vmatmul.mubr.f32.gmra.mxu0 %v2522
      %v2727 = vpop.f32.mrf.mxu0
      %v2728 = vadd.f32 %v2453, %v2727
      %v2729 = vpop.f32.mrf.mxu0
      %2730 = vmatprep.mubr.f32.mxu0 0.0
      %2731 = vmatmul.mubr.f32.gmra.mxu0 %v2525
      %v2732 = vpop.f32.mrf.mxu0
      %v2733 = vadd.f32 %v2453, %v2732
      %v2734 = vpop.f32.mrf.mxu0
      %2735 = vmatprep.mubr.f32.mxu0 0.0
      %2736 = vmatmul.mubr.f32.gmra.mxu0 %v2528
      %v2737 = vpop.f32.mrf.mxu0
      %v2738 = vadd.f32 %v2453, %v2737
      %v2739 = vpop.f32.mrf.mxu0
      %2740 = vmatprep.mubr.f32.mxu0 0.0
      %2741 = vmatmul.mubr.f32.gmra.mxu0 %v2531
      %v2742 = vpop.f32.mrf.mxu0
      %v2743 = vadd.f32 %v2453, %v2742
      %v2744 = vpop.f32.mrf.mxu0
      %2745 = vmatprep.mubr.f32.mxu0 0.0
      %2746 = vmatmul.mubr.f32.gmra.mxu0 %v2534
      %v2747 = vpop.f32.mrf.mxu0
      %v2748 = vadd.f32 %v2453, %v2747
      %v2749 = vpop.f32.mrf.mxu0
      %2750 = vmatprep.mubr.f32.mxu0 0.0
      %2751 = vmatmul.mubr.f32.gmra.mxu0 %v2537
      %v2752 = vpop.f32.mrf.mxu0
      %v2753 = vadd.f32 %v2453, %v2752
      %v2754 = vpop.f32.mrf.mxu0
      %2755 = vmatprep.mubr.f32.mxu0 0.0
      %2756 = vmatmul.mubr.f32.gmra.mxu0 %v2540
      %v2757 = vpop.f32.mrf.mxu0
      %v2758 = vadd.f32 %v2453, %v2757
      %v2759 = vpop.f32.mrf.mxu0
      %2760 = vmatprep.mubr.f32.mxu0 0.0
      %2761 = vmatmul.mubr.f32.gmra.mxu0 %v2543
      %v2762 = vpop.f32.mrf.mxu0
      %v2763 = vadd.f32 %v2453, %v2762
      %v2764 = vpop.f32.mrf.mxu0
      %2765 = vmatprep.mubr.f32.mxu0 0.0
      %2766 = vmatmul.mubr.f32.gmra.mxu0 %v2546
      %v2767 = vpop.f32.mrf.mxu0
      %v2768 = vadd.f32 %v2453, %v2767
      %v2769 = vpop.f32.mrf.mxu0
      %2770 = vmatprep.mubr.f32.mxu0 0.0
      %2771 = vmatmul.mubr.f32.gmra.mxu0 %v2549
      %v2772 = vpop.f32.mrf.mxu0
      %v2773 = vadd.f32 %v2453, %v2772
      %v2774 = vpop.f32.mrf.mxu0
      %2775 = vdwg.mxu0
      %v2776 = vmax.f32 %v2618, 0.0
      %v2777 = vmax.f32 %v2623, 0.0
      %v2778 = vmax.f32 %v2628, 0.0
      %v2779 = vmax.f32 %v2633, 0.0
      %v2780 = vmax.f32 %v2638, 0.0
      %v2781 = vmax.f32 %v2643, 0.0
      %v2782 = vmax.f32 %v2648, 0.0
      %v2783 = vmax.f32 %v2653, 0.0
      %v2784 = vmax.f32 %v2658, 0.0
      %v2785 = vmax.f32 %v2663, 0.0
      %v2786 = vmax.f32 %v2668, 0.0
      %v2787 = vmax.f32 %v2673, 0.0
      %v2788 = vmax.f32 %v2678, 0.0
      %v2789 = vmax.f32 %v2683, 0.0
      %v2790 = vmax.f32 %v2688, 0.0
      %v2791 = vmax.f32 %v2693, 0.0
      %v2792 = vmax.f32 %v2698, 0.0
      %v2793 = vmax.f32 %v2703, 0.0
      %v2794 = vmax.f32 %v2708, 0.0
      %v2795 = vmax.f32 %v2713, 0.0
      %v2796 = vmax.f32 %v2718, 0.0
      %v2797 = vmax.f32 %v2723, 0.0
      %v2798 = vmax.f32 %v2728, 0.0
      %v2799 = vmax.f32 %v2733, 0.0
      %v2800 = vmax.f32 %v2738, 0.0
      %v2801 = vmax.f32 %v2743, 0.0
      %v2802 = vmax.f32 %v2748, 0.0
      %v2803 = vmax.f32 %v2753, 0.0
      %v2804 = vmax.f32 %v2758, 0.0
      %v2805 = vmax.f32 %v2763, 0.0
      %v2806 = vmax.f32 %v2768, 0.0
      %v2807 = vmax.f32 %v2773, 0.0
      %v2808 = vld [vmem:[%s7] sm:$0xff]
      %v2809 = vld [vmem:[%s7 + $0x8] sm:$0xff]
      %v2810 = vld [vmem:[%s8] sm:$0x1]
      %v2812 = vlaneseq
      %v2813 = vshrl.u32 %v2812, 7
      %v2814 = vsub.s32 0, %v2813
      %v2815 = vrot.slane %v2810, %v2814
      %v2818 = vsel %vm1508, %v2776, 0
      %v2821 = vsel %vm1508, %v2777, 0
      %v2824 = vsel %vm1508, %v2778, 0
      %v2827 = vsel %vm1508, %v2779, 0
      %v2830 = vsel %vm1508, %v2780, 0
      %v2833 = vsel %vm1508, %v2781, 0
      %v2836 = vsel %vm1508, %v2782, 0
      %v2839 = vsel %vm1508, %v2783, 0
      %v2842 = vsel %vm1508, %v2784, 0
      %v2845 = vsel %vm1508, %v2785, 0
      %v2848 = vsel %vm1508, %v2786, 0
      %v2851 = vsel %vm1508, %v2787, 0
      %v2854 = vsel %vm1508, %v2788, 0
      %v2857 = vsel %vm1508, %v2789, 0
      %v2860 = vsel %vm1508, %v2790, 0
      %v2863 = vsel %vm1508, %v2791, 0
      %v2866 = vsel %vm1508, %v2792, 0
      %v2869 = vsel %vm1508, %v2793, 0
      %v2872 = vsel %vm1508, %v2794, 0
      %v2875 = vsel %vm1508, %v2795, 0
      %v2878 = vsel %vm1508, %v2796, 0
      %v2881 = vsel %vm1508, %v2797, 0
      %v2884 = vsel %vm1508, %v2798, 0
      %v2887 = vsel %vm1508, %v2799, 0
      %v2890 = vsel %vm1508, %v2800, 0
      %v2893 = vsel %vm1508, %v2801, 0
      %v2896 = vsel %vm1508, %v2802, 0
      %v2899 = vsel %vm1508, %v2803, 0
      %v2902 = vsel %vm1508, %v2804, 0
      %v2905 = vsel %vm1508, %v2805, 0
      %v2908 = vsel %vm1508, %v2806, 0
      %v2911 = vsel %vm1508, %v2807, 0
      %2913 = vmatprep.subr.mxu0 0.0
      %2914 = vmatpush1.msra.mxu0 0.0
      %2915 = vmatprep.subr.mxu0 0.0
      %2916 = vmatpush1.msra.mxu0 0.0
      %2917 = vmatprep.subr.mxu0 0.0
      %2918 = vmatpush1.msra.mxu0 0.0
      %2919 = vmatprep.subr.mxu0 0.0
      %2920 = vmatpush1.msra.mxu0 0.0
      %2921 = vmatprep.subr.mxu0 0.0
      %2922 = vmatpush1.msra.mxu0 0.0
      %2923 = vmatprep.subr.mxu0 0.0
      %2924 = vmatpush1.msra.mxu0 0.0
      %2925 = vmatprep.subr.mxu0 0.0
      %2926 = vmatpush1.msra.mxu0 0.0
      %2927 = vmatprep.subr.mxu0 0.0
      %2928 = vmatpush1.msra.mxu0 0.0
      %2929 = vmatprep.subr.mxu0 0.0
      %2930 = vmatpush1.msra.mxu0 0.0
      %2931 = vmatprep.subr.mxu0 0.0
      %2932 = vmatpush1.msra.mxu0 0.0
      %2933 = vmatprep.subr.mxu0 0.0
      %2934 = vmatpush1.msra.mxu0 0.0
      %2935 = vmatprep.subr.mxu0 0.0
      %2936 = vmatpush1.msra.mxu0 0.0
      %2937 = vmatprep.subr.mxu0 0.0
      %2938 = vmatpush1.msra.mxu0 0.0
      %2939 = vmatprep.subr.mxu0 0.0
      %2940 = vmatpush1.msra.mxu0 0.0
      %2941 = vmatprep.subr.mxu0 0.0
      %2942 = vmatpush1.msra.mxu0 %v2809
      %2943 = vmatprep.subr.mxu0 0.0
      %2944 = vmatpush1.msra.mxu0 %v2808
      %2945 = vmatprep.subr.mxu0 0.0
      %2946 = vmatpush2.msra.mxu0 0.0
      %2947 = vmatprep.subr.mxu0 0.0
      %2948 = vmatpush2.msra.mxu0 0.0
      %2949 = vmatprep.subr.mxu0 0.0
      %2950 = vmatpush2.msra.mxu0 0.0
      %2951 = vmatprep.subr.mxu0 0.0
      %2952 = vmatpush2.msra.mxu0 0.0
      %2953 = vmatprep.subr.mxu0 0.0
      %2954 = vmatpush2.msra.mxu0 0.0
      %2955 = vmatprep.subr.mxu0 0.0
      %2956 = vmatpush2.msra.mxu0 0.0
      %2957 = vmatprep.subr.mxu0 0.0
      %2958 = vmatpush2.msra.mxu0 0.0
      %2959 = vmatprep.subr.mxu0 0.0
      %2960 = vmatpush2.msra.mxu0 0.0
      %2961 = vmatprep.subr.mxu0 0.0
      %2962 = vmatpush2.msra.mxu0 0.0
      %2963 = vmatprep.subr.mxu0 0.0
      %2964 = vmatpush2.msra.mxu0 0.0
      %2965 = vmatprep.subr.mxu0 0.0
      %2966 = vmatpush2.msra.mxu0 0.0
      %2967 = vmatprep.subr.mxu0 0.0
      %2968 = vmatpush2.msra.mxu0 0.0
      %2969 = vmatprep.subr.mxu0 0.0
      %2970 = vmatpush2.msra.mxu0 0.0
      %2971 = vmatprep.subr.mxu0 0.0
      %2972 = vmatpush2.msra.mxu0 0.0
      %2973 = vmatprep.subr.mxu0 0.0
      %2974 = vmatpush2.msra.mxu0 0.0
      %2975 = vmatprep.subr.mxu0 0.0
      %2976 = vmatpush2.msra.mxu0 0.0
      %2977 = vmatprep.mubr.f32.mxu0 0.0
      %2978 = vmatmul.mubr.f32.gmra.mxu0 %v2818
      %v2979 = vpop.f32.mrf.mxu0
      %v2980 = vadd.f32 %v2815, %v2979
      %v2981 = vpop.f32.mrf.mxu0
      %2982 = vmatprep.mubr.f32.mxu0 0.0
      %2983 = vmatmul.mubr.f32.gmra.mxu0 %v2821
      %v2984 = vpop.f32.mrf.mxu0
      %v2985 = vadd.f32 %v2815, %v2984
      %v2986 = vpop.f32.mrf.mxu0
      %2987 = vmatprep.mubr.f32.mxu0 0.0
      %2988 = vmatmul.mubr.f32.gmra.mxu0 %v2824
      %v2989 = vpop.f32.mrf.mxu0
      %v2990 = vadd.f32 %v2815, %v2989
      %v2991 = vpop.f32.mrf.mxu0
      %2992 = vmatprep.mubr.f32.mxu0 0.0
      %2993 = vmatmul.mubr.f32.gmra.mxu0 %v2827
      %v2994 = vpop.f32.mrf.mxu0
      %v2995 = vadd.f32 %v2815, %v2994
      %v2996 = vpop.f32.mrf.mxu0
      %2997 = vmatprep.mubr.f32.mxu0 0.0
      %2998 = vmatmul.mubr.f32.gmra.mxu0 %v2830
      %v2999 = vpop.f32.mrf.mxu0
      %v3000 = vadd.f32 %v2815, %v2999
      %v3001 = vpop.f32.mrf.mxu0
      %3002 = vmatprep.mubr.f32.mxu0 0.0
      %3003 = vmatmul.mubr.f32.gmra.mxu0 %v2833
      %v3004 = vpop.f32.mrf.mxu0
      %v3005 = vadd.f32 %v2815, %v3004
      %v3006 = vpop.f32.mrf.mxu0
      %3007 = vmatprep.mubr.f32.mxu0 0.0
      %3008 = vmatmul.mubr.f32.gmra.mxu0 %v2836
      %v3009 = vpop.f32.mrf.mxu0
      %v3010 = vadd.f32 %v2815, %v3009
      %v3011 = vpop.f32.mrf.mxu0
      %3012 = vmatprep.mubr.f32.mxu0 0.0
      %3013 = vmatmul.mubr.f32.gmra.mxu0 %v2839
      %v3014 = vpop.f32.mrf.mxu0
      %v3015 = vadd.f32 %v2815, %v3014
      %v3016 = vpop.f32.mrf.mxu0
      %3017 = vmatprep.mubr.f32.mxu0 0.0
      %3018 = vmatmul.mubr.f32.gmra.mxu0 %v2842
      %v3019 = vpop.f32.mrf.mxu0
      %v3020 = vadd.f32 %v2815, %v3019
      %v3021 = vpop.f32.mrf.mxu0
      %3022 = vmatprep.mubr.f32.mxu0 0.0
      %3023 = vmatmul.mubr.f32.gmra.mxu0 %v2845
      %v3024 = vpop.f32.mrf.mxu0
      %v3025 = vadd.f32 %v2815, %v3024
      %v3026 = vpop.f32.mrf.mxu0
      %3027 = vmatprep.mubr.f32.mxu0 0.0
      %3028 = vmatmul.mubr.f32.gmra.mxu0 %v2848
      %v3029 = vpop.f32.mrf.mxu0
      %v3030 = vadd.f32 %v2815, %v3029
      %v3031 = vpop.f32.mrf.mxu0
      %3032 = vmatprep.mubr.f32.mxu0 0.0
      %3033 = vmatmul.mubr.f32.gmra.mxu0 %v2851
      %v3034 = vpop.f32.mrf.mxu0
      %v3035 = vadd.f32 %v2815, %v3034
      %v3036 = vpop.f32.mrf.mxu0
      %3037 = vmatprep.mubr.f32.mxu0 0.0
      %3038 = vmatmul.mubr.f32.gmra.mxu0 %v2854
      %v3039 = vpop.f32.mrf.mxu0
      %v3040 = vadd.f32 %v2815, %v3039
      %v3041 = vpop.f32.mrf.mxu0
      %3042 = vmatprep.mubr.f32.mxu0 0.0
      %3043 = vmatmul.mubr.f32.gmra.mxu0 %v2857
      %v3044 = vpop.f32.mrf.mxu0
      %v3045 = vadd.f32 %v2815, %v3044
      %v3046 = vpop.f32.mrf.mxu0
      %3047 = vmatprep.mubr.f32.mxu0 0.0
      %3048 = vmatmul.mubr.f32.gmra.mxu0 %v2860
      %v3049 = vpop.f32.mrf.mxu0
      %v3050 = vadd.f32 %v2815, %v3049
      %v3051 = vpop.f32.mrf.mxu0
      %3052 = vmatprep.mubr.f32.mxu0 0.0
      %3053 = vmatmul.mubr.f32.gmra.mxu0 %v2863
      %v3054 = vpop.f32.mrf.mxu0
      %v3055 = vadd.f32 %v2815, %v3054
      %v3056 = vpop.f32.mrf.mxu0
      %3057 = vmatprep.mubr.f32.mxu0 0.0
      %3058 = vmatmul.mubr.f32.gmra.mxu0 %v2866
      %v3059 = vpop.f32.mrf.mxu0
      %v3060 = vadd.f32 %v2815, %v3059
      %v3061 = vpop.f32.mrf.mxu0
      %3062 = vmatprep.mubr.f32.mxu0 0.0
      %3063 = vmatmul.mubr.f32.gmra.mxu0 %v2869
      %v3064 = vpop.f32.mrf.mxu0
      %v3065 = vadd.f32 %v2815, %v3064
      %v3066 = vpop.f32.mrf.mxu0
      %3067 = vmatprep.mubr.f32.mxu0 0.0
      %3068 = vmatmul.mubr.f32.gmra.mxu0 %v2872
      %v3069 = vpop.f32.mrf.mxu0
      %v3070 = vadd.f32 %v2815, %v3069
      %v3071 = vpop.f32.mrf.mxu0
      %3072 = vmatprep.mubr.f32.mxu0 0.0
      %3073 = vmatmul.mubr.f32.gmra.mxu0 %v2875
      %v3074 = vpop.f32.mrf.mxu0
      %v3075 = vadd.f32 %v2815, %v3074
      %v3076 = vpop.f32.mrf.mxu0
      %3077 = vmatprep.mubr.f32.mxu0 0.0
      %3078 = vmatmul.mubr.f32.gmra.mxu0 %v2878
      %v3079 = vpop.f32.mrf.mxu0
      %v3080 = vadd.f32 %v2815, %v3079
      %v3081 = vpop.f32.mrf.mxu0
      %3082 = vmatprep.mubr.f32.mxu0 0.0
      %3083 = vmatmul.mubr.f32.gmra.mxu0 %v2881
      %v3084 = vpop.f32.mrf.mxu0
      %v3085 = vadd.f32 %v2815, %v3084
      %v3086 = vpop.f32.mrf.mxu0
      %3087 = vmatprep.mubr.f32.mxu0 0.0
      %3088 = vmatmul.mubr.f32.gmra.mxu0 %v2884
      %v3089 = vpop.f32.mrf.mxu0
      %v3090 = vadd.f32 %v2815, %v3089
      %v3091 = vpop.f32.mrf.mxu0
      %3092 = vmatprep.mubr.f32.mxu0 0.0
      %3093 = vmatmul.mubr.f32.gmra.mxu0 %v2887
      %v3094 = vpop.f32.mrf.mxu0
      %v3095 = vadd.f32 %v2815, %v3094
      %v3096 = vpop.f32.mrf.mxu0
      %3097 = vmatprep.mubr.f32.mxu0 0.0
      %3098 = vmatmul.mubr.f32.gmra.mxu0 %v2890
      %v3099 = vpop.f32.mrf.mxu0
      %v3100 = vadd.f32 %v2815, %v3099
      %v3101 = vpop.f32.mrf.mxu0
      %3102 = vmatprep.mubr.f32.mxu0 0.0
      %3103 = vmatmul.mubr.f32.gmra.mxu0 %v2893
      %v3104 = vpop.f32.mrf.mxu0
      %v3105 = vadd.f32 %v2815, %v3104
      %v3106 = vpop.f32.mrf.mxu0
      %3107 = vmatprep.mubr.f32.mxu0 0.0
      %3108 = vmatmul.mubr.f32.gmra.mxu0 %v2896
      %v3109 = vpop.f32.mrf.mxu0
      %v3110 = vadd.f32 %v2815, %v3109
      %v3111 = vpop.f32.mrf.mxu0
      %3112 = vmatprep.mubr.f32.mxu0 0.0
      %3113 = vmatmul.mubr.f32.gmra.mxu0 %v2899
      %v3114 = vpop.f32.mrf.mxu0
      %v3115 = vadd.f32 %v2815, %v3114
      %v3116 = vpop.f32.mrf.mxu0
      %3117 = vmatprep.mubr.f32.mxu0 0.0
      %3118 = vmatmul.mubr.f32.gmra.mxu0 %v2902
      %v3119 = vpop.f32.mrf.mxu0
      %v3120 = vadd.f32 %v2815, %v3119
      %v3121 = vpop.f32.mrf.mxu0
      %3122 = vmatprep.mubr.f32.mxu0 0.0
      %3123 = vmatmul.mubr.f32.gmra.mxu0 %v2905
      %v3124 = vpop.f32.mrf.mxu0
      %v3125 = vadd.f32 %v2815, %v3124
      %v3126 = vpop.f32.mrf.mxu0
      %3127 = vmatprep.mubr.f32.mxu0 0.0
      %3128 = vmatmul.mubr.f32.gmra.mxu0 %v2908
      %v3129 = vpop.f32.mrf.mxu0
      %v3130 = vadd.f32 %v2815, %v3129
      %v3131 = vpop.f32.mrf.mxu0
      %3132 = vmatprep.mubr.f32.mxu0 0.0
      %3133 = vmatmul.mubr.f32.gmra.mxu0 %v2911
      %v3134 = vpop.f32.mrf.mxu0
      %v3135 = vadd.f32 %v2815, %v3134
      %v3136 = vpop.f32.mrf.mxu0
      %3137 = vdwg.mxu0
      %3138 = vst.msk [vmem:[%s414] sm:$0xff] %vm1508, %v2980
      %3139 = vst.msk [vmem:[%s414 + $0x8] sm:$0xff] %vm1508, %v2985
      %3140 = vst.msk [vmem:[%s414 + $0x10] sm:$0xff] %vm1508, %v2990
      %3141 = vst.msk [vmem:[%s414 + $0x18] sm:$0xff] %vm1508, %v2995
      %3142 = vst.msk [vmem:[%s414 + $0x20] sm:$0xff] %vm1508, %v3000
      %3143 = vst.msk [vmem:[%s414 + $0x28] sm:$0xff] %vm1508, %v3005
      %3144 = vst.msk [vmem:[%s414 + $0x30] sm:$0xff] %vm1508, %v3010
      %3145 = vst.msk [vmem:[%s414 + $0x38] sm:$0xff] %vm1508, %v3015
      %3146 = vst.msk [vmem:[%s414 + $0x40] sm:$0xff] %vm1508, %v3020
      %3147 = vst.msk [vmem:[%s414 + $0x48] sm:$0xff] %vm1508, %v3025
      %3148 = vst.msk [vmem:[%s414 + $0x50] sm:$0xff] %vm1508, %v3030
      %3149 = vst.msk [vmem:[%s414 + $0x58] sm:$0xff] %vm1508, %v3035
      %3150 = vst.msk [vmem:[%s414 + $0x60] sm:$0xff] %vm1508, %v3040
      %3151 = vst.msk [vmem:[%s414 + $0x68] sm:$0xff] %vm1508, %v3045
      %3152 = vst.msk [vmem:[%s414 + $0x70] sm:$0xff] %vm1508, %v3050
      %3153 = vst.msk [vmem:[%s414 + $0x78] sm:$0xff] %vm1508, %v3055
      %3154 = vst.msk [vmem:[%s414 + $0x80] sm:$0xff] %vm1508, %v3060
      %3155 = vst.msk [vmem:[%s414 + $0x88] sm:$0xff] %vm1508, %v3065
      %3156 = vst.msk [vmem:[%s414 + $0x90] sm:$0xff] %vm1508, %v3070
      %3157 = vst.msk [vmem:[%s414 + $0x98] sm:$0xff] %vm1508, %v3075
      %3158 = vst.msk [vmem:[%s414 + $0xa0] sm:$0xff] %vm1508, %v3080
      %3159 = vst.msk [vmem:[%s414 + $0xa8] sm:$0xff] %vm1508, %v3085
      %3160 = vst.msk [vmem:[%s414 + $0xb0] sm:$0xff] %vm1508, %v3090
      %3161 = vst.msk [vmem:[%s414 + $0xb8] sm:$0xff] %vm1508, %v3095
      %3162 = vst.msk [vmem:[%s414 + $0xc0] sm:$0xff] %vm1508, %v3100
      %3163 = vst.msk [vmem:[%s414 + $0xc8] sm:$0xff] %vm1508, %v3105
      %3164 = vst.msk [vmem:[%s414 + $0xd0] sm:$0xff] %vm1508, %v3110
      %3165 = vst.msk [vmem:[%s414 + $0xd8] sm:$0xff] %vm1508, %v3115
      %3166 = vst.msk [vmem:[%s414 + $0xe0] sm:$0xff] %vm1508, %v3120
      %3167 = vst.msk [vmem:[%s414 + $0xe8] sm:$0xff] %vm1508, %v3125
      %3168 = vst.msk [vmem:[%s414 + $0xf0] sm:$0xff] %vm1508, %v3130
      %3169 = vst.msk [vmem:[%s414 + $0xf8] sm:$0xff] %vm1508, %v3135
      %s3170 = smul.u32 16, %s25
      %p3171 = scmp.lt.s32.totalorder %s24, 1
      %s3172 = scalar_select %p3171, %s24, 1
      %p3173 = scmp.lt.s32.totalorder %s3170, 15
      %s3174 = scalar_select %p3173, %s3170, 15
      %s3175 = smul.addr %s3174, 2
      %s3176 = smul.addr %s3172, 32
      %s3177 = sadd.s32 %s3175, %s3176
      %s3178 = smul.addr %s3177, 8
      %s3179 = scalar_lea.vmem %s9, %s3178
      // Predicated region
      $region57: #{st_att_block.5} parent=55 // pred_check
        %p3180 = pneg %p255
      $region58: #{st_att_block.5} parent=55 // pred_check_branch
        %3182 = sbr.rel (%p3180) target = $region60
      $region59: #{st_att_block.5} parent=55 // pred_region
        %s3183 = smul.u32 16, %s25
      $region60: #{st_att_block.5} parent=55 // pred_fallthru
        _
    $region56: #{st_att_block.5} parent=5 // pred_fallthru
      _
    %p3184 = scmp.le.s32.totalorder 2, %s15
    // Predicated region
    $region61: #{st_att_block.5} parent=5 // pred_check
      %p3185 = pneg %p3184
    $region62: #{st_att_block.5} parent=5 // pred_check_branch
      %3187 = sbr.rel (%p3185) target = $region64
    $region63: #{st_att_block.5} parent=5 // pred_region
      %s3188 = ssub.s32 %s15, 2
      // Predicated region
      $region65: #{st_att_block.5} parent=63 // pred_check
        %p3189 = pneg %p261
      $region66: #{st_att_block.5} parent=63 // pred_check_branch
        %3191 = sbr.rel (%p3189) target = $region68
      $region67: #{st_att_block.5} parent=63 // pred_region
        %s3192 = smul.u32 16, %s27
        %p3193 = scmp.lt.s32.totalorder %s26, 1
        %s3194 = scalar_select %p3193, %s26, 1
        %p3195 = scmp.lt.s32.totalorder %s3192, 15
        %s3196 = scalar_select %p3195, %s3192, 15
        %s3197 = smul.addr %s3196, 2
        %s3198 = smul.addr %s3194, 32
        %s3199 = sadd.s32 %s3197, %s3198
        %s3200 = smul.addr %s3199, 8
        %s3201 = scalar_lea.vmem %s9, %s3200
      $region68: #{st_att_block.5} parent=63 // pred_fallthru
        _
    $region64: #{st_att_block.5} parent=5 // pred_fallthru
      _
  $region6: #{st_att_block.5} parent=0 // loop_footer
    %s19 = sadd.s32 1, %s15
  $region7: #{st_att_block.5} parent=0 // loop_footer_branch
    %14 = sbr.rel target = $region3
  $region8: #{st_att_block.5} parent=0 // loop_exit
    _

// kernel: st_att_block.4
$region0: #{st_att_block.4}
  #allocation0 [shape = 'u32[]', space=smem, size = 0x4, offset = 0x4, fixed_abs, tag = 'smem constant byte address 0x4 - core index']
  #allocation1 [shape = 'u32[144,128]{1,0:T(1,128)}', space=vmem, size = 0x12000, scoped, tag = 'internal scratch']
  %s0 = inlined_call_operand.vmem [shape: f32[2,16,16,16], index: 0, kind: input, shape index: {}]
  %s1 = inlined_call_operand.vmem [shape: f32[2,16,16,16], index: 1, kind: input, shape index: {}]
  %s2 = inlined_call_operand.vmem [shape: f32[32,48], index: 2, kind: input, shape index: {}]
  %s3 = inlined_call_operand.vmem [shape: f32[1,48], index: 3, kind: input, shape index: {}]
  %s4 = inlined_call_operand.vmem [shape: f32[16,16], index: 4, kind: input, shape index: {}]
  %s5 = inlined_call_operand.vmem [shape: f32[1,16], index: 5, kind: input, shape index: {}]
  %s6 = inlined_call_operand.vmem [shape: f32[16,16], index: 6, kind: input, shape index: {}]
  %s7 = inlined_call_operand.vmem [shape: f32[1,16], index: 7, kind: input, shape index: {}]
  %s8 = inlined_call_operand.vmem [shape: f32[2,16,16,16], index: 8, kind: output, shape index: {}]
  %s9 = sld [smem:[#allocation0]]
  $region65: #{st_att_block.4} parent=0
    _
  %s11 = ssub.s32 1, %s9
  %s12 = scalar_select 0, %s11, %s9
  loop: start=0, step=1, limit=4
  $region2: #{st_att_block.4} parent=0 // loop_pre_header
    _
  $region3: #{st_att_block.4} parent=0 // loop_header
    %s14 = sphi 0, %s18
    %p15 = scmp.ge.s32.totalorder %s14, 4
    %s21 = sphi 0, %s33
    %s22 = sphi 0, %s29
    %s23 = sphi 0, %s21
    %s24 = sphi 0, %s22
    %s25 = sphi 0, %s23
    %s26 = sphi 0, %s24
    %s38 = sphi 0, %s40
    %s41 = sphi 0, %s38
    %s42 = sphi 0, %s41
    %s58 = sphi 0, %s42
    %s66 = sphi 0, %s68
    %s69 = sphi 0, %s66
    %s70 = sphi 0, %s69
    %s86 = sphi 0, %s70
    %s90 = sphi 0, %s90
    %s92 = sphi 0, %s90
    %s93 = sphi 0, %s92
    %s107 = sphi 0, %s93
    %s111 = sphi 0, %s111
    %s113 = sphi 0, %s111
    %s114 = sphi 0, %s113
    %s128 = sphi 0, %s114
    %s132 = sphi 0, %s132
    %s134 = sphi 0, %s132
    %s135 = sphi 0, %s134
    %s149 = sphi 0, %s135
    %s153 = sphi 0, %s153
    %s155 = sphi 0, %s153
    %s156 = sphi 0, %s155
    %s170 = sphi 0, %s156
    %s174 = sphi 0, %s174
    %s176 = sphi 0, %s174
    %s177 = sphi 0, %s176
    %s191 = sphi 0, %s177
    %s195 = sphi 0, %s195
    %s197 = sphi 0, %s195
    %s198 = sphi 0, %s197
    %s212 = sphi 0, %s198
    %s220 = sphi 0, %s222
    %s223 = sphi 0, %s220
    %s224 = sphi 0, %s223
    %s240 = sphi 0, %s224
  $region4: #{st_att_block.4} parent=0 // loop_header_branch
    %17 = sbr.rel (%p15) target = $region8
  $region5: #{st_att_block.4} parent=0 // loop_body
    %s19 = ssub.s32 %s14, 1
    %s20 = ssub.s32 %s14, 2
    %s27 = sadd.s32 1, %s22
    %p28 = scmp.ge.s32.totalorder %s27, 1
    %s29 = scalar_select %p28, 0, %s27
    %s30 = sadd.s32 1, %s21
    %s31 = scalar_select %p28, %s30, %s21
    %p32 = scmp.ge.s32.totalorder %s31, 2
    %s33 = scalar_select %p32, 0, %s31
    %s34 = ssub.s32 %s21, %s33
    %s35 = ssub.s32 %s22, %s29
    %s36 = sor.u32 %s34, %s35
    %p37 = scmp.eq.s32.totalorder %s36, 0
    %s39 = sadd.s32 %s38, 1
    %s40 = scalar_select %p37, %s38, %s39
    %p43 = pneg %p37
    %p44 = scmp.eq.s32.totalorder %s14, 1
    %p45 = por %p43, %p44
    %p46 = scmp.ne.s32.totalorder %s38, %s41
    %p47 = scmp.eq.s32.totalorder %s14, 0
    %p48 = por %p46, %p47
    %p49 = scmp.ne.s32.totalorder %s38, %s41
    %p50 = scmp.eq.s32.totalorder %s19, 1
    %p51 = por %p49, %p50
    %p52 = scmp.ne.s32.totalorder %s41, %s42
    %p53 = scmp.eq.s32.totalorder %s19, 0
    %p54 = por %p52, %p53
    %p55 = scmp.ne.s32.totalorder %s41, %s42
    %p56 = scmp.eq.s32.totalorder %s20, 1
    %p57 = por %p55, %p56
    %p59 = scmp.ne.s32.totalorder %s42, %s58
    %p60 = scmp.eq.s32.totalorder %s20, 0
    %p61 = por %p59, %p60
    %s62 = ssub.s32 %s21, %s33
    %s63 = ssub.s32 %s22, %s29
    %s64 = sor.u32 %s62, %s63
    %p65 = scmp.eq.s32.totalorder %s64, 0
    %s67 = sadd.s32 %s66, 1
    %s68 = scalar_select %p65, %s66, %s67
    %p71 = pneg %p65
    %p72 = scmp.eq.s32.totalorder %s14, 1
    %p73 = por %p71, %p72
    %p74 = scmp.ne.s32.totalorder %s66, %s69
    %p75 = scmp.eq.s32.totalorder %s14, 0
    %p76 = por %p74, %p75
    %p77 = scmp.ne.s32.totalorder %s66, %s69
    %p78 = scmp.eq.s32.totalorder %s19, 1
    %p79 = por %p77, %p78
    %p80 = scmp.ne.s32.totalorder %s69, %s70
    %p81 = scmp.eq.s32.totalorder %s19, 0
    %p82 = por %p80, %p81
    %p83 = scmp.ne.s32.totalorder %s69, %s70
    %p84 = scmp.eq.s32.totalorder %s20, 1
    %p85 = por %p83, %p84
    %p87 = scmp.ne.s32.totalorder %s70, %s86
    %p88 = scmp.eq.s32.totalorder %s20, 0
    %p89 = por %p87, %p88
    %s91 = sadd.s32 %s90, 1
    %p94 = scmp.eq.s32.totalorder %s14, 1
    %p95 = scmp.ne.s32.totalorder %s90, %s92
    %p96 = scmp.eq.s32.totalorder %s14, 0
    %p97 = por %p95, %p96
    %p98 = scmp.ne.s32.totalorder %s90, %s92
    %p99 = scmp.eq.s32.totalorder %s19, 1
    %p100 = por %p98, %p99
    %p101 = scmp.ne.s32.totalorder %s92, %s93
    %p102 = scmp.eq.s32.totalorder %s19, 0
    %p103 = por %p101, %p102
    %p104 = scmp.ne.s32.totalorder %s92, %s93
    %p105 = scmp.eq.s32.totalorder %s20, 1
    %p106 = por %p104, %p105
    %p108 = scmp.ne.s32.totalorder %s93, %s107
    %p109 = scmp.eq.s32.totalorder %s20, 0
    %p110 = por %p108, %p109
    %s112 = sadd.s32 %s111, 1
    %p115 = scmp.eq.s32.totalorder %s14, 1
    %p116 = scmp.ne.s32.totalorder %s111, %s113
    %p117 = scmp.eq.s32.totalorder %s14, 0
    %p118 = por %p116, %p117
    %p119 = scmp.ne.s32.totalorder %s111, %s113
    %p120 = scmp.eq.s32.totalorder %s19, 1
    %p121 = por %p119, %p120
    %p122 = scmp.ne.s32.totalorder %s113, %s114
    %p123 = scmp.eq.s32.totalorder %s19, 0
    %p124 = por %p122, %p123
    %p125 = scmp.ne.s32.totalorder %s113, %s114
    %p126 = scmp.eq.s32.totalorder %s20, 1
    %p127 = por %p125, %p126
    %p129 = scmp.ne.s32.totalorder %s114, %s128
    %p130 = scmp.eq.s32.totalorder %s20, 0
    %p131 = por %p129, %p130
    %s133 = sadd.s32 %s132, 1
    %p136 = scmp.eq.s32.totalorder %s14, 1
    %p137 = scmp.ne.s32.totalorder %s132, %s134
    %p138 = scmp.eq.s32.totalorder %s14, 0
    %p139 = por %p137, %p138
    %p140 = scmp.ne.s32.totalorder %s132, %s134
    %p141 = scmp.eq.s32.totalorder %s19, 1
    %p142 = por %p140, %p141
    %p143 = scmp.ne.s32.totalorder %s134, %s135
    %p144 = scmp.eq.s32.totalorder %s19, 0
    %p145 = por %p143, %p144
    %p146 = scmp.ne.s32.totalorder %s134, %s135
    %p147 = scmp.eq.s32.totalorder %s20, 1
    %p148 = por %p146, %p147
    %p150 = scmp.ne.s32.totalorder %s135, %s149
    %p151 = scmp.eq.s32.totalorder %s20, 0
    %p152 = por %p150, %p151
    %s154 = sadd.s32 %s153, 1
    %p157 = scmp.eq.s32.totalorder %s14, 1
    %p158 = scmp.ne.s32.totalorder %s153, %s155
    %p159 = scmp.eq.s32.totalorder %s14, 0
    %p160 = por %p158, %p159
    %p161 = scmp.ne.s32.totalorder %s153, %s155
    %p162 = scmp.eq.s32.totalorder %s19, 1
    %p163 = por %p161, %p162
    %p164 = scmp.ne.s32.totalorder %s155, %s156
    %p165 = scmp.eq.s32.totalorder %s19, 0
    %p166 = por %p164, %p165
    %p167 = scmp.ne.s32.totalorder %s155, %s156
    %p168 = scmp.eq.s32.totalorder %s20, 1
    %p169 = por %p167, %p168
    %p171 = scmp.ne.s32.totalorder %s156, %s170
    %p172 = scmp.eq.s32.totalorder %s20, 0
    %p173 = por %p171, %p172
    %s175 = sadd.s32 %s174, 1
    %p178 = scmp.eq.s32.totalorder %s14, 1
    %p179 = scmp.ne.s32.totalorder %s174, %s176
    %p180 = scmp.eq.s32.totalorder %s14, 0
    %p181 = por %p179, %p180
    %p182 = scmp.ne.s32.totalorder %s174, %s176
    %p183 = scmp.eq.s32.totalorder %s19, 1
    %p184 = por %p182, %p183
    %p185 = scmp.ne.s32.totalorder %s176, %s177
    %p186 = scmp.eq.s32.totalorder %s19, 0
    %p187 = por %p185, %p186
    %p188 = scmp.ne.s32.totalorder %s176, %s177
    %p189 = scmp.eq.s32.totalorder %s20, 1
    %p190 = por %p188, %p189
    %p192 = scmp.ne.s32.totalorder %s177, %s191
    %p193 = scmp.eq.s32.totalorder %s20, 0
    %p194 = por %p192, %p193
    %s196 = sadd.s32 %s195, 1
    %p199 = scmp.eq.s32.totalorder %s14, 1
    %p200 = scmp.ne.s32.totalorder %s195, %s197
    %p201 = scmp.eq.s32.totalorder %s14, 0
    %p202 = por %p200, %p201
    %p203 = scmp.ne.s32.totalorder %s195, %s197
    %p204 = scmp.eq.s32.totalorder %s19, 1
    %p205 = por %p203, %p204
    %p206 = scmp.ne.s32.totalorder %s197, %s198
    %p207 = scmp.eq.s32.totalorder %s19, 0
    %p208 = por %p206, %p207
    %p209 = scmp.ne.s32.totalorder %s197, %s198
    %p210 = scmp.eq.s32.totalorder %s20, 1
    %p211 = por %p209, %p210
    %p213 = scmp.ne.s32.totalorder %s198, %s212
    %p214 = scmp.eq.s32.totalorder %s20, 0
    %p215 = por %p213, %p214
    %s216 = ssub.s32 %s21, %s33
    %s217 = ssub.s32 %s22, %s29
    %s218 = sor.u32 %s216, %s217
    %p219 = scmp.eq.s32.totalorder %s218, 0
    %s221 = sadd.s32 %s220, 1
    %s222 = scalar_select %p219, %s220, %s221
    %p225 = pneg %p219
    %p226 = scmp.eq.s32.totalorder %s14, 1
    %p227 = por %p225, %p226
    %p228 = scmp.ne.s32.totalorder %s220, %s223
    %p229 = scmp.eq.s32.totalorder %s14, 0
    %p230 = por %p228, %p229
    %p231 = scmp.ne.s32.totalorder %s220, %s223
    %p232 = scmp.eq.s32.totalorder %s19, 1
    %p233 = por %p231, %p232
    %p234 = scmp.ne.s32.totalorder %s223, %s224
    %p235 = scmp.eq.s32.totalorder %s19, 0
    %p236 = por %p234, %p235
    %p237 = scmp.ne.s32.totalorder %s223, %s224
    %p238 = scmp.eq.s32.totalorder %s20, 1
    %p239 = por %p237, %p238
    %p241 = scmp.ne.s32.totalorder %s224, %s240
    %p242 = scmp.eq.s32.totalorder %s20, 0
    %p243 = por %p241, %p242
    %p244 = scmp.le.s32.totalorder 1, %s14
    %p245 = scmp.lt.s32.totalorder %s14, 3
    %p246 = pnand %p244, %p245
    %p247 = pneg %p246
    // Predicated region
    $region9: #{st_att_block.4} parent=5 // pred_check
      _
    $region10: #{st_att_block.4} parent=5 // pred_check_branch
      %249 = sbr.rel (%p246) target = $region12
    $region11: #{st_att_block.4} parent=5 // pred_region
      %s250 = ssub.s32 %s14, 1
      // Predicated region
      $region13: #{st_att_block.4} parent=11 // pred_check
        %p251 = pneg %p103
      $region14: #{st_att_block.4} parent=11 // pred_check_branch
        %253 = sbr.rel (%p251) target = $region16
      $region15: #{st_att_block.4} parent=11 // pred_region
        _
      $region16: #{st_att_block.4} parent=11 // pred_fallthru
        _
      // Predicated region
      $region17: #{st_att_block.4} parent=11 // pred_check
        %p254 = pneg %p124
      $region18: #{st_att_block.4} parent=11 // pred_check_branch
        %256 = sbr.rel (%p254) target = $region20
      $region19: #{st_att_block.4} parent=11 // pred_region
        _
      $region20: #{st_att_block.4} parent=11 // pred_fallthru
        _
      // Predicated region
      $region21: #{st_att_block.4} parent=11 // pred_check
        %p257 = pneg %p145
      $region22: #{st_att_block.4} parent=11 // pred_check_branch
        %259 = sbr.rel (%p257) target = $region24
      $region23: #{st_att_block.4} parent=11 // pred_region
        _
      $region24: #{st_att_block.4} parent=11 // pred_fallthru
        _
      // Predicated region
      $region25: #{st_att_block.4} parent=11 // pred_check
        %p260 = pneg %p166
      $region26: #{st_att_block.4} parent=11 // pred_check_branch
        %262 = sbr.rel (%p260) target = $region28
      $region27: #{st_att_block.4} parent=11 // pred_region
        _
      $region28: #{st_att_block.4} parent=11 // pred_fallthru
        _
      // Predicated region
      $region29: #{st_att_block.4} parent=11 // pred_check
        %p263 = pneg %p187
      $region30: #{st_att_block.4} parent=11 // pred_check_branch
        %265 = sbr.rel (%p263) target = $region32
      $region31: #{st_att_block.4} parent=11 // pred_region
        _
      $region32: #{st_att_block.4} parent=11 // pred_fallthru
        _
      // Predicated region
      $region33: #{st_att_block.4} parent=11 // pred_check
        %p266 = pneg %p208
      $region34: #{st_att_block.4} parent=11 // pred_check_branch
        %268 = sbr.rel (%p266) target = $region36
      $region35: #{st_att_block.4} parent=11 // pred_region
        _
      $region36: #{st_att_block.4} parent=11 // pred_fallthru
        _
    $region12: #{st_att_block.4} parent=5 // pred_fallthru
      _
    %p269 = scmp.lt.s32.totalorder %s14, 2
    // Predicated region
    $region37: #{st_att_block.4} parent=5 // pred_check
      %p270 = pneg %p269
    $region38: #{st_att_block.4} parent=5 // pred_check_branch
      %272 = sbr.rel (%p270) target = $region40
    $region39: #{st_att_block.4} parent=5 // pred_region
      // Predicated region
      $region41: #{st_att_block.4} parent=39 // pred_check
        %p273 = pneg %p48
      $region42: #{st_att_block.4} parent=39 // pred_check_branch
        %275 = sbr.rel (%p273) target = $region44
      $region43: #{st_att_block.4} parent=39 // pred_region
        %s276 = smul.u32 16, %s22
        %p277 = scmp.lt.s32.totalorder %s21, 1
        %s278 = scalar_select %p277, %s21, 1
        %p279 = scmp.lt.s32.totalorder %s276, 15
        %s280 = scalar_select %p279, %s276, 15
        %s281 = smul.addr %s280, 2
        %s282 = smul.addr %s278, 32
        %s283 = sadd.s32 %s281, %s282
        %s284 = smul.addr %s283, 8
        %s285 = scalar_lea.vmem %s0, %s284
        %s286 = smul.u32 16, %s22
      $region44: #{st_att_block.4} parent=39 // pred_fallthru
        _
      // Predicated region
      $region45: #{st_att_block.4} parent=39 // pred_check
        %p287 = pneg %p76
      $region46: #{st_att_block.4} parent=39 // pred_check_branch
        %289 = sbr.rel (%p287) target = $region48
      $region47: #{st_att_block.4} parent=39 // pred_region
        %s290 = smul.u32 16, %s22
        %p291 = scmp.lt.s32.totalorder %s21, 1
        %s292 = scalar_select %p291, %s21, 1
        %p293 = scmp.lt.s32.totalorder %s290, 15
        %s294 = scalar_select %p293, %s290, 15
        %s295 = smul.addr %s294, 2
        %s296 = smul.addr %s292, 32
        %s297 = sadd.s32 %s295, %s296
        %s298 = smul.addr %s297, 8
        %s299 = scalar_lea.vmem %s1, %s298
        %s300 = smul.u32 16, %s22
      $region48: #{st_att_block.4} parent=39 // pred_fallthru
        _
    $region40: #{st_att_block.4} parent=5 // pred_fallthru
      _
    %p301 = scmp.le.s32.totalorder 1, %s14
    %p302 = scmp.lt.s32.totalorder %s14, 3
    %p303 = pnand %p301, %p302
    %p304 = pneg %p303
    // Predicated region
    $region49: #{st_att_block.4} parent=5 // pred_check
      _
    $region50: #{st_att_block.4} parent=5 // pred_check_branch
      %306 = sbr.rel (%p303) target = $region52
    $region51: #{st_att_block.4} parent=5 // pred_region
      %s307 = ssub.s32 %s14, 1
      %s308 = smul.u32 16, %s24
      %p309 = scmp.lt.s32.totalorder %s23, 1
      %s310 = scalar_select %p309, %s23, 1
      %p311 = scmp.lt.s32.totalorder %s308, 15
      %s312 = scalar_select %p311, %s308, 15
      %s313 = smul.addr %s312, 2
      %s314 = smul.addr %s310, 32
      %s315 = sadd.s32 %s313, %s314
      %s316 = smul.addr %s315, 8
      %s317 = scalar_lea.vmem %s0, %s316
      %p318 = pneg %p54
      %p319 = pneg %p51
      %s320 = smul.u32 16, %s24
      %p321 = scmp.lt.s32.totalorder %s23, 1
      %s322 = scalar_select %p321, %s23, 1
      %p323 = scmp.lt.s32.totalorder %s320, 15
      %s324 = scalar_select %p323, %s320, 15
      %s325 = smul.addr %s324, 2
      %s326 = smul.addr %s322, 32
      %s327 = sadd.s32 %s325, %s326
      %s328 = smul.addr %s327, 8
      %s329 = scalar_lea.vmem %s1, %s328
      %p330 = pneg %p82
      %p331 = pneg %p79
      %p332 = pneg %p103
      %p333 = pneg %p100
      %p334 = pneg %p124
      %p335 = pneg %p121
      %p336 = pneg %p145
      %p337 = pneg %p142
      %p338 = pneg %p166
      %p339 = pneg %p163
      %p340 = pneg %p187
      %p341 = pneg %p184
      %p342 = pneg %p208
      %p343 = pneg %p205
      %p344 = pneg %p236
      %p345 = pneg %p233
      %s346 = smul.u32 16, %s24
      %p347 = scmp.lt.s32.totalorder %s23, 1
      %s348 = scalar_select %p347, %s23, 1
      %p349 = scmp.lt.s32.totalorder %s346, 15
      %s350 = scalar_select %p349, %s346, 15
      %s351 = smul.addr %s350, 2
      %s352 = smul.addr %s348, 32
      %s353 = sadd.s32 %s351, %s352
      %s354 = smul.addr %s353, 8
      %s355 = scalar_lea.vmem %s8, %s354
      %s356 = smul.u32 16, %s24
      %p357 = scmp.lt.s32.totalorder %s23, 1
      %s358 = scalar_select %p357, %s23, 1
      %p359 = scmp.lt.s32.totalorder %s356, 15
      %s360 = scalar_select %p359, %s356, 15
      %s361 = smul.addr %s360, 2
      %s362 = smul.addr %s358, 32
      %s363 = sadd.s32 %s361, %s362
      %s364 = smul.addr %s363, 8
      %s365 = scalar_lea.vmem %s0, %s364
      %s366 = smul.u32 16, %s24
      %s367 = smul.u32 16, %s24
      %p368 = scmp.lt.s32.totalorder %s23, 1
      %s369 = scalar_select %p368, %s23, 1
      %p370 = scmp.lt.s32.totalorder %s367, 15
      %s371 = scalar_select %p370, %s367, 15
      %s372 = smul.addr %s371, 2
      %s373 = smul.addr %s369, 32
      %s374 = sadd.s32 %s372, %s373
      %s375 = smul.addr %s374, 8
      %s376 = scalar_lea.vmem %s1, %s375
      %s377 = smul.u32 16, %s24
      %s378 = smul.u32 16, %s24
      %p379 = scmp.lt.s32.totalorder %s23, 1
      %s380 = scalar_select %p379, %s23, 1
      %p381 = scmp.lt.s32.totalorder %s378, 15
      %s382 = scalar_select %p381, %s378, 15
      %s383 = smul.addr %s382, 2
      %s384 = smul.addr %s380, 32
      %s385 = sadd.s32 %s383, %s384
      %s386 = smul.addr %s385, 8
      %s387 = scalar_lea.vmem %s8, %s386
      %s388 = smul.u32 16, %s24
      %v389 = vld [vmem:[%s365] sm:$0xff]
      %v390 = vld [vmem:[%s365 + $0x8] sm:$0xff]
      %v391 = vld [vmem:[%s365 + $0x10] sm:$0xff]
      %v392 = vld [vmem:[%s365 + $0x18] sm:$0xff]
      %v393 = vld [vmem:[%s365 + $0x20] sm:$0xff]
      %v394 = vld [vmem:[%s365 + $0x28] sm:$0xff]
      %v395 = vld [vmem:[%s365 + $0x30] sm:$0xff]
      %v396 = vld [vmem:[%s365 + $0x38] sm:$0xff]
      %v397 = vld [vmem:[%s365 + $0x40] sm:$0xff]
      %v398 = vld [vmem:[%s365 + $0x48] sm:$0xff]
      %v399 = vld [vmem:[%s365 + $0x50] sm:$0xff]
      %v400 = vld [vmem:[%s365 + $0x58] sm:$0xff]
      %v401 = vld [vmem:[%s365 + $0x60] sm:$0xff]
      %v402 = vld [vmem:[%s365 + $0x68] sm:$0xff]
      %v403 = vld [vmem:[%s365 + $0x70] sm:$0xff]
      %v404 = vld [vmem:[%s365 + $0x78] sm:$0xff]
      %v405 = vld [vmem:[%s365 + $0x80] sm:$0xff]
      %v406 = vld [vmem:[%s365 + $0x88] sm:$0xff]
      %v407 = vld [vmem:[%s365 + $0x90] sm:$0xff]
      %v408 = vld [vmem:[%s365 + $0x98] sm:$0xff]
      %v409 = vld [vmem:[%s365 + $0xa0] sm:$0xff]
      %v410 = vld [vmem:[%s365 + $0xa8] sm:$0xff]
      %v411 = vld [vmem:[%s365 + $0xb0] sm:$0xff]
      %v412 = vld [vmem:[%s365 + $0xb8] sm:$0xff]
      %v413 = vld [vmem:[%s365 + $0xc0] sm:$0xff]
      %v414 = vld [vmem:[%s365 + $0xc8] sm:$0xff]
      %v415 = vld [vmem:[%s365 + $0xd0] sm:$0xff]
      %v416 = vld [vmem:[%s365 + $0xd8] sm:$0xff]
      %v417 = vld [vmem:[%s365 + $0xe0] sm:$0xff]
      %v418 = vld [vmem:[%s365 + $0xe8] sm:$0xff]
      %v419 = vld [vmem:[%s365 + $0xf0] sm:$0xff]
      %v420 = vld [vmem:[%s365 + $0xf8] sm:$0xff]
      %v421 = vld [vmem:[%s376] sm:$0xff]
      %v422 = vld [vmem:[%s376 + $0x8] sm:$0xff]
      %v423 = vld [vmem:[%s376 + $0x10] sm:$0xff]
      %v424 = vld [vmem:[%s376 + $0x18] sm:$0xff]
      %v425 = vld [vmem:[%s376 + $0x20] sm:$0xff]
      %v426 = vld [vmem:[%s376 + $0x28] sm:$0xff]
      %v427 = vld [vmem:[%s376 + $0x30] sm:$0xff]
      %v428 = vld [vmem:[%s376 + $0x38] sm:$0xff]
      %v429 = vld [vmem:[%s376 + $0x40] sm:$0xff]
      %v430 = vld [vmem:[%s376 + $0x48] sm:$0xff]
      %v431 = vld [vmem:[%s376 + $0x50] sm:$0xff]
      %v432 = vld [vmem:[%s376 + $0x58] sm:$0xff]
      %v433 = vld [vmem:[%s376 + $0x60] sm:$0xff]
      %v434 = vld [vmem:[%s376 + $0x68] sm:$0xff]
      %v435 = vld [vmem:[%s376 + $0x70] sm:$0xff]
      %v436 = vld [vmem:[%s376 + $0x78] sm:$0xff]
      %v437 = vld [vmem:[%s376 + $0x80] sm:$0xff]
      %v438 = vld [vmem:[%s376 + $0x88] sm:$0xff]
      %v439 = vld [vmem:[%s376 + $0x90] sm:$0xff]
      %v440 = vld [vmem:[%s376 + $0x98] sm:$0xff]
      %v441 = vld [vmem:[%s376 + $0xa0] sm:$0xff]
      %v442 = vld [vmem:[%s376 + $0xa8] sm:$0xff]
      %v443 = vld [vmem:[%s376 + $0xb0] sm:$0xff]
      %v444 = vld [vmem:[%s376 + $0xb8] sm:$0xff]
      %v445 = vld [vmem:[%s376 + $0xc0] sm:$0xff]
      %v446 = vld [vmem:[%s376 + $0xc8] sm:$0xff]
      %v447 = vld [vmem:[%s376 + $0xd0] sm:$0xff]
      %v448 = vld [vmem:[%s376 + $0xd8] sm:$0xff]
      %v449 = vld [vmem:[%s376 + $0xe0] sm:$0xff]
      %v450 = vld [vmem:[%s376 + $0xe8] sm:$0xff]
      %v451 = vld [vmem:[%s376 + $0xf0] sm:$0xff]
      %v452 = vld [vmem:[%s376 + $0xf8] sm:$0xff]
      %v453 = vld [vmem:[%s2] sm:$0xff]
      %v454 = vld [vmem:[%s2 + $0x8] sm:$0xff]
      %v455 = vld [vmem:[%s2 + $0x10] sm:$0xff]
      %v456 = vld [vmem:[%s2 + $0x18] sm:$0xff]
      %vm457 = vcmask 130048
      %v459 = vsel %vm457, %v421, 0
      %v462 = vsel %vm457, %v422, 0
      %v465 = vsel %vm457, %v423, 0
      %v468 = vsel %vm457, %v424, 0
      %v471 = vsel %vm457, %v425, 0
      %v474 = vsel %vm457, %v426, 0
      %v477 = vsel %vm457, %v427, 0
      %v480 = vsel %vm457, %v428, 0
      %v483 = vsel %vm457, %v429, 0
      %v486 = vsel %vm457, %v430, 0
      %v489 = vsel %vm457, %v431, 0
      %v492 = vsel %vm457, %v432, 0
      %v495 = vsel %vm457, %v433, 0
      %v498 = vsel %vm457, %v434, 0
      %v501 = vsel %vm457, %v435, 0
      %v504 = vsel %vm457, %v436, 0
      %v507 = vsel %vm457, %v437, 0
      %v510 = vsel %vm457, %v438, 0
      %v513 = vsel %vm457, %v439, 0
      %v516 = vsel %vm457, %v440, 0
      %v519 = vsel %vm457, %v441, 0
      %v522 = vsel %vm457, %v442, 0
      %v525 = vsel %vm457, %v443, 0
      %v528 = vsel %vm457, %v444, 0
      %v531 = vsel %vm457, %v445, 0
      %v534 = vsel %vm457, %v446, 0
      %v537 = vsel %vm457, %v447, 0
      %v540 = vsel %vm457, %v448, 0
      %v543 = vsel %vm457, %v449, 0
      %v546 = vsel %vm457, %v450, 0
      %v549 = vsel %vm457, %v451, 0
      %v552 = vsel %vm457, %v452, 0
      %554 = vmatprep.subr.mxu0 0.0
      %555 = vmatpush1.msra.mxu0 0.0
      %556 = vmatprep.subr.mxu0 0.0
      %557 = vmatpush1.msra.mxu0 0.0
      %558 = vmatprep.subr.mxu0 0.0
      %559 = vmatpush1.msra.mxu0 0.0
      %560 = vmatprep.subr.mxu0 0.0
      %561 = vmatpush1.msra.mxu0 0.0
      %562 = vmatprep.subr.mxu0 0.0
      %563 = vmatpush1.msra.mxu0 0.0
      %564 = vmatprep.subr.mxu0 0.0
      %565 = vmatpush1.msra.mxu0 0.0
      %566 = vmatprep.subr.mxu0 0.0
      %567 = vmatpush1.msra.mxu0 0.0
      %568 = vmatprep.subr.mxu0 0.0
      %569 = vmatpush1.msra.mxu0 0.0
      %570 = vmatprep.subr.mxu0 0.0
      %571 = vmatpush1.msra.mxu0 0.0
      %572 = vmatprep.subr.mxu0 0.0
      %573 = vmatpush1.msra.mxu0 0.0
      %574 = vmatprep.subr.mxu0 0.0
      %575 = vmatpush1.msra.mxu0 0.0
      %576 = vmatprep.subr.mxu0 0.0
      %577 = vmatpush1.msra.mxu0 0.0
      %578 = vmatprep.subr.mxu0 0.0
      %579 = vmatpush1.msra.mxu0 0.0
      %580 = vmatprep.subr.mxu0 0.0
      %581 = vmatpush1.msra.mxu0 0.0
      %582 = vmatprep.subr.mxu0 0.0
      %583 = vmatpush1.msra.mxu0 %v456
      %584 = vmatprep.subr.mxu0 0.0
      %585 = vmatpush1.msra.mxu0 %v455
      %586 = vmatprep.subr.mxu0 0.0
      %587 = vmatpush2.msra.mxu0 0.0
      %588 = vmatprep.subr.mxu0 0.0
      %589 = vmatpush2.msra.mxu0 0.0
      %590 = vmatprep.subr.mxu0 0.0
      %591 = vmatpush2.msra.mxu0 0.0
      %592 = vmatprep.subr.mxu0 0.0
      %593 = vmatpush2.msra.mxu0 0.0
      %594 = vmatprep.subr.mxu0 0.0
      %595 = vmatpush2.msra.mxu0 0.0
      %596 = vmatprep.subr.mxu0 0.0
      %597 = vmatpush2.msra.mxu0 0.0
      %598 = vmatprep.subr.mxu0 0.0
      %599 = vmatpush2.msra.mxu0 0.0
      %600 = vmatprep.subr.mxu0 0.0
      %601 = vmatpush2.msra.mxu0 0.0
      %602 = vmatprep.subr.mxu0 0.0
      %603 = vmatpush2.msra.mxu0 0.0
      %604 = vmatprep.subr.mxu0 0.0
      %605 = vmatpush2.msra.mxu0 0.0
      %606 = vmatprep.subr.mxu0 0.0
      %607 = vmatpush2.msra.mxu0 0.0
      %608 = vmatprep.subr.mxu0 0.0
      %609 = vmatpush2.msra.mxu0 0.0
      %610 = vmatprep.subr.mxu0 0.0
      %611 = vmatpush2.msra.mxu0 0.0
      %612 = vmatprep.subr.mxu0 0.0
      %613 = vmatpush2.msra.mxu0 0.0
      %614 = vmatprep.subr.mxu0 0.0
      %615 = vmatpush2.msra.mxu0 0.0
      %616 = vmatprep.subr.mxu0 0.0
      %617 = vmatpush2.msra.mxu0 0.0
      %618 = vmatprep.mubr.f32.mxu0 0.0
      %619 = vmatmul.mubr.f32.gmra.mxu0 %v459
      %v620 = vpop.f32.mrf.mxu0
      %v621 = vadd.f32 0.0, %v620
      %v622 = vpop.f32.mrf.mxu0
      %623 = vmatprep.mubr.f32.mxu0 0.0
      %624 = vmatmul.mubr.f32.gmra.mxu0 %v462
      %v625 = vpop.f32.mrf.mxu0
      %v626 = vadd.f32 0.0, %v625
      %v627 = vpop.f32.mrf.mxu0
      %628 = vmatprep.mubr.f32.mxu0 0.0
      %629 = vmatmul.mubr.f32.gmra.mxu0 %v465
      %v630 = vpop.f32.mrf.mxu0
      %v631 = vadd.f32 0.0, %v630
      %v632 = vpop.f32.mrf.mxu0
      %633 = vmatprep.mubr.f32.mxu0 0.0
      %634 = vmatmul.mubr.f32.gmra.mxu0 %v468
      %v635 = vpop.f32.mrf.mxu0
      %v636 = vadd.f32 0.0, %v635
      %v637 = vpop.f32.mrf.mxu0
      %638 = vmatprep.mubr.f32.mxu0 0.0
      %639 = vmatmul.mubr.f32.gmra.mxu0 %v471
      %v640 = vpop.f32.mrf.mxu0
      %v641 = vadd.f32 0.0, %v640
      %v642 = vpop.f32.mrf.mxu0
      %643 = vmatprep.mubr.f32.mxu0 0.0
      %644 = vmatmul.mubr.f32.gmra.mxu0 %v474
      %v645 = vpop.f32.mrf.mxu0
      %v646 = vadd.f32 0.0, %v645
      %v647 = vpop.f32.mrf.mxu0
      %648 = vmatprep.mubr.f32.mxu0 0.0
      %649 = vmatmul.mubr.f32.gmra.mxu0 %v477
      %v650 = vpop.f32.mrf.mxu0
      %v651 = vadd.f32 0.0, %v650
      %v652 = vpop.f32.mrf.mxu0
      %653 = vmatprep.mubr.f32.mxu0 0.0
      %654 = vmatmul.mubr.f32.gmra.mxu0 %v480
      %v655 = vpop.f32.mrf.mxu0
      %v656 = vadd.f32 0.0, %v655
      %v657 = vpop.f32.mrf.mxu0
      %658 = vmatprep.mubr.f32.mxu0 0.0
      %659 = vmatmul.mubr.f32.gmra.mxu0 %v483
      %v660 = vpop.f32.mrf.mxu0
      %v661 = vadd.f32 0.0, %v660
      %v662 = vpop.f32.mrf.mxu0
      %663 = vmatprep.mubr.f32.mxu0 0.0
      %664 = vmatmul.mubr.f32.gmra.mxu0 %v486
      %v665 = vpop.f32.mrf.mxu0
      %v666 = vadd.f32 0.0, %v665
      %v667 = vpop.f32.mrf.mxu0
      %668 = vmatprep.mubr.f32.mxu0 0.0
      %669 = vmatmul.mubr.f32.gmra.mxu0 %v489
      %v670 = vpop.f32.mrf.mxu0
      %v671 = vadd.f32 0.0, %v670
      %v672 = vpop.f32.mrf.mxu0
      %673 = vmatprep.mubr.f32.mxu0 0.0
      %674 = vmatmul.mubr.f32.gmra.mxu0 %v492
      %v675 = vpop.f32.mrf.mxu0
      %v676 = vadd.f32 0.0, %v675
      %v677 = vpop.f32.mrf.mxu0
      %678 = vmatprep.mubr.f32.mxu0 0.0
      %679 = vmatmul.mubr.f32.gmra.mxu0 %v495
      %v680 = vpop.f32.mrf.mxu0
      %v681 = vadd.f32 0.0, %v680
      %v682 = vpop.f32.mrf.mxu0
      %683 = vmatprep.mubr.f32.mxu0 0.0
      %684 = vmatmul.mubr.f32.gmra.mxu0 %v498
      %v685 = vpop.f32.mrf.mxu0
      %v686 = vadd.f32 0.0, %v685
      %v687 = vpop.f32.mrf.mxu0
      %688 = vmatprep.mubr.f32.mxu0 0.0
      %689 = vmatmul.mubr.f32.gmra.mxu0 %v501
      %v690 = vpop.f32.mrf.mxu0
      %v691 = vadd.f32 0.0, %v690
      %v692 = vpop.f32.mrf.mxu0
      %693 = vmatprep.mubr.f32.mxu0 0.0
      %694 = vmatmul.mubr.f32.gmra.mxu0 %v504
      %v695 = vpop.f32.mrf.mxu0
      %v696 = vadd.f32 0.0, %v695
      %v697 = vpop.f32.mrf.mxu0
      %698 = vmatprep.mubr.f32.mxu0 0.0
      %699 = vmatmul.mubr.f32.gmra.mxu0 %v507
      %v700 = vpop.f32.mrf.mxu0
      %v701 = vadd.f32 0.0, %v700
      %v702 = vpop.f32.mrf.mxu0
      %703 = vmatprep.mubr.f32.mxu0 0.0
      %704 = vmatmul.mubr.f32.gmra.mxu0 %v510
      %v705 = vpop.f32.mrf.mxu0
      %v706 = vadd.f32 0.0, %v705
      %v707 = vpop.f32.mrf.mxu0
      %708 = vmatprep.mubr.f32.mxu0 0.0
      %709 = vmatmul.mubr.f32.gmra.mxu0 %v513
      %v710 = vpop.f32.mrf.mxu0
      %v711 = vadd.f32 0.0, %v710
      %v712 = vpop.f32.mrf.mxu0
      %713 = vmatprep.mubr.f32.mxu0 0.0
      %714 = vmatmul.mubr.f32.gmra.mxu0 %v516
      %v715 = vpop.f32.mrf.mxu0
      %v716 = vadd.f32 0.0, %v715
      %v717 = vpop.f32.mrf.mxu0
      %718 = vmatprep.mubr.f32.mxu0 0.0
      %719 = vmatmul.mubr.f32.gmra.mxu0 %v519
      %v720 = vpop.f32.mrf.mxu0
      %v721 = vadd.f32 0.0, %v720
      %v722 = vpop.f32.mrf.mxu0
      %723 = vmatprep.mubr.f32.mxu0 0.0
      %724 = vmatmul.mubr.f32.gmra.mxu0 %v522
      %v725 = vpop.f32.mrf.mxu0
      %v726 = vadd.f32 0.0, %v725
      %v727 = vpop.f32.mrf.mxu0
      %728 = vmatprep.mubr.f32.mxu0 0.0
      %729 = vmatmul.mubr.f32.gmra.mxu0 %v525
      %v730 = vpop.f32.mrf.mxu0
      %v731 = vadd.f32 0.0, %v730
      %v732 = vpop.f32.mrf.mxu0
      %733 = vmatprep.mubr.f32.mxu0 0.0
      %734 = vmatmul.mubr.f32.gmra.mxu0 %v528
      %v735 = vpop.f32.mrf.mxu0
      %v736 = vadd.f32 0.0, %v735
      %v737 = vpop.f32.mrf.mxu0
      %738 = vmatprep.mubr.f32.mxu0 0.0
      %739 = vmatmul.mubr.f32.gmra.mxu0 %v531
      %v740 = vpop.f32.mrf.mxu0
      %v741 = vadd.f32 0.0, %v740
      %v742 = vpop.f32.mrf.mxu0
      %743 = vmatprep.mubr.f32.mxu0 0.0
      %744 = vmatmul.mubr.f32.gmra.mxu0 %v534
      %v745 = vpop.f32.mrf.mxu0
      %v746 = vadd.f32 0.0, %v745
      %v747 = vpop.f32.mrf.mxu0
      %748 = vmatprep.mubr.f32.mxu0 0.0
      %749 = vmatmul.mubr.f32.gmra.mxu0 %v537
      %v750 = vpop.f32.mrf.mxu0
      %v751 = vadd.f32 0.0, %v750
      %v752 = vpop.f32.mrf.mxu0
      %753 = vmatprep.mubr.f32.mxu0 0.0
      %754 = vmatmul.mubr.f32.gmra.mxu0 %v540
      %v755 = vpop.f32.mrf.mxu0
      %v756 = vadd.f32 0.0, %v755
      %v757 = vpop.f32.mrf.mxu0
      %758 = vmatprep.mubr.f32.mxu0 0.0
      %759 = vmatmul.mubr.f32.gmra.mxu0 %v543
      %v760 = vpop.f32.mrf.mxu0
      %v761 = vadd.f32 0.0, %v760
      %v762 = vpop.f32.mrf.mxu0
      %763 = vmatprep.mubr.f32.mxu0 0.0
      %764 = vmatmul.mubr.f32.gmra.mxu0 %v546
      %v765 = vpop.f32.mrf.mxu0
      %v766 = vadd.f32 0.0, %v765
      %v767 = vpop.f32.mrf.mxu0
      %768 = vmatprep.mubr.f32.mxu0 0.0
      %769 = vmatmul.mubr.f32.gmra.mxu0 %v549
      %v770 = vpop.f32.mrf.mxu0
      %v771 = vadd.f32 0.0, %v770
      %v772 = vpop.f32.mrf.mxu0
      %773 = vmatprep.mubr.f32.mxu0 0.0
      %774 = vmatmul.mubr.f32.gmra.mxu0 %v552
      %v775 = vpop.f32.mrf.mxu0
      %v776 = vadd.f32 0.0, %v775
      %v777 = vpop.f32.mrf.mxu0
      %778 = vdwg.mxu0
      %v780 = vsel %vm457, %v389, 0
      %v783 = vsel %vm457, %v390, 0
      %v786 = vsel %vm457, %v391, 0
      %v789 = vsel %vm457, %v392, 0
      %v792 = vsel %vm457, %v393, 0
      %v795 = vsel %vm457, %v394, 0
      %v798 = vsel %vm457, %v395, 0
      %v801 = vsel %vm457, %v396, 0
      %v804 = vsel %vm457, %v397, 0
      %v807 = vsel %vm457, %v398, 0
      %v810 = vsel %vm457, %v399, 0
      %v813 = vsel %vm457, %v400, 0
      %v816 = vsel %vm457, %v401, 0
      %v819 = vsel %vm457, %v402, 0
      %v822 = vsel %vm457, %v403, 0
      %v825 = vsel %vm457, %v404, 0
      %v828 = vsel %vm457, %v405, 0
      %v831 = vsel %vm457, %v406, 0
      %v834 = vsel %vm457, %v407, 0
      %v837 = vsel %vm457, %v408, 0
      %v840 = vsel %vm457, %v409, 0
      %v843 = vsel %vm457, %v410, 0
      %v846 = vsel %vm457, %v411, 0
      %v849 = vsel %vm457, %v412, 0
      %v852 = vsel %vm457, %v413, 0
      %v855 = vsel %vm457, %v414, 0
      %v858 = vsel %vm457, %v415, 0
      %v861 = vsel %vm457, %v416, 0
      %v864 = vsel %vm457, %v417, 0
      %v867 = vsel %vm457, %v418, 0
      %v870 = vsel %vm457, %v419, 0
      %v873 = vsel %vm457, %v420, 0
      %875 = vmatprep.subr.mxu0 0.0
      %876 = vmatpush1.msra.mxu0 0.0
      %877 = vmatprep.subr.mxu0 0.0
      %878 = vmatpush1.msra.mxu0 0.0
      %879 = vmatprep.subr.mxu0 0.0
      %880 = vmatpush1.msra.mxu0 0.0
      %881 = vmatprep.subr.mxu0 0.0
      %882 = vmatpush1.msra.mxu0 0.0
      %883 = vmatprep.subr.mxu0 0.0
      %884 = vmatpush1.msra.mxu0 0.0
      %885 = vmatprep.subr.mxu0 0.0
      %886 = vmatpush1.msra.mxu0 0.0
      %887 = vmatprep.subr.mxu0 0.0
      %888 = vmatpush1.msra.mxu0 0.0
      %889 = vmatprep.subr.mxu0 0.0
      %890 = vmatpush1.msra.mxu0 0.0
      %891 = vmatprep.subr.mxu0 0.0
      %892 = vmatpush1.msra.mxu0 0.0
      %893 = vmatprep.subr.mxu0 0.0
      %894 = vmatpush1.msra.mxu0 0.0
      %895 = vmatprep.subr.mxu0 0.0
      %896 = vmatpush1.msra.mxu0 0.0
      %897 = vmatprep.subr.mxu0 0.0
      %898 = vmatpush1.msra.mxu0 0.0
      %899 = vmatprep.subr.mxu0 0.0
      %900 = vmatpush1.msra.mxu0 0.0
      %901 = vmatprep.subr.mxu0 0.0
      %902 = vmatpush1.msra.mxu0 0.0
      %903 = vmatprep.subr.mxu0 0.0
      %904 = vmatpush1.msra.mxu0 %v454
      %905 = vmatprep.subr.mxu0 0.0
      %906 = vmatpush1.msra.mxu0 %v453
      %907 = vmatprep.subr.mxu0 0.0
      %908 = vmatpush2.msra.mxu0 0.0
      %909 = vmatprep.subr.mxu0 0.0
      %910 = vmatpush2.msra.mxu0 0.0
      %911 = vmatprep.subr.mxu0 0.0
      %912 = vmatpush2.msra.mxu0 0.0
      %913 = vmatprep.subr.mxu0 0.0
      %914 = vmatpush2.msra.mxu0 0.0
      %915 = vmatprep.subr.mxu0 0.0
      %916 = vmatpush2.msra.mxu0 0.0
      %917 = vmatprep.subr.mxu0 0.0
      %918 = vmatpush2.msra.mxu0 0.0
      %919 = vmatprep.subr.mxu0 0.0
      %920 = vmatpush2.msra.mxu0 0.0
      %921 = vmatprep.subr.mxu0 0.0
      %922 = vmatpush2.msra.mxu0 0.0
      %923 = vmatprep.subr.mxu0 0.0
      %924 = vmatpush2.msra.mxu0 0.0
      %925 = vmatprep.subr.mxu0 0.0
      %926 = vmatpush2.msra.mxu0 0.0
      %927 = vmatprep.subr.mxu0 0.0
      %928 = vmatpush2.msra.mxu0 0.0
      %929 = vmatprep.subr.mxu0 0.0
      %930 = vmatpush2.msra.mxu0 0.0
      %931 = vmatprep.subr.mxu0 0.0
      %932 = vmatpush2.msra.mxu0 0.0
      %933 = vmatprep.subr.mxu0 0.0
      %934 = vmatpush2.msra.mxu0 0.0
      %935 = vmatprep.subr.mxu0 0.0
      %936 = vmatpush2.msra.mxu0 0.0
      %937 = vmatprep.subr.mxu0 0.0
      %938 = vmatpush2.msra.mxu0 0.0
      %939 = vmatprep.mubr.f32.mxu0 0.0
      %940 = vmatmul.mubr.f32.gmra.mxu0 %v780
      %v941 = vpop.f32.mrf.mxu0
      %v942 = vadd.f32 %v621, %v941
      %v943 = vpop.f32.mrf.mxu0
      %944 = vmatprep.mubr.f32.mxu0 0.0
      %945 = vmatmul.mubr.f32.gmra.mxu0 %v783
      %v946 = vpop.f32.mrf.mxu0
      %v947 = vadd.f32 %v626, %v946
      %v948 = vpop.f32.mrf.mxu0
      %949 = vmatprep.mubr.f32.mxu0 0.0
      %950 = vmatmul.mubr.f32.gmra.mxu0 %v786
      %v951 = vpop.f32.mrf.mxu0
      %v952 = vadd.f32 %v631, %v951
      %v953 = vpop.f32.mrf.mxu0
      %954 = vmatprep.mubr.f32.mxu0 0.0
      %955 = vmatmul.mubr.f32.gmra.mxu0 %v789
      %v956 = vpop.f32.mrf.mxu0
      %v957 = vadd.f32 %v636, %v956
      %v958 = vpop.f32.mrf.mxu0
      %959 = vmatprep.mubr.f32.mxu0 0.0
      %960 = vmatmul.mubr.f32.gmra.mxu0 %v792
      %v961 = vpop.f32.mrf.mxu0
      %v962 = vadd.f32 %v641, %v961
      %v963 = vpop.f32.mrf.mxu0
      %964 = vmatprep.mubr.f32.mxu0 0.0
      %965 = vmatmul.mubr.f32.gmra.mxu0 %v795
      %v966 = vpop.f32.mrf.mxu0
      %v967 = vadd.f32 %v646, %v966
      %v968 = vpop.f32.mrf.mxu0
      %969 = vmatprep.mubr.f32.mxu0 0.0
      %970 = vmatmul.mubr.f32.gmra.mxu0 %v798
      %v971 = vpop.f32.mrf.mxu0
      %v972 = vadd.f32 %v651, %v971
      %v973 = vpop.f32.mrf.mxu0
      %974 = vmatprep.mubr.f32.mxu0 0.0
      %975 = vmatmul.mubr.f32.gmra.mxu0 %v801
      %v976 = vpop.f32.mrf.mxu0
      %v977 = vadd.f32 %v656, %v976
      %v978 = vpop.f32.mrf.mxu0
      %979 = vmatprep.mubr.f32.mxu0 0.0
      %980 = vmatmul.mubr.f32.gmra.mxu0 %v804
      %v981 = vpop.f32.mrf.mxu0
      %v982 = vadd.f32 %v661, %v981
      %v983 = vpop.f32.mrf.mxu0
      %984 = vmatprep.mubr.f32.mxu0 0.0
      %985 = vmatmul.mubr.f32.gmra.mxu0 %v807
      %v986 = vpop.f32.mrf.mxu0
      %v987 = vadd.f32 %v666, %v986
      %v988 = vpop.f32.mrf.mxu0
      %989 = vmatprep.mubr.f32.mxu0 0.0
      %990 = vmatmul.mubr.f32.gmra.mxu0 %v810
      %v991 = vpop.f32.mrf.mxu0
      %v992 = vadd.f32 %v671, %v991
      %v993 = vpop.f32.mrf.mxu0
      %994 = vmatprep.mubr.f32.mxu0 0.0
      %995 = vmatmul.mubr.f32.gmra.mxu0 %v813
      %v996 = vpop.f32.mrf.mxu0
      %v997 = vadd.f32 %v676, %v996
      %v998 = vpop.f32.mrf.mxu0
      %999 = vmatprep.mubr.f32.mxu0 0.0
      %1000 = vmatmul.mubr.f32.gmra.mxu0 %v816
      %v1001 = vpop.f32.mrf.mxu0
      %v1002 = vadd.f32 %v681, %v1001
      %v1003 = vpop.f32.mrf.mxu0
      %1004 = vmatprep.mubr.f32.mxu0 0.0
      %1005 = vmatmul.mubr.f32.gmra.mxu0 %v819
      %v1006 = vpop.f32.mrf.mxu0
      %v1007 = vadd.f32 %v686, %v1006
      %v1008 = vpop.f32.mrf.mxu0
      %1009 = vmatprep.mubr.f32.mxu0 0.0
      %1010 = vmatmul.mubr.f32.gmra.mxu0 %v822
      %v1011 = vpop.f32.mrf.mxu0
      %v1012 = vadd.f32 %v691, %v1011
      %v1013 = vpop.f32.mrf.mxu0
      %1014 = vmatprep.mubr.f32.mxu0 0.0
      %1015 = vmatmul.mubr.f32.gmra.mxu0 %v825
      %v1016 = vpop.f32.mrf.mxu0
      %v1017 = vadd.f32 %v696, %v1016
      %v1018 = vpop.f32.mrf.mxu0
      %1019 = vmatprep.mubr.f32.mxu0 0.0
      %1020 = vmatmul.mubr.f32.gmra.mxu0 %v828
      %v1021 = vpop.f32.mrf.mxu0
      %v1022 = vadd.f32 %v701, %v1021
      %v1023 = vpop.f32.mrf.mxu0
      %1024 = vmatprep.mubr.f32.mxu0 0.0
      %1025 = vmatmul.mubr.f32.gmra.mxu0 %v831
      %v1026 = vpop.f32.mrf.mxu0
      %v1027 = vadd.f32 %v706, %v1026
      %v1028 = vpop.f32.mrf.mxu0
      %1029 = vmatprep.mubr.f32.mxu0 0.0
      %1030 = vmatmul.mubr.f32.gmra.mxu0 %v834
      %v1031 = vpop.f32.mrf.mxu0
      %v1032 = vadd.f32 %v711, %v1031
      %v1033 = vpop.f32.mrf.mxu0
      %1034 = vmatprep.mubr.f32.mxu0 0.0
      %1035 = vmatmul.mubr.f32.gmra.mxu0 %v837
      %v1036 = vpop.f32.mrf.mxu0
      %v1037 = vadd.f32 %v716, %v1036
      %v1038 = vpop.f32.mrf.mxu0
      %1039 = vmatprep.mubr.f32.mxu0 0.0
      %1040 = vmatmul.mubr.f32.gmra.mxu0 %v840
      %v1041 = vpop.f32.mrf.mxu0
      %v1042 = vadd.f32 %v721, %v1041
      %v1043 = vpop.f32.mrf.mxu0
      %1044 = vmatprep.mubr.f32.mxu0 0.0
      %1045 = vmatmul.mubr.f32.gmra.mxu0 %v843
      %v1046 = vpop.f32.mrf.mxu0
      %v1047 = vadd.f32 %v726, %v1046
      %v1048 = vpop.f32.mrf.mxu0
      %1049 = vmatprep.mubr.f32.mxu0 0.0
      %1050 = vmatmul.mubr.f32.gmra.mxu0 %v846
      %v1051 = vpop.f32.mrf.mxu0
      %v1052 = vadd.f32 %v731, %v1051
      %v1053 = vpop.f32.mrf.mxu0
      %1054 = vmatprep.mubr.f32.mxu0 0.0
      %1055 = vmatmul.mubr.f32.gmra.mxu0 %v849
      %v1056 = vpop.f32.mrf.mxu0
      %v1057 = vadd.f32 %v736, %v1056
      %v1058 = vpop.f32.mrf.mxu0
      %1059 = vmatprep.mubr.f32.mxu0 0.0
      %1060 = vmatmul.mubr.f32.gmra.mxu0 %v852
      %v1061 = vpop.f32.mrf.mxu0
      %v1062 = vadd.f32 %v741, %v1061
      %v1063 = vpop.f32.mrf.mxu0
      %1064 = vmatprep.mubr.f32.mxu0 0.0
      %1065 = vmatmul.mubr.f32.gmra.mxu0 %v855
      %v1066 = vpop.f32.mrf.mxu0
      %v1067 = vadd.f32 %v746, %v1066
      %v1068 = vpop.f32.mrf.mxu0
      %1069 = vmatprep.mubr.f32.mxu0 0.0
      %1070 = vmatmul.mubr.f32.gmra.mxu0 %v858
      %v1071 = vpop.f32.mrf.mxu0
      %v1072 = vadd.f32 %v751, %v1071
      %v1073 = vpop.f32.mrf.mxu0
      %1074 = vmatprep.mubr.f32.mxu0 0.0
      %1075 = vmatmul.mubr.f32.gmra.mxu0 %v861
      %v1076 = vpop.f32.mrf.mxu0
      %v1077 = vadd.f32 %v756, %v1076
      %v1078 = vpop.f32.mrf.mxu0
      %1079 = vmatprep.mubr.f32.mxu0 0.0
      %1080 = vmatmul.mubr.f32.gmra.mxu0 %v864
      %v1081 = vpop.f32.mrf.mxu0
      %v1082 = vadd.f32 %v761, %v1081
      %v1083 = vpop.f32.mrf.mxu0
      %1084 = vmatprep.mubr.f32.mxu0 0.0
      %1085 = vmatmul.mubr.f32.gmra.mxu0 %v867
      %v1086 = vpop.f32.mrf.mxu0
      %v1087 = vadd.f32 %v766, %v1086
      %v1088 = vpop.f32.mrf.mxu0
      %1089 = vmatprep.mubr.f32.mxu0 0.0
      %1090 = vmatmul.mubr.f32.gmra.mxu0 %v870
      %v1091 = vpop.f32.mrf.mxu0
      %v1092 = vadd.f32 %v771, %v1091
      %v1093 = vpop.f32.mrf.mxu0
      %1094 = vmatprep.mubr.f32.mxu0 0.0
      %1095 = vmatmul.mubr.f32.gmra.mxu0 %v873
      %v1096 = vpop.f32.mrf.mxu0
      %v1097 = vadd.f32 %v776, %v1096
      %v1098 = vpop.f32.mrf.mxu0
      %1099 = vdwg.mxu0
      %v1100 = vld [vmem:[%s3] sm:$0x1]
      %v1102 = vlaneseq
      %v1103 = vshrl.u32 %v1102, 7
      %v1104 = vsub.s32 0, %v1103
      %v1105 = vrot.slane %v1100, %v1104
      %v1107 = vadd.f32 %v942, %v1105
      %v1108 = vadd.f32 %v947, %v1105
      %v1109 = vadd.f32 %v952, %v1105
      %v1110 = vadd.f32 %v957, %v1105
      %v1111 = vadd.f32 %v962, %v1105
      %v1112 = vadd.f32 %v967, %v1105
      %v1113 = vadd.f32 %v972, %v1105
      %v1114 = vadd.f32 %v977, %v1105
      %v1115 = vadd.f32 %v982, %v1105
      %v1116 = vadd.f32 %v987, %v1105
      %v1117 = vadd.f32 %v992, %v1105
      %v1118 = vadd.f32 %v997, %v1105
      %v1119 = vadd.f32 %v1002, %v1105
      %v1120 = vadd.f32 %v1007, %v1105
      %v1121 = vadd.f32 %v1012, %v1105
      %v1122 = vadd.f32 %v1017, %v1105
      %v1123 = vadd.f32 %v1022, %v1105
      %v1124 = vadd.f32 %v1027, %v1105
      %v1125 = vadd.f32 %v1032, %v1105
      %v1126 = vadd.f32 %v1037, %v1105
      %v1127 = vadd.f32 %v1042, %v1105
      %v1128 = vadd.f32 %v1047, %v1105
      %v1129 = vadd.f32 %v1052, %v1105
      %v1130 = vadd.f32 %v1057, %v1105
      %v1131 = vadd.f32 %v1062, %v1105
      %v1132 = vadd.f32 %v1067, %v1105
      %v1133 = vadd.f32 %v1072, %v1105
      %v1134 = vadd.f32 %v1077, %v1105
      %v1135 = vadd.f32 %v1082, %v1105
      %v1136 = vadd.f32 %v1087, %v1105
      %v1137 = vadd.f32 %v1092, %v1105
      %v1138 = vadd.f32 %v1097, %v1105
      %v1139 = vmax.f32 %v1107, 0.0
      %v1140 = vmax.f32 %v1108, 0.0
      %v1141 = vmax.f32 %v1109, 0.0
      %v1142 = vmax.f32 %v1110, 0.0
      %v1143 = vmax.f32 %v1111, 0.0
      %v1144 = vmax.f32 %v1112, 0.0
      %v1145 = vmax.f32 %v1113, 0.0
      %v1146 = vmax.f32 %v1114, 0.0
      %v1147 = vmax.f32 %v1115, 0.0
      %v1148 = vmax.f32 %v1116, 0.0
      %v1149 = vmax.f32 %v1117, 0.0
      %v1150 = vmax.f32 %v1118, 0.0
      %v1151 = vmax.f32 %v1119, 0.0
      %v1152 = vmax.f32 %v1120, 0.0
      %v1153 = vmax.f32 %v1121, 0.0
      %v1154 = vmax.f32 %v1122, 0.0
      %v1155 = vmax.f32 %v1123, 0.0
      %v1156 = vmax.f32 %v1124, 0.0
      %v1157 = vmax.f32 %v1125, 0.0
      %v1158 = vmax.f32 %v1126, 0.0
      %v1159 = vmax.f32 %v1127, 0.0
      %v1160 = vmax.f32 %v1128, 0.0
      %v1161 = vmax.f32 %v1129, 0.0
      %v1162 = vmax.f32 %v1130, 0.0
      %v1163 = vmax.f32 %v1131, 0.0
      %v1164 = vmax.f32 %v1132, 0.0
      %v1165 = vmax.f32 %v1133, 0.0
      %v1166 = vmax.f32 %v1134, 0.0
      %v1167 = vmax.f32 %v1135, 0.0
      %v1168 = vmax.f32 %v1136, 0.0
      %v1169 = vmax.f32 %v1137, 0.0
      %v1170 = vmax.f32 %v1138, 0.0
      %v1171 = vld [vmem:[%s4] sm:$0xff]
      %v1172 = vld [vmem:[%s4 + $0x8] sm:$0xff]
      %1175 = vrot.lane.b32.xlu0 %v1139, 112
      %v1176 = vpop.permute.xlu0 %1175
      %1177 = vrot.lane.b32.xlu0 %v1140, 112
      %v1178 = vpop.permute.xlu0 %1177
      %vm1179 = vcmask 64512
      %v1180 = vsel %vm1179, %v1139, 0
      %v1182 = vsel %vm1179, %v1140, 0
      %v1184 = vsel %vm1179, %v1176, 0
      %v1186 = vsel %vm1179, %v1178, 0
      %1188 = vmatprep.subr.mxu0 0.0
      %1189 = vmatpush1.xpose.msra.mxu0 0.0
      %1190 = vmatprep.subr.mxu0 0.0
      %1191 = vmatpush1.xpose.msra.mxu0 0.0
      %1192 = vmatprep.subr.mxu0 0.0
      %1193 = vmatpush1.xpose.msra.mxu0 0.0
      %1194 = vmatprep.subr.mxu0 0.0
      %1195 = vmatpush1.xpose.msra.mxu0 0.0
      %1196 = vmatprep.subr.mxu0 0.0
      %1197 = vmatpush1.xpose.msra.mxu0 0.0
      %1198 = vmatprep.subr.mxu0 0.0
      %1199 = vmatpush1.xpose.msra.mxu0 0.0
      %1200 = vmatprep.subr.mxu0 0.0
      %1201 = vmatpush1.xpose.msra.mxu0 0.0
      %1202 = vmatprep.subr.mxu0 0.0
      %1203 = vmatpush1.xpose.msra.mxu0 0.0
      %1204 = vmatprep.subr.mxu0 0.0
      %1205 = vmatpush1.xpose.msra.mxu0 0.0
      %1206 = vmatprep.subr.mxu0 0.0
      %1207 = vmatpush1.xpose.msra.mxu0 0.0
      %1208 = vmatprep.subr.mxu0 0.0
      %1209 = vmatpush1.xpose.msra.mxu0 0.0
      %1210 = vmatprep.subr.mxu0 0.0
      %1211 = vmatpush1.xpose.msra.mxu0 0.0
      %1212 = vmatprep.subr.mxu0 0.0
      %1213 = vmatpush1.xpose.msra.mxu0 0.0
      %1214 = vmatprep.subr.mxu0 0.0
      %1215 = vmatpush1.xpose.msra.mxu0 0.0
      %1216 = vmatprep.subr.mxu0 0.0
      %1217 = vmatpush1.xpose.msra.mxu0 %v1186
      %1218 = vmatprep.subr.mxu0 0.0
      %1219 = vmatpush1.xpose.msra.mxu0 %v1184
      %1220 = vmatprep.subr.mxu0 0.0
      %1221 = vmatpush2.xpose.msra.mxu0 0.0
      %1222 = vmatprep.subr.mxu0 0.0
      %1223 = vmatpush2.xpose.msra.mxu0 0.0
      %1224 = vmatprep.subr.mxu0 0.0
      %1225 = vmatpush2.xpose.msra.mxu0 0.0
      %1226 = vmatprep.subr.mxu0 0.0
      %1227 = vmatpush2.xpose.msra.mxu0 0.0
      %1228 = vmatprep.subr.mxu0 0.0
      %1229 = vmatpush2.xpose.msra.mxu0 0.0
      %1230 = vmatprep.subr.mxu0 0.0
      %1231 = vmatpush2.xpose.msra.mxu0 0.0
      %1232 = vmatprep.subr.mxu0 0.0
      %1233 = vmatpush2.xpose.msra.mxu0 0.0
      %1234 = vmatprep.subr.mxu0 0.0
      %1235 = vmatpush2.xpose.msra.mxu0 0.0
      %1236 = vmatprep.subr.mxu0 0.0
      %1237 = vmatpush2.xpose.msra.mxu0 0.0
      %1238 = vmatprep.subr.mxu0 0.0
      %1239 = vmatpush2.xpose.msra.mxu0 0.0
      %1240 = vmatprep.subr.mxu0 0.0
      %1241 = vmatpush2.xpose.msra.mxu0 0.0
      %1242 = vmatprep.subr.mxu0 0.0
      %1243 = vmatpush2.xpose.msra.mxu0 0.0
      %1244 = vmatprep.subr.mxu0 0.0
      %1245 = vmatpush2.xpose.msra.mxu0 0.0
      %1246 = vmatprep.subr.mxu0 0.0
      %1247 = vmatpush2.xpose.msra.mxu0 0.0
      %1248 = vmatprep.subr.mxu0 0.0
      %1249 = vmatpush2.xpose.msra.mxu0 0.0
      %1250 = vmatprep.subr.mxu0 0.0
      %1251 = vmatpush2.xpose.msra.mxu0 0.0
      %1252 = vmatprep.mubr.f32.mxu0 0.0
      %1253 = vmatmul.mubr.f32.gmra.mxu0 %v1180
      %v1254 = vpop.f32.mrf.mxu0
      %v1255 = vadd.f32 0.0, %v1254
      %v1256 = vpop.f32.mrf.mxu0
      %1257 = vmatprep.mubr.f32.mxu0 0.0
      %1258 = vmatmul.mubr.f32.gmra.mxu0 %v1182
      %v1259 = vpop.f32.mrf.mxu0
      %v1260 = vadd.f32 0.0, %v1259
      %v1261 = vpop.f32.mrf.mxu0
      %1262 = vdwg.mxu0
      %1265 = vrot.lane.b32.xlu0 %v1141, 112
      %v1266 = vpop.permute.xlu0 %1265
      %1267 = vrot.lane.b32.xlu0 %v1142, 112
      %v1268 = vpop.permute.xlu0 %1267
      %v1269 = vsel %vm1179, %v1141, 0
      %v1271 = vsel %vm1179, %v1142, 0
      %v1273 = vsel %vm1179, %v1266, 0
      %v1275 = vsel %vm1179, %v1268, 0
      %1277 = vmatprep.subr.mxu0 0.0
      %1278 = vmatpush1.xpose.msra.mxu0 0.0
      %1279 = vmatprep.subr.mxu0 0.0
      %1280 = vmatpush1.xpose.msra.mxu0 0.0
      %1281 = vmatprep.subr.mxu0 0.0
      %1282 = vmatpush1.xpose.msra.mxu0 0.0
      %1283 = vmatprep.subr.mxu0 0.0
      %1284 = vmatpush1.xpose.msra.mxu0 0.0
      %1285 = vmatprep.subr.mxu0 0.0
      %1286 = vmatpush1.xpose.msra.mxu0 0.0
      %1287 = vmatprep.subr.mxu0 0.0
      %1288 = vmatpush1.xpose.msra.mxu0 0.0
      %1289 = vmatprep.subr.mxu0 0.0
      %1290 = vmatpush1.xpose.msra.mxu0 0.0
      %1291 = vmatprep.subr.mxu0 0.0
      %1292 = vmatpush1.xpose.msra.mxu0 0.0
      %1293 = vmatprep.subr.mxu0 0.0
      %1294 = vmatpush1.xpose.msra.mxu0 0.0
      %1295 = vmatprep.subr.mxu0 0.0
      %1296 = vmatpush1.xpose.msra.mxu0 0.0
      %1297 = vmatprep.subr.mxu0 0.0
      %1298 = vmatpush1.xpose.msra.mxu0 0.0
      %1299 = vmatprep.subr.mxu0 0.0
      %1300 = vmatpush1.xpose.msra.mxu0 0.0
      %1301 = vmatprep.subr.mxu0 0.0
      %1302 = vmatpush1.xpose.msra.mxu0 0.0
      %1303 = vmatprep.subr.mxu0 0.0
      %1304 = vmatpush1.xpose.msra.mxu0 0.0
      %1305 = vmatprep.subr.mxu0 0.0
      %1306 = vmatpush1.xpose.msra.mxu0 %v1275
      %1307 = vmatprep.subr.mxu0 0.0
      %1308 = vmatpush1.xpose.msra.mxu0 %v1273
      %1309 = vmatprep.subr.mxu0 0.0
      %1310 = vmatpush2.xpose.msra.mxu0 0.0
      %1311 = vmatprep.subr.mxu0 0.0
      %1312 = vmatpush2.xpose.msra.mxu0 0.0
      %1313 = vmatprep.subr.mxu0 0.0
      %1314 = vmatpush2.xpose.msra.mxu0 0.0
      %1315 = vmatprep.subr.mxu0 0.0
      %1316 = vmatpush2.xpose.msra.mxu0 0.0
      %1317 = vmatprep.subr.mxu0 0.0
      %1318 = vmatpush2.xpose.msra.mxu0 0.0
      %1319 = vmatprep.subr.mxu0 0.0
      %1320 = vmatpush2.xpose.msra.mxu0 0.0
      %1321 = vmatprep.subr.mxu0 0.0
      %1322 = vmatpush2.xpose.msra.mxu0 0.0
      %1323 = vmatprep.subr.mxu0 0.0
      %1324 = vmatpush2.xpose.msra.mxu0 0.0
      %1325 = vmatprep.subr.mxu0 0.0
      %1326 = vmatpush2.xpose.msra.mxu0 0.0
      %1327 = vmatprep.subr.mxu0 0.0
      %1328 = vmatpush2.xpose.msra.mxu0 0.0
      %1329 = vmatprep.subr.mxu0 0.0
      %1330 = vmatpush2.xpose.msra.mxu0 0.0
      %1331 = vmatprep.subr.mxu0 0.0
      %1332 = vmatpush2.xpose.msra.mxu0 0.0
      %1333 = vmatprep.subr.mxu0 0.0
      %1334 = vmatpush2.xpose.msra.mxu0 0.0
      %1335 = vmatprep.subr.mxu0 0.0
      %1336 = vmatpush2.xpose.msra.mxu0 0.0
      %1337 = vmatprep.subr.mxu0 0.0
      %1338 = vmatpush2.xpose.msra.mxu0 0.0
      %1339 = vmatprep.subr.mxu0 0.0
      %1340 = vmatpush2.xpose.msra.mxu0 0.0
      %1341 = vmatprep.mubr.f32.mxu0 0.0
      %1342 = vmatmul.mubr.f32.gmra.mxu0 %v1269
      %v1343 = vpop.f32.mrf.mxu0
      %v1344 = vadd.f32 0.0, %v1343
      %v1345 = vpop.f32.mrf.mxu0
      %1346 = vmatprep.mubr.f32.mxu0 0.0
      %1347 = vmatmul.mubr.f32.gmra.mxu0 %v1271
      %v1348 = vpop.f32.mrf.mxu0
      %v1349 = vadd.f32 0.0, %v1348
      %v1350 = vpop.f32.mrf.mxu0
      %1351 = vdwg.mxu0
      %1354 = vrot.lane.b32.xlu0 %v1143, 112
      %v1355 = vpop.permute.xlu0 %1354
      %1356 = vrot.lane.b32.xlu0 %v1144, 112
      %v1357 = vpop.permute.xlu0 %1356
      %v1358 = vsel %vm1179, %v1143, 0
      %v1360 = vsel %vm1179, %v1144, 0
      %v1362 = vsel %vm1179, %v1355, 0
      %v1364 = vsel %vm1179, %v1357, 0
      %1366 = vmatprep.subr.mxu0 0.0
      %1367 = vmatpush1.xpose.msra.mxu0 0.0
      %1368 = vmatprep.subr.mxu0 0.0
      %1369 = vmatpush1.xpose.msra.mxu0 0.0
      %1370 = vmatprep.subr.mxu0 0.0
      %1371 = vmatpush1.xpose.msra.mxu0 0.0
      %1372 = vmatprep.subr.mxu0 0.0
      %1373 = vmatpush1.xpose.msra.mxu0 0.0
      %1374 = vmatprep.subr.mxu0 0.0
      %1375 = vmatpush1.xpose.msra.mxu0 0.0
      %1376 = vmatprep.subr.mxu0 0.0
      %1377 = vmatpush1.xpose.msra.mxu0 0.0
      %1378 = vmatprep.subr.mxu0 0.0
      %1379 = vmatpush1.xpose.msra.mxu0 0.0
      %1380 = vmatprep.subr.mxu0 0.0
      %1381 = vmatpush1.xpose.msra.mxu0 0.0
      %1382 = vmatprep.subr.mxu0 0.0
      %1383 = vmatpush1.xpose.msra.mxu0 0.0
      %1384 = vmatprep.subr.mxu0 0.0
      %1385 = vmatpush1.xpose.msra.mxu0 0.0
      %1386 = vmatprep.subr.mxu0 0.0
      %1387 = vmatpush1.xpose.msra.mxu0 0.0
      %1388 = vmatprep.subr.mxu0 0.0
      %1389 = vmatpush1.xpose.msra.mxu0 0.0
      %1390 = vmatprep.subr.mxu0 0.0
      %1391 = vmatpush1.xpose.msra.mxu0 0.0
      %1392 = vmatprep.subr.mxu0 0.0
      %1393 = vmatpush1.xpose.msra.mxu0 0.0
      %1394 = vmatprep.subr.mxu0 0.0
      %1395 = vmatpush1.xpose.msra.mxu0 %v1364
      %1396 = vmatprep.subr.mxu0 0.0
      %1397 = vmatpush1.xpose.msra.mxu0 %v1362
      %1398 = vmatprep.subr.mxu0 0.0
      %1399 = vmatpush2.xpose.msra.mxu0 0.0
      %1400 = vmatprep.subr.mxu0 0.0
      %1401 = vmatpush2.xpose.msra.mxu0 0.0
      %1402 = vmatprep.subr.mxu0 0.0
      %1403 = vmatpush2.xpose.msra.mxu0 0.0
      %1404 = vmatprep.subr.mxu0 0.0
      %1405 = vmatpush2.xpose.msra.mxu0 0.0
      %1406 = vmatprep.subr.mxu0 0.0
      %1407 = vmatpush2.xpose.msra.mxu0 0.0
      %1408 = vmatprep.subr.mxu0 0.0
      %1409 = vmatpush2.xpose.msra.mxu0 0.0
      %1410 = vmatprep.subr.mxu0 0.0
      %1411 = vmatpush2.xpose.msra.mxu0 0.0
      %1412 = vmatprep.subr.mxu0 0.0
      %1413 = vmatpush2.xpose.msra.mxu0 0.0
      %1414 = vmatprep.subr.mxu0 0.0
      %1415 = vmatpush2.xpose.msra.mxu0 0.0
      %1416 = vmatprep.subr.mxu0 0.0
      %1417 = vmatpush2.xpose.msra.mxu0 0.0
      %1418 = vmatprep.subr.mxu0 0.0
      %1419 = vmatpush2.xpose.msra.mxu0 0.0
      %1420 = vmatprep.subr.mxu0 0.0
      %1421 = vmatpush2.xpose.msra.mxu0 0.0
      %1422 = vmatprep.subr.mxu0 0.0
      %1423 = vmatpush2.xpose.msra.mxu0 0.0
      %1424 = vmatprep.subr.mxu0 0.0
      %1425 = vmatpush2.xpose.msra.mxu0 0.0
      %1426 = vmatprep.subr.mxu0 0.0
      %1427 = vmatpush2.xpose.msra.mxu0 0.0
      %1428 = vmatprep.subr.mxu0 0.0
      %1429 = vmatpush2.xpose.msra.mxu0 0.0
      %1430 = vmatprep.mubr.f32.mxu0 0.0
      %1431 = vmatmul.mubr.f32.gmra.mxu0 %v1358
      %v1432 = vpop.f32.mrf.mxu0
      %v1433 = vadd.f32 0.0, %v1432
      %v1434 = vpop.f32.mrf.mxu0
      %1435 = vmatprep.mubr.f32.mxu0 0.0
      %1436 = vmatmul.mubr.f32.gmra.mxu0 %v1360
      %v1437 = vpop.f32.mrf.mxu0
      %v1438 = vadd.f32 0.0, %v1437
      %v1439 = vpop.f32.mrf.mxu0
      %1440 = vdwg.mxu0
      %1443 = vrot.lane.b32.xlu0 %v1145, 112
      %v1444 = vpop.permute.xlu0 %1443
      %1445 = vrot.lane.b32.xlu0 %v1146, 112
      %v1446 = vpop.permute.xlu0 %1445
      %v1447 = vsel %vm1179, %v1145, 0
      %v1449 = vsel %vm1179, %v1146, 0
      %v1451 = vsel %vm1179, %v1444, 0
      %v1453 = vsel %vm1179, %v1446, 0
      %1455 = vmatprep.subr.mxu0 0.0
      %1456 = vmatpush1.xpose.msra.mxu0 0.0
      %1457 = vmatprep.subr.mxu0 0.0
      %1458 = vmatpush1.xpose.msra.mxu0 0.0
      %1459 = vmatprep.subr.mxu0 0.0
      %1460 = vmatpush1.xpose.msra.mxu0 0.0
      %1461 = vmatprep.subr.mxu0 0.0
      %1462 = vmatpush1.xpose.msra.mxu0 0.0
      %1463 = vmatprep.subr.mxu0 0.0
      %1464 = vmatpush1.xpose.msra.mxu0 0.0
      %1465 = vmatprep.subr.mxu0 0.0
      %1466 = vmatpush1.xpose.msra.mxu0 0.0
      %1467 = vmatprep.subr.mxu0 0.0
      %1468 = vmatpush1.xpose.msra.mxu0 0.0
      %1469 = vmatprep.subr.mxu0 0.0
      %1470 = vmatpush1.xpose.msra.mxu0 0.0
      %1471 = vmatprep.subr.mxu0 0.0
      %1472 = vmatpush1.xpose.msra.mxu0 0.0
      %1473 = vmatprep.subr.mxu0 0.0
      %1474 = vmatpush1.xpose.msra.mxu0 0.0
      %1475 = vmatprep.subr.mxu0 0.0
      %1476 = vmatpush1.xpose.msra.mxu0 0.0
      %1477 = vmatprep.subr.mxu0 0.0
      %1478 = vmatpush1.xpose.msra.mxu0 0.0
      %1479 = vmatprep.subr.mxu0 0.0
      %1480 = vmatpush1.xpose.msra.mxu0 0.0
      %1481 = vmatprep.subr.mxu0 0.0
      %1482 = vmatpush1.xpose.msra.mxu0 0.0
      %1483 = vmatprep.subr.mxu0 0.0
      %1484 = vmatpush1.xpose.msra.mxu0 %v1453
      %1485 = vmatprep.subr.mxu0 0.0
      %1486 = vmatpush1.xpose.msra.mxu0 %v1451
      %1487 = vmatprep.subr.mxu0 0.0
      %1488 = vmatpush2.xpose.msra.mxu0 0.0
      %1489 = vmatprep.subr.mxu0 0.0
      %1490 = vmatpush2.xpose.msra.mxu0 0.0
      %1491 = vmatprep.subr.mxu0 0.0
      %1492 = vmatpush2.xpose.msra.mxu0 0.0
      %1493 = vmatprep.subr.mxu0 0.0
      %1494 = vmatpush2.xpose.msra.mxu0 0.0
      %1495 = vmatprep.subr.mxu0 0.0
      %1496 = vmatpush2.xpose.msra.mxu0 0.0
      %1497 = vmatprep.subr.mxu0 0.0
      %1498 = vmatpush2.xpose.msra.mxu0 0.0
      %1499 = vmatprep.subr.mxu0 0.0
      %1500 = vmatpush2.xpose.msra.mxu0 0.0
      %1501 = vmatprep.subr.mxu0 0.0
      %1502 = vmatpush2.xpose.msra.mxu0 0.0
      %1503 = vmatprep.subr.mxu0 0.0
      %1504 = vmatpush2.xpose.msra.mxu0 0.0
      %1505 = vmatprep.subr.mxu0 0.0
      %1506 = vmatpush2.xpose.msra.mxu0 0.0
      %1507 = vmatprep.subr.mxu0 0.0
      %1508 = vmatpush2.xpose.msra.mxu0 0.0
      %1509 = vmatprep.subr.mxu0 0.0
      %1510 = vmatpush2.xpose.msra.mxu0 0.0
      %1511 = vmatprep.subr.mxu0 0.0
      %1512 = vmatpush2.xpose.msra.mxu0 0.0
      %1513 = vmatprep.subr.mxu0 0.0
      %1514 = vmatpush2.xpose.msra.mxu0 0.0
      %1515 = vmatprep.subr.mxu0 0.0
      %1516 = vmatpush2.xpose.msra.mxu0 0.0
      %1517 = vmatprep.subr.mxu0 0.0
      %1518 = vmatpush2.xpose.msra.mxu0 0.0
      %1519 = vmatprep.mubr.f32.mxu0 0.0
      %1520 = vmatmul.mubr.f32.gmra.mxu0 %v1447
      %v1521 = vpop.f32.mrf.mxu0
      %v1522 = vadd.f32 0.0, %v1521
      %v1523 = vpop.f32.mrf.mxu0
      %1524 = vmatprep.mubr.f32.mxu0 0.0
      %1525 = vmatmul.mubr.f32.gmra.mxu0 %v1449
      %v1526 = vpop.f32.mrf.mxu0
      %v1527 = vadd.f32 0.0, %v1526
      %v1528 = vpop.f32.mrf.mxu0
      %1529 = vdwg.mxu0
      %1532 = vrot.lane.b32.xlu0 %v1147, 112
      %v1533 = vpop.permute.xlu0 %1532
      %1534 = vrot.lane.b32.xlu0 %v1148, 112
      %v1535 = vpop.permute.xlu0 %1534
      %v1536 = vsel %vm1179, %v1147, 0
      %v1538 = vsel %vm1179, %v1148, 0
      %v1540 = vsel %vm1179, %v1533, 0
      %v1542 = vsel %vm1179, %v1535, 0
      %1544 = vmatprep.subr.mxu0 0.0
      %1545 = vmatpush1.xpose.msra.mxu0 0.0
      %1546 = vmatprep.subr.mxu0 0.0
      %1547 = vmatpush1.xpose.msra.mxu0 0.0
      %1548 = vmatprep.subr.mxu0 0.0
      %1549 = vmatpush1.xpose.msra.mxu0 0.0
      %1550 = vmatprep.subr.mxu0 0.0
      %1551 = vmatpush1.xpose.msra.mxu0 0.0
      %1552 = vmatprep.subr.mxu0 0.0
      %1553 = vmatpush1.xpose.msra.mxu0 0.0
      %1554 = vmatprep.subr.mxu0 0.0
      %1555 = vmatpush1.xpose.msra.mxu0 0.0
      %1556 = vmatprep.subr.mxu0 0.0
      %1557 = vmatpush1.xpose.msra.mxu0 0.0
      %1558 = vmatprep.subr.mxu0 0.0
      %1559 = vmatpush1.xpose.msra.mxu0 0.0
      %1560 = vmatprep.subr.mxu0 0.0
      %1561 = vmatpush1.xpose.msra.mxu0 0.0
      %1562 = vmatprep.subr.mxu0 0.0
      %1563 = vmatpush1.xpose.msra.mxu0 0.0
      %1564 = vmatprep.subr.mxu0 0.0
      %1565 = vmatpush1.xpose.msra.mxu0 0.0
      %1566 = vmatprep.subr.mxu0 0.0
      %1567 = vmatpush1.xpose.msra.mxu0 0.0
      %1568 = vmatprep.subr.mxu0 0.0
      %1569 = vmatpush1.xpose.msra.mxu0 0.0
      %1570 = vmatprep.subr.mxu0 0.0
      %1571 = vmatpush1.xpose.msra.mxu0 0.0
      %1572 = vmatprep.subr.mxu0 0.0
      %1573 = vmatpush1.xpose.msra.mxu0 %v1542
      %1574 = vmatprep.subr.mxu0 0.0
      %1575 = vmatpush1.xpose.msra.mxu0 %v1540
      %1576 = vmatprep.subr.mxu0 0.0
      %1577 = vmatpush2.xpose.msra.mxu0 0.0
      %1578 = vmatprep.subr.mxu0 0.0
      %1579 = vmatpush2.xpose.msra.mxu0 0.0
      %1580 = vmatprep.subr.mxu0 0.0
      %1581 = vmatpush2.xpose.msra.mxu0 0.0
      %1582 = vmatprep.subr.mxu0 0.0
      %1583 = vmatpush2.xpose.msra.mxu0 0.0
      %1584 = vmatprep.subr.mxu0 0.0
      %1585 = vmatpush2.xpose.msra.mxu0 0.0
      %1586 = vmatprep.subr.mxu0 0.0
      %1587 = vmatpush2.xpose.msra.mxu0 0.0
      %1588 = vmatprep.subr.mxu0 0.0
      %1589 = vmatpush2.xpose.msra.mxu0 0.0
      %1590 = vmatprep.subr.mxu0 0.0
      %1591 = vmatpush2.xpose.msra.mxu0 0.0
      %1592 = vmatprep.subr.mxu0 0.0
      %1593 = vmatpush2.xpose.msra.mxu0 0.0
      %1594 = vmatprep.subr.mxu0 0.0
      %1595 = vmatpush2.xpose.msra.mxu0 0.0
      %1596 = vmatprep.subr.mxu0 0.0
      %1597 = vmatpush2.xpose.msra.mxu0 0.0
      %1598 = vmatprep.subr.mxu0 0.0
      %1599 = vmatpush2.xpose.msra.mxu0 0.0
      %1600 = vmatprep.subr.mxu0 0.0
      %1601 = vmatpush2.xpose.msra.mxu0 0.0
      %1602 = vmatprep.subr.mxu0 0.0
      %1603 = vmatpush2.xpose.msra.mxu0 0.0
      %1604 = vmatprep.subr.mxu0 0.0
      %1605 = vmatpush2.xpose.msra.mxu0 0.0
      %1606 = vmatprep.subr.mxu0 0.0
      %1607 = vmatpush2.xpose.msra.mxu0 0.0
      %1608 = vmatprep.mubr.f32.mxu0 0.0
      %1609 = vmatmul.mubr.f32.gmra.mxu0 %v1536
      %v1610 = vpop.f32.mrf.mxu0
      %v1611 = vadd.f32 0.0, %v1610
      %v1612 = vpop.f32.mrf.mxu0
      %1613 = vmatprep.mubr.f32.mxu0 0.0
      %1614 = vmatmul.mubr.f32.gmra.mxu0 %v1538
      %v1615 = vpop.f32.mrf.mxu0
      %v1616 = vadd.f32 0.0, %v1615
      %v1617 = vpop.f32.mrf.mxu0
      %1618 = vdwg.mxu0
      %1621 = vrot.lane.b32.xlu0 %v1149, 112
      %v1622 = vpop.permute.xlu0 %1621
      %1623 = vrot.lane.b32.xlu0 %v1150, 112
      %v1624 = vpop.permute.xlu0 %1623
      %v1625 = vsel %vm1179, %v1149, 0
      %v1627 = vsel %vm1179, %v1150, 0
      %v1629 = vsel %vm1179, %v1622, 0
      %v1631 = vsel %vm1179, %v1624, 0
      %1633 = vmatprep.subr.mxu0 0.0
      %1634 = vmatpush1.xpose.msra.mxu0 0.0
      %1635 = vmatprep.subr.mxu0 0.0
      %1636 = vmatpush1.xpose.msra.mxu0 0.0
      %1637 = vmatprep.subr.mxu0 0.0
      %1638 = vmatpush1.xpose.msra.mxu0 0.0
      %1639 = vmatprep.subr.mxu0 0.0
      %1640 = vmatpush1.xpose.msra.mxu0 0.0
      %1641 = vmatprep.subr.mxu0 0.0
      %1642 = vmatpush1.xpose.msra.mxu0 0.0
      %1643 = vmatprep.subr.mxu0 0.0
      %1644 = vmatpush1.xpose.msra.mxu0 0.0
      %1645 = vmatprep.subr.mxu0 0.0
      %1646 = vmatpush1.xpose.msra.mxu0 0.0
      %1647 = vmatprep.subr.mxu0 0.0
      %1648 = vmatpush1.xpose.msra.mxu0 0.0
      %1649 = vmatprep.subr.mxu0 0.0
      %1650 = vmatpush1.xpose.msra.mxu0 0.0
      %1651 = vmatprep.subr.mxu0 0.0
      %1652 = vmatpush1.xpose.msra.mxu0 0.0
      %1653 = vmatprep.subr.mxu0 0.0
      %1654 = vmatpush1.xpose.msra.mxu0 0.0
      %1655 = vmatprep.subr.mxu0 0.0
      %1656 = vmatpush1.xpose.msra.mxu0 0.0
      %1657 = vmatprep.subr.mxu0 0.0
      %1658 = vmatpush1.xpose.msra.mxu0 0.0
      %1659 = vmatprep.subr.mxu0 0.0
      %1660 = vmatpush1.xpose.msra.mxu0 0.0
      %1661 = vmatprep.subr.mxu0 0.0
      %1662 = vmatpush1.xpose.msra.mxu0 %v1631
      %1663 = vmatprep.subr.mxu0 0.0
      %1664 = vmatpush1.xpose.msra.mxu0 %v1629
      %1665 = vmatprep.subr.mxu0 0.0
      %1666 = vmatpush2.xpose.msra.mxu0 0.0
      %1667 = vmatprep.subr.mxu0 0.0
      %1668 = vmatpush2.xpose.msra.mxu0 0.0
      %1669 = vmatprep.subr.mxu0 0.0
      %1670 = vmatpush2.xpose.msra.mxu0 0.0
      %1671 = vmatprep.subr.mxu0 0.0
      %1672 = vmatpush2.xpose.msra.mxu0 0.0
      %1673 = vmatprep.subr.mxu0 0.0
      %1674 = vmatpush2.xpose.msra.mxu0 0.0
      %1675 = vmatprep.subr.mxu0 0.0
      %1676 = vmatpush2.xpose.msra.mxu0 0.0
      %1677 = vmatprep.subr.mxu0 0.0
      %1678 = vmatpush2.xpose.msra.mxu0 0.0
      %1679 = vmatprep.subr.mxu0 0.0
      %1680 = vmatpush2.xpose.msra.mxu0 0.0
      %1681 = vmatprep.subr.mxu0 0.0
      %1682 = vmatpush2.xpose.msra.mxu0 0.0
      %1683 = vmatprep.subr.mxu0 0.0
      %1684 = vmatpush2.xpose.msra.mxu0 0.0
      %1685 = vmatprep.subr.mxu0 0.0
      %1686 = vmatpush2.xpose.msra.mxu0 0.0
      %1687 = vmatprep.subr.mxu0 0.0
      %1688 = vmatpush2.xpose.msra.mxu0 0.0
      %1689 = vmatprep.subr.mxu0 0.0
      %1690 = vmatpush2.xpose.msra.mxu0 0.0
      %1691 = vmatprep.subr.mxu0 0.0
      %1692 = vmatpush2.xpose.msra.mxu0 0.0
      %1693 = vmatprep.subr.mxu0 0.0
      %1694 = vmatpush2.xpose.msra.mxu0 0.0
      %1695 = vmatprep.subr.mxu0 0.0
      %1696 = vmatpush2.xpose.msra.mxu0 0.0
      %1697 = vmatprep.mubr.f32.mxu0 0.0
      %1698 = vmatmul.mubr.f32.gmra.mxu0 %v1625
      %v1699 = vpop.f32.mrf.mxu0
      %v1700 = vadd.f32 0.0, %v1699
      %v1701 = vpop.f32.mrf.mxu0
      %1702 = vmatprep.mubr.f32.mxu0 0.0
      %1703 = vmatmul.mubr.f32.gmra.mxu0 %v1627
      %v1704 = vpop.f32.mrf.mxu0
      %v1705 = vadd.f32 0.0, %v1704
      %v1706 = vpop.f32.mrf.mxu0
      %1707 = vdwg.mxu0
      %1710 = vrot.lane.b32.xlu0 %v1151, 112
      %v1711 = vpop.permute.xlu0 %1710
      %1712 = vrot.lane.b32.xlu0 %v1152, 112
      %v1713 = vpop.permute.xlu0 %1712
      %v1714 = vsel %vm1179, %v1151, 0
      %v1716 = vsel %vm1179, %v1152, 0
      %v1718 = vsel %vm1179, %v1711, 0
      %v1720 = vsel %vm1179, %v1713, 0
      %1722 = vmatprep.subr.mxu0 0.0
      %1723 = vmatpush1.xpose.msra.mxu0 0.0
      %1724 = vmatprep.subr.mxu0 0.0
      %1725 = vmatpush1.xpose.msra.mxu0 0.0
      %1726 = vmatprep.subr.mxu0 0.0
      %1727 = vmatpush1.xpose.msra.mxu0 0.0
      %1728 = vmatprep.subr.mxu0 0.0
      %1729 = vmatpush1.xpose.msra.mxu0 0.0
      %1730 = vmatprep.subr.mxu0 0.0
      %1731 = vmatpush1.xpose.msra.mxu0 0.0
      %1732 = vmatprep.subr.mxu0 0.0
      %1733 = vmatpush1.xpose.msra.mxu0 0.0
      %1734 = vmatprep.subr.mxu0 0.0
      %1735 = vmatpush1.xpose.msra.mxu0 0.0
      %1736 = vmatprep.subr.mxu0 0.0
      %1737 = vmatpush1.xpose.msra.mxu0 0.0
      %1738 = vmatprep.subr.mxu0 0.0
      %1739 = vmatpush1.xpose.msra.mxu0 0.0
      %1740 = vmatprep.subr.mxu0 0.0
      %1741 = vmatpush1.xpose.msra.mxu0 0.0
      %1742 = vmatprep.subr.mxu0 0.0
      %1743 = vmatpush1.xpose.msra.mxu0 0.0
      %1744 = vmatprep.subr.mxu0 0.0
      %1745 = vmatpush1.xpose.msra.mxu0 0.0
      %1746 = vmatprep.subr.mxu0 0.0
      %1747 = vmatpush1.xpose.msra.mxu0 0.0
      %1748 = vmatprep.subr.mxu0 0.0
      %1749 = vmatpush1.xpose.msra.mxu0 0.0
      %1750 = vmatprep.subr.mxu0 0.0
      %1751 = vmatpush1.xpose.msra.mxu0 %v1720
      %1752 = vmatprep.subr.mxu0 0.0
      %1753 = vmatpush1.xpose.msra.mxu0 %v1718
      %1754 = vmatprep.subr.mxu0 0.0
      %1755 = vmatpush2.xpose.msra.mxu0 0.0
      %1756 = vmatprep.subr.mxu0 0.0
      %1757 = vmatpush2.xpose.msra.mxu0 0.0
      %1758 = vmatprep.subr.mxu0 0.0
      %1759 = vmatpush2.xpose.msra.mxu0 0.0
      %1760 = vmatprep.subr.mxu0 0.0
      %1761 = vmatpush2.xpose.msra.mxu0 0.0
      %1762 = vmatprep.subr.mxu0 0.0
      %1763 = vmatpush2.xpose.msra.mxu0 0.0
      %1764 = vmatprep.subr.mxu0 0.0
      %1765 = vmatpush2.xpose.msra.mxu0 0.0
      %1766 = vmatprep.subr.mxu0 0.0
      %1767 = vmatpush2.xpose.msra.mxu0 0.0
      %1768 = vmatprep.subr.mxu0 0.0
      %1769 = vmatpush2.xpose.msra.mxu0 0.0
      %1770 = vmatprep.subr.mxu0 0.0
      %1771 = vmatpush2.xpose.msra.mxu0 0.0
      %1772 = vmatprep.subr.mxu0 0.0
      %1773 = vmatpush2.xpose.msra.mxu0 0.0
      %1774 = vmatprep.subr.mxu0 0.0
      %1775 = vmatpush2.xpose.msra.mxu0 0.0
      %1776 = vmatprep.subr.mxu0 0.0
      %1777 = vmatpush2.xpose.msra.mxu0 0.0
      %1778 = vmatprep.subr.mxu0 0.0
      %1779 = vmatpush2.xpose.msra.mxu0 0.0
      %1780 = vmatprep.subr.mxu0 0.0
      %1781 = vmatpush2.xpose.msra.mxu0 0.0
      %1782 = vmatprep.subr.mxu0 0.0
      %1783 = vmatpush2.xpose.msra.mxu0 0.0
      %1784 = vmatprep.subr.mxu0 0.0
      %1785 = vmatpush2.xpose.msra.mxu0 0.0
      %1786 = vmatprep.mubr.f32.mxu0 0.0
      %1787 = vmatmul.mubr.f32.gmra.mxu0 %v1714
      %v1788 = vpop.f32.mrf.mxu0
      %v1789 = vadd.f32 0.0, %v1788
      %v1790 = vpop.f32.mrf.mxu0
      %1791 = vmatprep.mubr.f32.mxu0 0.0
      %1792 = vmatmul.mubr.f32.gmra.mxu0 %v1716
      %v1793 = vpop.f32.mrf.mxu0
      %v1794 = vadd.f32 0.0, %v1793
      %v1795 = vpop.f32.mrf.mxu0
      %1796 = vdwg.mxu0
      %1799 = vrot.lane.b32.xlu0 %v1153, 112
      %v1800 = vpop.permute.xlu0 %1799
      %1801 = vrot.lane.b32.xlu0 %v1154, 112
      %v1802 = vpop.permute.xlu0 %1801
      %v1803 = vsel %vm1179, %v1153, 0
      %v1805 = vsel %vm1179, %v1154, 0
      %v1807 = vsel %vm1179, %v1800, 0
      %v1809 = vsel %vm1179, %v1802, 0
      %1811 = vmatprep.subr.mxu0 0.0
      %1812 = vmatpush1.xpose.msra.mxu0 0.0
      %1813 = vmatprep.subr.mxu0 0.0
      %1814 = vmatpush1.xpose.msra.mxu0 0.0
      %1815 = vmatprep.subr.mxu0 0.0
      %1816 = vmatpush1.xpose.msra.mxu0 0.0
      %1817 = vmatprep.subr.mxu0 0.0
      %1818 = vmatpush1.xpose.msra.mxu0 0.0
      %1819 = vmatprep.subr.mxu0 0.0
      %1820 = vmatpush1.xpose.msra.mxu0 0.0
      %1821 = vmatprep.subr.mxu0 0.0
      %1822 = vmatpush1.xpose.msra.mxu0 0.0
      %1823 = vmatprep.subr.mxu0 0.0
      %1824 = vmatpush1.xpose.msra.mxu0 0.0
      %1825 = vmatprep.subr.mxu0 0.0
      %1826 = vmatpush1.xpose.msra.mxu0 0.0
      %1827 = vmatprep.subr.mxu0 0.0
      %1828 = vmatpush1.xpose.msra.mxu0 0.0
      %1829 = vmatprep.subr.mxu0 0.0
      %1830 = vmatpush1.xpose.msra.mxu0 0.0
      %1831 = vmatprep.subr.mxu0 0.0
      %1832 = vmatpush1.xpose.msra.mxu0 0.0
      %1833 = vmatprep.subr.mxu0 0.0
      %1834 = vmatpush1.xpose.msra.mxu0 0.0
      %1835 = vmatprep.subr.mxu0 0.0
      %1836 = vmatpush1.xpose.msra.mxu0 0.0
      %1837 = vmatprep.subr.mxu0 0.0
      %1838 = vmatpush1.xpose.msra.mxu0 0.0
      %1839 = vmatprep.subr.mxu0 0.0
      %1840 = vmatpush1.xpose.msra.mxu0 %v1809
      %1841 = vmatprep.subr.mxu0 0.0
      %1842 = vmatpush1.xpose.msra.mxu0 %v1807
      %1843 = vmatprep.subr.mxu0 0.0
      %1844 = vmatpush2.xpose.msra.mxu0 0.0
      %1845 = vmatprep.subr.mxu0 0.0
      %1846 = vmatpush2.xpose.msra.mxu0 0.0
      %1847 = vmatprep.subr.mxu0 0.0
      %1848 = vmatpush2.xpose.msra.mxu0 0.0
      %1849 = vmatprep.subr.mxu0 0.0
      %1850 = vmatpush2.xpose.msra.mxu0 0.0
      %1851 = vmatprep.subr.mxu0 0.0
      %1852 = vmatpush2.xpose.msra.mxu0 0.0
      %1853 = vmatprep.subr.mxu0 0.0
      %1854 = vmatpush2.xpose.msra.mxu0 0.0
      %1855 = vmatprep.subr.mxu0 0.0
      %1856 = vmatpush2.xpose.msra.mxu0 0.0
      %1857 = vmatprep.subr.mxu0 0.0
      %1858 = vmatpush2.xpose.msra.mxu0 0.0
      %1859 = vmatprep.subr.mxu0 0.0
      %1860 = vmatpush2.xpose.msra.mxu0 0.0
      %1861 = vmatprep.subr.mxu0 0.0
      %1862 = vmatpush2.xpose.msra.mxu0 0.0
      %1863 = vmatprep.subr.mxu0 0.0
      %1864 = vmatpush2.xpose.msra.mxu0 0.0
      %1865 = vmatprep.subr.mxu0 0.0
      %1866 = vmatpush2.xpose.msra.mxu0 0.0
      %1867 = vmatprep.subr.mxu0 0.0
      %1868 = vmatpush2.xpose.msra.mxu0 0.0
      %1869 = vmatprep.subr.mxu0 0.0
      %1870 = vmatpush2.xpose.msra.mxu0 0.0
      %1871 = vmatprep.subr.mxu0 0.0
      %1872 = vmatpush2.xpose.msra.mxu0 0.0
      %1873 = vmatprep.subr.mxu0 0.0
      %1874 = vmatpush2.xpose.msra.mxu0 0.0
      %1875 = vmatprep.mubr.f32.mxu0 0.0
      %1876 = vmatmul.mubr.f32.gmra.mxu0 %v1803
      %v1877 = vpop.f32.mrf.mxu0
      %v1878 = vadd.f32 0.0, %v1877
      %v1879 = vpop.f32.mrf.mxu0
      %1880 = vmatprep.mubr.f32.mxu0 0.0
      %1881 = vmatmul.mubr.f32.gmra.mxu0 %v1805
      %v1882 = vpop.f32.mrf.mxu0
      %v1883 = vadd.f32 0.0, %v1882
      %v1884 = vpop.f32.mrf.mxu0
      %1885 = vdwg.mxu0
      %1888 = vrot.lane.b32.xlu0 %v1155, 112
      %v1889 = vpop.permute.xlu0 %1888
      %1890 = vrot.lane.b32.xlu0 %v1156, 112
      %v1891 = vpop.permute.xlu0 %1890
      %v1892 = vsel %vm1179, %v1155, 0
      %v1894 = vsel %vm1179, %v1156, 0
      %v1896 = vsel %vm1179, %v1889, 0
      %v1898 = vsel %vm1179, %v1891, 0
      %1900 = vmatprep.subr.mxu0 0.0
      %1901 = vmatpush1.xpose.msra.mxu0 0.0
      %1902 = vmatprep.subr.mxu0 0.0
      %1903 = vmatpush1.xpose.msra.mxu0 0.0
      %1904 = vmatprep.subr.mxu0 0.0
      %1905 = vmatpush1.xpose.msra.mxu0 0.0
      %1906 = vmatprep.subr.mxu0 0.0
      %1907 = vmatpush1.xpose.msra.mxu0 0.0
      %1908 = vmatprep.subr.mxu0 0.0
      %1909 = vmatpush1.xpose.msra.mxu0 0.0
      %1910 = vmatprep.subr.mxu0 0.0
      %1911 = vmatpush1.xpose.msra.mxu0 0.0
      %1912 = vmatprep.subr.mxu0 0.0
      %1913 = vmatpush1.xpose.msra.mxu0 0.0
      %1914 = vmatprep.subr.mxu0 0.0
      %1915 = vmatpush1.xpose.msra.mxu0 0.0
      %1916 = vmatprep.subr.mxu0 0.0
      %1917 = vmatpush1.xpose.msra.mxu0 0.0
      %1918 = vmatprep.subr.mxu0 0.0
      %1919 = vmatpush1.xpose.msra.mxu0 0.0
      %1920 = vmatprep.subr.mxu0 0.0
      %1921 = vmatpush1.xpose.msra.mxu0 0.0
      %1922 = vmatprep.subr.mxu0 0.0
      %1923 = vmatpush1.xpose.msra.mxu0 0.0
      %1924 = vmatprep.subr.mxu0 0.0
      %1925 = vmatpush1.xpose.msra.mxu0 0.0
      %1926 = vmatprep.subr.mxu0 0.0
      %1927 = vmatpush1.xpose.msra.mxu0 0.0
      %1928 = vmatprep.subr.mxu0 0.0
      %1929 = vmatpush1.xpose.msra.mxu0 %v1898
      %1930 = vmatprep.subr.mxu0 0.0
      %1931 = vmatpush1.xpose.msra.mxu0 %v1896
      %1932 = vmatprep.subr.mxu0 0.0
      %1933 = vmatpush2.xpose.msra.mxu0 0.0
      %1934 = vmatprep.subr.mxu0 0.0
      %1935 = vmatpush2.xpose.msra.mxu0 0.0
      %1936 = vmatprep.subr.mxu0 0.0
      %1937 = vmatpush2.xpose.msra.mxu0 0.0
      %1938 = vmatprep.subr.mxu0 0.0
      %1939 = vmatpush2.xpose.msra.mxu0 0.0
      %1940 = vmatprep.subr.mxu0 0.0
      %1941 = vmatpush2.xpose.msra.mxu0 0.0
      %1942 = vmatprep.subr.mxu0 0.0
      %1943 = vmatpush2.xpose.msra.mxu0 0.0
      %1944 = vmatprep.subr.mxu0 0.0
      %1945 = vmatpush2.xpose.msra.mxu0 0.0
      %1946 = vmatprep.subr.mxu0 0.0
      %1947 = vmatpush2.xpose.msra.mxu0 0.0
      %1948 = vmatprep.subr.mxu0 0.0
      %1949 = vmatpush2.xpose.msra.mxu0 0.0
      %1950 = vmatprep.subr.mxu0 0.0
      %1951 = vmatpush2.xpose.msra.mxu0 0.0
      %1952 = vmatprep.subr.mxu0 0.0
      %1953 = vmatpush2.xpose.msra.mxu0 0.0
      %1954 = vmatprep.subr.mxu0 0.0
      %1955 = vmatpush2.xpose.msra.mxu0 0.0
      %1956 = vmatprep.subr.mxu0 0.0
      %1957 = vmatpush2.xpose.msra.mxu0 0.0
      %1958 = vmatprep.subr.mxu0 0.0
      %1959 = vmatpush2.xpose.msra.mxu0 0.0
      %1960 = vmatprep.subr.mxu0 0.0
      %1961 = vmatpush2.xpose.msra.mxu0 0.0
      %1962 = vmatprep.subr.mxu0 0.0
      %1963 = vmatpush2.xpose.msra.mxu0 0.0
      %1964 = vmatprep.mubr.f32.mxu0 0.0
      %1965 = vmatmul.mubr.f32.gmra.mxu0 %v1892
      %v1966 = vpop.f32.mrf.mxu0
      %v1967 = vadd.f32 0.0, %v1966
      %v1968 = vpop.f32.mrf.mxu0
      %1969 = vmatprep.mubr.f32.mxu0 0.0
      %1970 = vmatmul.mubr.f32.gmra.mxu0 %v1894
      %v1971 = vpop.f32.mrf.mxu0
      %v1972 = vadd.f32 0.0, %v1971
      %v1973 = vpop.f32.mrf.mxu0
      %1974 = vdwg.mxu0
      %1977 = vrot.lane.b32.xlu0 %v1157, 112
      %v1978 = vpop.permute.xlu0 %1977
      %1979 = vrot.lane.b32.xlu0 %v1158, 112
      %v1980 = vpop.permute.xlu0 %1979
      %v1981 = vsel %vm1179, %v1157, 0
      %v1983 = vsel %vm1179, %v1158, 0
      %v1985 = vsel %vm1179, %v1978, 0
      %v1987 = vsel %vm1179, %v1980, 0
      %1989 = vmatprep.subr.mxu0 0.0
      %1990 = vmatpush1.xpose.msra.mxu0 0.0
      %1991 = vmatprep.subr.mxu0 0.0
      %1992 = vmatpush1.xpose.msra.mxu0 0.0
      %1993 = vmatprep.subr.mxu0 0.0
      %1994 = vmatpush1.xpose.msra.mxu0 0.0
      %1995 = vmatprep.subr.mxu0 0.0
      %1996 = vmatpush1.xpose.msra.mxu0 0.0
      %1997 = vmatprep.subr.mxu0 0.0
      %1998 = vmatpush1.xpose.msra.mxu0 0.0
      %1999 = vmatprep.subr.mxu0 0.0
      %2000 = vmatpush1.xpose.msra.mxu0 0.0
      %2001 = vmatprep.subr.mxu0 0.0
      %2002 = vmatpush1.xpose.msra.mxu0 0.0
      %2003 = vmatprep.subr.mxu0 0.0
      %2004 = vmatpush1.xpose.msra.mxu0 0.0
      %2005 = vmatprep.subr.mxu0 0.0
      %2006 = vmatpush1.xpose.msra.mxu0 0.0
      %2007 = vmatprep.subr.mxu0 0.0
      %2008 = vmatpush1.xpose.msra.mxu0 0.0
      %2009 = vmatprep.subr.mxu0 0.0
      %2010 = vmatpush1.xpose.msra.mxu0 0.0
      %2011 = vmatprep.subr.mxu0 0.0
      %2012 = vmatpush1.xpose.msra.mxu0 0.0
      %2013 = vmatprep.subr.mxu0 0.0
      %2014 = vmatpush1.xpose.msra.mxu0 0.0
      %2015 = vmatprep.subr.mxu0 0.0
      %2016 = vmatpush1.xpose.msra.mxu0 0.0
      %2017 = vmatprep.subr.mxu0 0.0
      %2018 = vmatpush1.xpose.msra.mxu0 %v1987
      %2019 = vmatprep.subr.mxu0 0.0
      %2020 = vmatpush1.xpose.msra.mxu0 %v1985
      %2021 = vmatprep.subr.mxu0 0.0
      %2022 = vmatpush2.xpose.msra.mxu0 0.0
      %2023 = vmatprep.subr.mxu0 0.0
      %2024 = vmatpush2.xpose.msra.mxu0 0.0
      %2025 = vmatprep.subr.mxu0 0.0
      %2026 = vmatpush2.xpose.msra.mxu0 0.0
      %2027 = vmatprep.subr.mxu0 0.0
      %2028 = vmatpush2.xpose.msra.mxu0 0.0
      %2029 = vmatprep.subr.mxu0 0.0
      %2030 = vmatpush2.xpose.msra.mxu0 0.0
      %2031 = vmatprep.subr.mxu0 0.0
      %2032 = vmatpush2.xpose.msra.mxu0 0.0
      %2033 = vmatprep.subr.mxu0 0.0
      %2034 = vmatpush2.xpose.msra.mxu0 0.0
      %2035 = vmatprep.subr.mxu0 0.0
      %2036 = vmatpush2.xpose.msra.mxu0 0.0
      %2037 = vmatprep.subr.mxu0 0.0
      %2038 = vmatpush2.xpose.msra.mxu0 0.0
      %2039 = vmatprep.subr.mxu0 0.0
      %2040 = vmatpush2.xpose.msra.mxu0 0.0
      %2041 = vmatprep.subr.mxu0 0.0
      %2042 = vmatpush2.xpose.msra.mxu0 0.0
      %2043 = vmatprep.subr.mxu0 0.0
      %2044 = vmatpush2.xpose.msra.mxu0 0.0
      %2045 = vmatprep.subr.mxu0 0.0
      %2046 = vmatpush2.xpose.msra.mxu0 0.0
      %2047 = vmatprep.subr.mxu0 0.0
      %2048 = vmatpush2.xpose.msra.mxu0 0.0
      %2049 = vmatprep.subr.mxu0 0.0
      %2050 = vmatpush2.xpose.msra.mxu0 0.0
      %2051 = vmatprep.subr.mxu0 0.0
      %2052 = vmatpush2.xpose.msra.mxu0 0.0
      %2053 = vmatprep.mubr.f32.mxu0 0.0
      %2054 = vmatmul.mubr.f32.gmra.mxu0 %v1981
      %v2055 = vpop.f32.mrf.mxu0
      %v2056 = vadd.f32 0.0, %v2055
      %v2057 = vpop.f32.mrf.mxu0
      %2058 = vmatprep.mubr.f32.mxu0 0.0
      %2059 = vmatmul.mubr.f32.gmra.mxu0 %v1983
      %v2060 = vpop.f32.mrf.mxu0
      %v2061 = vadd.f32 0.0, %v2060
      %v2062 = vpop.f32.mrf.mxu0
      %2063 = vdwg.mxu0
      %2066 = vrot.lane.b32.xlu0 %v1159, 112
      %v2067 = vpop.permute.xlu0 %2066
      %2068 = vrot.lane.b32.xlu0 %v1160, 112
      %v2069 = vpop.permute.xlu0 %2068
      %v2070 = vsel %vm1179, %v1159, 0
      %v2072 = vsel %vm1179, %v1160, 0
      %v2074 = vsel %vm1179, %v2067, 0
      %v2076 = vsel %vm1179, %v2069, 0
      %2078 = vmatprep.subr.mxu0 0.0
      %2079 = vmatpush1.xpose.msra.mxu0 0.0
      %2080 = vmatprep.subr.mxu0 0.0
      %2081 = vmatpush1.xpose.msra.mxu0 0.0
      %2082 = vmatprep.subr.mxu0 0.0
      %2083 = vmatpush1.xpose.msra.mxu0 0.0
      %2084 = vmatprep.subr.mxu0 0.0
      %2085 = vmatpush1.xpose.msra.mxu0 0.0
      %2086 = vmatprep.subr.mxu0 0.0
      %2087 = vmatpush1.xpose.msra.mxu0 0.0
      %2088 = vmatprep.subr.mxu0 0.0
      %2089 = vmatpush1.xpose.msra.mxu0 0.0
      %2090 = vmatprep.subr.mxu0 0.0
      %2091 = vmatpush1.xpose.msra.mxu0 0.0
      %2092 = vmatprep.subr.mxu0 0.0
      %2093 = vmatpush1.xpose.msra.mxu0 0.0
      %2094 = vmatprep.subr.mxu0 0.0
      %2095 = vmatpush1.xpose.msra.mxu0 0.0
      %2096 = vmatprep.subr.mxu0 0.0
      %2097 = vmatpush1.xpose.msra.mxu0 0.0
      %2098 = vmatprep.subr.mxu0 0.0
      %2099 = vmatpush1.xpose.msra.mxu0 0.0
      %2100 = vmatprep.subr.mxu0 0.0
      %2101 = vmatpush1.xpose.msra.mxu0 0.0
      %2102 = vmatprep.subr.mxu0 0.0
      %2103 = vmatpush1.xpose.msra.mxu0 0.0
      %2104 = vmatprep.subr.mxu0 0.0
      %2105 = vmatpush1.xpose.msra.mxu0 0.0
      %2106 = vmatprep.subr.mxu0 0.0
      %2107 = vmatpush1.xpose.msra.mxu0 %v2076
      %2108 = vmatprep.subr.mxu0 0.0
      %2109 = vmatpush1.xpose.msra.mxu0 %v2074
      %2110 = vmatprep.subr.mxu0 0.0
      %2111 = vmatpush2.xpose.msra.mxu0 0.0
      %2112 = vmatprep.subr.mxu0 0.0
      %2113 = vmatpush2.xpose.msra.mxu0 0.0
      %2114 = vmatprep.subr.mxu0 0.0
      %2115 = vmatpush2.xpose.msra.mxu0 0.0
      %2116 = vmatprep.subr.mxu0 0.0
      %2117 = vmatpush2.xpose.msra.mxu0 0.0
      %2118 = vmatprep.subr.mxu0 0.0
      %2119 = vmatpush2.xpose.msra.mxu0 0.0
      %2120 = vmatprep.subr.mxu0 0.0
      %2121 = vmatpush2.xpose.msra.mxu0 0.0
      %2122 = vmatprep.subr.mxu0 0.0
      %2123 = vmatpush2.xpose.msra.mxu0 0.0
      %2124 = vmatprep.subr.mxu0 0.0
      %2125 = vmatpush2.xpose.msra.mxu0 0.0
      %2126 = vmatprep.subr.mxu0 0.0
      %2127 = vmatpush2.xpose.msra.mxu0 0.0
      %2128 = vmatprep.subr.mxu0 0.0
      %2129 = vmatpush2.xpose.msra.mxu0 0.0
      %2130 = vmatprep.subr.mxu0 0.0
      %2131 = vmatpush2.xpose.msra.mxu0 0.0
      %2132 = vmatprep.subr.mxu0 0.0
      %2133 = vmatpush2.xpose.msra.mxu0 0.0
      %2134 = vmatprep.subr.mxu0 0.0
      %2135 = vmatpush2.xpose.msra.mxu0 0.0
      %2136 = vmatprep.subr.mxu0 0.0
      %2137 = vmatpush2.xpose.msra.mxu0 0.0
      %2138 = vmatprep.subr.mxu0 0.0
      %2139 = vmatpush2.xpose.msra.mxu0 0.0
      %2140 = vmatprep.subr.mxu0 0.0
      %2141 = vmatpush2.xpose.msra.mxu0 0.0
      %2142 = vmatprep.mubr.f32.mxu0 0.0
      %2143 = vmatmul.mubr.f32.gmra.mxu0 %v2070
      %v2144 = vpop.f32.mrf.mxu0
      %v2145 = vadd.f32 0.0, %v2144
      %v2146 = vpop.f32.mrf.mxu0
      %2147 = vmatprep.mubr.f32.mxu0 0.0
      %2148 = vmatmul.mubr.f32.gmra.mxu0 %v2072
      %v2149 = vpop.f32.mrf.mxu0
      %v2150 = vadd.f32 0.0, %v2149
      %v2151 = vpop.f32.mrf.mxu0
      %2152 = vdwg.mxu0
      %2155 = vrot.lane.b32.xlu0 %v1161, 112
      %v2156 = vpop.permute.xlu0 %2155
      %2157 = vrot.lane.b32.xlu0 %v1162, 112
      %v2158 = vpop.permute.xlu0 %2157
      %v2159 = vsel %vm1179, %v1161, 0
      %v2161 = vsel %vm1179, %v1162, 0
      %v2163 = vsel %vm1179, %v2156, 0
      %v2165 = vsel %vm1179, %v2158, 0
      %2167 = vmatprep.subr.mxu0 0.0
      %2168 = vmatpush1.xpose.msra.mxu0 0.0
      %2169 = vmatprep.subr.mxu0 0.0
      %2170 = vmatpush1.xpose.msra.mxu0 0.0
      %2171 = vmatprep.subr.mxu0 0.0
      %2172 = vmatpush1.xpose.msra.mxu0 0.0
      %2173 = vmatprep.subr.mxu0 0.0
      %2174 = vmatpush1.xpose.msra.mxu0 0.0
      %2175 = vmatprep.subr.mxu0 0.0
      %2176 = vmatpush1.xpose.msra.mxu0 0.0
      %2177 = vmatprep.subr.mxu0 0.0
      %2178 = vmatpush1.xpose.msra.mxu0 0.0
      %2179 = vmatprep.subr.mxu0 0.0
      %2180 = vmatpush1.xpose.msra.mxu0 0.0
      %2181 = vmatprep.subr.mxu0 0.0
      %2182 = vmatpush1.xpose.msra.mxu0 0.0
      %2183 = vmatprep.subr.mxu0 0.0
      %2184 = vmatpush1.xpose.msra.mxu0 0.0
      %2185 = vmatprep.subr.mxu0 0.0
      %2186 = vmatpush1.xpose.msra.mxu0 0.0
      %2187 = vmatprep.subr.mxu0 0.0
      %2188 = vmatpush1.xpose.msra.mxu0 0.0
      %2189 = vmatprep.subr.mxu0 0.0
      %2190 = vmatpush1.xpose.msra.mxu0 0.0
      %2191 = vmatprep.subr.mxu0 0.0
      %2192 = vmatpush1.xpose.msra.mxu0 0.0
      %2193 = vmatprep.subr.mxu0 0.0
      %2194 = vmatpush1.xpose.msra.mxu0 0.0
      %2195 = vmatprep.subr.mxu0 0.0
      %2196 = vmatpush1.xpose.msra.mxu0 %v2165
      %2197 = vmatprep.subr.mxu0 0.0
      %2198 = vmatpush1.xpose.msra.mxu0 %v2163
      %2199 = vmatprep.subr.mxu0 0.0
      %2200 = vmatpush2.xpose.msra.mxu0 0.0
      %2201 = vmatprep.subr.mxu0 0.0
      %2202 = vmatpush2.xpose.msra.mxu0 0.0
      %2203 = vmatprep.subr.mxu0 0.0
      %2204 = vmatpush2.xpose.msra.mxu0 0.0
      %2205 = vmatprep.subr.mxu0 0.0
      %2206 = vmatpush2.xpose.msra.mxu0 0.0
      %2207 = vmatprep.subr.mxu0 0.0
      %2208 = vmatpush2.xpose.msra.mxu0 0.0
      %2209 = vmatprep.subr.mxu0 0.0
      %2210 = vmatpush2.xpose.msra.mxu0 0.0
      %2211 = vmatprep.subr.mxu0 0.0
      %2212 = vmatpush2.xpose.msra.mxu0 0.0
      %2213 = vmatprep.subr.mxu0 0.0
      %2214 = vmatpush2.xpose.msra.mxu0 0.0
      %2215 = vmatprep.subr.mxu0 0.0
      %2216 = vmatpush2.xpose.msra.mxu0 0.0
      %2217 = vmatprep.subr.mxu0 0.0
      %2218 = vmatpush2.xpose.msra.mxu0 0.0
      %2219 = vmatprep.subr.mxu0 0.0
      %2220 = vmatpush2.xpose.msra.mxu0 0.0
      %2221 = vmatprep.subr.mxu0 0.0
      %2222 = vmatpush2.xpose.msra.mxu0 0.0
      %2223 = vmatprep.subr.mxu0 0.0
      %2224 = vmatpush2.xpose.msra.mxu0 0.0
      %2225 = vmatprep.subr.mxu0 0.0
      %2226 = vmatpush2.xpose.msra.mxu0 0.0
      %2227 = vmatprep.subr.mxu0 0.0
      %2228 = vmatpush2.xpose.msra.mxu0 0.0
      %2229 = vmatprep.subr.mxu0 0.0
      %2230 = vmatpush2.xpose.msra.mxu0 0.0
      %2231 = vmatprep.mubr.f32.mxu0 0.0
      %2232 = vmatmul.mubr.f32.gmra.mxu0 %v2159
      %v2233 = vpop.f32.mrf.mxu0
      %v2234 = vadd.f32 0.0, %v2233
      %v2235 = vpop.f32.mrf.mxu0
      %2236 = vmatprep.mubr.f32.mxu0 0.0
      %2237 = vmatmul.mubr.f32.gmra.mxu0 %v2161
      %v2238 = vpop.f32.mrf.mxu0
      %v2239 = vadd.f32 0.0, %v2238
      %v2240 = vpop.f32.mrf.mxu0
      %2241 = vdwg.mxu0
      %2244 = vrot.lane.b32.xlu0 %v1163, 112
      %v2245 = vpop.permute.xlu0 %2244
      %2246 = vrot.lane.b32.xlu0 %v1164, 112
      %v2247 = vpop.permute.xlu0 %2246
      %v2248 = vsel %vm1179, %v1163, 0
      %v2250 = vsel %vm1179, %v1164, 0
      %v2252 = vsel %vm1179, %v2245, 0
      %v2254 = vsel %vm1179, %v2247, 0
      %2256 = vmatprep.subr.mxu0 0.0
      %2257 = vmatpush1.xpose.msra.mxu0 0.0
      %2258 = vmatprep.subr.mxu0 0.0
      %2259 = vmatpush1.xpose.msra.mxu0 0.0
      %2260 = vmatprep.subr.mxu0 0.0
      %2261 = vmatpush1.xpose.msra.mxu0 0.0
      %2262 = vmatprep.subr.mxu0 0.0
      %2263 = vmatpush1.xpose.msra.mxu0 0.0
      %2264 = vmatprep.subr.mxu0 0.0
      %2265 = vmatpush1.xpose.msra.mxu0 0.0
      %2266 = vmatprep.subr.mxu0 0.0
      %2267 = vmatpush1.xpose.msra.mxu0 0.0
      %2268 = vmatprep.subr.mxu0 0.0
      %2269 = vmatpush1.xpose.msra.mxu0 0.0
      %2270 = vmatprep.subr.mxu0 0.0
      %2271 = vmatpush1.xpose.msra.mxu0 0.0
      %2272 = vmatprep.subr.mxu0 0.0
      %2273 = vmatpush1.xpose.msra.mxu0 0.0
      %2274 = vmatprep.subr.mxu0 0.0
      %2275 = vmatpush1.xpose.msra.mxu0 0.0
      %2276 = vmatprep.subr.mxu0 0.0
      %2277 = vmatpush1.xpose.msra.mxu0 0.0
      %2278 = vmatprep.subr.mxu0 0.0
      %2279 = vmatpush1.xpose.msra.mxu0 0.0
      %2280 = vmatprep.subr.mxu0 0.0
      %2281 = vmatpush1.xpose.msra.mxu0 0.0
      %2282 = vmatprep.subr.mxu0 0.0
      %2283 = vmatpush1.xpose.msra.mxu0 0.0
      %2284 = vmatprep.subr.mxu0 0.0
      %2285 = vmatpush1.xpose.msra.mxu0 %v2254
      %2286 = vmatprep.subr.mxu0 0.0
      %2287 = vmatpush1.xpose.msra.mxu0 %v2252
      %2288 = vmatprep.subr.mxu0 0.0
      %2289 = vmatpush2.xpose.msra.mxu0 0.0
      %2290 = vmatprep.subr.mxu0 0.0
      %2291 = vmatpush2.xpose.msra.mxu0 0.0
      %2292 = vmatprep.subr.mxu0 0.0
      %2293 = vmatpush2.xpose.msra.mxu0 0.0
      %2294 = vmatprep.subr.mxu0 0.0
      %2295 = vmatpush2.xpose.msra.mxu0 0.0
      %2296 = vmatprep.subr.mxu0 0.0
      %2297 = vmatpush2.xpose.msra.mxu0 0.0
      %2298 = vmatprep.subr.mxu0 0.0
      %2299 = vmatpush2.xpose.msra.mxu0 0.0
      %2300 = vmatprep.subr.mxu0 0.0
      %2301 = vmatpush2.xpose.msra.mxu0 0.0
      %2302 = vmatprep.subr.mxu0 0.0
      %2303 = vmatpush2.xpose.msra.mxu0 0.0
      %2304 = vmatprep.subr.mxu0 0.0
      %2305 = vmatpush2.xpose.msra.mxu0 0.0
      %2306 = vmatprep.subr.mxu0 0.0
      %2307 = vmatpush2.xpose.msra.mxu0 0.0
      %2308 = vmatprep.subr.mxu0 0.0
      %2309 = vmatpush2.xpose.msra.mxu0 0.0
      %2310 = vmatprep.subr.mxu0 0.0
      %2311 = vmatpush2.xpose.msra.mxu0 0.0
      %2312 = vmatprep.subr.mxu0 0.0
      %2313 = vmatpush2.xpose.msra.mxu0 0.0
      %2314 = vmatprep.subr.mxu0 0.0
      %2315 = vmatpush2.xpose.msra.mxu0 0.0
      %2316 = vmatprep.subr.mxu0 0.0
      %2317 = vmatpush2.xpose.msra.mxu0 0.0
      %2318 = vmatprep.subr.mxu0 0.0
      %2319 = vmatpush2.xpose.msra.mxu0 0.0
      %2320 = vmatprep.mubr.f32.mxu0 0.0
      %2321 = vmatmul.mubr.f32.gmra.mxu0 %v2248
      %v2322 = vpop.f32.mrf.mxu0
      %v2323 = vadd.f32 0.0, %v2322
      %v2324 = vpop.f32.mrf.mxu0
      %2325 = vmatprep.mubr.f32.mxu0 0.0
      %2326 = vmatmul.mubr.f32.gmra.mxu0 %v2250
      %v2327 = vpop.f32.mrf.mxu0
      %v2328 = vadd.f32 0.0, %v2327
      %v2329 = vpop.f32.mrf.mxu0
      %2330 = vdwg.mxu0
      %2333 = vrot.lane.b32.xlu0 %v1165, 112
      %v2334 = vpop.permute.xlu0 %2333
      %2335 = vrot.lane.b32.xlu0 %v1166, 112
      %v2336 = vpop.permute.xlu0 %2335
      %v2337 = vsel %vm1179, %v1165, 0
      %v2339 = vsel %vm1179, %v1166, 0
      %v2341 = vsel %vm1179, %v2334, 0
      %v2343 = vsel %vm1179, %v2336, 0
      %2345 = vmatprep.subr.mxu0 0.0
      %2346 = vmatpush1.xpose.msra.mxu0 0.0
      %2347 = vmatprep.subr.mxu0 0.0
      %2348 = vmatpush1.xpose.msra.mxu0 0.0
      %2349 = vmatprep.subr.mxu0 0.0
      %2350 = vmatpush1.xpose.msra.mxu0 0.0
      %2351 = vmatprep.subr.mxu0 0.0
      %2352 = vmatpush1.xpose.msra.mxu0 0.0
      %2353 = vmatprep.subr.mxu0 0.0
      %2354 = vmatpush1.xpose.msra.mxu0 0.0
      %2355 = vmatprep.subr.mxu0 0.0
      %2356 = vmatpush1.xpose.msra.mxu0 0.0
      %2357 = vmatprep.subr.mxu0 0.0
      %2358 = vmatpush1.xpose.msra.mxu0 0.0
      %2359 = vmatprep.subr.mxu0 0.0
      %2360 = vmatpush1.xpose.msra.mxu0 0.0
      %2361 = vmatprep.subr.mxu0 0.0
      %2362 = vmatpush1.xpose.msra.mxu0 0.0
      %2363 = vmatprep.subr.mxu0 0.0
      %2364 = vmatpush1.xpose.msra.mxu0 0.0
      %2365 = vmatprep.subr.mxu0 0.0
      %2366 = vmatpush1.xpose.msra.mxu0 0.0
      %2367 = vmatprep.subr.mxu0 0.0
      %2368 = vmatpush1.xpose.msra.mxu0 0.0
      %2369 = vmatprep.subr.mxu0 0.0
      %2370 = vmatpush1.xpose.msra.mxu0 0.0
      %2371 = vmatprep.subr.mxu0 0.0
      %2372 = vmatpush1.xpose.msra.mxu0 0.0
      %2373 = vmatprep.subr.mxu0 0.0
      %2374 = vmatpush1.xpose.msra.mxu0 %v2343
      %2375 = vmatprep.subr.mxu0 0.0
      %2376 = vmatpush1.xpose.msra.mxu0 %v2341
      %2377 = vmatprep.subr.mxu0 0.0
      %2378 = vmatpush2.xpose.msra.mxu0 0.0
      %2379 = vmatprep.subr.mxu0 0.0
      %2380 = vmatpush2.xpose.msra.mxu0 0.0
      %2381 = vmatprep.subr.mxu0 0.0
      %2382 = vmatpush2.xpose.msra.mxu0 0.0
      %2383 = vmatprep.subr.mxu0 0.0
      %2384 = vmatpush2.xpose.msra.mxu0 0.0
      %2385 = vmatprep.subr.mxu0 0.0
      %2386 = vmatpush2.xpose.msra.mxu0 0.0
      %2387 = vmatprep.subr.mxu0 0.0
      %2388 = vmatpush2.xpose.msra.mxu0 0.0
      %2389 = vmatprep.subr.mxu0 0.0
      %2390 = vmatpush2.xpose.msra.mxu0 0.0
      %2391 = vmatprep.subr.mxu0 0.0
      %2392 = vmatpush2.xpose.msra.mxu0 0.0
      %2393 = vmatprep.subr.mxu0 0.0
      %2394 = vmatpush2.xpose.msra.mxu0 0.0
      %2395 = vmatprep.subr.mxu0 0.0
      %2396 = vmatpush2.xpose.msra.mxu0 0.0
      %2397 = vmatprep.subr.mxu0 0.0
      %2398 = vmatpush2.xpose.msra.mxu0 0.0
      %2399 = vmatprep.subr.mxu0 0.0
      %2400 = vmatpush2.xpose.msra.mxu0 0.0
      %2401 = vmatprep.subr.mxu0 0.0
      %2402 = vmatpush2.xpose.msra.mxu0 0.0
      %2403 = vmatprep.subr.mxu0 0.0
      %2404 = vmatpush2.xpose.msra.mxu0 0.0
      %2405 = vmatprep.subr.mxu0 0.0
      %2406 = vmatpush2.xpose.msra.mxu0 0.0
      %2407 = vmatprep.subr.mxu0 0.0
      %2408 = vmatpush2.xpose.msra.mxu0 0.0
      %2409 = vmatprep.mubr.f32.mxu0 0.0
      %2410 = vmatmul.mubr.f32.gmra.mxu0 %v2337
      %v2411 = vpop.f32.mrf.mxu0
      %v2412 = vadd.f32 0.0, %v2411
      %v2413 = vpop.f32.mrf.mxu0
      %2414 = vmatprep.mubr.f32.mxu0 0.0
      %2415 = vmatmul.mubr.f32.gmra.mxu0 %v2339
      %v2416 = vpop.f32.mrf.mxu0
      %v2417 = vadd.f32 0.0, %v2416
      %v2418 = vpop.f32.mrf.mxu0
      %2419 = vdwg.mxu0
      %2422 = vrot.lane.b32.xlu0 %v1167, 112
      %v2423 = vpop.permute.xlu0 %2422
      %2424 = vrot.lane.b32.xlu0 %v1168, 112
      %v2425 = vpop.permute.xlu0 %2424
      %v2426 = vsel %vm1179, %v1167, 0
      %v2428 = vsel %vm1179, %v1168, 0
      %v2430 = vsel %vm1179, %v2423, 0
      %v2432 = vsel %vm1179, %v2425, 0
      %2434 = vmatprep.subr.mxu0 0.0
      %2435 = vmatpush1.xpose.msra.mxu0 0.0
      %2436 = vmatprep.subr.mxu0 0.0
      %2437 = vmatpush1.xpose.msra.mxu0 0.0
      %2438 = vmatprep.subr.mxu0 0.0
      %2439 = vmatpush1.xpose.msra.mxu0 0.0
      %2440 = vmatprep.subr.mxu0 0.0
      %2441 = vmatpush1.xpose.msra.mxu0 0.0
      %2442 = vmatprep.subr.mxu0 0.0
      %2443 = vmatpush1.xpose.msra.mxu0 0.0
      %2444 = vmatprep.subr.mxu0 0.0
      %2445 = vmatpush1.xpose.msra.mxu0 0.0
      %2446 = vmatprep.subr.mxu0 0.0
      %2447 = vmatpush1.xpose.msra.mxu0 0.0
      %2448 = vmatprep.subr.mxu0 0.0
      %2449 = vmatpush1.xpose.msra.mxu0 0.0
      %2450 = vmatprep.subr.mxu0 0.0
      %2451 = vmatpush1.xpose.msra.mxu0 0.0
      %2452 = vmatprep.subr.mxu0 0.0
      %2453 = vmatpush1.xpose.msra.mxu0 0.0
      %2454 = vmatprep.subr.mxu0 0.0
      %2455 = vmatpush1.xpose.msra.mxu0 0.0
      %2456 = vmatprep.subr.mxu0 0.0
      %2457 = vmatpush1.xpose.msra.mxu0 0.0
      %2458 = vmatprep.subr.mxu0 0.0
      %2459 = vmatpush1.xpose.msra.mxu0 0.0
      %2460 = vmatprep.subr.mxu0 0.0
      %2461 = vmatpush1.xpose.msra.mxu0 0.0
      %2462 = vmatprep.subr.mxu0 0.0
      %2463 = vmatpush1.xpose.msra.mxu0 %v2432
      %2464 = vmatprep.subr.mxu0 0.0
      %2465 = vmatpush1.xpose.msra.mxu0 %v2430
      %2466 = vmatprep.subr.mxu0 0.0
      %2467 = vmatpush2.xpose.msra.mxu0 0.0
      %2468 = vmatprep.subr.mxu0 0.0
      %2469 = vmatpush2.xpose.msra.mxu0 0.0
      %2470 = vmatprep.subr.mxu0 0.0
      %2471 = vmatpush2.xpose.msra.mxu0 0.0
      %2472 = vmatprep.subr.mxu0 0.0
      %2473 = vmatpush2.xpose.msra.mxu0 0.0
      %2474 = vmatprep.subr.mxu0 0.0
      %2475 = vmatpush2.xpose.msra.mxu0 0.0
      %2476 = vmatprep.subr.mxu0 0.0
      %2477 = vmatpush2.xpose.msra.mxu0 0.0
      %2478 = vmatprep.subr.mxu0 0.0
      %2479 = vmatpush2.xpose.msra.mxu0 0.0
      %2480 = vmatprep.subr.mxu0 0.0
      %2481 = vmatpush2.xpose.msra.mxu0 0.0
      %2482 = vmatprep.subr.mxu0 0.0
      %2483 = vmatpush2.xpose.msra.mxu0 0.0
      %2484 = vmatprep.subr.mxu0 0.0
      %2485 = vmatpush2.xpose.msra.mxu0 0.0
      %2486 = vmatprep.subr.mxu0 0.0
      %2487 = vmatpush2.xpose.msra.mxu0 0.0
      %2488 = vmatprep.subr.mxu0 0.0
      %2489 = vmatpush2.xpose.msra.mxu0 0.0
      %2490 = vmatprep.subr.mxu0 0.0
      %2491 = vmatpush2.xpose.msra.mxu0 0.0
      %2492 = vmatprep.subr.mxu0 0.0
      %2493 = vmatpush2.xpose.msra.mxu0 0.0
      %2494 = vmatprep.subr.mxu0 0.0
      %2495 = vmatpush2.xpose.msra.mxu0 0.0
      %2496 = vmatprep.subr.mxu0 0.0
      %2497 = vmatpush2.xpose.msra.mxu0 0.0
      %2498 = vmatprep.mubr.f32.mxu0 0.0
      %2499 = vmatmul.mubr.f32.gmra.mxu0 %v2426
      %v2500 = vpop.f32.mrf.mxu0
      %v2501 = vadd.f32 0.0, %v2500
      %v2502 = vpop.f32.mrf.mxu0
      %2503 = vmatprep.mubr.f32.mxu0 0.0
      %2504 = vmatmul.mubr.f32.gmra.mxu0 %v2428
      %v2505 = vpop.f32.mrf.mxu0
      %v2506 = vadd.f32 0.0, %v2505
      %v2507 = vpop.f32.mrf.mxu0
      %2508 = vdwg.mxu0
      %2511 = vrot.lane.b32.xlu0 %v1169, 112
      %v2512 = vpop.permute.xlu0 %2511
      %2513 = vrot.lane.b32.xlu0 %v1170, 112
      %v2514 = vpop.permute.xlu0 %2513
      %v2515 = vsel %vm1179, %v1169, 0
      %v2517 = vsel %vm1179, %v1170, 0
      %v2519 = vsel %vm1179, %v2512, 0
      %v2521 = vsel %vm1179, %v2514, 0
      %2523 = vmatprep.subr.mxu0 0.0
      %2524 = vmatpush1.xpose.msra.mxu0 0.0
      %2525 = vmatprep.subr.mxu0 0.0
      %2526 = vmatpush1.xpose.msra.mxu0 0.0
      %2527 = vmatprep.subr.mxu0 0.0
      %2528 = vmatpush1.xpose.msra.mxu0 0.0
      %2529 = vmatprep.subr.mxu0 0.0
      %2530 = vmatpush1.xpose.msra.mxu0 0.0
      %2531 = vmatprep.subr.mxu0 0.0
      %2532 = vmatpush1.xpose.msra.mxu0 0.0
      %2533 = vmatprep.subr.mxu0 0.0
      %2534 = vmatpush1.xpose.msra.mxu0 0.0
      %2535 = vmatprep.subr.mxu0 0.0
      %2536 = vmatpush1.xpose.msra.mxu0 0.0
      %2537 = vmatprep.subr.mxu0 0.0
      %2538 = vmatpush1.xpose.msra.mxu0 0.0
      %2539 = vmatprep.subr.mxu0 0.0
      %2540 = vmatpush1.xpose.msra.mxu0 0.0
      %2541 = vmatprep.subr.mxu0 0.0
      %2542 = vmatpush1.xpose.msra.mxu0 0.0
      %2543 = vmatprep.subr.mxu0 0.0
      %2544 = vmatpush1.xpose.msra.mxu0 0.0
      %2545 = vmatprep.subr.mxu0 0.0
      %2546 = vmatpush1.xpose.msra.mxu0 0.0
      %2547 = vmatprep.subr.mxu0 0.0
      %2548 = vmatpush1.xpose.msra.mxu0 0.0
      %2549 = vmatprep.subr.mxu0 0.0
      %2550 = vmatpush1.xpose.msra.mxu0 0.0
      %2551 = vmatprep.subr.mxu0 0.0
      %2552 = vmatpush1.xpose.msra.mxu0 %v2521
      %2553 = vmatprep.subr.mxu0 0.0
      %2554 = vmatpush1.xpose.msra.mxu0 %v2519
      %2555 = vmatprep.subr.mxu0 0.0
      %2556 = vmatpush2.xpose.msra.mxu0 0.0
      %2557 = vmatprep.subr.mxu0 0.0
      %2558 = vmatpush2.xpose.msra.mxu0 0.0
      %2559 = vmatprep.subr.mxu0 0.0
      %2560 = vmatpush2.xpose.msra.mxu0 0.0
      %2561 = vmatprep.subr.mxu0 0.0
      %2562 = vmatpush2.xpose.msra.mxu0 0.0
      %2563 = vmatprep.subr.mxu0 0.0
      %2564 = vmatpush2.xpose.msra.mxu0 0.0
      %2565 = vmatprep.subr.mxu0 0.0
      %2566 = vmatpush2.xpose.msra.mxu0 0.0
      %2567 = vmatprep.subr.mxu0 0.0
      %2568 = vmatpush2.xpose.msra.mxu0 0.0
      %2569 = vmatprep.subr.mxu0 0.0
      %2570 = vmatpush2.xpose.msra.mxu0 0.0
      %2571 = vmatprep.subr.mxu0 0.0
      %2572 = vmatpush2.xpose.msra.mxu0 0.0
      %2573 = vmatprep.subr.mxu0 0.0
      %2574 = vmatpush2.xpose.msra.mxu0 0.0
      %2575 = vmatprep.subr.mxu0 0.0
      %2576 = vmatpush2.xpose.msra.mxu0 0.0
      %2577 = vmatprep.subr.mxu0 0.0
      %2578 = vmatpush2.xpose.msra.mxu0 0.0
      %2579 = vmatprep.subr.mxu0 0.0
      %2580 = vmatpush2.xpose.msra.mxu0 0.0
      %2581 = vmatprep.subr.mxu0 0.0
      %2582 = vmatpush2.xpose.msra.mxu0 0.0
      %2583 = vmatprep.subr.mxu0 0.0
      %2584 = vmatpush2.xpose.msra.mxu0 0.0
      %2585 = vmatprep.subr.mxu0 0.0
      %2586 = vmatpush2.xpose.msra.mxu0 0.0
      %2587 = vmatprep.mubr.f32.mxu0 0.0
      %2588 = vmatmul.mubr.f32.gmra.mxu0 %v2515
      %v2589 = vpop.f32.mrf.mxu0
      %v2590 = vadd.f32 0.0, %v2589
      %v2591 = vpop.f32.mrf.mxu0
      %2592 = vmatprep.mubr.f32.mxu0 0.0
      %2593 = vmatmul.mubr.f32.gmra.mxu0 %v2517
      %v2594 = vpop.f32.mrf.mxu0
      %v2595 = vadd.f32 0.0, %v2594
      %v2596 = vpop.f32.mrf.mxu0
      %2597 = vdwg.mxu0
      %v2598 = vsel %vm457, %v1255, -inf
      %2599 = vmax.xlane.f32.xlu0 %v2598
      %v2600 = vpop.xlane.xlu0 %2599
      %v2601 = vsel %vm457, %v1260, -inf
      %2602 = vmax.xlane.f32.xlu0 %v2601
      %v2603 = vpop.xlane.xlu0 %2602
      %v2604 = vsel %vm457, %v1344, -inf
      %2605 = vmax.xlane.f32.xlu0 %v2604
      %v2606 = vpop.xlane.xlu0 %2605
      %v2607 = vsel %vm457, %v1349, -inf
      %2608 = vmax.xlane.f32.xlu0 %v2607
      %v2609 = vpop.xlane.xlu0 %2608
      %v2610 = vsel %vm457, %v1433, -inf
      %2611 = vmax.xlane.f32.xlu0 %v2610
      %v2612 = vpop.xlane.xlu0 %2611
      %v2613 = vsel %vm457, %v1438, -inf
      %2614 = vmax.xlane.f32.xlu0 %v2613
      %v2615 = vpop.xlane.xlu0 %2614
      %v2616 = vsel %vm457, %v1522, -inf
      %2617 = vmax.xlane.f32.xlu0 %v2616
      %v2618 = vpop.xlane.xlu0 %2617
      %v2619 = vsel %vm457, %v1527, -inf
      %2620 = vmax.xlane.f32.xlu0 %v2619
      %v2621 = vpop.xlane.xlu0 %2620
      %v2622 = vsel %vm457, %v1611, -inf
      %2623 = vmax.xlane.f32.xlu0 %v2622
      %v2624 = vpop.xlane.xlu0 %2623
      %v2625 = vsel %vm457, %v1616, -inf
      %2626 = vmax.xlane.f32.xlu0 %v2625
      %v2627 = vpop.xlane.xlu0 %2626
      %v2628 = vsel %vm457, %v1700, -inf
      %2629 = vmax.xlane.f32.xlu0 %v2628
      %v2630 = vpop.xlane.xlu0 %2629
      %v2631 = vsel %vm457, %v1705, -inf
      %2632 = vmax.xlane.f32.xlu0 %v2631
      %v2633 = vpop.xlane.xlu0 %2632
      %v2634 = vsel %vm457, %v1789, -inf
      %2635 = vmax.xlane.f32.xlu0 %v2634
      %v2636 = vpop.xlane.xlu0 %2635
      %v2637 = vsel %vm457, %v1794, -inf
      %2638 = vmax.xlane.f32.xlu0 %v2637
      %v2639 = vpop.xlane.xlu0 %2638
      %v2640 = vsel %vm457, %v1878, -inf
      %2641 = vmax.xlane.f32.xlu0 %v2640
      %v2642 = vpop.xlane.xlu0 %2641
      %v2643 = vsel %vm457, %v1883, -inf
      %2644 = vmax.xlane.f32.xlu0 %v2643
      %v2645 = vpop.xlane.xlu0 %2644
      %v2646 = vsel %vm457, %v1967, -inf
      %2647 = vmax.xlane.f32.xlu0 %v2646
      %v2648 = vpop.xlane.xlu0 %2647
      %v2649 = vsel %vm457, %v1972, -inf
      %2650 = vmax.xlane.f32.xlu0 %v2649
      %v2651 = vpop.xlane.xlu0 %2650
      %v2652 = vsel %vm457, %v2056, -inf
      %2653 = vmax.xlane.f32.xlu0 %v2652
      %v2654 = vpop.xlane.xlu0 %2653
      %v2655 = vsel %vm457, %v2061, -inf
      %2656 = vmax.xlane.f32.xlu0 %v2655
      %v2657 = vpop.xlane.xlu0 %2656
      %v2658 = vsel %vm457, %v2145, -inf
      %2659 = vmax.xlane.f32.xlu0 %v2658
      %v2660 = vpop.xlane.xlu0 %2659
      %v2661 = vsel %vm457, %v2150, -inf
      %2662 = vmax.xlane.f32.xlu0 %v2661
      %v2663 = vpop.xlane.xlu0 %2662
      %v2664 = vsel %vm457, %v2234, -inf
      %2665 = vmax.xlane.f32.xlu0 %v2664
      %v2666 = vpop.xlane.xlu0 %2665
      %v2667 = vsel %vm457, %v2239, -inf
      %2668 = vmax.xlane.f32.xlu0 %v2667
      %v2669 = vpop.xlane.xlu0 %2668
      %v2670 = vsel %vm457, %v2323, -inf
      %2671 = vmax.xlane.f32.xlu0 %v2670
      %v2672 = vpop.xlane.xlu0 %2671
      %v2673 = vsel %vm457, %v2328, -inf
      %2674 = vmax.xlane.f32.xlu0 %v2673
      %v2675 = vpop.xlane.xlu0 %2674
      %v2676 = vsel %vm457, %v2412, -inf
      %2677 = vmax.xlane.f32.xlu0 %v2676
      %v2678 = vpop.xlane.xlu0 %2677
      %v2679 = vsel %vm457, %v2417, -inf
      %2680 = vmax.xlane.f32.xlu0 %v2679
      %v2681 = vpop.xlane.xlu0 %2680
      %v2682 = vsel %vm457, %v2501, -inf
      %2683 = vmax.xlane.f32.xlu0 %v2682
      %v2684 = vpop.xlane.xlu0 %2683
      %v2685 = vsel %vm457, %v2506, -inf
      %2686 = vmax.xlane.f32.xlu0 %v2685
      %v2687 = vpop.xlane.xlu0 %2686
      %v2688 = vsel %vm457, %v2590, -inf
      %2689 = vmax.xlane.f32.xlu0 %v2688
      %v2690 = vpop.xlane.xlu0 %2689
      %v2691 = vsel %vm457, %v2595, -inf
      %2692 = vmax.xlane.f32.xlu0 %v2691
      %v2693 = vpop.xlane.xlu0 %2692
      %v2694 = vsub.f32 %v1255, %v2600
      %v2695 = vsub.f32 %v1260, %v2603
      %v2696 = vsub.f32 %v1344, %v2606
      %v2697 = vsub.f32 %v1349, %v2609
      %v2698 = vsub.f32 %v1433, %v2612
      %v2699 = vsub.f32 %v1438, %v2615
      %v2700 = vsub.f32 %v1522, %v2618
      %v2701 = vsub.f32 %v1527, %v2621
      %v2702 = vsub.f32 %v1611, %v2624
      %v2703 = vsub.f32 %v1616, %v2627
      %v2704 = vsub.f32 %v1700, %v2630
      %v2705 = vsub.f32 %v1705, %v2633
      %v2706 = vsub.f32 %v1789, %v2636
      %v2707 = vsub.f32 %v1794, %v2639
      %v2708 = vsub.f32 %v1878, %v2642
      %v2709 = vsub.f32 %v1883, %v2645
      %v2710 = vsub.f32 %v1967, %v2648
      %v2711 = vsub.f32 %v1972, %v2651
      %v2712 = vsub.f32 %v2056, %v2654
      %v2713 = vsub.f32 %v2061, %v2657
      %v2714 = vsub.f32 %v2145, %v2660
      %v2715 = vsub.f32 %v2150, %v2663
      %v2716 = vsub.f32 %v2234, %v2666
      %v2717 = vsub.f32 %v2239, %v2669
      %v2718 = vsub.f32 %v2323, %v2672
      %v2719 = vsub.f32 %v2328, %v2675
      %v2720 = vsub.f32 %v2412, %v2678
      %v2721 = vsub.f32 %v2417, %v2681
      %v2722 = vsub.f32 %v2501, %v2684
      %v2723 = vsub.f32 %v2506, %v2687
      %v2724 = vsub.f32 %v2590, %v2690
      %v2725 = vsub.f32 %v2595, %v2693
      %v2726 = vmul.f32 %v2694, 1.442695
      %v2727 = vpow.pop %v2726
      %v2728 = vmul.f32 %v2695, 1.442695
      %v2729 = vpow.pop %v2728
      %v2730 = vmul.f32 %v2696, 1.442695
      %v2731 = vpow.pop %v2730
      %v2732 = vmul.f32 %v2697, 1.442695
      %v2733 = vpow.pop %v2732
      %v2734 = vmul.f32 %v2698, 1.442695
      %v2735 = vpow.pop %v2734
      %v2736 = vmul.f32 %v2699, 1.442695
      %v2737 = vpow.pop %v2736
      %v2738 = vmul.f32 %v2700, 1.442695
      %v2739 = vpow.pop %v2738
      %v2740 = vmul.f32 %v2701, 1.442695
      %v2741 = vpow.pop %v2740
      %v2742 = vmul.f32 %v2702, 1.442695
      %v2743 = vpow.pop %v2742
      %v2744 = vmul.f32 %v2703, 1.442695
      %v2745 = vpow.pop %v2744
      %v2746 = vmul.f32 %v2704, 1.442695
      %v2747 = vpow.pop %v2746
      %v2748 = vmul.f32 %v2705, 1.442695
      %v2749 = vpow.pop %v2748
      %v2750 = vmul.f32 %v2706, 1.442695
      %v2751 = vpow.pop %v2750
      %v2752 = vmul.f32 %v2707, 1.442695
      %v2753 = vpow.pop %v2752
      %v2754 = vmul.f32 %v2708, 1.442695
      %v2755 = vpow.pop %v2754
      %v2756 = vmul.f32 %v2709, 1.442695
      %v2757 = vpow.pop %v2756
      %v2758 = vmul.f32 %v2710, 1.442695
      %v2759 = vpow.pop %v2758
      %v2760 = vmul.f32 %v2711, 1.442695
      %v2761 = vpow.pop %v2760
      %v2762 = vmul.f32 %v2712, 1.442695
      %v2763 = vpow.pop %v2762
      %v2764 = vmul.f32 %v2713, 1.442695
      %v2765 = vpow.pop %v2764
      %v2766 = vmul.f32 %v2714, 1.442695
      %v2767 = vpow.pop %v2766
      %v2768 = vmul.f32 %v2715, 1.442695
      %v2769 = vpow.pop %v2768
      %v2770 = vmul.f32 %v2716, 1.442695
      %v2771 = vpow.pop %v2770
      %v2772 = vmul.f32 %v2717, 1.442695
      %v2773 = vpow.pop %v2772
      %v2774 = vmul.f32 %v2718, 1.442695
      %v2775 = vpow.pop %v2774
      %v2776 = vmul.f32 %v2719, 1.442695
      %v2777 = vpow.pop %v2776
      %v2778 = vmul.f32 %v2720, 1.442695
      %v2779 = vpow.pop %v2778
      %v2780 = vmul.f32 %v2721, 1.442695
      %v2781 = vpow.pop %v2780
      %v2782 = vmul.f32 %v2722, 1.442695
      %v2783 = vpow.pop %v2782
      %v2784 = vmul.f32 %v2723, 1.442695
      %v2785 = vpow.pop %v2784
      %v2786 = vmul.f32 %v2724, 1.442695
      %v2787 = vpow.pop %v2786
      %v2788 = vmul.f32 %v2725, 1.442695
      %v2789 = vpow.pop %v2788
      %v2790 = vsel %vm457, %v2727, 0.0
      %2791 = vadd.xlane.f32.xlu0 %v2790
      %v2792 = vpop.xlane.xlu0 %2791
      %v2793 = vsel %vm457, %v2729, 0.0
      %2794 = vadd.xlane.f32.xlu0 %v2793
      %v2795 = vpop.xlane.xlu0 %2794
      %v2796 = vsel %vm457, %v2731, 0.0
      %2797 = vadd.xlane.f32.xlu0 %v2796
      %v2798 = vpop.xlane.xlu0 %2797
      %v2799 = vsel %vm457, %v2733, 0.0
      %2800 = vadd.xlane.f32.xlu0 %v2799
      %v2801 = vpop.xlane.xlu0 %2800
      %v2802 = vsel %vm457, %v2735, 0.0
      %2803 = vadd.xlane.f32.xlu0 %v2802
      %v2804 = vpop.xlane.xlu0 %2803
      %v2805 = vsel %vm457, %v2737, 0.0
      %2806 = vadd.xlane.f32.xlu0 %v2805
      %v2807 = vpop.xlane.xlu0 %2806
      %v2808 = vsel %vm457, %v2739, 0.0
      %2809 = vadd.xlane.f32.xlu0 %v2808
      %v2810 = vpop.xlane.xlu0 %2809
      %v2811 = vsel %vm457, %v2741, 0.0
      %2812 = vadd.xlane.f32.xlu0 %v2811
      %v2813 = vpop.xlane.xlu0 %2812
      %v2814 = vsel %vm457, %v2743, 0.0
      %2815 = vadd.xlane.f32.xlu0 %v2814
      %v2816 = vpop.xlane.xlu0 %2815
      %v2817 = vsel %vm457, %v2745, 0.0
      %2818 = vadd.xlane.f32.xlu0 %v2817
      %v2819 = vpop.xlane.xlu0 %2818
      %v2820 = vsel %vm457, %v2747, 0.0
      %2821 = vadd.xlane.f32.xlu0 %v2820
      %v2822 = vpop.xlane.xlu0 %2821
      %v2823 = vsel %vm457, %v2749, 0.0
      %2824 = vadd.xlane.f32.xlu0 %v2823
      %v2825 = vpop.xlane.xlu0 %2824
      %v2826 = vsel %vm457, %v2751, 0.0
      %2827 = vadd.xlane.f32.xlu0 %v2826
      %v2828 = vpop.xlane.xlu0 %2827
      %v2829 = vsel %vm457, %v2753, 0.0
      %2830 = vadd.xlane.f32.xlu0 %v2829
      %v2831 = vpop.xlane.xlu0 %2830
      %v2832 = vsel %vm457, %v2755, 0.0
      %2833 = vadd.xlane.f32.xlu0 %v2832
      %v2834 = vpop.xlane.xlu0 %2833
      %v2835 = vsel %vm457, %v2757, 0.0
      %2836 = vadd.xlane.f32.xlu0 %v2835
      %v2837 = vpop.xlane.xlu0 %2836
      %v2838 = vsel %vm457, %v2759, 0.0
      %2839 = vadd.xlane.f32.xlu0 %v2838
      %v2840 = vpop.xlane.xlu0 %2839
      %v2841 = vsel %vm457, %v2761, 0.0
      %2842 = vadd.xlane.f32.xlu0 %v2841
      %v2843 = vpop.xlane.xlu0 %2842
      %v2844 = vsel %vm457, %v2763, 0.0
      %2845 = vadd.xlane.f32.xlu0 %v2844
      %v2846 = vpop.xlane.xlu0 %2845
      %v2847 = vsel %vm457, %v2765, 0.0
      %2848 = vadd.xlane.f32.xlu0 %v2847
      %v2849 = vpop.xlane.xlu0 %2848
      %v2850 = vsel %vm457, %v2767, 0.0
      %2851 = vadd.xlane.f32.xlu0 %v2850
      %v2852 = vpop.xlane.xlu0 %2851
      %v2853 = vsel %vm457, %v2769, 0.0
      %2854 = vadd.xlane.f32.xlu0 %v2853
      %v2855 = vpop.xlane.xlu0 %2854
      %v2856 = vsel %vm457, %v2771, 0.0
      %2857 = vadd.xlane.f32.xlu0 %v2856
      %v2858 = vpop.xlane.xlu0 %2857
      %v2859 = vsel %vm457, %v2773, 0.0
      %2860 = vadd.xlane.f32.xlu0 %v2859
      %v2861 = vpop.xlane.xlu0 %2860
      %v2862 = vsel %vm457, %v2775, 0.0
      %2863 = vadd.xlane.f32.xlu0 %v2862
      %v2864 = vpop.xlane.xlu0 %2863
      %v2865 = vsel %vm457, %v2777, 0.0
      %2866 = vadd.xlane.f32.xlu0 %v2865
      %v2867 = vpop.xlane.xlu0 %2866
      %v2868 = vsel %vm457, %v2779, 0.0
      %2869 = vadd.xlane.f32.xlu0 %v2868
      %v2870 = vpop.xlane.xlu0 %2869
      %v2871 = vsel %vm457, %v2781, 0.0
      %2872 = vadd.xlane.f32.xlu0 %v2871
      %v2873 = vpop.xlane.xlu0 %2872
      %v2874 = vsel %vm457, %v2783, 0.0
      %2875 = vadd.xlane.f32.xlu0 %v2874
      %v2876 = vpop.xlane.xlu0 %2875
      %v2877 = vsel %vm457, %v2785, 0.0
      %2878 = vadd.xlane.f32.xlu0 %v2877
      %v2879 = vpop.xlane.xlu0 %2878
      %v2880 = vsel %vm457, %v2787, 0.0
      %2881 = vadd.xlane.f32.xlu0 %v2880
      %v2882 = vpop.xlane.xlu0 %2881
      %v2883 = vsel %vm457, %v2789, 0.0
      %2884 = vadd.xlane.f32.xlu0 %v2883
      %v2885 = vpop.xlane.xlu0 %2884
      %v2886 = vrcp.pop %v2792
      %v2887 = vrcp.pop %v2795
      %v2888 = vrcp.pop %v2798
      %v2889 = vrcp.pop %v2801
      %v2890 = vrcp.pop %v2804
      %v2891 = vrcp.pop %v2807
      %v2892 = vrcp.pop %v2810
      %v2893 = vrcp.pop %v2813
      %v2894 = vrcp.pop %v2816
      %v2895 = vrcp.pop %v2819
      %v2896 = vrcp.pop %v2822
      %v2897 = vrcp.pop %v2825
      %v2898 = vrcp.pop %v2828
      %v2899 = vrcp.pop %v2831
      %v2900 = vrcp.pop %v2834
      %v2901 = vrcp.pop %v2837
      %v2902 = vrcp.pop %v2840
      %v2903 = vrcp.pop %v2843
      %v2904 = vrcp.pop %v2846
      %v2905 = vrcp.pop %v2849
      %v2906 = vrcp.pop %v2852
      %v2907 = vrcp.pop %v2855
      %v2908 = vrcp.pop %v2858
      %v2909 = vrcp.pop %v2861
      %v2910 = vrcp.pop %v2864
      %v2911 = vrcp.pop %v2867
      %v2912 = vrcp.pop %v2870
      %v2913 = vrcp.pop %v2873
      %v2914 = vrcp.pop %v2876
      %v2915 = vrcp.pop %v2879
      %v2916 = vrcp.pop %v2882
      %v2917 = vrcp.pop %v2885
      %v2918 = vmul.f32 %v2727, %v2886
      %v2919 = vmul.f32 %v2729, %v2887
      %v2920 = vmul.f32 %v2731, %v2888
      %v2921 = vmul.f32 %v2733, %v2889
      %v2922 = vmul.f32 %v2735, %v2890
      %v2923 = vmul.f32 %v2737, %v2891
      %v2924 = vmul.f32 %v2739, %v2892
      %v2925 = vmul.f32 %v2741, %v2893
      %v2926 = vmul.f32 %v2743, %v2894
      %v2927 = vmul.f32 %v2745, %v2895
      %v2928 = vmul.f32 %v2747, %v2896
      %v2929 = vmul.f32 %v2749, %v2897
      %v2930 = vmul.f32 %v2751, %v2898
      %v2931 = vmul.f32 %v2753, %v2899
      %v2932 = vmul.f32 %v2755, %v2900
      %v2933 = vmul.f32 %v2757, %v2901
      %v2934 = vmul.f32 %v2759, %v2902
      %v2935 = vmul.f32 %v2761, %v2903
      %v2936 = vmul.f32 %v2763, %v2904
      %v2937 = vmul.f32 %v2765, %v2905
      %v2938 = vmul.f32 %v2767, %v2906
      %v2939 = vmul.f32 %v2769, %v2907
      %v2940 = vmul.f32 %v2771, %v2908
      %v2941 = vmul.f32 %v2773, %v2909
      %v2942 = vmul.f32 %v2775, %v2910
      %v2943 = vmul.f32 %v2777, %v2911
      %v2944 = vmul.f32 %v2779, %v2912
      %v2945 = vmul.f32 %v2781, %v2913
      %v2946 = vmul.f32 %v2783, %v2914
      %v2947 = vmul.f32 %v2785, %v2915
      %v2948 = vmul.f32 %v2787, %v2916
      %v2949 = vmul.f32 %v2789, %v2917
      %2950 = vrot.lane.b32.xlu0 %v1139, 96
      %v2951 = vpop.permute.xlu0 %2950
      %2952 = vrot.lane.b32.xlu0 %v1140, 96
      %v2953 = vpop.permute.xlu0 %2952
      %v2957 = vsel %vm457, %v2918, 0
      %v2960 = vsel %vm457, %v2919, 0
      %2962 = vmatprep.subr.mxu0 0.0
      %2963 = vmatpush1.msra.mxu0 0.0
      %2964 = vmatprep.subr.mxu0 0.0
      %2965 = vmatpush1.msra.mxu0 0.0
      %2966 = vmatprep.subr.mxu0 0.0
      %2967 = vmatpush1.msra.mxu0 0.0
      %2968 = vmatprep.subr.mxu0 0.0
      %2969 = vmatpush1.msra.mxu0 0.0
      %2970 = vmatprep.subr.mxu0 0.0
      %2971 = vmatpush1.msra.mxu0 0.0
      %2972 = vmatprep.subr.mxu0 0.0
      %2973 = vmatpush1.msra.mxu0 0.0
      %2974 = vmatprep.subr.mxu0 0.0
      %2975 = vmatpush1.msra.mxu0 0.0
      %2976 = vmatprep.subr.mxu0 0.0
      %2977 = vmatpush1.msra.mxu0 0.0
      %2978 = vmatprep.subr.mxu0 0.0
      %2979 = vmatpush1.msra.mxu0 0.0
      %2980 = vmatprep.subr.mxu0 0.0
      %2981 = vmatpush1.msra.mxu0 0.0
      %2982 = vmatprep.subr.mxu0 0.0
      %2983 = vmatpush1.msra.mxu0 0.0
      %2984 = vmatprep.subr.mxu0 0.0
      %2985 = vmatpush1.msra.mxu0 0.0
      %2986 = vmatprep.subr.mxu0 0.0
      %2987 = vmatpush1.msra.mxu0 0.0
      %2988 = vmatprep.subr.mxu0 0.0
      %2989 = vmatpush1.msra.mxu0 0.0
      %2990 = vmatprep.subr.mxu0 0.0
      %2991 = vmatpush1.msra.mxu0 %v2953
      %2992 = vmatprep.subr.mxu0 0.0
      %2993 = vmatpush1.msra.mxu0 %v2951
      %2994 = vmatprep.subr.mxu0 0.0
      %2995 = vmatpush2.msra.mxu0 0.0
      %2996 = vmatprep.subr.mxu0 0.0
      %2997 = vmatpush2.msra.mxu0 0.0
      %2998 = vmatprep.subr.mxu0 0.0
      %2999 = vmatpush2.msra.mxu0 0.0
      %3000 = vmatprep.subr.mxu0 0.0
      %3001 = vmatpush2.msra.mxu0 0.0
      %3002 = vmatprep.subr.mxu0 0.0
      %3003 = vmatpush2.msra.mxu0 0.0
      %3004 = vmatprep.subr.mxu0 0.0
      %3005 = vmatpush2.msra.mxu0 0.0
      %3006 = vmatprep.subr.mxu0 0.0
      %3007 = vmatpush2.msra.mxu0 0.0
      %3008 = vmatprep.subr.mxu0 0.0
      %3009 = vmatpush2.msra.mxu0 0.0
      %3010 = vmatprep.subr.mxu0 0.0
      %3011 = vmatpush2.msra.mxu0 0.0
      %3012 = vmatprep.subr.mxu0 0.0
      %3013 = vmatpush2.msra.mxu0 0.0
      %3014 = vmatprep.subr.mxu0 0.0
      %3015 = vmatpush2.msra.mxu0 0.0
      %3016 = vmatprep.subr.mxu0 0.0
      %3017 = vmatpush2.msra.mxu0 0.0
      %3018 = vmatprep.subr.mxu0 0.0
      %3019 = vmatpush2.msra.mxu0 0.0
      %3020 = vmatprep.subr.mxu0 0.0
      %3021 = vmatpush2.msra.mxu0 0.0
      %3022 = vmatprep.subr.mxu0 0.0
      %3023 = vmatpush2.msra.mxu0 0.0
      %3024 = vmatprep.subr.mxu0 0.0
      %3025 = vmatpush2.msra.mxu0 0.0
      %3026 = vmatprep.mubr.f32.mxu0 0.0
      %3027 = vmatmul.mubr.f32.gmra.mxu0 %v2957
      %v3028 = vpop.f32.mrf.mxu0
      %v3029 = vadd.f32 0.0, %v3028
      %v3030 = vpop.f32.mrf.mxu0
      %3031 = vmatprep.mubr.f32.mxu0 0.0
      %3032 = vmatmul.mubr.f32.gmra.mxu0 %v2960
      %v3033 = vpop.f32.mrf.mxu0
      %v3034 = vadd.f32 0.0, %v3033
      %v3035 = vpop.f32.mrf.mxu0
      %3036 = vdwg.mxu0
      %3037 = vrot.lane.b32.xlu0 %v1141, 96
      %v3038 = vpop.permute.xlu0 %3037
      %3039 = vrot.lane.b32.xlu0 %v1142, 96
      %v3040 = vpop.permute.xlu0 %3039
      %v3044 = vsel %vm457, %v2920, 0
      %v3047 = vsel %vm457, %v2921, 0
      %3049 = vmatprep.subr.mxu0 0.0
      %3050 = vmatpush1.msra.mxu0 0.0
      %3051 = vmatprep.subr.mxu0 0.0
      %3052 = vmatpush1.msra.mxu0 0.0
      %3053 = vmatprep.subr.mxu0 0.0
      %3054 = vmatpush1.msra.mxu0 0.0
      %3055 = vmatprep.subr.mxu0 0.0
      %3056 = vmatpush1.msra.mxu0 0.0
      %3057 = vmatprep.subr.mxu0 0.0
      %3058 = vmatpush1.msra.mxu0 0.0
      %3059 = vmatprep.subr.mxu0 0.0
      %3060 = vmatpush1.msra.mxu0 0.0
      %3061 = vmatprep.subr.mxu0 0.0
      %3062 = vmatpush1.msra.mxu0 0.0
      %3063 = vmatprep.subr.mxu0 0.0
      %3064 = vmatpush1.msra.mxu0 0.0
      %3065 = vmatprep.subr.mxu0 0.0
      %3066 = vmatpush1.msra.mxu0 0.0
      %3067 = vmatprep.subr.mxu0 0.0
      %3068 = vmatpush1.msra.mxu0 0.0
      %3069 = vmatprep.subr.mxu0 0.0
      %3070 = vmatpush1.msra.mxu0 0.0
      %3071 = vmatprep.subr.mxu0 0.0
      %3072 = vmatpush1.msra.mxu0 0.0
      %3073 = vmatprep.subr.mxu0 0.0
      %3074 = vmatpush1.msra.mxu0 0.0
      %3075 = vmatprep.subr.mxu0 0.0
      %3076 = vmatpush1.msra.mxu0 0.0
      %3077 = vmatprep.subr.mxu0 0.0
      %3078 = vmatpush1.msra.mxu0 %v3040
      %3079 = vmatprep.subr.mxu0 0.0
      %3080 = vmatpush1.msra.mxu0 %v3038
      %3081 = vmatprep.subr.mxu0 0.0
      %3082 = vmatpush2.msra.mxu0 0.0
      %3083 = vmatprep.subr.mxu0 0.0
      %3084 = vmatpush2.msra.mxu0 0.0
      %3085 = vmatprep.subr.mxu0 0.0
      %3086 = vmatpush2.msra.mxu0 0.0
      %3087 = vmatprep.subr.mxu0 0.0
      %3088 = vmatpush2.msra.mxu0 0.0
      %3089 = vmatprep.subr.mxu0 0.0
      %3090 = vmatpush2.msra.mxu0 0.0
      %3091 = vmatprep.subr.mxu0 0.0
      %3092 = vmatpush2.msra.mxu0 0.0
      %3093 = vmatprep.subr.mxu0 0.0
      %3094 = vmatpush2.msra.mxu0 0.0
      %3095 = vmatprep.subr.mxu0 0.0
      %3096 = vmatpush2.msra.mxu0 0.0
      %3097 = vmatprep.subr.mxu0 0.0
      %3098 = vmatpush2.msra.mxu0 0.0
      %3099 = vmatprep.subr.mxu0 0.0
      %3100 = vmatpush2.msra.mxu0 0.0
      %3101 = vmatprep.subr.mxu0 0.0
      %3102 = vmatpush2.msra.mxu0 0.0
      %3103 = vmatprep.subr.mxu0 0.0
      %3104 = vmatpush2.msra.mxu0 0.0
      %3105 = vmatprep.subr.mxu0 0.0
      %3106 = vmatpush2.msra.mxu0 0.0
      %3107 = vmatprep.subr.mxu0 0.0
      %3108 = vmatpush2.msra.mxu0 0.0
      %3109 = vmatprep.subr.mxu0 0.0
      %3110 = vmatpush2.msra.mxu0 0.0
      %3111 = vmatprep.subr.mxu0 0.0
      %3112 = vmatpush2.msra.mxu0 0.0
      %3113 = vmatprep.mubr.f32.mxu0 0.0
      %3114 = vmatmul.mubr.f32.gmra.mxu0 %v3044
      %v3115 = vpop.f32.mrf.mxu0
      %v3116 = vadd.f32 0.0, %v3115
      %v3117 = vpop.f32.mrf.mxu0
      %3118 = vmatprep.mubr.f32.mxu0 0.0
      %3119 = vmatmul.mubr.f32.gmra.mxu0 %v3047
      %v3120 = vpop.f32.mrf.mxu0
      %v3121 = vadd.f32 0.0, %v3120
      %v3122 = vpop.f32.mrf.mxu0
      %3123 = vdwg.mxu0
      %3124 = vrot.lane.b32.xlu0 %v1143, 96
      %v3125 = vpop.permute.xlu0 %3124
      %3126 = vrot.lane.b32.xlu0 %v1144, 96
      %v3127 = vpop.permute.xlu0 %3126
      %v3131 = vsel %vm457, %v2922, 0
      %v3134 = vsel %vm457, %v2923, 0
      %3136 = vmatprep.subr.mxu0 0.0
      %3137 = vmatpush1.msra.mxu0 0.0
      %3138 = vmatprep.subr.mxu0 0.0
      %3139 = vmatpush1.msra.mxu0 0.0
      %3140 = vmatprep.subr.mxu0 0.0
      %3141 = vmatpush1.msra.mxu0 0.0
      %3142 = vmatprep.subr.mxu0 0.0
      %3143 = vmatpush1.msra.mxu0 0.0
      %3144 = vmatprep.subr.mxu0 0.0
      %3145 = vmatpush1.msra.mxu0 0.0
      %3146 = vmatprep.subr.mxu0 0.0
      %3147 = vmatpush1.msra.mxu0 0.0
      %3148 = vmatprep.subr.mxu0 0.0
      %3149 = vmatpush1.msra.mxu0 0.0
      %3150 = vmatprep.subr.mxu0 0.0
      %3151 = vmatpush1.msra.mxu0 0.0
      %3152 = vmatprep.subr.mxu0 0.0
      %3153 = vmatpush1.msra.mxu0 0.0
      %3154 = vmatprep.subr.mxu0 0.0
      %3155 = vmatpush1.msra.mxu0 0.0
      %3156 = vmatprep.subr.mxu0 0.0
      %3157 = vmatpush1.msra.mxu0 0.0
      %3158 = vmatprep.subr.mxu0 0.0
      %3159 = vmatpush1.msra.mxu0 0.0
      %3160 = vmatprep.subr.mxu0 0.0
      %3161 = vmatpush1.msra.mxu0 0.0
      %3162 = vmatprep.subr.mxu0 0.0
      %3163 = vmatpush1.msra.mxu0 0.0
      %3164 = vmatprep.subr.mxu0 0.0
      %3165 = vmatpush1.msra.mxu0 %v3127
      %3166 = vmatprep.subr.mxu0 0.0
      %3167 = vmatpush1.msra.mxu0 %v3125
      %3168 = vmatprep.subr.mxu0 0.0
      %3169 = vmatpush2.msra.mxu0 0.0
      %3170 = vmatprep.subr.mxu0 0.0
      %3171 = vmatpush2.msra.mxu0 0.0
      %3172 = vmatprep.subr.mxu0 0.0
      %3173 = vmatpush2.msra.mxu0 0.0
      %3174 = vmatprep.subr.mxu0 0.0
      %3175 = vmatpush2.msra.mxu0 0.0
      %3176 = vmatprep.subr.mxu0 0.0
      %3177 = vmatpush2.msra.mxu0 0.0
      %3178 = vmatprep.subr.mxu0 0.0
      %3179 = vmatpush2.msra.mxu0 0.0
      %3180 = vmatprep.subr.mxu0 0.0
      %3181 = vmatpush2.msra.mxu0 0.0
      %3182 = vmatprep.subr.mxu0 0.0
      %3183 = vmatpush2.msra.mxu0 0.0
      %3184 = vmatprep.subr.mxu0 0.0
      %3185 = vmatpush2.msra.mxu0 0.0
      %3186 = vmatprep.subr.mxu0 0.0
      %3187 = vmatpush2.msra.mxu0 0.0
      %3188 = vmatprep.subr.mxu0 0.0
      %3189 = vmatpush2.msra.mxu0 0.0
      %3190 = vmatprep.subr.mxu0 0.0
      %3191 = vmatpush2.msra.mxu0 0.0
      %3192 = vmatprep.subr.mxu0 0.0
      %3193 = vmatpush2.msra.mxu0 0.0
      %3194 = vmatprep.subr.mxu0 0.0
      %3195 = vmatpush2.msra.mxu0 0.0
      %3196 = vmatprep.subr.mxu0 0.0
      %3197 = vmatpush2.msra.mxu0 0.0
      %3198 = vmatprep.subr.mxu0 0.0
      %3199 = vmatpush2.msra.mxu0 0.0
      %3200 = vmatprep.mubr.f32.mxu0 0.0
      %3201 = vmatmul.mubr.f32.gmra.mxu0 %v3131
      %v3202 = vpop.f32.mrf.mxu0
      %v3203 = vadd.f32 0.0, %v3202
      %v3204 = vpop.f32.mrf.mxu0
      %3205 = vmatprep.mubr.f32.mxu0 0.0
      %3206 = vmatmul.mubr.f32.gmra.mxu0 %v3134
      %v3207 = vpop.f32.mrf.mxu0
      %v3208 = vadd.f32 0.0, %v3207
      %v3209 = vpop.f32.mrf.mxu0
      %3210 = vdwg.mxu0
      %3211 = vrot.lane.b32.xlu0 %v1145, 96
      %v3212 = vpop.permute.xlu0 %3211
      %3213 = vrot.lane.b32.xlu0 %v1146, 96
      %v3214 = vpop.permute.xlu0 %3213
      %v3218 = vsel %vm457, %v2924, 0
      %v3221 = vsel %vm457, %v2925, 0
      %3223 = vmatprep.subr.mxu0 0.0
      %3224 = vmatpush1.msra.mxu0 0.0
      %3225 = vmatprep.subr.mxu0 0.0
      %3226 = vmatpush1.msra.mxu0 0.0
      %3227 = vmatprep.subr.mxu0 0.0
      %3228 = vmatpush1.msra.mxu0 0.0
      %3229 = vmatprep.subr.mxu0 0.0
      %3230 = vmatpush1.msra.mxu0 0.0
      %3231 = vmatprep.subr.mxu0 0.0
      %3232 = vmatpush1.msra.mxu0 0.0
      %3233 = vmatprep.subr.mxu0 0.0
      %3234 = vmatpush1.msra.mxu0 0.0
      %3235 = vmatprep.subr.mxu0 0.0
      %3236 = vmatpush1.msra.mxu0 0.0
      %3237 = vmatprep.subr.mxu0 0.0
      %3238 = vmatpush1.msra.mxu0 0.0
      %3239 = vmatprep.subr.mxu0 0.0
      %3240 = vmatpush1.msra.mxu0 0.0
      %3241 = vmatprep.subr.mxu0 0.0
      %3242 = vmatpush1.msra.mxu0 0.0
      %3243 = vmatprep.subr.mxu0 0.0
      %3244 = vmatpush1.msra.mxu0 0.0
      %3245 = vmatprep.subr.mxu0 0.0
      %3246 = vmatpush1.msra.mxu0 0.0
      %3247 = vmatprep.subr.mxu0 0.0
      %3248 = vmatpush1.msra.mxu0 0.0
      %3249 = vmatprep.subr.mxu0 0.0
      %3250 = vmatpush1.msra.mxu0 0.0
      %3251 = vmatprep.subr.mxu0 0.0
      %3252 = vmatpush1.msra.mxu0 %v3214
      %3253 = vmatprep.subr.mxu0 0.0
      %3254 = vmatpush1.msra.mxu0 %v3212
      %3255 = vmatprep.subr.mxu0 0.0
      %3256 = vmatpush2.msra.mxu0 0.0
      %3257 = vmatprep.subr.mxu0 0.0
      %3258 = vmatpush2.msra.mxu0 0.0
      %3259 = vmatprep.subr.mxu0 0.0
      %3260 = vmatpush2.msra.mxu0 0.0
      %3261 = vmatprep.subr.mxu0 0.0
      %3262 = vmatpush2.msra.mxu0 0.0
      %3263 = vmatprep.subr.mxu0 0.0
      %3264 = vmatpush2.msra.mxu0 0.0
      %3265 = vmatprep.subr.mxu0 0.0
      %3266 = vmatpush2.msra.mxu0 0.0
      %3267 = vmatprep.subr.mxu0 0.0
      %3268 = vmatpush2.msra.mxu0 0.0
      %3269 = vmatprep.subr.mxu0 0.0
      %3270 = vmatpush2.msra.mxu0 0.0
      %3271 = vmatprep.subr.mxu0 0.0
      %3272 = vmatpush2.msra.mxu0 0.0
      %3273 = vmatprep.subr.mxu0 0.0
      %3274 = vmatpush2.msra.mxu0 0.0
      %3275 = vmatprep.subr.mxu0 0.0
      %3276 = vmatpush2.msra.mxu0 0.0
      %3277 = vmatprep.subr.mxu0 0.0
      %3278 = vmatpush2.msra.mxu0 0.0
      %3279 = vmatprep.subr.mxu0 0.0
      %3280 = vmatpush2.msra.mxu0 0.0
      %3281 = vmatprep.subr.mxu0 0.0
      %3282 = vmatpush2.msra.mxu0 0.0
      %3283 = vmatprep.subr.mxu0 0.0
      %3284 = vmatpush2.msra.mxu0 0.0
      %3285 = vmatprep.subr.mxu0 0.0
      %3286 = vmatpush2.msra.mxu0 0.0
      %3287 = vmatprep.mubr.f32.mxu0 0.0
      %3288 = vmatmul.mubr.f32.gmra.mxu0 %v3218
      %v3289 = vpop.f32.mrf.mxu0
      %v3290 = vadd.f32 0.0, %v3289
      %v3291 = vpop.f32.mrf.mxu0
      %3292 = vmatprep.mubr.f32.mxu0 0.0
      %3293 = vmatmul.mubr.f32.gmra.mxu0 %v3221
      %v3294 = vpop.f32.mrf.mxu0
      %v3295 = vadd.f32 0.0, %v3294
      %v3296 = vpop.f32.mrf.mxu0
      %3297 = vdwg.mxu0
      %3298 = vrot.lane.b32.xlu0 %v1147, 96
      %v3299 = vpop.permute.xlu0 %3298
      %3300 = vrot.lane.b32.xlu0 %v1148, 96
      %v3301 = vpop.permute.xlu0 %3300
      %v3305 = vsel %vm457, %v2926, 0
      %v3308 = vsel %vm457, %v2927, 0
      %3310 = vmatprep.subr.mxu0 0.0
      %3311 = vmatpush1.msra.mxu0 0.0
      %3312 = vmatprep.subr.mxu0 0.0
      %3313 = vmatpush1.msra.mxu0 0.0
      %3314 = vmatprep.subr.mxu0 0.0
      %3315 = vmatpush1.msra.mxu0 0.0
      %3316 = vmatprep.subr.mxu0 0.0
      %3317 = vmatpush1.msra.mxu0 0.0
      %3318 = vmatprep.subr.mxu0 0.0
      %3319 = vmatpush1.msra.mxu0 0.0
      %3320 = vmatprep.subr.mxu0 0.0
      %3321 = vmatpush1.msra.mxu0 0.0
      %3322 = vmatprep.subr.mxu0 0.0
      %3323 = vmatpush1.msra.mxu0 0.0
      %3324 = vmatprep.subr.mxu0 0.0
      %3325 = vmatpush1.msra.mxu0 0.0
      %3326 = vmatprep.subr.mxu0 0.0
      %3327 = vmatpush1.msra.mxu0 0.0
      %3328 = vmatprep.subr.mxu0 0.0
      %3329 = vmatpush1.msra.mxu0 0.0
      %3330 = vmatprep.subr.mxu0 0.0
      %3331 = vmatpush1.msra.mxu0 0.0
      %3332 = vmatprep.subr.mxu0 0.0
      %3333 = vmatpush1.msra.mxu0 0.0
      %3334 = vmatprep.subr.mxu0 0.0
      %3335 = vmatpush1.msra.mxu0 0.0
      %3336 = vmatprep.subr.mxu0 0.0
      %3337 = vmatpush1.msra.mxu0 0.0
      %3338 = vmatprep.subr.mxu0 0.0
      %3339 = vmatpush1.msra.mxu0 %v3301
      %3340 = vmatprep.subr.mxu0 0.0
      %3341 = vmatpush1.msra.mxu0 %v3299
      %3342 = vmatprep.subr.mxu0 0.0
      %3343 = vmatpush2.msra.mxu0 0.0
      %3344 = vmatprep.subr.mxu0 0.0
      %3345 = vmatpush2.msra.mxu0 0.0
      %3346 = vmatprep.subr.mxu0 0.0
      %3347 = vmatpush2.msra.mxu0 0.0
      %3348 = vmatprep.subr.mxu0 0.0
      %3349 = vmatpush2.msra.mxu0 0.0
      %3350 = vmatprep.subr.mxu0 0.0
      %3351 = vmatpush2.msra.mxu0 0.0
      %3352 = vmatprep.subr.mxu0 0.0
      %3353 = vmatpush2.msra.mxu0 0.0
      %3354 = vmatprep.subr.mxu0 0.0
      %3355 = vmatpush2.msra.mxu0 0.0
      %3356 = vmatprep.subr.mxu0 0.0
      %3357 = vmatpush2.msra.mxu0 0.0
      %3358 = vmatprep.subr.mxu0 0.0
      %3359 = vmatpush2.msra.mxu0 0.0
      %3360 = vmatprep.subr.mxu0 0.0
      %3361 = vmatpush2.msra.mxu0 0.0
      %3362 = vmatprep.subr.mxu0 0.0
      %3363 = vmatpush2.msra.mxu0 0.0
      %3364 = vmatprep.subr.mxu0 0.0
      %3365 = vmatpush2.msra.mxu0 0.0
      %3366 = vmatprep.subr.mxu0 0.0
      %3367 = vmatpush2.msra.mxu0 0.0
      %3368 = vmatprep.subr.mxu0 0.0
      %3369 = vmatpush2.msra.mxu0 0.0
      %3370 = vmatprep.subr.mxu0 0.0
      %3371 = vmatpush2.msra.mxu0 0.0
      %3372 = vmatprep.subr.mxu0 0.0
      %3373 = vmatpush2.msra.mxu0 0.0
      %3374 = vmatprep.mubr.f32.mxu0 0.0
      %3375 = vmatmul.mubr.f32.gmra.mxu0 %v3305
      %v3376 = vpop.f32.mrf.mxu0
      %v3377 = vadd.f32 0.0, %v3376
      %v3378 = vpop.f32.mrf.mxu0
      %3379 = vmatprep.mubr.f32.mxu0 0.0
      %3380 = vmatmul.mubr.f32.gmra.mxu0 %v3308
      %v3381 = vpop.f32.mrf.mxu0
      %v3382 = vadd.f32 0.0, %v3381
      %v3383 = vpop.f32.mrf.mxu0
      %3384 = vdwg.mxu0
      %3385 = vrot.lane.b32.xlu0 %v1149, 96
      %v3386 = vpop.permute.xlu0 %3385
      %3387 = vrot.lane.b32.xlu0 %v1150, 96
      %v3388 = vpop.permute.xlu0 %3387
      %v3392 = vsel %vm457, %v2928, 0
      %v3395 = vsel %vm457, %v2929, 0
      %3397 = vmatprep.subr.mxu0 0.0
      %3398 = vmatpush1.msra.mxu0 0.0
      %3399 = vmatprep.subr.mxu0 0.0
      %3400 = vmatpush1.msra.mxu0 0.0
      %3401 = vmatprep.subr.mxu0 0.0
      %3402 = vmatpush1.msra.mxu0 0.0
      %3403 = vmatprep.subr.mxu0 0.0
      %3404 = vmatpush1.msra.mxu0 0.0
      %3405 = vmatprep.subr.mxu0 0.0
      %3406 = vmatpush1.msra.mxu0 0.0
      %3407 = vmatprep.subr.mxu0 0.0
      %3408 = vmatpush1.msra.mxu0 0.0
      %3409 = vmatprep.subr.mxu0 0.0
      %3410 = vmatpush1.msra.mxu0 0.0
      %3411 = vmatprep.subr.mxu0 0.0
      %3412 = vmatpush1.msra.mxu0 0.0
      %3413 = vmatprep.subr.mxu0 0.0
      %3414 = vmatpush1.msra.mxu0 0.0
      %3415 = vmatprep.subr.mxu0 0.0
      %3416 = vmatpush1.msra.mxu0 0.0
      %3417 = vmatprep.subr.mxu0 0.0
      %3418 = vmatpush1.msra.mxu0 0.0
      %3419 = vmatprep.subr.mxu0 0.0
      %3420 = vmatpush1.msra.mxu0 0.0
      %3421 = vmatprep.subr.mxu0 0.0
      %3422 = vmatpush1.msra.mxu0 0.0
      %3423 = vmatprep.subr.mxu0 0.0
      %3424 = vmatpush1.msra.mxu0 0.0
      %3425 = vmatprep.subr.mxu0 0.0
      %3426 = vmatpush1.msra.mxu0 %v3388
      %3427 = vmatprep.subr.mxu0 0.0
      %3428 = vmatpush1.msra.mxu0 %v3386
      %3429 = vmatprep.subr.mxu0 0.0
      %3430 = vmatpush2.msra.mxu0 0.0
      %3431 = vmatprep.subr.mxu0 0.0
      %3432 = vmatpush2.msra.mxu0 0.0
      %3433 = vmatprep.subr.mxu0 0.0
      %3434 = vmatpush2.msra.mxu0 0.0
      %3435 = vmatprep.subr.mxu0 0.0
      %3436 = vmatpush2.msra.mxu0 0.0
      %3437 = vmatprep.subr.mxu0 0.0
      %3438 = vmatpush2.msra.mxu0 0.0
      %3439 = vmatprep.subr.mxu0 0.0
      %3440 = vmatpush2.msra.mxu0 0.0
      %3441 = vmatprep.subr.mxu0 0.0
      %3442 = vmatpush2.msra.mxu0 0.0
      %3443 = vmatprep.subr.mxu0 0.0
      %3444 = vmatpush2.msra.mxu0 0.0
      %3445 = vmatprep.subr.mxu0 0.0
      %3446 = vmatpush2.msra.mxu0 0.0
      %3447 = vmatprep.subr.mxu0 0.0
      %3448 = vmatpush2.msra.mxu0 0.0
      %3449 = vmatprep.subr.mxu0 0.0
      %3450 = vmatpush2.msra.mxu0 0.0
      %3451 = vmatprep.subr.mxu0 0.0
      %3452 = vmatpush2.msra.mxu0 0.0
      %3453 = vmatprep.subr.mxu0 0.0
      %3454 = vmatpush2.msra.mxu0 0.0
      %3455 = vmatprep.subr.mxu0 0.0
      %3456 = vmatpush2.msra.mxu0 0.0
      %3457 = vmatprep.subr.mxu0 0.0
      %3458 = vmatpush2.msra.mxu0 0.0
      %3459 = vmatprep.subr.mxu0 0.0
      %3460 = vmatpush2.msra.mxu0 0.0
      %3461 = vmatprep.mubr.f32.mxu0 0.0
      %3462 = vmatmul.mubr.f32.gmra.mxu0 %v3392
      %v3463 = vpop.f32.mrf.mxu0
      %v3464 = vadd.f32 0.0, %v3463
      %v3465 = vpop.f32.mrf.mxu0
      %3466 = vmatprep.mubr.f32.mxu0 0.0
      %3467 = vmatmul.mubr.f32.gmra.mxu0 %v3395
      %v3468 = vpop.f32.mrf.mxu0
      %v3469 = vadd.f32 0.0, %v3468
      %v3470 = vpop.f32.mrf.mxu0
      %3471 = vdwg.mxu0
      %3472 = vrot.lane.b32.xlu0 %v1151, 96
      %v3473 = vpop.permute.xlu0 %3472
      %3474 = vrot.lane.b32.xlu0 %v1152, 96
      %v3475 = vpop.permute.xlu0 %3474
      %v3479 = vsel %vm457, %v2930, 0
      %v3482 = vsel %vm457, %v2931, 0
      %3484 = vmatprep.subr.mxu0 0.0
      %3485 = vmatpush1.msra.mxu0 0.0
      %3486 = vmatprep.subr.mxu0 0.0
      %3487 = vmatpush1.msra.mxu0 0.0
      %3488 = vmatprep.subr.mxu0 0.0
      %3489 = vmatpush1.msra.mxu0 0.0
      %3490 = vmatprep.subr.mxu0 0.0
      %3491 = vmatpush1.msra.mxu0 0.0
      %3492 = vmatprep.subr.mxu0 0.0
      %3493 = vmatpush1.msra.mxu0 0.0
      %3494 = vmatprep.subr.mxu0 0.0
      %3495 = vmatpush1.msra.mxu0 0.0
      %3496 = vmatprep.subr.mxu0 0.0
      %3497 = vmatpush1.msra.mxu0 0.0
      %3498 = vmatprep.subr.mxu0 0.0
      %3499 = vmatpush1.msra.mxu0 0.0
      %3500 = vmatprep.subr.mxu0 0.0
      %3501 = vmatpush1.msra.mxu0 0.0
      %3502 = vmatprep.subr.mxu0 0.0
      %3503 = vmatpush1.msra.mxu0 0.0
      %3504 = vmatprep.subr.mxu0 0.0
      %3505 = vmatpush1.msra.mxu0 0.0
      %3506 = vmatprep.subr.mxu0 0.0
      %3507 = vmatpush1.msra.mxu0 0.0
      %3508 = vmatprep.subr.mxu0 0.0
      %3509 = vmatpush1.msra.mxu0 0.0
      %3510 = vmatprep.subr.mxu0 0.0
      %3511 = vmatpush1.msra.mxu0 0.0
      %3512 = vmatprep.subr.mxu0 0.0
      %3513 = vmatpush1.msra.mxu0 %v3475
      %3514 = vmatprep.subr.mxu0 0.0
      %3515 = vmatpush1.msra.mxu0 %v3473
      %3516 = vmatprep.subr.mxu0 0.0
      %3517 = vmatpush2.msra.mxu0 0.0
      %3518 = vmatprep.subr.mxu0 0.0
      %3519 = vmatpush2.msra.mxu0 0.0
      %3520 = vmatprep.subr.mxu0 0.0
      %3521 = vmatpush2.msra.mxu0 0.0
      %3522 = vmatprep.subr.mxu0 0.0
      %3523 = vmatpush2.msra.mxu0 0.0
      %3524 = vmatprep.subr.mxu0 0.0
      %3525 = vmatpush2.msra.mxu0 0.0
      %3526 = vmatprep.subr.mxu0 0.0
      %3527 = vmatpush2.msra.mxu0 0.0
      %3528 = vmatprep.subr.mxu0 0.0
      %3529 = vmatpush2.msra.mxu0 0.0
      %3530 = vmatprep.subr.mxu0 0.0
      %3531 = vmatpush2.msra.mxu0 0.0
      %3532 = vmatprep.subr.mxu0 0.0
      %3533 = vmatpush2.msra.mxu0 0.0
      %3534 = vmatprep.subr.mxu0 0.0
      %3535 = vmatpush2.msra.mxu0 0.0
      %3536 = vmatprep.subr.mxu0 0.0
      %3537 = vmatpush2.msra.mxu0 0.0
      %3538 = vmatprep.subr.mxu0 0.0
      %3539 = vmatpush2.msra.mxu0 0.0
      %3540 = vmatprep.subr.mxu0 0.0
      %3541 = vmatpush2.msra.mxu0 0.0
      %3542 = vmatprep.subr.mxu0 0.0
      %3543 = vmatpush2.msra.mxu0 0.0
      %3544 = vmatprep.subr.mxu0 0.0
      %3545 = vmatpush2.msra.mxu0 0.0
      %3546 = vmatprep.subr.mxu0 0.0
      %3547 = vmatpush2.msra.mxu0 0.0
      %3548 = vmatprep.mubr.f32.mxu0 0.0
      %3549 = vmatmul.mubr.f32.gmra.mxu0 %v3479
      %v3550 = vpop.f32.mrf.mxu0
      %v3551 = vadd.f32 0.0, %v3550
      %v3552 = vpop.f32.mrf.mxu0
      %3553 = vmatprep.mubr.f32.mxu0 0.0
      %3554 = vmatmul.mubr.f32.gmra.mxu0 %v3482
      %v3555 = vpop.f32.mrf.mxu0
      %v3556 = vadd.f32 0.0, %v3555
      %v3557 = vpop.f32.mrf.mxu0
      %3558 = vdwg.mxu0
      %3559 = vrot.lane.b32.xlu0 %v1153, 96
      %v3560 = vpop.permute.xlu0 %3559
      %3561 = vrot.lane.b32.xlu0 %v1154, 96
      %v3562 = vpop.permute.xlu0 %3561
      %v3566 = vsel %vm457, %v2932, 0
      %v3569 = vsel %vm457, %v2933, 0
      %3571 = vmatprep.subr.mxu0 0.0
      %3572 = vmatpush1.msra.mxu0 0.0
      %3573 = vmatprep.subr.mxu0 0.0
      %3574 = vmatpush1.msra.mxu0 0.0
      %3575 = vmatprep.subr.mxu0 0.0
      %3576 = vmatpush1.msra.mxu0 0.0
      %3577 = vmatprep.subr.mxu0 0.0
      %3578 = vmatpush1.msra.mxu0 0.0
      %3579 = vmatprep.subr.mxu0 0.0
      %3580 = vmatpush1.msra.mxu0 0.0
      %3581 = vmatprep.subr.mxu0 0.0
      %3582 = vmatpush1.msra.mxu0 0.0
      %3583 = vmatprep.subr.mxu0 0.0
      %3584 = vmatpush1.msra.mxu0 0.0
      %3585 = vmatprep.subr.mxu0 0.0
      %3586 = vmatpush1.msra.mxu0 0.0
      %3587 = vmatprep.subr.mxu0 0.0
      %3588 = vmatpush1.msra.mxu0 0.0
      %3589 = vmatprep.subr.mxu0 0.0
      %3590 = vmatpush1.msra.mxu0 0.0
      %3591 = vmatprep.subr.mxu0 0.0
      %3592 = vmatpush1.msra.mxu0 0.0
      %3593 = vmatprep.subr.mxu0 0.0
      %3594 = vmatpush1.msra.mxu0 0.0
      %3595 = vmatprep.subr.mxu0 0.0
      %3596 = vmatpush1.msra.mxu0 0.0
      %3597 = vmatprep.subr.mxu0 0.0
      %3598 = vmatpush1.msra.mxu0 0.0
      %3599 = vmatprep.subr.mxu0 0.0
      %3600 = vmatpush1.msra.mxu0 %v3562
      %3601 = vmatprep.subr.mxu0 0.0
      %3602 = vmatpush1.msra.mxu0 %v3560
      %3603 = vmatprep.subr.mxu0 0.0
      %3604 = vmatpush2.msra.mxu0 0.0
      %3605 = vmatprep.subr.mxu0 0.0
      %3606 = vmatpush2.msra.mxu0 0.0
      %3607 = vmatprep.subr.mxu0 0.0
      %3608 = vmatpush2.msra.mxu0 0.0
      %3609 = vmatprep.subr.mxu0 0.0
      %3610 = vmatpush2.msra.mxu0 0.0
      %3611 = vmatprep.subr.mxu0 0.0
      %3612 = vmatpush2.msra.mxu0 0.0
      %3613 = vmatprep.subr.mxu0 0.0
      %3614 = vmatpush2.msra.mxu0 0.0
      %3615 = vmatprep.subr.mxu0 0.0
      %3616 = vmatpush2.msra.mxu0 0.0
      %3617 = vmatprep.subr.mxu0 0.0
      %3618 = vmatpush2.msra.mxu0 0.0
      %3619 = vmatprep.subr.mxu0 0.0
      %3620 = vmatpush2.msra.mxu0 0.0
      %3621 = vmatprep.subr.mxu0 0.0
      %3622 = vmatpush2.msra.mxu0 0.0
      %3623 = vmatprep.subr.mxu0 0.0
      %3624 = vmatpush2.msra.mxu0 0.0
      %3625 = vmatprep.subr.mxu0 0.0
      %3626 = vmatpush2.msra.mxu0 0.0
      %3627 = vmatprep.subr.mxu0 0.0
      %3628 = vmatpush2.msra.mxu0 0.0
      %3629 = vmatprep.subr.mxu0 0.0
      %3630 = vmatpush2.msra.mxu0 0.0
      %3631 = vmatprep.subr.mxu0 0.0
      %3632 = vmatpush2.msra.mxu0 0.0
      %3633 = vmatprep.subr.mxu0 0.0
      %3634 = vmatpush2.msra.mxu0 0.0
      %3635 = vmatprep.mubr.f32.mxu0 0.0
      %3636 = vmatmul.mubr.f32.gmra.mxu0 %v3566
      %v3637 = vpop.f32.mrf.mxu0
      %v3638 = vadd.f32 0.0, %v3637
      %v3639 = vpop.f32.mrf.mxu0
      %3640 = vmatprep.mubr.f32.mxu0 0.0
      %3641 = vmatmul.mubr.f32.gmra.mxu0 %v3569
      %v3642 = vpop.f32.mrf.mxu0
      %v3643 = vadd.f32 0.0, %v3642
      %v3644 = vpop.f32.mrf.mxu0
      %3645 = vdwg.mxu0
      %3646 = vrot.lane.b32.xlu0 %v1155, 96
      %v3647 = vpop.permute.xlu0 %3646
      %3648 = vrot.lane.b32.xlu0 %v1156, 96
      %v3649 = vpop.permute.xlu0 %3648
      %v3653 = vsel %vm457, %v2934, 0
      %v3656 = vsel %vm457, %v2935, 0
      %3658 = vmatprep.subr.mxu0 0.0
      %3659 = vmatpush1.msra.mxu0 0.0
      %3660 = vmatprep.subr.mxu0 0.0
      %3661 = vmatpush1.msra.mxu0 0.0
      %3662 = vmatprep.subr.mxu0 0.0
      %3663 = vmatpush1.msra.mxu0 0.0
      %3664 = vmatprep.subr.mxu0 0.0
      %3665 = vmatpush1.msra.mxu0 0.0
      %3666 = vmatprep.subr.mxu0 0.0
      %3667 = vmatpush1.msra.mxu0 0.0
      %3668 = vmatprep.subr.mxu0 0.0
      %3669 = vmatpush1.msra.mxu0 0.0
      %3670 = vmatprep.subr.mxu0 0.0
      %3671 = vmatpush1.msra.mxu0 0.0
      %3672 = vmatprep.subr.mxu0 0.0
      %3673 = vmatpush1.msra.mxu0 0.0
      %3674 = vmatprep.subr.mxu0 0.0
      %3675 = vmatpush1.msra.mxu0 0.0
      %3676 = vmatprep.subr.mxu0 0.0
      %3677 = vmatpush1.msra.mxu0 0.0
      %3678 = vmatprep.subr.mxu0 0.0
      %3679 = vmatpush1.msra.mxu0 0.0
      %3680 = vmatprep.subr.mxu0 0.0
      %3681 = vmatpush1.msra.mxu0 0.0
      %3682 = vmatprep.subr.mxu0 0.0
      %3683 = vmatpush1.msra.mxu0 0.0
      %3684 = vmatprep.subr.mxu0 0.0
      %3685 = vmatpush1.msra.mxu0 0.0
      %3686 = vmatprep.subr.mxu0 0.0
      %3687 = vmatpush1.msra.mxu0 %v3649
      %3688 = vmatprep.subr.mxu0 0.0
      %3689 = vmatpush1.msra.mxu0 %v3647
      %3690 = vmatprep.subr.mxu0 0.0
      %3691 = vmatpush2.msra.mxu0 0.0
      %3692 = vmatprep.subr.mxu0 0.0
      %3693 = vmatpush2.msra.mxu0 0.0
      %3694 = vmatprep.subr.mxu0 0.0
      %3695 = vmatpush2.msra.mxu0 0.0
      %3696 = vmatprep.subr.mxu0 0.0
      %3697 = vmatpush2.msra.mxu0 0.0
      %3698 = vmatprep.subr.mxu0 0.0
      %3699 = vmatpush2.msra.mxu0 0.0
      %3700 = vmatprep.subr.mxu0 0.0
      %3701 = vmatpush2.msra.mxu0 0.0
      %3702 = vmatprep.subr.mxu0 0.0
      %3703 = vmatpush2.msra.mxu0 0.0
      %3704 = vmatprep.subr.mxu0 0.0
      %3705 = vmatpush2.msra.mxu0 0.0
      %3706 = vmatprep.subr.mxu0 0.0
      %3707 = vmatpush2.msra.mxu0 0.0
      %3708 = vmatprep.subr.mxu0 0.0
      %3709 = vmatpush2.msra.mxu0 0.0
      %3710 = vmatprep.subr.mxu0 0.0
      %3711 = vmatpush2.msra.mxu0 0.0
      %3712 = vmatprep.subr.mxu0 0.0
      %3713 = vmatpush2.msra.mxu0 0.0
      %3714 = vmatprep.subr.mxu0 0.0
      %3715 = vmatpush2.msra.mxu0 0.0
      %3716 = vmatprep.subr.mxu0 0.0
      %3717 = vmatpush2.msra.mxu0 0.0
      %3718 = vmatprep.subr.mxu0 0.0
      %3719 = vmatpush2.msra.mxu0 0.0
      %3720 = vmatprep.subr.mxu0 0.0
      %3721 = vmatpush2.msra.mxu0 0.0
      %3722 = vmatprep.mubr.f32.mxu0 0.0
      %3723 = vmatmul.mubr.f32.gmra.mxu0 %v3653
      %v3724 = vpop.f32.mrf.mxu0
      %v3725 = vadd.f32 0.0, %v3724
      %v3726 = vpop.f32.mrf.mxu0
      %3727 = vmatprep.mubr.f32.mxu0 0.0
      %3728 = vmatmul.mubr.f32.gmra.mxu0 %v3656
      %v3729 = vpop.f32.mrf.mxu0
      %v3730 = vadd.f32 0.0, %v3729
      %v3731 = vpop.f32.mrf.mxu0
      %3732 = vdwg.mxu0
      %3733 = vrot.lane.b32.xlu0 %v1157, 96
      %v3734 = vpop.permute.xlu0 %3733
      %3735 = vrot.lane.b32.xlu0 %v1158, 96
      %v3736 = vpop.permute.xlu0 %3735
      %v3740 = vsel %vm457, %v2936, 0
      %v3743 = vsel %vm457, %v2937, 0
      %3745 = vmatprep.subr.mxu0 0.0
      %3746 = vmatpush1.msra.mxu0 0.0
      %3747 = vmatprep.subr.mxu0 0.0
      %3748 = vmatpush1.msra.mxu0 0.0
      %3749 = vmatprep.subr.mxu0 0.0
      %3750 = vmatpush1.msra.mxu0 0.0
      %3751 = vmatprep.subr.mxu0 0.0
      %3752 = vmatpush1.msra.mxu0 0.0
      %3753 = vmatprep.subr.mxu0 0.0
      %3754 = vmatpush1.msra.mxu0 0.0
      %3755 = vmatprep.subr.mxu0 0.0
      %3756 = vmatpush1.msra.mxu0 0.0
      %3757 = vmatprep.subr.mxu0 0.0
      %3758 = vmatpush1.msra.mxu0 0.0
      %3759 = vmatprep.subr.mxu0 0.0
      %3760 = vmatpush1.msra.mxu0 0.0
      %3761 = vmatprep.subr.mxu0 0.0
      %3762 = vmatpush1.msra.mxu0 0.0
      %3763 = vmatprep.subr.mxu0 0.0
      %3764 = vmatpush1.msra.mxu0 0.0
      %3765 = vmatprep.subr.mxu0 0.0
      %3766 = vmatpush1.msra.mxu0 0.0
      %3767 = vmatprep.subr.mxu0 0.0
      %3768 = vmatpush1.msra.mxu0 0.0
      %3769 = vmatprep.subr.mxu0 0.0
      %3770 = vmatpush1.msra.mxu0 0.0
      %3771 = vmatprep.subr.mxu0 0.0
      %3772 = vmatpush1.msra.mxu0 0.0
      %3773 = vmatprep.subr.mxu0 0.0
      %3774 = vmatpush1.msra.mxu0 %v3736
      %3775 = vmatprep.subr.mxu0 0.0
      %3776 = vmatpush1.msra.mxu0 %v3734
      %3777 = vmatprep.subr.mxu0 0.0
      %3778 = vmatpush2.msra.mxu0 0.0
      %3779 = vmatprep.subr.mxu0 0.0
      %3780 = vmatpush2.msra.mxu0 0.0
      %3781 = vmatprep.subr.mxu0 0.0
      %3782 = vmatpush2.msra.mxu0 0.0
      %3783 = vmatprep.subr.mxu0 0.0
      %3784 = vmatpush2.msra.mxu0 0.0
      %3785 = vmatprep.subr.mxu0 0.0
      %3786 = vmatpush2.msra.mxu0 0.0
      %3787 = vmatprep.subr.mxu0 0.0
      %3788 = vmatpush2.msra.mxu0 0.0
      %3789 = vmatprep.subr.mxu0 0.0
      %3790 = vmatpush2.msra.mxu0 0.0
      %3791 = vmatprep.subr.mxu0 0.0
      %3792 = vmatpush2.msra.mxu0 0.0
      %3793 = vmatprep.subr.mxu0 0.0
      %3794 = vmatpush2.msra.mxu0 0.0
      %3795 = vmatprep.subr.mxu0 0.0
      %3796 = vmatpush2.msra.mxu0 0.0
      %3797 = vmatprep.subr.mxu0 0.0
      %3798 = vmatpush2.msra.mxu0 0.0
      %3799 = vmatprep.subr.mxu0 0.0
      %3800 = vmatpush2.msra.mxu0 0.0
      %3801 = vmatprep.subr.mxu0 0.0
      %3802 = vmatpush2.msra.mxu0 0.0
      %3803 = vmatprep.subr.mxu0 0.0
      %3804 = vmatpush2.msra.mxu0 0.0
      %3805 = vmatprep.subr.mxu0 0.0
      %3806 = vmatpush2.msra.mxu0 0.0
      %3807 = vmatprep.subr.mxu0 0.0
      %3808 = vmatpush2.msra.mxu0 0.0
      %3809 = vmatprep.mubr.f32.mxu0 0.0
      %3810 = vmatmul.mubr.f32.gmra.mxu0 %v3740
      %v3811 = vpop.f32.mrf.mxu0
      %v3812 = vadd.f32 0.0, %v3811
      %v3813 = vpop.f32.mrf.mxu0
      %3814 = vmatprep.mubr.f32.mxu0 0.0
      %3815 = vmatmul.mubr.f32.gmra.mxu0 %v3743
      %v3816 = vpop.f32.mrf.mxu0
      %v3817 = vadd.f32 0.0, %v3816
      %v3818 = vpop.f32.mrf.mxu0
      %3819 = vdwg.mxu0
      %3820 = vrot.lane.b32.xlu0 %v1159, 96
      %v3821 = vpop.permute.xlu0 %3820
      %3822 = vrot.lane.b32.xlu0 %v1160, 96
      %v3823 = vpop.permute.xlu0 %3822
      %v3827 = vsel %vm457, %v2938, 0
      %v3830 = vsel %vm457, %v2939, 0
      %3832 = vmatprep.subr.mxu0 0.0
      %3833 = vmatpush1.msra.mxu0 0.0
      %3834 = vmatprep.subr.mxu0 0.0
      %3835 = vmatpush1.msra.mxu0 0.0
      %3836 = vmatprep.subr.mxu0 0.0
      %3837 = vmatpush1.msra.mxu0 0.0
      %3838 = vmatprep.subr.mxu0 0.0
      %3839 = vmatpush1.msra.mxu0 0.0
      %3840 = vmatprep.subr.mxu0 0.0
      %3841 = vmatpush1.msra.mxu0 0.0
      %3842 = vmatprep.subr.mxu0 0.0
      %3843 = vmatpush1.msra.mxu0 0.0
      %3844 = vmatprep.subr.mxu0 0.0
      %3845 = vmatpush1.msra.mxu0 0.0
      %3846 = vmatprep.subr.mxu0 0.0
      %3847 = vmatpush1.msra.mxu0 0.0
      %3848 = vmatprep.subr.mxu0 0.0
      %3849 = vmatpush1.msra.mxu0 0.0
      %3850 = vmatprep.subr.mxu0 0.0
      %3851 = vmatpush1.msra.mxu0 0.0
      %3852 = vmatprep.subr.mxu0 0.0
      %3853 = vmatpush1.msra.mxu0 0.0
      %3854 = vmatprep.subr.mxu0 0.0
      %3855 = vmatpush1.msra.mxu0 0.0
      %3856 = vmatprep.subr.mxu0 0.0
      %3857 = vmatpush1.msra.mxu0 0.0
      %3858 = vmatprep.subr.mxu0 0.0
      %3859 = vmatpush1.msra.mxu0 0.0
      %3860 = vmatprep.subr.mxu0 0.0
      %3861 = vmatpush1.msra.mxu0 %v3823
      %3862 = vmatprep.subr.mxu0 0.0
      %3863 = vmatpush1.msra.mxu0 %v3821
      %3864 = vmatprep.subr.mxu0 0.0
      %3865 = vmatpush2.msra.mxu0 0.0
      %3866 = vmatprep.subr.mxu0 0.0
      %3867 = vmatpush2.msra.mxu0 0.0
      %3868 = vmatprep.subr.mxu0 0.0
      %3869 = vmatpush2.msra.mxu0 0.0
      %3870 = vmatprep.subr.mxu0 0.0
      %3871 = vmatpush2.msra.mxu0 0.0
      %3872 = vmatprep.subr.mxu0 0.0
      %3873 = vmatpush2.msra.mxu0 0.0
      %3874 = vmatprep.subr.mxu0 0.0
      %3875 = vmatpush2.msra.mxu0 0.0
      %3876 = vmatprep.subr.mxu0 0.0
      %3877 = vmatpush2.msra.mxu0 0.0
      %3878 = vmatprep.subr.mxu0 0.0
      %3879 = vmatpush2.msra.mxu0 0.0
      %3880 = vmatprep.subr.mxu0 0.0
      %3881 = vmatpush2.msra.mxu0 0.0
      %3882 = vmatprep.subr.mxu0 0.0
      %3883 = vmatpush2.msra.mxu0 0.0
      %3884 = vmatprep.subr.mxu0 0.0
      %3885 = vmatpush2.msra.mxu0 0.0
      %3886 = vmatprep.subr.mxu0 0.0
      %3887 = vmatpush2.msra.mxu0 0.0
      %3888 = vmatprep.subr.mxu0 0.0
      %3889 = vmatpush2.msra.mxu0 0.0
      %3890 = vmatprep.subr.mxu0 0.0
      %3891 = vmatpush2.msra.mxu0 0.0
      %3892 = vmatprep.subr.mxu0 0.0
      %3893 = vmatpush2.msra.mxu0 0.0
      %3894 = vmatprep.subr.mxu0 0.0
      %3895 = vmatpush2.msra.mxu0 0.0
      %3896 = vmatprep.mubr.f32.mxu0 0.0
      %3897 = vmatmul.mubr.f32.gmra.mxu0 %v3827
      %v3898 = vpop.f32.mrf.mxu0
      %v3899 = vadd.f32 0.0, %v3898
      %v3900 = vpop.f32.mrf.mxu0
      %3901 = vmatprep.mubr.f32.mxu0 0.0
      %3902 = vmatmul.mubr.f32.gmra.mxu0 %v3830
      %v3903 = vpop.f32.mrf.mxu0
      %v3904 = vadd.f32 0.0, %v3903
      %v3905 = vpop.f32.mrf.mxu0
      %3906 = vdwg.mxu0
      %3907 = vrot.lane.b32.xlu0 %v1161, 96
      %v3908 = vpop.permute.xlu0 %3907
      %3909 = vrot.lane.b32.xlu0 %v1162, 96
      %v3910 = vpop.permute.xlu0 %3909
      %v3914 = vsel %vm457, %v2940, 0
      %v3917 = vsel %vm457, %v2941, 0
      %3919 = vmatprep.subr.mxu0 0.0
      %3920 = vmatpush1.msra.mxu0 0.0
      %3921 = vmatprep.subr.mxu0 0.0
      %3922 = vmatpush1.msra.mxu0 0.0
      %3923 = vmatprep.subr.mxu0 0.0
      %3924 = vmatpush1.msra.mxu0 0.0
      %3925 = vmatprep.subr.mxu0 0.0
      %3926 = vmatpush1.msra.mxu0 0.0
      %3927 = vmatprep.subr.mxu0 0.0
      %3928 = vmatpush1.msra.mxu0 0.0
      %3929 = vmatprep.subr.mxu0 0.0
      %3930 = vmatpush1.msra.mxu0 0.0
      %3931 = vmatprep.subr.mxu0 0.0
      %3932 = vmatpush1.msra.mxu0 0.0
      %3933 = vmatprep.subr.mxu0 0.0
      %3934 = vmatpush1.msra.mxu0 0.0
      %3935 = vmatprep.subr.mxu0 0.0
      %3936 = vmatpush1.msra.mxu0 0.0
      %3937 = vmatprep.subr.mxu0 0.0
      %3938 = vmatpush1.msra.mxu0 0.0
      %3939 = vmatprep.subr.mxu0 0.0
      %3940 = vmatpush1.msra.mxu0 0.0
      %3941 = vmatprep.subr.mxu0 0.0
      %3942 = vmatpush1.msra.mxu0 0.0
      %3943 = vmatprep.subr.mxu0 0.0
      %3944 = vmatpush1.msra.mxu0 0.0
      %3945 = vmatprep.subr.mxu0 0.0
      %3946 = vmatpush1.msra.mxu0 0.0
      %3947 = vmatprep.subr.mxu0 0.0
      %3948 = vmatpush1.msra.mxu0 %v3910
      %3949 = vmatprep.subr.mxu0 0.0
      %3950 = vmatpush1.msra.mxu0 %v3908
      %3951 = vmatprep.subr.mxu0 0.0
      %3952 = vmatpush2.msra.mxu0 0.0
      %3953 = vmatprep.subr.mxu0 0.0
      %3954 = vmatpush2.msra.mxu0 0.0
      %3955 = vmatprep.subr.mxu0 0.0
      %3956 = vmatpush2.msra.mxu0 0.0
      %3957 = vmatprep.subr.mxu0 0.0
      %3958 = vmatpush2.msra.mxu0 0.0
      %3959 = vmatprep.subr.mxu0 0.0
      %3960 = vmatpush2.msra.mxu0 0.0
      %3961 = vmatprep.subr.mxu0 0.0
      %3962 = vmatpush2.msra.mxu0 0.0
      %3963 = vmatprep.subr.mxu0 0.0
      %3964 = vmatpush2.msra.mxu0 0.0
      %3965 = vmatprep.subr.mxu0 0.0
      %3966 = vmatpush2.msra.mxu0 0.0
      %3967 = vmatprep.subr.mxu0 0.0
      %3968 = vmatpush2.msra.mxu0 0.0
      %3969 = vmatprep.subr.mxu0 0.0
      %3970 = vmatpush2.msra.mxu0 0.0
      %3971 = vmatprep.subr.mxu0 0.0
      %3972 = vmatpush2.msra.mxu0 0.0
      %3973 = vmatprep.subr.mxu0 0.0
      %3974 = vmatpush2.msra.mxu0 0.0
      %3975 = vmatprep.subr.mxu0 0.0
      %3976 = vmatpush2.msra.mxu0 0.0
      %3977 = vmatprep.subr.mxu0 0.0
      %3978 = vmatpush2.msra.mxu0 0.0
      %3979 = vmatprep.subr.mxu0 0.0
      %3980 = vmatpush2.msra.mxu0 0.0
      %3981 = vmatprep.subr.mxu0 0.0
      %3982 = vmatpush2.msra.mxu0 0.0
      %3983 = vmatprep.mubr.f32.mxu0 0.0
      %3984 = vmatmul.mubr.f32.gmra.mxu0 %v3914
      %v3985 = vpop.f32.mrf.mxu0
      %v3986 = vadd.f32 0.0, %v3985
      %v3987 = vpop.f32.mrf.mxu0
      %3988 = vmatprep.mubr.f32.mxu0 0.0
      %3989 = vmatmul.mubr.f32.gmra.mxu0 %v3917
      %v3990 = vpop.f32.mrf.mxu0
      %v3991 = vadd.f32 0.0, %v3990
      %v3992 = vpop.f32.mrf.mxu0
      %3993 = vdwg.mxu0
      %3994 = vrot.lane.b32.xlu0 %v1163, 96
      %v3995 = vpop.permute.xlu0 %3994
      %3996 = vrot.lane.b32.xlu0 %v1164, 96
      %v3997 = vpop.permute.xlu0 %3996
      %v4001 = vsel %vm457, %v2942, 0
      %v4004 = vsel %vm457, %v2943, 0
      %4006 = vmatprep.subr.mxu0 0.0
      %4007 = vmatpush1.msra.mxu0 0.0
      %4008 = vmatprep.subr.mxu0 0.0
      %4009 = vmatpush1.msra.mxu0 0.0
      %4010 = vmatprep.subr.mxu0 0.0
      %4011 = vmatpush1.msra.mxu0 0.0
      %4012 = vmatprep.subr.mxu0 0.0
      %4013 = vmatpush1.msra.mxu0 0.0
      %4014 = vmatprep.subr.mxu0 0.0
      %4015 = vmatpush1.msra.mxu0 0.0
      %4016 = vmatprep.subr.mxu0 0.0
      %4017 = vmatpush1.msra.mxu0 0.0
      %4018 = vmatprep.subr.mxu0 0.0
      %4019 = vmatpush1.msra.mxu0 0.0
      %4020 = vmatprep.subr.mxu0 0.0
      %4021 = vmatpush1.msra.mxu0 0.0
      %4022 = vmatprep.subr.mxu0 0.0
      %4023 = vmatpush1.msra.mxu0 0.0
      %4024 = vmatprep.subr.mxu0 0.0
      %4025 = vmatpush1.msra.mxu0 0.0
      %4026 = vmatprep.subr.mxu0 0.0
      %4027 = vmatpush1.msra.mxu0 0.0
      %4028 = vmatprep.subr.mxu0 0.0
      %4029 = vmatpush1.msra.mxu0 0.0
      %4030 = vmatprep.subr.mxu0 0.0
      %4031 = vmatpush1.msra.mxu0 0.0
      %4032 = vmatprep.subr.mxu0 0.0
      %4033 = vmatpush1.msra.mxu0 0.0
      %4034 = vmatprep.subr.mxu0 0.0
      %4035 = vmatpush1.msra.mxu0 %v3997
      %4036 = vmatprep.subr.mxu0 0.0
      %4037 = vmatpush1.msra.mxu0 %v3995
      %4038 = vmatprep.subr.mxu0 0.0
      %4039 = vmatpush2.msra.mxu0 0.0
      %4040 = vmatprep.subr.mxu0 0.0
      %4041 = vmatpush2.msra.mxu0 0.0
      %4042 = vmatprep.subr.mxu0 0.0
      %4043 = vmatpush2.msra.mxu0 0.0
      %4044 = vmatprep.subr.mxu0 0.0
      %4045 = vmatpush2.msra.mxu0 0.0
      %4046 = vmatprep.subr.mxu0 0.0
      %4047 = vmatpush2.msra.mxu0 0.0
      %4048 = vmatprep.subr.mxu0 0.0
      %4049 = vmatpush2.msra.mxu0 0.0
      %4050 = vmatprep.subr.mxu0 0.0
      %4051 = vmatpush2.msra.mxu0 0.0
      %4052 = vmatprep.subr.mxu0 0.0
      %4053 = vmatpush2.msra.mxu0 0.0
      %4054 = vmatprep.subr.mxu0 0.0
      %4055 = vmatpush2.msra.mxu0 0.0
      %4056 = vmatprep.subr.mxu0 0.0
      %4057 = vmatpush2.msra.mxu0 0.0
      %4058 = vmatprep.subr.mxu0 0.0
      %4059 = vmatpush2.msra.mxu0 0.0
      %4060 = vmatprep.subr.mxu0 0.0
      %4061 = vmatpush2.msra.mxu0 0.0
      %4062 = vmatprep.subr.mxu0 0.0
      %4063 = vmatpush2.msra.mxu0 0.0
      %4064 = vmatprep.subr.mxu0 0.0
      %4065 = vmatpush2.msra.mxu0 0.0
      %4066 = vmatprep.subr.mxu0 0.0
      %4067 = vmatpush2.msra.mxu0 0.0
      %4068 = vmatprep.subr.mxu0 0.0
      %4069 = vmatpush2.msra.mxu0 0.0
      %4070 = vmatprep.mubr.f32.mxu0 0.0
      %4071 = vmatmul.mubr.f32.gmra.mxu0 %v4001
      %v4072 = vpop.f32.mrf.mxu0
      %v4073 = vadd.f32 0.0, %v4072
      %v4074 = vpop.f32.mrf.mxu0
      %4075 = vmatprep.mubr.f32.mxu0 0.0
      %4076 = vmatmul.mubr.f32.gmra.mxu0 %v4004
      %v4077 = vpop.f32.mrf.mxu0
      %v4078 = vadd.f32 0.0, %v4077
      %v4079 = vpop.f32.mrf.mxu0
      %4080 = vdwg.mxu0
      %4081 = vrot.lane.b32.xlu0 %v1165, 96
      %v4082 = vpop.permute.xlu0 %4081
      %4083 = vrot.lane.b32.xlu0 %v1166, 96
      %v4084 = vpop.permute.xlu0 %4083
      %v4088 = vsel %vm457, %v2944, 0
      %v4091 = vsel %vm457, %v2945, 0
      %4093 = vmatprep.subr.mxu0 0.0
      %4094 = vmatpush1.msra.mxu0 0.0
      %4095 = vmatprep.subr.mxu0 0.0
      %4096 = vmatpush1.msra.mxu0 0.0
      %4097 = vmatprep.subr.mxu0 0.0
      %4098 = vmatpush1.msra.mxu0 0.0
      %4099 = vmatprep.subr.mxu0 0.0
      %4100 = vmatpush1.msra.mxu0 0.0
      %4101 = vmatprep.subr.mxu0 0.0
      %4102 = vmatpush1.msra.mxu0 0.0
      %4103 = vmatprep.subr.mxu0 0.0
      %4104 = vmatpush1.msra.mxu0 0.0
      %4105 = vmatprep.subr.mxu0 0.0
      %4106 = vmatpush1.msra.mxu0 0.0
      %4107 = vmatprep.subr.mxu0 0.0
      %4108 = vmatpush1.msra.mxu0 0.0
      %4109 = vmatprep.subr.mxu0 0.0
      %4110 = vmatpush1.msra.mxu0 0.0
      %4111 = vmatprep.subr.mxu0 0.0
      %4112 = vmatpush1.msra.mxu0 0.0
      %4113 = vmatprep.subr.mxu0 0.0
      %4114 = vmatpush1.msra.mxu0 0.0
      %4115 = vmatprep.subr.mxu0 0.0
      %4116 = vmatpush1.msra.mxu0 0.0
      %4117 = vmatprep.subr.mxu0 0.0
      %4118 = vmatpush1.msra.mxu0 0.0
      %4119 = vmatprep.subr.mxu0 0.0
      %4120 = vmatpush1.msra.mxu0 0.0
      %4121 = vmatprep.subr.mxu0 0.0
      %4122 = vmatpush1.msra.mxu0 %v4084
      %4123 = vmatprep.subr.mxu0 0.0
      %4124 = vmatpush1.msra.mxu0 %v4082
      %4125 = vmatprep.subr.mxu0 0.0
      %4126 = vmatpush2.msra.mxu0 0.0
      %4127 = vmatprep.subr.mxu0 0.0
      %4128 = vmatpush2.msra.mxu0 0.0
      %4129 = vmatprep.subr.mxu0 0.0
      %4130 = vmatpush2.msra.mxu0 0.0
      %4131 = vmatprep.subr.mxu0 0.0
      %4132 = vmatpush2.msra.mxu0 0.0
      %4133 = vmatprep.subr.mxu0 0.0
      %4134 = vmatpush2.msra.mxu0 0.0
      %4135 = vmatprep.subr.mxu0 0.0
      %4136 = vmatpush2.msra.mxu0 0.0
      %4137 = vmatprep.subr.mxu0 0.0
      %4138 = vmatpush2.msra.mxu0 0.0
      %4139 = vmatprep.subr.mxu0 0.0
      %4140 = vmatpush2.msra.mxu0 0.0
      %4141 = vmatprep.subr.mxu0 0.0
      %4142 = vmatpush2.msra.mxu0 0.0
      %4143 = vmatprep.subr.mxu0 0.0
      %4144 = vmatpush2.msra.mxu0 0.0
      %4145 = vmatprep.subr.mxu0 0.0
      %4146 = vmatpush2.msra.mxu0 0.0
      %4147 = vmatprep.subr.mxu0 0.0
      %4148 = vmatpush2.msra.mxu0 0.0
      %4149 = vmatprep.subr.mxu0 0.0
      %4150 = vmatpush2.msra.mxu0 0.0
      %4151 = vmatprep.subr.mxu0 0.0
      %4152 = vmatpush2.msra.mxu0 0.0
      %4153 = vmatprep.subr.mxu0 0.0
      %4154 = vmatpush2.msra.mxu0 0.0
      %4155 = vmatprep.subr.mxu0 0.0
      %4156 = vmatpush2.msra.mxu0 0.0
      %4157 = vmatprep.mubr.f32.mxu0 0.0
      %4158 = vmatmul.mubr.f32.gmra.mxu0 %v4088
      %v4159 = vpop.f32.mrf.mxu0
      %v4160 = vadd.f32 0.0, %v4159
      %v4161 = vpop.f32.mrf.mxu0
      %4162 = vmatprep.mubr.f32.mxu0 0.0
      %4163 = vmatmul.mubr.f32.gmra.mxu0 %v4091
      %v4164 = vpop.f32.mrf.mxu0
      %v4165 = vadd.f32 0.0, %v4164
      %v4166 = vpop.f32.mrf.mxu0
      %4167 = vdwg.mxu0
      %4168 = vrot.lane.b32.xlu0 %v1167, 96
      %v4169 = vpop.permute.xlu0 %4168
      %4170 = vrot.lane.b32.xlu0 %v1168, 96
      %v4171 = vpop.permute.xlu0 %4170
      %v4175 = vsel %vm457, %v2946, 0
      %v4178 = vsel %vm457, %v2947, 0
      %4180 = vmatprep.subr.mxu0 0.0
      %4181 = vmatpush1.msra.mxu0 0.0
      %4182 = vmatprep.subr.mxu0 0.0
      %4183 = vmatpush1.msra.mxu0 0.0
      %4184 = vmatprep.subr.mxu0 0.0
      %4185 = vmatpush1.msra.mxu0 0.0
      %4186 = vmatprep.subr.mxu0 0.0
      %4187 = vmatpush1.msra.mxu0 0.0
      %4188 = vmatprep.subr.mxu0 0.0
      %4189 = vmatpush1.msra.mxu0 0.0
      %4190 = vmatprep.subr.mxu0 0.0
      %4191 = vmatpush1.msra.mxu0 0.0
      %4192 = vmatprep.subr.mxu0 0.0
      %4193 = vmatpush1.msra.mxu0 0.0
      %4194 = vmatprep.subr.mxu0 0.0
      %4195 = vmatpush1.msra.mxu0 0.0
      %4196 = vmatprep.subr.mxu0 0.0
      %4197 = vmatpush1.msra.mxu0 0.0
      %4198 = vmatprep.subr.mxu0 0.0
      %4199 = vmatpush1.msra.mxu0 0.0
      %4200 = vmatprep.subr.mxu0 0.0
      %4201 = vmatpush1.msra.mxu0 0.0
      %4202 = vmatprep.subr.mxu0 0.0
      %4203 = vmatpush1.msra.mxu0 0.0
      %4204 = vmatprep.subr.mxu0 0.0
      %4205 = vmatpush1.msra.mxu0 0.0
      %4206 = vmatprep.subr.mxu0 0.0
      %4207 = vmatpush1.msra.mxu0 0.0
      %4208 = vmatprep.subr.mxu0 0.0
      %4209 = vmatpush1.msra.mxu0 %v4171
      %4210 = vmatprep.subr.mxu0 0.0
      %4211 = vmatpush1.msra.mxu0 %v4169
      %4212 = vmatprep.subr.mxu0 0.0
      %4213 = vmatpush2.msra.mxu0 0.0
      %4214 = vmatprep.subr.mxu0 0.0
      %4215 = vmatpush2.msra.mxu0 0.0
      %4216 = vmatprep.subr.mxu0 0.0
      %4217 = vmatpush2.msra.mxu0 0.0
      %4218 = vmatprep.subr.mxu0 0.0
      %4219 = vmatpush2.msra.mxu0 0.0
      %4220 = vmatprep.subr.mxu0 0.0
      %4221 = vmatpush2.msra.mxu0 0.0
      %4222 = vmatprep.subr.mxu0 0.0
      %4223 = vmatpush2.msra.mxu0 0.0
      %4224 = vmatprep.subr.mxu0 0.0
      %4225 = vmatpush2.msra.mxu0 0.0
      %4226 = vmatprep.subr.mxu0 0.0
      %4227 = vmatpush2.msra.mxu0 0.0
      %4228 = vmatprep.subr.mxu0 0.0
      %4229 = vmatpush2.msra.mxu0 0.0
      %4230 = vmatprep.subr.mxu0 0.0
      %4231 = vmatpush2.msra.mxu0 0.0
      %4232 = vmatprep.subr.mxu0 0.0
      %4233 = vmatpush2.msra.mxu0 0.0
      %4234 = vmatprep.subr.mxu0 0.0
      %4235 = vmatpush2.msra.mxu0 0.0
      %4236 = vmatprep.subr.mxu0 0.0
      %4237 = vmatpush2.msra.mxu0 0.0
      %4238 = vmatprep.subr.mxu0 0.0
      %4239 = vmatpush2.msra.mxu0 0.0
      %4240 = vmatprep.subr.mxu0 0.0
      %4241 = vmatpush2.msra.mxu0 0.0
      %4242 = vmatprep.subr.mxu0 0.0
      %4243 = vmatpush2.msra.mxu0 0.0
      %4244 = vmatprep.mubr.f32.mxu0 0.0
      %4245 = vmatmul.mubr.f32.gmra.mxu0 %v4175
      %v4246 = vpop.f32.mrf.mxu0
      %v4247 = vadd.f32 0.0, %v4246
      %v4248 = vpop.f32.mrf.mxu0
      %4249 = vmatprep.mubr.f32.mxu0 0.0
      %4250 = vmatmul.mubr.f32.gmra.mxu0 %v4178
      %v4251 = vpop.f32.mrf.mxu0
      %v4252 = vadd.f32 0.0, %v4251
      %v4253 = vpop.f32.mrf.mxu0
      %4254 = vdwg.mxu0
      %4255 = vrot.lane.b32.xlu0 %v1169, 96
      %v4256 = vpop.permute.xlu0 %4255
      %4257 = vrot.lane.b32.xlu0 %v1170, 96
      %v4258 = vpop.permute.xlu0 %4257
      %v4262 = vsel %vm457, %v2948, 0
      %v4265 = vsel %vm457, %v2949, 0
      %4267 = vmatprep.subr.mxu0 0.0
      %4268 = vmatpush1.msra.mxu0 0.0
      %4269 = vmatprep.subr.mxu0 0.0
      %4270 = vmatpush1.msra.mxu0 0.0
      %4271 = vmatprep.subr.mxu0 0.0
      %4272 = vmatpush1.msra.mxu0 0.0
      %4273 = vmatprep.subr.mxu0 0.0
      %4274 = vmatpush1.msra.mxu0 0.0
      %4275 = vmatprep.subr.mxu0 0.0
      %4276 = vmatpush1.msra.mxu0 0.0
      %4277 = vmatprep.subr.mxu0 0.0
      %4278 = vmatpush1.msra.mxu0 0.0
      %4279 = vmatprep.subr.mxu0 0.0
      %4280 = vmatpush1.msra.mxu0 0.0
      %4281 = vmatprep.subr.mxu0 0.0
      %4282 = vmatpush1.msra.mxu0 0.0
      %4283 = vmatprep.subr.mxu0 0.0
      %4284 = vmatpush1.msra.mxu0 0.0
      %4285 = vmatprep.subr.mxu0 0.0
      %4286 = vmatpush1.msra.mxu0 0.0
      %4287 = vmatprep.subr.mxu0 0.0
      %4288 = vmatpush1.msra.mxu0 0.0
      %4289 = vmatprep.subr.mxu0 0.0
      %4290 = vmatpush1.msra.mxu0 0.0
      %4291 = vmatprep.subr.mxu0 0.0
      %4292 = vmatpush1.msra.mxu0 0.0
      %4293 = vmatprep.subr.mxu0 0.0
      %4294 = vmatpush1.msra.mxu0 0.0
      %4295 = vmatprep.subr.mxu0 0.0
      %4296 = vmatpush1.msra.mxu0 %v4258
      %4297 = vmatprep.subr.mxu0 0.0
      %4298 = vmatpush1.msra.mxu0 %v4256
      %4299 = vmatprep.subr.mxu0 0.0
      %4300 = vmatpush2.msra.mxu0 0.0
      %4301 = vmatprep.subr.mxu0 0.0
      %4302 = vmatpush2.msra.mxu0 0.0
      %4303 = vmatprep.subr.mxu0 0.0
      %4304 = vmatpush2.msra.mxu0 0.0
      %4305 = vmatprep.subr.mxu0 0.0
      %4306 = vmatpush2.msra.mxu0 0.0
      %4307 = vmatprep.subr.mxu0 0.0
      %4308 = vmatpush2.msra.mxu0 0.0
      %4309 = vmatprep.subr.mxu0 0.0
      %4310 = vmatpush2.msra.mxu0 0.0
      %4311 = vmatprep.subr.mxu0 0.0
      %4312 = vmatpush2.msra.mxu0 0.0
      %4313 = vmatprep.subr.mxu0 0.0
      %4314 = vmatpush2.msra.mxu0 0.0
      %4315 = vmatprep.subr.mxu0 0.0
      %4316 = vmatpush2.msra.mxu0 0.0
      %4317 = vmatprep.subr.mxu0 0.0
      %4318 = vmatpush2.msra.mxu0 0.0
      %4319 = vmatprep.subr.mxu0 0.0
      %4320 = vmatpush2.msra.mxu0 0.0
      %4321 = vmatprep.subr.mxu0 0.0
      %4322 = vmatpush2.msra.mxu0 0.0
      %4323 = vmatprep.subr.mxu0 0.0
      %4324 = vmatpush2.msra.mxu0 0.0
      %4325 = vmatprep.subr.mxu0 0.0
      %4326 = vmatpush2.msra.mxu0 0.0
      %4327 = vmatprep.subr.mxu0 0.0
      %4328 = vmatpush2.msra.mxu0 0.0
      %4329 = vmatprep.subr.mxu0 0.0
      %4330 = vmatpush2.msra.mxu0 0.0
      %4331 = vmatprep.mubr.f32.mxu0 0.0
      %4332 = vmatmul.mubr.f32.gmra.mxu0 %v4262
      %v4333 = vpop.f32.mrf.mxu0
      %v4334 = vadd.f32 0.0, %v4333
      %v4335 = vpop.f32.mrf.mxu0
      %4336 = vmatprep.mubr.f32.mxu0 0.0
      %4337 = vmatmul.mubr.f32.gmra.mxu0 %v4265
      %v4338 = vpop.f32.mrf.mxu0
      %v4339 = vadd.f32 0.0, %v4338
      %v4340 = vpop.f32.mrf.mxu0
      %4341 = vdwg.mxu0
      %4342 = vrot.lane.b32.xlu0 %v1139, 120
      %v4343 = vpop.permute.xlu0 %4342
      %4344 = vrot.lane.b32.xlu0 %v1140, 120
      %v4345 = vpop.permute.xlu0 %4344
      %4346 = vrot.lane.b32.xlu0 %v1139, 104
      %v4347 = vpop.permute.xlu0 %4346
      %4348 = vrot.lane.b32.xlu0 %v1140, 104
      %v4349 = vpop.permute.xlu0 %4348
      %v4350 = vsel %vm1179, %v4343, 0
      %v4352 = vsel %vm1179, %v4345, 0
      %v4354 = vsel %vm1179, %v4347, 0
      %v4356 = vsel %vm1179, %v4349, 0
      %4358 = vmatprep.subr.mxu0 0.0
      %4359 = vmatpush1.xpose.msra.mxu0 0.0
      %4360 = vmatprep.subr.mxu0 0.0
      %4361 = vmatpush1.xpose.msra.mxu0 0.0
      %4362 = vmatprep.subr.mxu0 0.0
      %4363 = vmatpush1.xpose.msra.mxu0 0.0
      %4364 = vmatprep.subr.mxu0 0.0
      %4365 = vmatpush1.xpose.msra.mxu0 0.0
      %4366 = vmatprep.subr.mxu0 0.0
      %4367 = vmatpush1.xpose.msra.mxu0 0.0
      %4368 = vmatprep.subr.mxu0 0.0
      %4369 = vmatpush1.xpose.msra.mxu0 0.0
      %4370 = vmatprep.subr.mxu0 0.0
      %4371 = vmatpush1.xpose.msra.mxu0 0.0
      %4372 = vmatprep.subr.mxu0 0.0
      %4373 = vmatpush1.xpose.msra.mxu0 0.0
      %4374 = vmatprep.subr.mxu0 0.0
      %4375 = vmatpush1.xpose.msra.mxu0 0.0
      %4376 = vmatprep.subr.mxu0 0.0
      %4377 = vmatpush1.xpose.msra.mxu0 0.0
      %4378 = vmatprep.subr.mxu0 0.0
      %4379 = vmatpush1.xpose.msra.mxu0 0.0
      %4380 = vmatprep.subr.mxu0 0.0
      %4381 = vmatpush1.xpose.msra.mxu0 0.0
      %4382 = vmatprep.subr.mxu0 0.0
      %4383 = vmatpush1.xpose.msra.mxu0 0.0
      %4384 = vmatprep.subr.mxu0 0.0
      %4385 = vmatpush1.xpose.msra.mxu0 0.0
      %4386 = vmatprep.subr.mxu0 0.0
      %4387 = vmatpush1.xpose.msra.mxu0 %v4356
      %4388 = vmatprep.subr.mxu0 0.0
      %4389 = vmatpush1.xpose.msra.mxu0 %v4354
      %4390 = vmatprep.subr.mxu0 0.0
      %4391 = vmatpush2.xpose.msra.mxu0 0.0
      %4392 = vmatprep.subr.mxu0 0.0
      %4393 = vmatpush2.xpose.msra.mxu0 0.0
      %4394 = vmatprep.subr.mxu0 0.0
      %4395 = vmatpush2.xpose.msra.mxu0 0.0
      %4396 = vmatprep.subr.mxu0 0.0
      %4397 = vmatpush2.xpose.msra.mxu0 0.0
      %4398 = vmatprep.subr.mxu0 0.0
      %4399 = vmatpush2.xpose.msra.mxu0 0.0
      %4400 = vmatprep.subr.mxu0 0.0
      %4401 = vmatpush2.xpose.msra.mxu0 0.0
      %4402 = vmatprep.subr.mxu0 0.0
      %4403 = vmatpush2.xpose.msra.mxu0 0.0
      %4404 = vmatprep.subr.mxu0 0.0
      %4405 = vmatpush2.xpose.msra.mxu0 0.0
      %4406 = vmatprep.subr.mxu0 0.0
      %4407 = vmatpush2.xpose.msra.mxu0 0.0
      %4408 = vmatprep.subr.mxu0 0.0
      %4409 = vmatpush2.xpose.msra.mxu0 0.0
      %4410 = vmatprep.subr.mxu0 0.0
      %4411 = vmatpush2.xpose.msra.mxu0 0.0
      %4412 = vmatprep.subr.mxu0 0.0
      %4413 = vmatpush2.xpose.msra.mxu0 0.0
      %4414 = vmatprep.subr.mxu0 0.0
      %4415 = vmatpush2.xpose.msra.mxu0 0.0
      %4416 = vmatprep.subr.mxu0 0.0
      %4417 = vmatpush2.xpose.msra.mxu0 0.0
      %4418 = vmatprep.subr.mxu0 0.0
      %4419 = vmatpush2.xpose.msra.mxu0 0.0
      %4420 = vmatprep.subr.mxu0 0.0
      %4421 = vmatpush2.xpose.msra.mxu0 0.0
      %4422 = vmatprep.mubr.f32.mxu0 0.0
      %4423 = vmatmul.mubr.f32.gmra.mxu0 %v4350
      %v4424 = vpop.f32.mrf.mxu0
      %v4425 = vadd.f32 0.0, %v4424
      %v4426 = vpop.f32.mrf.mxu0
      %4427 = vmatprep.mubr.f32.mxu0 0.0
      %4428 = vmatmul.mubr.f32.gmra.mxu0 %v4352
      %v4429 = vpop.f32.mrf.mxu0
      %v4430 = vadd.f32 0.0, %v4429
      %v4431 = vpop.f32.mrf.mxu0
      %4432 = vdwg.mxu0
      %4433 = vrot.lane.b32.xlu0 %v1141, 120
      %v4434 = vpop.permute.xlu0 %4433
      %4435 = vrot.lane.b32.xlu0 %v1142, 120
      %v4436 = vpop.permute.xlu0 %4435
      %4437 = vrot.lane.b32.xlu0 %v1141, 104
      %v4438 = vpop.permute.xlu0 %4437
      %4439 = vrot.lane.b32.xlu0 %v1142, 104
      %v4440 = vpop.permute.xlu0 %4439
      %v4441 = vsel %vm1179, %v4434, 0
      %v4443 = vsel %vm1179, %v4436, 0
      %v4445 = vsel %vm1179, %v4438, 0
      %v4447 = vsel %vm1179, %v4440, 0
      %4449 = vmatprep.subr.mxu0 0.0
      %4450 = vmatpush1.xpose.msra.mxu0 0.0
      %4451 = vmatprep.subr.mxu0 0.0
      %4452 = vmatpush1.xpose.msra.mxu0 0.0
      %4453 = vmatprep.subr.mxu0 0.0
      %4454 = vmatpush1.xpose.msra.mxu0 0.0
      %4455 = vmatprep.subr.mxu0 0.0
      %4456 = vmatpush1.xpose.msra.mxu0 0.0
      %4457 = vmatprep.subr.mxu0 0.0
      %4458 = vmatpush1.xpose.msra.mxu0 0.0
      %4459 = vmatprep.subr.mxu0 0.0
      %4460 = vmatpush1.xpose.msra.mxu0 0.0
      %4461 = vmatprep.subr.mxu0 0.0
      %4462 = vmatpush1.xpose.msra.mxu0 0.0
      %4463 = vmatprep.subr.mxu0 0.0
      %4464 = vmatpush1.xpose.msra.mxu0 0.0
      %4465 = vmatprep.subr.mxu0 0.0
      %4466 = vmatpush1.xpose.msra.mxu0 0.0
      %4467 = vmatprep.subr.mxu0 0.0
      %4468 = vmatpush1.xpose.msra.mxu0 0.0
      %4469 = vmatprep.subr.mxu0 0.0
      %4470 = vmatpush1.xpose.msra.mxu0 0.0
      %4471 = vmatprep.subr.mxu0 0.0
      %4472 = vmatpush1.xpose.msra.mxu0 0.0
      %4473 = vmatprep.subr.mxu0 0.0
      %4474 = vmatpush1.xpose.msra.mxu0 0.0
      %4475 = vmatprep.subr.mxu0 0.0
      %4476 = vmatpush1.xpose.msra.mxu0 0.0
      %4477 = vmatprep.subr.mxu0 0.0
      %4478 = vmatpush1.xpose.msra.mxu0 %v4447
      %4479 = vmatprep.subr.mxu0 0.0
      %4480 = vmatpush1.xpose.msra.mxu0 %v4445
      %4481 = vmatprep.subr.mxu0 0.0
      %4482 = vmatpush2.xpose.msra.mxu0 0.0
      %4483 = vmatprep.subr.mxu0 0.0
      %4484 = vmatpush2.xpose.msra.mxu0 0.0
      %4485 = vmatprep.subr.mxu0 0.0
      %4486 = vmatpush2.xpose.msra.mxu0 0.0
      %4487 = vmatprep.subr.mxu0 0.0
      %4488 = vmatpush2.xpose.msra.mxu0 0.0
      %4489 = vmatprep.subr.mxu0 0.0
      %4490 = vmatpush2.xpose.msra.mxu0 0.0
      %4491 = vmatprep.subr.mxu0 0.0
      %4492 = vmatpush2.xpose.msra.mxu0 0.0
      %4493 = vmatprep.subr.mxu0 0.0
      %4494 = vmatpush2.xpose.msra.mxu0 0.0
      %4495 = vmatprep.subr.mxu0 0.0
      %4496 = vmatpush2.xpose.msra.mxu0 0.0
      %4497 = vmatprep.subr.mxu0 0.0
      %4498 = vmatpush2.xpose.msra.mxu0 0.0
      %4499 = vmatprep.subr.mxu0 0.0
      %4500 = vmatpush2.xpose.msra.mxu0 0.0
      %4501 = vmatprep.subr.mxu0 0.0
      %4502 = vmatpush2.xpose.msra.mxu0 0.0
      %4503 = vmatprep.subr.mxu0 0.0
      %4504 = vmatpush2.xpose.msra.mxu0 0.0
      %4505 = vmatprep.subr.mxu0 0.0
      %4506 = vmatpush2.xpose.msra.mxu0 0.0
      %4507 = vmatprep.subr.mxu0 0.0
      %4508 = vmatpush2.xpose.msra.mxu0 0.0
      %4509 = vmatprep.subr.mxu0 0.0
      %4510 = vmatpush2.xpose.msra.mxu0 0.0
      %4511 = vmatprep.subr.mxu0 0.0
      %4512 = vmatpush2.xpose.msra.mxu0 0.0
      %4513 = vmatprep.mubr.f32.mxu0 0.0
      %4514 = vmatmul.mubr.f32.gmra.mxu0 %v4441
      %v4515 = vpop.f32.mrf.mxu0
      %v4516 = vadd.f32 0.0, %v4515
      %v4517 = vpop.f32.mrf.mxu0
      %4518 = vmatprep.mubr.f32.mxu0 0.0
      %4519 = vmatmul.mubr.f32.gmra.mxu0 %v4443
      %v4520 = vpop.f32.mrf.mxu0
      %v4521 = vadd.f32 0.0, %v4520
      %v4522 = vpop.f32.mrf.mxu0
      %4523 = vdwg.mxu0
      %4524 = vrot.lane.b32.xlu0 %v1143, 120
      %v4525 = vpop.permute.xlu0 %4524
      %4526 = vrot.lane.b32.xlu0 %v1144, 120
      %v4527 = vpop.permute.xlu0 %4526
      %4528 = vrot.lane.b32.xlu0 %v1143, 104
      %v4529 = vpop.permute.xlu0 %4528
      %4530 = vrot.lane.b32.xlu0 %v1144, 104
      %v4531 = vpop.permute.xlu0 %4530
      %v4532 = vsel %vm1179, %v4525, 0
      %v4534 = vsel %vm1179, %v4527, 0
      %v4536 = vsel %vm1179, %v4529, 0
      %v4538 = vsel %vm1179, %v4531, 0
      %4540 = vmatprep.subr.mxu0 0.0
      %4541 = vmatpush1.xpose.msra.mxu0 0.0
      %4542 = vmatprep.subr.mxu0 0.0
      %4543 = vmatpush1.xpose.msra.mxu0 0.0
      %4544 = vmatprep.subr.mxu0 0.0
      %4545 = vmatpush1.xpose.msra.mxu0 0.0
      %4546 = vmatprep.subr.mxu0 0.0
      %4547 = vmatpush1.xpose.msra.mxu0 0.0
      %4548 = vmatprep.subr.mxu0 0.0
      %4549 = vmatpush1.xpose.msra.mxu0 0.0
      %4550 = vmatprep.subr.mxu0 0.0
      %4551 = vmatpush1.xpose.msra.mxu0 0.0
      %4552 = vmatprep.subr.mxu0 0.0
      %4553 = vmatpush1.xpose.msra.mxu0 0.0
      %4554 = vmatprep.subr.mxu0 0.0
      %4555 = vmatpush1.xpose.msra.mxu0 0.0
      %4556 = vmatprep.subr.mxu0 0.0
      %4557 = vmatpush1.xpose.msra.mxu0 0.0
      %4558 = vmatprep.subr.mxu0 0.0
      %4559 = vmatpush1.xpose.msra.mxu0 0.0
      %4560 = vmatprep.subr.mxu0 0.0
      %4561 = vmatpush1.xpose.msra.mxu0 0.0
      %4562 = vmatprep.subr.mxu0 0.0
      %4563 = vmatpush1.xpose.msra.mxu0 0.0
      %4564 = vmatprep.subr.mxu0 0.0
      %4565 = vmatpush1.xpose.msra.mxu0 0.0
      %4566 = vmatprep.subr.mxu0 0.0
      %4567 = vmatpush1.xpose.msra.mxu0 0.0
      %4568 = vmatprep.subr.mxu0 0.0
      %4569 = vmatpush1.xpose.msra.mxu0 %v4538
      %4570 = vmatprep.subr.mxu0 0.0
      %4571 = vmatpush1.xpose.msra.mxu0 %v4536
      %4572 = vmatprep.subr.mxu0 0.0
      %4573 = vmatpush2.xpose.msra.mxu0 0.0
      %4574 = vmatprep.subr.mxu0 0.0
      %4575 = vmatpush2.xpose.msra.mxu0 0.0
      %4576 = vmatprep.subr.mxu0 0.0
      %4577 = vmatpush2.xpose.msra.mxu0 0.0
      %4578 = vmatprep.subr.mxu0 0.0
      %4579 = vmatpush2.xpose.msra.mxu0 0.0
      %4580 = vmatprep.subr.mxu0 0.0
      %4581 = vmatpush2.xpose.msra.mxu0 0.0
      %4582 = vmatprep.subr.mxu0 0.0
      %4583 = vmatpush2.xpose.msra.mxu0 0.0
      %4584 = vmatprep.subr.mxu0 0.0
      %4585 = vmatpush2.xpose.msra.mxu0 0.0
      %4586 = vmatprep.subr.mxu0 0.0
      %4587 = vmatpush2.xpose.msra.mxu0 0.0
      %4588 = vmatprep.subr.mxu0 0.0
      %4589 = vmatpush2.xpose.msra.mxu0 0.0
      %4590 = vmatprep.subr.mxu0 0.0
      %4591 = vmatpush2.xpose.msra.mxu0 0.0
      %4592 = vmatprep.subr.mxu0 0.0
      %4593 = vmatpush2.xpose.msra.mxu0 0.0
      %4594 = vmatprep.subr.mxu0 0.0
      %4595 = vmatpush2.xpose.msra.mxu0 0.0
      %4596 = vmatprep.subr.mxu0 0.0
      %4597 = vmatpush2.xpose.msra.mxu0 0.0
      %4598 = vmatprep.subr.mxu0 0.0
      %4599 = vmatpush2.xpose.msra.mxu0 0.0
      %4600 = vmatprep.subr.mxu0 0.0
      %4601 = vmatpush2.xpose.msra.mxu0 0.0
      %4602 = vmatprep.subr.mxu0 0.0
      %4603 = vmatpush2.xpose.msra.mxu0 0.0
      %4604 = vmatprep.mubr.f32.mxu0 0.0
      %4605 = vmatmul.mubr.f32.gmra.mxu0 %v4532
      %v4606 = vpop.f32.mrf.mxu0
      %v4607 = vadd.f32 0.0, %v4606
      %v4608 = vpop.f32.mrf.mxu0
      %4609 = vmatprep.mubr.f32.mxu0 0.0
      %4610 = vmatmul.mubr.f32.gmra.mxu0 %v4534
      %v4611 = vpop.f32.mrf.mxu0
      %v4612 = vadd.f32 0.0, %v4611
      %v4613 = vpop.f32.mrf.mxu0
      %4614 = vdwg.mxu0
      %4615 = vrot.lane.b32.xlu0 %v1145, 120
      %v4616 = vpop.permute.xlu0 %4615
      %4617 = vrot.lane.b32.xlu0 %v1146, 120
      %v4618 = vpop.permute.xlu0 %4617
      %4619 = vrot.lane.b32.xlu0 %v1145, 104
      %v4620 = vpop.permute.xlu0 %4619
      %4621 = vrot.lane.b32.xlu0 %v1146, 104
      %v4622 = vpop.permute.xlu0 %4621
      %v4623 = vsel %vm1179, %v4616, 0
      %v4625 = vsel %vm1179, %v4618, 0
      %v4627 = vsel %vm1179, %v4620, 0
      %v4629 = vsel %vm1179, %v4622, 0
      %4631 = vmatprep.subr.mxu0 0.0
      %4632 = vmatpush1.xpose.msra.mxu0 0.0
      %4633 = vmatprep.subr.mxu0 0.0
      %4634 = vmatpush1.xpose.msra.mxu0 0.0
      %4635 = vmatprep.subr.mxu0 0.0
      %4636 = vmatpush1.xpose.msra.mxu0 0.0
      %4637 = vmatprep.subr.mxu0 0.0
      %4638 = vmatpush1.xpose.msra.mxu0 0.0
      %4639 = vmatprep.subr.mxu0 0.0
      %4640 = vmatpush1.xpose.msra.mxu0 0.0
      %4641 = vmatprep.subr.mxu0 0.0
      %4642 = vmatpush1.xpose.msra.mxu0 0.0
      %4643 = vmatprep.subr.mxu0 0.0
      %4644 = vmatpush1.xpose.msra.mxu0 0.0
      %4645 = vmatprep.subr.mxu0 0.0
      %4646 = vmatpush1.xpose.msra.mxu0 0.0
      %4647 = vmatprep.subr.mxu0 0.0
      %4648 = vmatpush1.xpose.msra.mxu0 0.0
      %4649 = vmatprep.subr.mxu0 0.0
      %4650 = vmatpush1.xpose.msra.mxu0 0.0
      %4651 = vmatprep.subr.mxu0 0.0
      %4652 = vmatpush1.xpose.msra.mxu0 0.0
      %4653 = vmatprep.subr.mxu0 0.0
      %4654 = vmatpush1.xpose.msra.mxu0 0.0
      %4655 = vmatprep.subr.mxu0 0.0
      %4656 = vmatpush1.xpose.msra.mxu0 0.0
      %4657 = vmatprep.subr.mxu0 0.0
      %4658 = vmatpush1.xpose.msra.mxu0 0.0
      %4659 = vmatprep.subr.mxu0 0.0
      %4660 = vmatpush1.xpose.msra.mxu0 %v4629
      %4661 = vmatprep.subr.mxu0 0.0
      %4662 = vmatpush1.xpose.msra.mxu0 %v4627
      %4663 = vmatprep.subr.mxu0 0.0
      %4664 = vmatpush2.xpose.msra.mxu0 0.0
      %4665 = vmatprep.subr.mxu0 0.0
      %4666 = vmatpush2.xpose.msra.mxu0 0.0
      %4667 = vmatprep.subr.mxu0 0.0
      %4668 = vmatpush2.xpose.msra.mxu0 0.0
      %4669 = vmatprep.subr.mxu0 0.0
      %4670 = vmatpush2.xpose.msra.mxu0 0.0
      %4671 = vmatprep.subr.mxu0 0.0
      %4672 = vmatpush2.xpose.msra.mxu0 0.0
      %4673 = vmatprep.subr.mxu0 0.0
      %4674 = vmatpush2.xpose.msra.mxu0 0.0
      %4675 = vmatprep.subr.mxu0 0.0
      %4676 = vmatpush2.xpose.msra.mxu0 0.0
      %4677 = vmatprep.subr.mxu0 0.0
      %4678 = vmatpush2.xpose.msra.mxu0 0.0
      %4679 = vmatprep.subr.mxu0 0.0
      %4680 = vmatpush2.xpose.msra.mxu0 0.0
      %4681 = vmatprep.subr.mxu0 0.0
      %4682 = vmatpush2.xpose.msra.mxu0 0.0
      %4683 = vmatprep.subr.mxu0 0.0
      %4684 = vmatpush2.xpose.msra.mxu0 0.0
      %4685 = vmatprep.subr.mxu0 0.0
      %4686 = vmatpush2.xpose.msra.mxu0 0.0
      %4687 = vmatprep.subr.mxu0 0.0
      %4688 = vmatpush2.xpose.msra.mxu0 0.0
      %4689 = vmatprep.subr.mxu0 0.0
      %4690 = vmatpush2.xpose.msra.mxu0 0.0
      %4691 = vmatprep.subr.mxu0 0.0
      %4692 = vmatpush2.xpose.msra.mxu0 0.0
      %4693 = vmatprep.subr.mxu0 0.0
      %4694 = vmatpush2.xpose.msra.mxu0 0.0
      %4695 = vmatprep.mubr.f32.mxu0 0.0
      %4696 = vmatmul.mubr.f32.gmra.mxu0 %v4623
      %v4697 = vpop.f32.mrf.mxu0
      %v4698 = vadd.f32 0.0, %v4697
      %v4699 = vpop.f32.mrf.mxu0
      %4700 = vmatprep.mubr.f32.mxu0 0.0
      %4701 = vmatmul.mubr.f32.gmra.mxu0 %v4625
      %v4702 = vpop.f32.mrf.mxu0
      %v4703 = vadd.f32 0.0, %v4702
      %v4704 = vpop.f32.mrf.mxu0
      %4705 = vdwg.mxu0
      %4706 = vrot.lane.b32.xlu0 %v1147, 120
      %v4707 = vpop.permute.xlu0 %4706
      %4708 = vrot.lane.b32.xlu0 %v1148, 120
      %v4709 = vpop.permute.xlu0 %4708
      %4710 = vrot.lane.b32.xlu0 %v1147, 104
      %v4711 = vpop.permute.xlu0 %4710
      %4712 = vrot.lane.b32.xlu0 %v1148, 104
      %v4713 = vpop.permute.xlu0 %4712
      %v4714 = vsel %vm1179, %v4707, 0
      %v4716 = vsel %vm1179, %v4709, 0
      %v4718 = vsel %vm1179, %v4711, 0
      %v4720 = vsel %vm1179, %v4713, 0
      %4722 = vmatprep.subr.mxu0 0.0
      %4723 = vmatpush1.xpose.msra.mxu0 0.0
      %4724 = vmatprep.subr.mxu0 0.0
      %4725 = vmatpush1.xpose.msra.mxu0 0.0
      %4726 = vmatprep.subr.mxu0 0.0
      %4727 = vmatpush1.xpose.msra.mxu0 0.0
      %4728 = vmatprep.subr.mxu0 0.0
      %4729 = vmatpush1.xpose.msra.mxu0 0.0
      %4730 = vmatprep.subr.mxu0 0.0
      %4731 = vmatpush1.xpose.msra.mxu0 0.0
      %4732 = vmatprep.subr.mxu0 0.0
      %4733 = vmatpush1.xpose.msra.mxu0 0.0
      %4734 = vmatprep.subr.mxu0 0.0
      %4735 = vmatpush1.xpose.msra.mxu0 0.0
      %4736 = vmatprep.subr.mxu0 0.0
      %4737 = vmatpush1.xpose.msra.mxu0 0.0
      %4738 = vmatprep.subr.mxu0 0.0
      %4739 = vmatpush1.xpose.msra.mxu0 0.0
      %4740 = vmatprep.subr.mxu0 0.0
      %4741 = vmatpush1.xpose.msra.mxu0 0.0
      %4742 = vmatprep.subr.mxu0 0.0
      %4743 = vmatpush1.xpose.msra.mxu0 0.0
      %4744 = vmatprep.subr.mxu0 0.0
      %4745 = vmatpush1.xpose.msra.mxu0 0.0
      %4746 = vmatprep.subr.mxu0 0.0
      %4747 = vmatpush1.xpose.msra.mxu0 0.0
      %4748 = vmatprep.subr.mxu0 0.0
      %4749 = vmatpush1.xpose.msra.mxu0 0.0
      %4750 = vmatprep.subr.mxu0 0.0
      %4751 = vmatpush1.xpose.msra.mxu0 %v4720
      %4752 = vmatprep.subr.mxu0 0.0
      %4753 = vmatpush1.xpose.msra.mxu0 %v4718
      %4754 = vmatprep.subr.mxu0 0.0
      %4755 = vmatpush2.xpose.msra.mxu0 0.0
      %4756 = vmatprep.subr.mxu0 0.0
      %4757 = vmatpush2.xpose.msra.mxu0 0.0
      %4758 = vmatprep.subr.mxu0 0.0
      %4759 = vmatpush2.xpose.msra.mxu0 0.0
      %4760 = vmatprep.subr.mxu0 0.0
      %4761 = vmatpush2.xpose.msra.mxu0 0.0
      %4762 = vmatprep.subr.mxu0 0.0
      %4763 = vmatpush2.xpose.msra.mxu0 0.0
      %4764 = vmatprep.subr.mxu0 0.0
      %4765 = vmatpush2.xpose.msra.mxu0 0.0
      %4766 = vmatprep.subr.mxu0 0.0
      %4767 = vmatpush2.xpose.msra.mxu0 0.0
      %4768 = vmatprep.subr.mxu0 0.0
      %4769 = vmatpush2.xpose.msra.mxu0 0.0
      %4770 = vmatprep.subr.mxu0 0.0
      %4771 = vmatpush2.xpose.msra.mxu0 0.0
      %4772 = vmatprep.subr.mxu0 0.0
      %4773 = vmatpush2.xpose.msra.mxu0 0.0
      %4774 = vmatprep.subr.mxu0 0.0
      %4775 = vmatpush2.xpose.msra.mxu0 0.0
      %4776 = vmatprep.subr.mxu0 0.0
      %4777 = vmatpush2.xpose.msra.mxu0 0.0
      %4778 = vmatprep.subr.mxu0 0.0
      %4779 = vmatpush2.xpose.msra.mxu0 0.0
      %4780 = vmatprep.subr.mxu0 0.0
      %4781 = vmatpush2.xpose.msra.mxu0 0.0
      %4782 = vmatprep.subr.mxu0 0.0
      %4783 = vmatpush2.xpose.msra.mxu0 0.0
      %4784 = vmatprep.subr.mxu0 0.0
      %4785 = vmatpush2.xpose.msra.mxu0 0.0
      %4786 = vmatprep.mubr.f32.mxu0 0.0
      %4787 = vmatmul.mubr.f32.gmra.mxu0 %v4714
      %v4788 = vpop.f32.mrf.mxu0
      %v4789 = vadd.f32 0.0, %v4788
      %v4790 = vpop.f32.mrf.mxu0
      %4791 = vmatprep.mubr.f32.mxu0 0.0
      %4792 = vmatmul.mubr.f32.gmra.mxu0 %v4716
      %v4793 = vpop.f32.mrf.mxu0
      %v4794 = vadd.f32 0.0, %v4793
      %v4795 = vpop.f32.mrf.mxu0
      %4796 = vdwg.mxu0
      %4797 = vrot.lane.b32.xlu0 %v1149, 120
      %v4798 = vpop.permute.xlu0 %4797
      %4799 = vrot.lane.b32.xlu0 %v1150, 120
      %v4800 = vpop.permute.xlu0 %4799
      %4801 = vrot.lane.b32.xlu0 %v1149, 104
      %v4802 = vpop.permute.xlu0 %4801
      %4803 = vrot.lane.b32.xlu0 %v1150, 104
      %v4804 = vpop.permute.xlu0 %4803
      %v4805 = vsel %vm1179, %v4798, 0
      %v4807 = vsel %vm1179, %v4800, 0
      %v4809 = vsel %vm1179, %v4802, 0
      %v4811 = vsel %vm1179, %v4804, 0
      %4813 = vmatprep.subr.mxu0 0.0
      %4814 = vmatpush1.xpose.msra.mxu0 0.0
      %4815 = vmatprep.subr.mxu0 0.0
      %4816 = vmatpush1.xpose.msra.mxu0 0.0
      %4817 = vmatprep.subr.mxu0 0.0
      %4818 = vmatpush1.xpose.msra.mxu0 0.0
      %4819 = vmatprep.subr.mxu0 0.0
      %4820 = vmatpush1.xpose.msra.mxu0 0.0
      %4821 = vmatprep.subr.mxu0 0.0
      %4822 = vmatpush1.xpose.msra.mxu0 0.0
      %4823 = vmatprep.subr.mxu0 0.0
      %4824 = vmatpush1.xpose.msra.mxu0 0.0
      %4825 = vmatprep.subr.mxu0 0.0
      %4826 = vmatpush1.xpose.msra.mxu0 0.0
      %4827 = vmatprep.subr.mxu0 0.0
      %4828 = vmatpush1.xpose.msra.mxu0 0.0
      %4829 = vmatprep.subr.mxu0 0.0
      %4830 = vmatpush1.xpose.msra.mxu0 0.0
      %4831 = vmatprep.subr.mxu0 0.0
      %4832 = vmatpush1.xpose.msra.mxu0 0.0
      %4833 = vmatprep.subr.mxu0 0.0
      %4834 = vmatpush1.xpose.msra.mxu0 0.0
      %4835 = vmatprep.subr.mxu0 0.0
      %4836 = vmatpush1.xpose.msra.mxu0 0.0
      %4837 = vmatprep.subr.mxu0 0.0
      %4838 = vmatpush1.xpose.msra.mxu0 0.0
      %4839 = vmatprep.subr.mxu0 0.0
      %4840 = vmatpush1.xpose.msra.mxu0 0.0
      %4841 = vmatprep.subr.mxu0 0.0
      %4842 = vmatpush1.xpose.msra.mxu0 %v4811
      %4843 = vmatprep.subr.mxu0 0.0
      %4844 = vmatpush1.xpose.msra.mxu0 %v4809
      %4845 = vmatprep.subr.mxu0 0.0
      %4846 = vmatpush2.xpose.msra.mxu0 0.0
      %4847 = vmatprep.subr.mxu0 0.0
      %4848 = vmatpush2.xpose.msra.mxu0 0.0
      %4849 = vmatprep.subr.mxu0 0.0
      %4850 = vmatpush2.xpose.msra.mxu0 0.0
      %4851 = vmatprep.subr.mxu0 0.0
      %4852 = vmatpush2.xpose.msra.mxu0 0.0
      %4853 = vmatprep.subr.mxu0 0.0
      %4854 = vmatpush2.xpose.msra.mxu0 0.0
      %4855 = vmatprep.subr.mxu0 0.0
      %4856 = vmatpush2.xpose.msra.mxu0 0.0
      %4857 = vmatprep.subr.mxu0 0.0
      %4858 = vmatpush2.xpose.msra.mxu0 0.0
      %4859 = vmatprep.subr.mxu0 0.0
      %4860 = vmatpush2.xpose.msra.mxu0 0.0
      %4861 = vmatprep.subr.mxu0 0.0
      %4862 = vmatpush2.xpose.msra.mxu0 0.0
      %4863 = vmatprep.subr.mxu0 0.0
      %4864 = vmatpush2.xpose.msra.mxu0 0.0
      %4865 = vmatprep.subr.mxu0 0.0
      %4866 = vmatpush2.xpose.msra.mxu0 0.0
      %4867 = vmatprep.subr.mxu0 0.0
      %4868 = vmatpush2.xpose.msra.mxu0 0.0
      %4869 = vmatprep.subr.mxu0 0.0
      %4870 = vmatpush2.xpose.msra.mxu0 0.0
      %4871 = vmatprep.subr.mxu0 0.0
      %4872 = vmatpush2.xpose.msra.mxu0 0.0
      %4873 = vmatprep.subr.mxu0 0.0
      %4874 = vmatpush2.xpose.msra.mxu0 0.0
      %4875 = vmatprep.subr.mxu0 0.0
      %4876 = vmatpush2.xpose.msra.mxu0 0.0
      %4877 = vmatprep.mubr.f32.mxu0 0.0
      %4878 = vmatmul.mubr.f32.gmra.mxu0 %v4805
      %v4879 = vpop.f32.mrf.mxu0
      %v4880 = vadd.f32 0.0, %v4879
      %v4881 = vpop.f32.mrf.mxu0
      %4882 = vmatprep.mubr.f32.mxu0 0.0
      %4883 = vmatmul.mubr.f32.gmra.mxu0 %v4807
      %v4884 = vpop.f32.mrf.mxu0
      %v4885 = vadd.f32 0.0, %v4884
      %v4886 = vpop.f32.mrf.mxu0
      %4887 = vdwg.mxu0
      %4888 = vrot.lane.b32.xlu0 %v1151, 120
      %v4889 = vpop.permute.xlu0 %4888
      %4890 = vrot.lane.b32.xlu0 %v1152, 120
      %v4891 = vpop.permute.xlu0 %4890
      %4892 = vrot.lane.b32.xlu0 %v1151, 104
      %v4893 = vpop.permute.xlu0 %4892
      %4894 = vrot.lane.b32.xlu0 %v1152, 104
      %v4895 = vpop.permute.xlu0 %4894
      %v4896 = vsel %vm1179, %v4889, 0
      %v4898 = vsel %vm1179, %v4891, 0
      %v4900 = vsel %vm1179, %v4893, 0
      %v4902 = vsel %vm1179, %v4895, 0
      %4904 = vmatprep.subr.mxu0 0.0
      %4905 = vmatpush1.xpose.msra.mxu0 0.0
      %4906 = vmatprep.subr.mxu0 0.0
      %4907 = vmatpush1.xpose.msra.mxu0 0.0
      %4908 = vmatprep.subr.mxu0 0.0
      %4909 = vmatpush1.xpose.msra.mxu0 0.0
      %4910 = vmatprep.subr.mxu0 0.0
      %4911 = vmatpush1.xpose.msra.mxu0 0.0
      %4912 = vmatprep.subr.mxu0 0.0
      %4913 = vmatpush1.xpose.msra.mxu0 0.0
      %4914 = vmatprep.subr.mxu0 0.0
      %4915 = vmatpush1.xpose.msra.mxu0 0.0
      %4916 = vmatprep.subr.mxu0 0.0
      %4917 = vmatpush1.xpose.msra.mxu0 0.0
      %4918 = vmatprep.subr.mxu0 0.0
      %4919 = vmatpush1.xpose.msra.mxu0 0.0
      %4920 = vmatprep.subr.mxu0 0.0
      %4921 = vmatpush1.xpose.msra.mxu0 0.0
      %4922 = vmatprep.subr.mxu0 0.0
      %4923 = vmatpush1.xpose.msra.mxu0 0.0
      %4924 = vmatprep.subr.mxu0 0.0
      %4925 = vmatpush1.xpose.msra.mxu0 0.0
      %4926 = vmatprep.subr.mxu0 0.0
      %4927 = vmatpush1.xpose.msra.mxu0 0.0
      %4928 = vmatprep.subr.mxu0 0.0
      %4929 = vmatpush1.xpose.msra.mxu0 0.0
      %4930 = vmatprep.subr.mxu0 0.0
      %4931 = vmatpush1.xpose.msra.mxu0 0.0
      %4932 = vmatprep.subr.mxu0 0.0
      %4933 = vmatpush1.xpose.msra.mxu0 %v4902
      %4934 = vmatprep.subr.mxu0 0.0
      %4935 = vmatpush1.xpose.msra.mxu0 %v4900
      %4936 = vmatprep.subr.mxu0 0.0
      %4937 = vmatpush2.xpose.msra.mxu0 0.0
      %4938 = vmatprep.subr.mxu0 0.0
      %4939 = vmatpush2.xpose.msra.mxu0 0.0
      %4940 = vmatprep.subr.mxu0 0.0
      %4941 = vmatpush2.xpose.msra.mxu0 0.0
      %4942 = vmatprep.subr.mxu0 0.0
      %4943 = vmatpush2.xpose.msra.mxu0 0.0
      %4944 = vmatprep.subr.mxu0 0.0
      %4945 = vmatpush2.xpose.msra.mxu0 0.0
      %4946 = vmatprep.subr.mxu0 0.0
      %4947 = vmatpush2.xpose.msra.mxu0 0.0
      %4948 = vmatprep.subr.mxu0 0.0
      %4949 = vmatpush2.xpose.msra.mxu0 0.0
      %4950 = vmatprep.subr.mxu0 0.0
      %4951 = vmatpush2.xpose.msra.mxu0 0.0
      %4952 = vmatprep.subr.mxu0 0.0
      %4953 = vmatpush2.xpose.msra.mxu0 0.0
      %4954 = vmatprep.subr.mxu0 0.0
      %4955 = vmatpush2.xpose.msra.mxu0 0.0
      %4956 = vmatprep.subr.mxu0 0.0
      %4957 = vmatpush2.xpose.msra.mxu0 0.0
      %4958 = vmatprep.subr.mxu0 0.0
      %4959 = vmatpush2.xpose.msra.mxu0 0.0
      %4960 = vmatprep.subr.mxu0 0.0
      %4961 = vmatpush2.xpose.msra.mxu0 0.0
      %4962 = vmatprep.subr.mxu0 0.0
      %4963 = vmatpush2.xpose.msra.mxu0 0.0
      %4964 = vmatprep.subr.mxu0 0.0
      %4965 = vmatpush2.xpose.msra.mxu0 0.0
      %4966 = vmatprep.subr.mxu0 0.0
      %4967 = vmatpush2.xpose.msra.mxu0 0.0
      %4968 = vmatprep.mubr.f32.mxu0 0.0
      %4969 = vmatmul.mubr.f32.gmra.mxu0 %v4896
      %v4970 = vpop.f32.mrf.mxu0
      %v4971 = vadd.f32 0.0, %v4970
      %v4972 = vpop.f32.mrf.mxu0
      %4973 = vmatprep.mubr.f32.mxu0 0.0
      %4974 = vmatmul.mubr.f32.gmra.mxu0 %v4898
      %v4975 = vpop.f32.mrf.mxu0
      %v4976 = vadd.f32 0.0, %v4975
      %v4977 = vpop.f32.mrf.mxu0
      %4978 = vdwg.mxu0
      %4979 = vrot.lane.b32.xlu0 %v1153, 120
      %v4980 = vpop.permute.xlu0 %4979
      %4981 = vrot.lane.b32.xlu0 %v1154, 120
      %v4982 = vpop.permute.xlu0 %4981
      %4983 = vrot.lane.b32.xlu0 %v1153, 104
      %v4984 = vpop.permute.xlu0 %4983
      %4985 = vrot.lane.b32.xlu0 %v1154, 104
      %v4986 = vpop.permute.xlu0 %4985
      %v4987 = vsel %vm1179, %v4980, 0
      %v4989 = vsel %vm1179, %v4982, 0
      %v4991 = vsel %vm1179, %v4984, 0
      %v4993 = vsel %vm1179, %v4986, 0
      %4995 = vmatprep.subr.mxu0 0.0
      %4996 = vmatpush1.xpose.msra.mxu0 0.0
      %4997 = vmatprep.subr.mxu0 0.0
      %4998 = vmatpush1.xpose.msra.mxu0 0.0
      %4999 = vmatprep.subr.mxu0 0.0
      %5000 = vmatpush1.xpose.msra.mxu0 0.0
      %5001 = vmatprep.subr.mxu0 0.0
      %5002 = vmatpush1.xpose.msra.mxu0 0.0
      %5003 = vmatprep.subr.mxu0 0.0
      %5004 = vmatpush1.xpose.msra.mxu0 0.0
      %5005 = vmatprep.subr.mxu0 0.0
      %5006 = vmatpush1.xpose.msra.mxu0 0.0
      %5007 = vmatprep.subr.mxu0 0.0
      %5008 = vmatpush1.xpose.msra.mxu0 0.0
      %5009 = vmatprep.subr.mxu0 0.0
      %5010 = vmatpush1.xpose.msra.mxu0 0.0
      %5011 = vmatprep.subr.mxu0 0.0
      %5012 = vmatpush1.xpose.msra.mxu0 0.0
      %5013 = vmatprep.subr.mxu0 0.0
      %5014 = vmatpush1.xpose.msra.mxu0 0.0
      %5015 = vmatprep.subr.mxu0 0.0
      %5016 = vmatpush1.xpose.msra.mxu0 0.0
      %5017 = vmatprep.subr.mxu0 0.0
      %5018 = vmatpush1.xpose.msra.mxu0 0.0
      %5019 = vmatprep.subr.mxu0 0.0
      %5020 = vmatpush1.xpose.msra.mxu0 0.0
      %5021 = vmatprep.subr.mxu0 0.0
      %5022 = vmatpush1.xpose.msra.mxu0 0.0
      %5023 = vmatprep.subr.mxu0 0.0
      %5024 = vmatpush1.xpose.msra.mxu0 %v4993
      %5025 = vmatprep.subr.mxu0 0.0
      %5026 = vmatpush1.xpose.msra.mxu0 %v4991
      %5027 = vmatprep.subr.mxu0 0.0
      %5028 = vmatpush2.xpose.msra.mxu0 0.0
      %5029 = vmatprep.subr.mxu0 0.0
      %5030 = vmatpush2.xpose.msra.mxu0 0.0
      %5031 = vmatprep.subr.mxu0 0.0
      %5032 = vmatpush2.xpose.msra.mxu0 0.0
      %5033 = vmatprep.subr.mxu0 0.0
      %5034 = vmatpush2.xpose.msra.mxu0 0.0
      %5035 = vmatprep.subr.mxu0 0.0
      %5036 = vmatpush2.xpose.msra.mxu0 0.0
      %5037 = vmatprep.subr.mxu0 0.0
      %5038 = vmatpush2.xpose.msra.mxu0 0.0
      %5039 = vmatprep.subr.mxu0 0.0
      %5040 = vmatpush2.xpose.msra.mxu0 0.0
      %5041 = vmatprep.subr.mxu0 0.0
      %5042 = vmatpush2.xpose.msra.mxu0 0.0
      %5043 = vmatprep.subr.mxu0 0.0
      %5044 = vmatpush2.xpose.msra.mxu0 0.0
      %5045 = vmatprep.subr.mxu0 0.0
      %5046 = vmatpush2.xpose.msra.mxu0 0.0
      %5047 = vmatprep.subr.mxu0 0.0
      %5048 = vmatpush2.xpose.msra.mxu0 0.0
      %5049 = vmatprep.subr.mxu0 0.0
      %5050 = vmatpush2.xpose.msra.mxu0 0.0
      %5051 = vmatprep.subr.mxu0 0.0
      %5052 = vmatpush2.xpose.msra.mxu0 0.0
      %5053 = vmatprep.subr.mxu0 0.0
      %5054 = vmatpush2.xpose.msra.mxu0 0.0
      %5055 = vmatprep.subr.mxu0 0.0
      %5056 = vmatpush2.xpose.msra.mxu0 0.0
      %5057 = vmatprep.subr.mxu0 0.0
      %5058 = vmatpush2.xpose.msra.mxu0 0.0
      %5059 = vmatprep.mubr.f32.mxu0 0.0
      %5060 = vmatmul.mubr.f32.gmra.mxu0 %v4987
      %v5061 = vpop.f32.mrf.mxu0
      %v5062 = vadd.f32 0.0, %v5061
      %v5063 = vpop.f32.mrf.mxu0
      %5064 = vmatprep.mubr.f32.mxu0 0.0
      %5065 = vmatmul.mubr.f32.gmra.mxu0 %v4989
      %v5066 = vpop.f32.mrf.mxu0
      %v5067 = vadd.f32 0.0, %v5066
      %v5068 = vpop.f32.mrf.mxu0
      %5069 = vdwg.mxu0
      %5070 = vrot.lane.b32.xlu0 %v1155, 120
      %v5071 = vpop.permute.xlu0 %5070
      %5072 = vrot.lane.b32.xlu0 %v1156, 120
      %v5073 = vpop.permute.xlu0 %5072
      %5074 = vrot.lane.b32.xlu0 %v1155, 104
      %v5075 = vpop.permute.xlu0 %5074
      %5076 = vrot.lane.b32.xlu0 %v1156, 104
      %v5077 = vpop.permute.xlu0 %5076
      %v5078 = vsel %vm1179, %v5071, 0
      %v5080 = vsel %vm1179, %v5073, 0
      %v5082 = vsel %vm1179, %v5075, 0
      %v5084 = vsel %vm1179, %v5077, 0
      %5086 = vmatprep.subr.mxu0 0.0
      %5087 = vmatpush1.xpose.msra.mxu0 0.0
      %5088 = vmatprep.subr.mxu0 0.0
      %5089 = vmatpush1.xpose.msra.mxu0 0.0
      %5090 = vmatprep.subr.mxu0 0.0
      %5091 = vmatpush1.xpose.msra.mxu0 0.0
      %5092 = vmatprep.subr.mxu0 0.0
      %5093 = vmatpush1.xpose.msra.mxu0 0.0
      %5094 = vmatprep.subr.mxu0 0.0
      %5095 = vmatpush1.xpose.msra.mxu0 0.0
      %5096 = vmatprep.subr.mxu0 0.0
      %5097 = vmatpush1.xpose.msra.mxu0 0.0
      %5098 = vmatprep.subr.mxu0 0.0
      %5099 = vmatpush1.xpose.msra.mxu0 0.0
      %5100 = vmatprep.subr.mxu0 0.0
      %5101 = vmatpush1.xpose.msra.mxu0 0.0
      %5102 = vmatprep.subr.mxu0 0.0
      %5103 = vmatpush1.xpose.msra.mxu0 0.0
      %5104 = vmatprep.subr.mxu0 0.0
      %5105 = vmatpush1.xpose.msra.mxu0 0.0
      %5106 = vmatprep.subr.mxu0 0.0
      %5107 = vmatpush1.xpose.msra.mxu0 0.0
      %5108 = vmatprep.subr.mxu0 0.0
      %5109 = vmatpush1.xpose.msra.mxu0 0.0
      %5110 = vmatprep.subr.mxu0 0.0
      %5111 = vmatpush1.xpose.msra.mxu0 0.0
      %5112 = vmatprep.subr.mxu0 0.0
      %5113 = vmatpush1.xpose.msra.mxu0 0.0
      %5114 = vmatprep.subr.mxu0 0.0
      %5115 = vmatpush1.xpose.msra.mxu0 %v5084
      %5116 = vmatprep.subr.mxu0 0.0
      %5117 = vmatpush1.xpose.msra.mxu0 %v5082
      %5118 = vmatprep.subr.mxu0 0.0
      %5119 = vmatpush2.xpose.msra.mxu0 0.0
      %5120 = vmatprep.subr.mxu0 0.0
      %5121 = vmatpush2.xpose.msra.mxu0 0.0
      %5122 = vmatprep.subr.mxu0 0.0
      %5123 = vmatpush2.xpose.msra.mxu0 0.0
      %5124 = vmatprep.subr.mxu0 0.0
      %5125 = vmatpush2.xpose.msra.mxu0 0.0
      %5126 = vmatprep.subr.mxu0 0.0
      %5127 = vmatpush2.xpose.msra.mxu0 0.0
      %5128 = vmatprep.subr.mxu0 0.0
      %5129 = vmatpush2.xpose.msra.mxu0 0.0
      %5130 = vmatprep.subr.mxu0 0.0
      %5131 = vmatpush2.xpose.msra.mxu0 0.0
      %5132 = vmatprep.subr.mxu0 0.0
      %5133 = vmatpush2.xpose.msra.mxu0 0.0
      %5134 = vmatprep.subr.mxu0 0.0
      %5135 = vmatpush2.xpose.msra.mxu0 0.0
      %5136 = vmatprep.subr.mxu0 0.0
      %5137 = vmatpush2.xpose.msra.mxu0 0.0
      %5138 = vmatprep.subr.mxu0 0.0
      %5139 = vmatpush2.xpose.msra.mxu0 0.0
      %5140 = vmatprep.subr.mxu0 0.0
      %5141 = vmatpush2.xpose.msra.mxu0 0.0
      %5142 = vmatprep.subr.mxu0 0.0
      %5143 = vmatpush2.xpose.msra.mxu0 0.0
      %5144 = vmatprep.subr.mxu0 0.0
      %5145 = vmatpush2.xpose.msra.mxu0 0.0
      %5146 = vmatprep.subr.mxu0 0.0
      %5147 = vmatpush2.xpose.msra.mxu0 0.0
      %5148 = vmatprep.subr.mxu0 0.0
      %5149 = vmatpush2.xpose.msra.mxu0 0.0
      %5150 = vmatprep.mubr.f32.mxu0 0.0
      %5151 = vmatmul.mubr.f32.gmra.mxu0 %v5078
      %v5152 = vpop.f32.mrf.mxu0
      %v5153 = vadd.f32 0.0, %v5152
      %v5154 = vpop.f32.mrf.mxu0
      %5155 = vmatprep.mubr.f32.mxu0 0.0
      %5156 = vmatmul.mubr.f32.gmra.mxu0 %v5080
      %v5157 = vpop.f32.mrf.mxu0
      %v5158 = vadd.f32 0.0, %v5157
      %v5159 = vpop.f32.mrf.mxu0
      %5160 = vdwg.mxu0
      %5161 = vrot.lane.b32.xlu0 %v1157, 120
      %v5162 = vpop.permute.xlu0 %5161
      %5163 = vrot.lane.b32.xlu0 %v1158, 120
      %v5164 = vpop.permute.xlu0 %5163
      %5165 = vrot.lane.b32.xlu0 %v1157, 104
      %v5166 = vpop.permute.xlu0 %5165
      %5167 = vrot.lane.b32.xlu0 %v1158, 104
      %v5168 = vpop.permute.xlu0 %5167
      %v5169 = vsel %vm1179, %v5162, 0
      %v5171 = vsel %vm1179, %v5164, 0
      %v5173 = vsel %vm1179, %v5166, 0
      %v5175 = vsel %vm1179, %v5168, 0
      %5177 = vmatprep.subr.mxu0 0.0
      %5178 = vmatpush1.xpose.msra.mxu0 0.0
      %5179 = vmatprep.subr.mxu0 0.0
      %5180 = vmatpush1.xpose.msra.mxu0 0.0
      %5181 = vmatprep.subr.mxu0 0.0
      %5182 = vmatpush1.xpose.msra.mxu0 0.0
      %5183 = vmatprep.subr.mxu0 0.0
      %5184 = vmatpush1.xpose.msra.mxu0 0.0
      %5185 = vmatprep.subr.mxu0 0.0
      %5186 = vmatpush1.xpose.msra.mxu0 0.0
      %5187 = vmatprep.subr.mxu0 0.0
      %5188 = vmatpush1.xpose.msra.mxu0 0.0
      %5189 = vmatprep.subr.mxu0 0.0
      %5190 = vmatpush1.xpose.msra.mxu0 0.0
      %5191 = vmatprep.subr.mxu0 0.0
      %5192 = vmatpush1.xpose.msra.mxu0 0.0
      %5193 = vmatprep.subr.mxu0 0.0
      %5194 = vmatpush1.xpose.msra.mxu0 0.0
      %5195 = vmatprep.subr.mxu0 0.0
      %5196 = vmatpush1.xpose.msra.mxu0 0.0
      %5197 = vmatprep.subr.mxu0 0.0
      %5198 = vmatpush1.xpose.msra.mxu0 0.0
      %5199 = vmatprep.subr.mxu0 0.0
      %5200 = vmatpush1.xpose.msra.mxu0 0.0
      %5201 = vmatprep.subr.mxu0 0.0
      %5202 = vmatpush1.xpose.msra.mxu0 0.0
      %5203 = vmatprep.subr.mxu0 0.0
      %5204 = vmatpush1.xpose.msra.mxu0 0.0
      %5205 = vmatprep.subr.mxu0 0.0
      %5206 = vmatpush1.xpose.msra.mxu0 %v5175
      %5207 = vmatprep.subr.mxu0 0.0
      %5208 = vmatpush1.xpose.msra.mxu0 %v5173
      %5209 = vmatprep.subr.mxu0 0.0
      %5210 = vmatpush2.xpose.msra.mxu0 0.0
      %5211 = vmatprep.subr.mxu0 0.0
      %5212 = vmatpush2.xpose.msra.mxu0 0.0
      %5213 = vmatprep.subr.mxu0 0.0
      %5214 = vmatpush2.xpose.msra.mxu0 0.0
      %5215 = vmatprep.subr.mxu0 0.0
      %5216 = vmatpush2.xpose.msra.mxu0 0.0
      %5217 = vmatprep.subr.mxu0 0.0
      %5218 = vmatpush2.xpose.msra.mxu0 0.0
      %5219 = vmatprep.subr.mxu0 0.0
      %5220 = vmatpush2.xpose.msra.mxu0 0.0
      %5221 = vmatprep.subr.mxu0 0.0
      %5222 = vmatpush2.xpose.msra.mxu0 0.0
      %5223 = vmatprep.subr.mxu0 0.0
      %5224 = vmatpush2.xpose.msra.mxu0 0.0
      %5225 = vmatprep.subr.mxu0 0.0
      %5226 = vmatpush2.xpose.msra.mxu0 0.0
      %5227 = vmatprep.subr.mxu0 0.0
      %5228 = vmatpush2.xpose.msra.mxu0 0.0
      %5229 = vmatprep.subr.mxu0 0.0
      %5230 = vmatpush2.xpose.msra.mxu0 0.0
      %5231 = vmatprep.subr.mxu0 0.0
      %5232 = vmatpush2.xpose.msra.mxu0 0.0
      %5233 = vmatprep.subr.mxu0 0.0
      %5234 = vmatpush2.xpose.msra.mxu0 0.0
      %5235 = vmatprep.subr.mxu0 0.0
      %5236 = vmatpush2.xpose.msra.mxu0 0.0
      %5237 = vmatprep.subr.mxu0 0.0
      %5238 = vmatpush2.xpose.msra.mxu0 0.0
      %5239 = vmatprep.subr.mxu0 0.0
      %5240 = vmatpush2.xpose.msra.mxu0 0.0
      %5241 = vmatprep.mubr.f32.mxu0 0.0
      %5242 = vmatmul.mubr.f32.gmra.mxu0 %v5169
      %v5243 = vpop.f32.mrf.mxu0
      %v5244 = vadd.f32 0.0, %v5243
      %v5245 = vpop.f32.mrf.mxu0
      %5246 = vmatprep.mubr.f32.mxu0 0.0
      %5247 = vmatmul.mubr.f32.gmra.mxu0 %v5171
      %v5248 = vpop.f32.mrf.mxu0
      %v5249 = vadd.f32 0.0, %v5248
      %v5250 = vpop.f32.mrf.mxu0
      %5251 = vdwg.mxu0
      %5252 = vrot.lane.b32.xlu0 %v1159, 120
      %v5253 = vpop.permute.xlu0 %5252
      %5254 = vrot.lane.b32.xlu0 %v1160, 120
      %v5255 = vpop.permute.xlu0 %5254
      %5256 = vrot.lane.b32.xlu0 %v1159, 104
      %v5257 = vpop.permute.xlu0 %5256
      %5258 = vrot.lane.b32.xlu0 %v1160, 104
      %v5259 = vpop.permute.xlu0 %5258
      %v5260 = vsel %vm1179, %v5253, 0
      %v5262 = vsel %vm1179, %v5255, 0
      %v5264 = vsel %vm1179, %v5257, 0
      %v5266 = vsel %vm1179, %v5259, 0
      %5268 = vmatprep.subr.mxu0 0.0
      %5269 = vmatpush1.xpose.msra.mxu0 0.0
      %5270 = vmatprep.subr.mxu0 0.0
      %5271 = vmatpush1.xpose.msra.mxu0 0.0
      %5272 = vmatprep.subr.mxu0 0.0
      %5273 = vmatpush1.xpose.msra.mxu0 0.0
      %5274 = vmatprep.subr.mxu0 0.0
      %5275 = vmatpush1.xpose.msra.mxu0 0.0
      %5276 = vmatprep.subr.mxu0 0.0
      %5277 = vmatpush1.xpose.msra.mxu0 0.0
      %5278 = vmatprep.subr.mxu0 0.0
      %5279 = vmatpush1.xpose.msra.mxu0 0.0
      %5280 = vmatprep.subr.mxu0 0.0
      %5281 = vmatpush1.xpose.msra.mxu0 0.0
      %5282 = vmatprep.subr.mxu0 0.0
      %5283 = vmatpush1.xpose.msra.mxu0 0.0
      %5284 = vmatprep.subr.mxu0 0.0
      %5285 = vmatpush1.xpose.msra.mxu0 0.0
      %5286 = vmatprep.subr.mxu0 0.0
      %5287 = vmatpush1.xpose.msra.mxu0 0.0
      %5288 = vmatprep.subr.mxu0 0.0
      %5289 = vmatpush1.xpose.msra.mxu0 0.0
      %5290 = vmatprep.subr.mxu0 0.0
      %5291 = vmatpush1.xpose.msra.mxu0 0.0
      %5292 = vmatprep.subr.mxu0 0.0
      %5293 = vmatpush1.xpose.msra.mxu0 0.0
      %5294 = vmatprep.subr.mxu0 0.0
      %5295 = vmatpush1.xpose.msra.mxu0 0.0
      %5296 = vmatprep.subr.mxu0 0.0
      %5297 = vmatpush1.xpose.msra.mxu0 %v5266
      %5298 = vmatprep.subr.mxu0 0.0
      %5299 = vmatpush1.xpose.msra.mxu0 %v5264
      %5300 = vmatprep.subr.mxu0 0.0
      %5301 = vmatpush2.xpose.msra.mxu0 0.0
      %5302 = vmatprep.subr.mxu0 0.0
      %5303 = vmatpush2.xpose.msra.mxu0 0.0
      %5304 = vmatprep.subr.mxu0 0.0
      %5305 = vmatpush2.xpose.msra.mxu0 0.0
      %5306 = vmatprep.subr.mxu0 0.0
      %5307 = vmatpush2.xpose.msra.mxu0 0.0
      %5308 = vmatprep.subr.mxu0 0.0
      %5309 = vmatpush2.xpose.msra.mxu0 0.0
      %5310 = vmatprep.subr.mxu0 0.0
      %5311 = vmatpush2.xpose.msra.mxu0 0.0
      %5312 = vmatprep.subr.mxu0 0.0
      %5313 = vmatpush2.xpose.msra.mxu0 0.0
      %5314 = vmatprep.subr.mxu0 0.0
      %5315 = vmatpush2.xpose.msra.mxu0 0.0
      %5316 = vmatprep.subr.mxu0 0.0
      %5317 = vmatpush2.xpose.msra.mxu0 0.0
      %5318 = vmatprep.subr.mxu0 0.0
      %5319 = vmatpush2.xpose.msra.mxu0 0.0
      %5320 = vmatprep.subr.mxu0 0.0
      %5321 = vmatpush2.xpose.msra.mxu0 0.0
      %5322 = vmatprep.subr.mxu0 0.0
      %5323 = vmatpush2.xpose.msra.mxu0 0.0
      %5324 = vmatprep.subr.mxu0 0.0
      %5325 = vmatpush2.xpose.msra.mxu0 0.0
      %5326 = vmatprep.subr.mxu0 0.0
      %5327 = vmatpush2.xpose.msra.mxu0 0.0
      %5328 = vmatprep.subr.mxu0 0.0
      %5329 = vmatpush2.xpose.msra.mxu0 0.0
      %5330 = vmatprep.subr.mxu0 0.0
      %5331 = vmatpush2.xpose.msra.mxu0 0.0
      %5332 = vmatprep.mubr.f32.mxu0 0.0
      %5333 = vmatmul.mubr.f32.gmra.mxu0 %v5260
      %v5334 = vpop.f32.mrf.mxu0
      %v5335 = vadd.f32 0.0, %v5334
      %v5336 = vpop.f32.mrf.mxu0
      %5337 = vmatprep.mubr.f32.mxu0 0.0
      %5338 = vmatmul.mubr.f32.gmra.mxu0 %v5262
      %v5339 = vpop.f32.mrf.mxu0
      %v5340 = vadd.f32 0.0, %v5339
      %v5341 = vpop.f32.mrf.mxu0
      %5342 = vdwg.mxu0
      %5343 = vrot.lane.b32.xlu0 %v1161, 120
      %v5344 = vpop.permute.xlu0 %5343
      %5345 = vrot.lane.b32.xlu0 %v1162, 120
      %v5346 = vpop.permute.xlu0 %5345
      %5347 = vrot.lane.b32.xlu0 %v1161, 104
      %v5348 = vpop.permute.xlu0 %5347
      %5349 = vrot.lane.b32.xlu0 %v1162, 104
      %v5350 = vpop.permute.xlu0 %5349
      %v5351 = vsel %vm1179, %v5344, 0
      %v5353 = vsel %vm1179, %v5346, 0
      %v5355 = vsel %vm1179, %v5348, 0
      %v5357 = vsel %vm1179, %v5350, 0
      %5359 = vmatprep.subr.mxu0 0.0
      %5360 = vmatpush1.xpose.msra.mxu0 0.0
      %5361 = vmatprep.subr.mxu0 0.0
      %5362 = vmatpush1.xpose.msra.mxu0 0.0
      %5363 = vmatprep.subr.mxu0 0.0
      %5364 = vmatpush1.xpose.msra.mxu0 0.0
      %5365 = vmatprep.subr.mxu0 0.0
      %5366 = vmatpush1.xpose.msra.mxu0 0.0
      %5367 = vmatprep.subr.mxu0 0.0
      %5368 = vmatpush1.xpose.msra.mxu0 0.0
      %5369 = vmatprep.subr.mxu0 0.0
      %5370 = vmatpush1.xpose.msra.mxu0 0.0
      %5371 = vmatprep.subr.mxu0 0.0
      %5372 = vmatpush1.xpose.msra.mxu0 0.0
      %5373 = vmatprep.subr.mxu0 0.0
      %5374 = vmatpush1.xpose.msra.mxu0 0.0
      %5375 = vmatprep.subr.mxu0 0.0
      %5376 = vmatpush1.xpose.msra.mxu0 0.0
      %5377 = vmatprep.subr.mxu0 0.0
      %5378 = vmatpush1.xpose.msra.mxu0 0.0
      %5379 = vmatprep.subr.mxu0 0.0
      %5380 = vmatpush1.xpose.msra.mxu0 0.0
      %5381 = vmatprep.subr.mxu0 0.0
      %5382 = vmatpush1.xpose.msra.mxu0 0.0
      %5383 = vmatprep.subr.mxu0 0.0
      %5384 = vmatpush1.xpose.msra.mxu0 0.0
      %5385 = vmatprep.subr.mxu0 0.0
      %5386 = vmatpush1.xpose.msra.mxu0 0.0
      %5387 = vmatprep.subr.mxu0 0.0
      %5388 = vmatpush1.xpose.msra.mxu0 %v5357
      %5389 = vmatprep.subr.mxu0 0.0
      %5390 = vmatpush1.xpose.msra.mxu0 %v5355
      %5391 = vmatprep.subr.mxu0 0.0
      %5392 = vmatpush2.xpose.msra.mxu0 0.0
      %5393 = vmatprep.subr.mxu0 0.0
      %5394 = vmatpush2.xpose.msra.mxu0 0.0
      %5395 = vmatprep.subr.mxu0 0.0
      %5396 = vmatpush2.xpose.msra.mxu0 0.0
      %5397 = vmatprep.subr.mxu0 0.0
      %5398 = vmatpush2.xpose.msra.mxu0 0.0
      %5399 = vmatprep.subr.mxu0 0.0
      %5400 = vmatpush2.xpose.msra.mxu0 0.0
      %5401 = vmatprep.subr.mxu0 0.0
      %5402 = vmatpush2.xpose.msra.mxu0 0.0
      %5403 = vmatprep.subr.mxu0 0.0
      %5404 = vmatpush2.xpose.msra.mxu0 0.0
      %5405 = vmatprep.subr.mxu0 0.0
      %5406 = vmatpush2.xpose.msra.mxu0 0.0
      %5407 = vmatprep.subr.mxu0 0.0
      %5408 = vmatpush2.xpose.msra.mxu0 0.0
      %5409 = vmatprep.subr.mxu0 0.0
      %5410 = vmatpush2.xpose.msra.mxu0 0.0
      %5411 = vmatprep.subr.mxu0 0.0
      %5412 = vmatpush2.xpose.msra.mxu0 0.0
      %5413 = vmatprep.subr.mxu0 0.0
      %5414 = vmatpush2.xpose.msra.mxu0 0.0
      %5415 = vmatprep.subr.mxu0 0.0
      %5416 = vmatpush2.xpose.msra.mxu0 0.0
      %5417 = vmatprep.subr.mxu0 0.0
      %5418 = vmatpush2.xpose.msra.mxu0 0.0
      %5419 = vmatprep.subr.mxu0 0.0
      %5420 = vmatpush2.xpose.msra.mxu0 0.0
      %5421 = vmatprep.subr.mxu0 0.0
      %5422 = vmatpush2.xpose.msra.mxu0 0.0
      %5423 = vmatprep.mubr.f32.mxu0 0.0
      %5424 = vmatmul.mubr.f32.gmra.mxu0 %v5351
      %v5425 = vpop.f32.mrf.mxu0
      %v5426 = vadd.f32 0.0, %v5425
      %v5427 = vpop.f32.mrf.mxu0
      %5428 = vmatprep.mubr.f32.mxu0 0.0
      %5429 = vmatmul.mubr.f32.gmra.mxu0 %v5353
      %v5430 = vpop.f32.mrf.mxu0
      %v5431 = vadd.f32 0.0, %v5430
      %v5432 = vpop.f32.mrf.mxu0
      %5433 = vdwg.mxu0
      %5434 = vrot.lane.b32.xlu0 %v1163, 120
      %v5435 = vpop.permute.xlu0 %5434
      %5436 = vrot.lane.b32.xlu0 %v1164, 120
      %v5437 = vpop.permute.xlu0 %5436
      %5438 = vrot.lane.b32.xlu0 %v1163, 104
      %v5439 = vpop.permute.xlu0 %5438
      %5440 = vrot.lane.b32.xlu0 %v1164, 104
      %v5441 = vpop.permute.xlu0 %5440
      %v5442 = vsel %vm1179, %v5435, 0
      %v5444 = vsel %vm1179, %v5437, 0
      %v5446 = vsel %vm1179, %v5439, 0
      %v5448 = vsel %vm1179, %v5441, 0
      %5450 = vmatprep.subr.mxu0 0.0
      %5451 = vmatpush1.xpose.msra.mxu0 0.0
      %5452 = vmatprep.subr.mxu0 0.0
      %5453 = vmatpush1.xpose.msra.mxu0 0.0
      %5454 = vmatprep.subr.mxu0 0.0
      %5455 = vmatpush1.xpose.msra.mxu0 0.0
      %5456 = vmatprep.subr.mxu0 0.0
      %5457 = vmatpush1.xpose.msra.mxu0 0.0
      %5458 = vmatprep.subr.mxu0 0.0
      %5459 = vmatpush1.xpose.msra.mxu0 0.0
      %5460 = vmatprep.subr.mxu0 0.0
      %5461 = vmatpush1.xpose.msra.mxu0 0.0
      %5462 = vmatprep.subr.mxu0 0.0
      %5463 = vmatpush1.xpose.msra.mxu0 0.0
      %5464 = vmatprep.subr.mxu0 0.0
      %5465 = vmatpush1.xpose.msra.mxu0 0.0
      %5466 = vmatprep.subr.mxu0 0.0
      %5467 = vmatpush1.xpose.msra.mxu0 0.0
      %5468 = vmatprep.subr.mxu0 0.0
      %5469 = vmatpush1.xpose.msra.mxu0 0.0
      %5470 = vmatprep.subr.mxu0 0.0
      %5471 = vmatpush1.xpose.msra.mxu0 0.0
      %5472 = vmatprep.subr.mxu0 0.0
      %5473 = vmatpush1.xpose.msra.mxu0 0.0
      %5474 = vmatprep.subr.mxu0 0.0
      %5475 = vmatpush1.xpose.msra.mxu0 0.0
      %5476 = vmatprep.subr.mxu0 0.0
      %5477 = vmatpush1.xpose.msra.mxu0 0.0
      %5478 = vmatprep.subr.mxu0 0.0
      %5479 = vmatpush1.xpose.msra.mxu0 %v5448
      %5480 = vmatprep.subr.mxu0 0.0
      %5481 = vmatpush1.xpose.msra.mxu0 %v5446
      %5482 = vmatprep.subr.mxu0 0.0
      %5483 = vmatpush2.xpose.msra.mxu0 0.0
      %5484 = vmatprep.subr.mxu0 0.0
      %5485 = vmatpush2.xpose.msra.mxu0 0.0
      %5486 = vmatprep.subr.mxu0 0.0
      %5487 = vmatpush2.xpose.msra.mxu0 0.0
      %5488 = vmatprep.subr.mxu0 0.0
      %5489 = vmatpush2.xpose.msra.mxu0 0.0
      %5490 = vmatprep.subr.mxu0 0.0
      %5491 = vmatpush2.xpose.msra.mxu0 0.0
      %5492 = vmatprep.subr.mxu0 0.0
      %5493 = vmatpush2.xpose.msra.mxu0 0.0
      %5494 = vmatprep.subr.mxu0 0.0
      %5495 = vmatpush2.xpose.msra.mxu0 0.0
      %5496 = vmatprep.subr.mxu0 0.0
      %5497 = vmatpush2.xpose.msra.mxu0 0.0
      %5498 = vmatprep.subr.mxu0 0.0
      %5499 = vmatpush2.xpose.msra.mxu0 0.0
      %5500 = vmatprep.subr.mxu0 0.0
      %5501 = vmatpush2.xpose.msra.mxu0 0.0
      %5502 = vmatprep.subr.mxu0 0.0
      %5503 = vmatpush2.xpose.msra.mxu0 0.0
      %5504 = vmatprep.subr.mxu0 0.0
      %5505 = vmatpush2.xpose.msra.mxu0 0.0
      %5506 = vmatprep.subr.mxu0 0.0
      %5507 = vmatpush2.xpose.msra.mxu0 0.0
      %5508 = vmatprep.subr.mxu0 0.0
      %5509 = vmatpush2.xpose.msra.mxu0 0.0
      %5510 = vmatprep.subr.mxu0 0.0
      %5511 = vmatpush2.xpose.msra.mxu0 0.0
      %5512 = vmatprep.subr.mxu0 0.0
      %5513 = vmatpush2.xpose.msra.mxu0 0.0
      %5514 = vmatprep.mubr.f32.mxu0 0.0
      %5515 = vmatmul.mubr.f32.gmra.mxu0 %v5442
      %v5516 = vpop.f32.mrf.mxu0
      %v5517 = vadd.f32 0.0, %v5516
      %v5518 = vpop.f32.mrf.mxu0
      %5519 = vmatprep.mubr.f32.mxu0 0.0
      %5520 = vmatmul.mubr.f32.gmra.mxu0 %v5444
      %v5521 = vpop.f32.mrf.mxu0
      %v5522 = vadd.f32 0.0, %v5521
      %v5523 = vpop.f32.mrf.mxu0
      %5524 = vdwg.mxu0
      %5525 = vrot.lane.b32.xlu0 %v1165, 120
      %v5526 = vpop.permute.xlu0 %5525
      %5527 = vrot.lane.b32.xlu0 %v1166, 120
      %v5528 = vpop.permute.xlu0 %5527
      %5529 = vrot.lane.b32.xlu0 %v1165, 104
      %v5530 = vpop.permute.xlu0 %5529
      %5531 = vrot.lane.b32.xlu0 %v1166, 104
      %v5532 = vpop.permute.xlu0 %5531
      %v5533 = vsel %vm1179, %v5526, 0
      %v5535 = vsel %vm1179, %v5528, 0
      %v5537 = vsel %vm1179, %v5530, 0
      %v5539 = vsel %vm1179, %v5532, 0
      %5541 = vmatprep.subr.mxu0 0.0
      %5542 = vmatpush1.xpose.msra.mxu0 0.0
      %5543 = vmatprep.subr.mxu0 0.0
      %5544 = vmatpush1.xpose.msra.mxu0 0.0
      %5545 = vmatprep.subr.mxu0 0.0
      %5546 = vmatpush1.xpose.msra.mxu0 0.0
      %5547 = vmatprep.subr.mxu0 0.0
      %5548 = vmatpush1.xpose.msra.mxu0 0.0
      %5549 = vmatprep.subr.mxu0 0.0
      %5550 = vmatpush1.xpose.msra.mxu0 0.0
      %5551 = vmatprep.subr.mxu0 0.0
      %5552 = vmatpush1.xpose.msra.mxu0 0.0
      %5553 = vmatprep.subr.mxu0 0.0
      %5554 = vmatpush1.xpose.msra.mxu0 0.0
      %5555 = vmatprep.subr.mxu0 0.0
      %5556 = vmatpush1.xpose.msra.mxu0 0.0
      %5557 = vmatprep.subr.mxu0 0.0
      %5558 = vmatpush1.xpose.msra.mxu0 0.0
      %5559 = vmatprep.subr.mxu0 0.0
      %5560 = vmatpush1.xpose.msra.mxu0 0.0
      %5561 = vmatprep.subr.mxu0 0.0
      %5562 = vmatpush1.xpose.msra.mxu0 0.0
      %5563 = vmatprep.subr.mxu0 0.0
      %5564 = vmatpush1.xpose.msra.mxu0 0.0
      %5565 = vmatprep.subr.mxu0 0.0
      %5566 = vmatpush1.xpose.msra.mxu0 0.0
      %5567 = vmatprep.subr.mxu0 0.0
      %5568 = vmatpush1.xpose.msra.mxu0 0.0
      %5569 = vmatprep.subr.mxu0 0.0
      %5570 = vmatpush1.xpose.msra.mxu0 %v5539
      %5571 = vmatprep.subr.mxu0 0.0
      %5572 = vmatpush1.xpose.msra.mxu0 %v5537
      %5573 = vmatprep.subr.mxu0 0.0
      %5574 = vmatpush2.xpose.msra.mxu0 0.0
      %5575 = vmatprep.subr.mxu0 0.0
      %5576 = vmatpush2.xpose.msra.mxu0 0.0
      %5577 = vmatprep.subr.mxu0 0.0
      %5578 = vmatpush2.xpose.msra.mxu0 0.0
      %5579 = vmatprep.subr.mxu0 0.0
      %5580 = vmatpush2.xpose.msra.mxu0 0.0
      %5581 = vmatprep.subr.mxu0 0.0
      %5582 = vmatpush2.xpose.msra.mxu0 0.0
      %5583 = vmatprep.subr.mxu0 0.0
      %5584 = vmatpush2.xpose.msra.mxu0 0.0
      %5585 = vmatprep.subr.mxu0 0.0
      %5586 = vmatpush2.xpose.msra.mxu0 0.0
      %5587 = vmatprep.subr.mxu0 0.0
      %5588 = vmatpush2.xpose.msra.mxu0 0.0
      %5589 = vmatprep.subr.mxu0 0.0
      %5590 = vmatpush2.xpose.msra.mxu0 0.0
      %5591 = vmatprep.subr.mxu0 0.0
      %5592 = vmatpush2.xpose.msra.mxu0 0.0
      %5593 = vmatprep.subr.mxu0 0.0
      %5594 = vmatpush2.xpose.msra.mxu0 0.0
      %5595 = vmatprep.subr.mxu0 0.0
      %5596 = vmatpush2.xpose.msra.mxu0 0.0
      %5597 = vmatprep.subr.mxu0 0.0
      %5598 = vmatpush2.xpose.msra.mxu0 0.0
      %5599 = vmatprep.subr.mxu0 0.0
      %5600 = vmatpush2.xpose.msra.mxu0 0.0
      %5601 = vmatprep.subr.mxu0 0.0
      %5602 = vmatpush2.xpose.msra.mxu0 0.0
      %5603 = vmatprep.subr.mxu0 0.0
      %5604 = vmatpush2.xpose.msra.mxu0 0.0
      %5605 = vmatprep.mubr.f32.mxu0 0.0
      %5606 = vmatmul.mubr.f32.gmra.mxu0 %v5533
      %v5607 = vpop.f32.mrf.mxu0
      %v5608 = vadd.f32 0.0, %v5607
      %v5609 = vpop.f32.mrf.mxu0
      %5610 = vmatprep.mubr.f32.mxu0 0.0
      %5611 = vmatmul.mubr.f32.gmra.mxu0 %v5535
      %v5612 = vpop.f32.mrf.mxu0
      %v5613 = vadd.f32 0.0, %v5612
      %v5614 = vpop.f32.mrf.mxu0
      %5615 = vdwg.mxu0
      %5616 = vrot.lane.b32.xlu0 %v1167, 120
      %v5617 = vpop.permute.xlu0 %5616
      %5618 = vrot.lane.b32.xlu0 %v1168, 120
      %v5619 = vpop.permute.xlu0 %5618
      %5620 = vrot.lane.b32.xlu0 %v1167, 104
      %v5621 = vpop.permute.xlu0 %5620
      %5622 = vrot.lane.b32.xlu0 %v1168, 104
      %v5623 = vpop.permute.xlu0 %5622
      %v5624 = vsel %vm1179, %v5617, 0
      %v5626 = vsel %vm1179, %v5619, 0
      %v5628 = vsel %vm1179, %v5621, 0
      %v5630 = vsel %vm1179, %v5623, 0
      %5632 = vmatprep.subr.mxu0 0.0
      %5633 = vmatpush1.xpose.msra.mxu0 0.0
      %5634 = vmatprep.subr.mxu0 0.0
      %5635 = vmatpush1.xpose.msra.mxu0 0.0
      %5636 = vmatprep.subr.mxu0 0.0
      %5637 = vmatpush1.xpose.msra.mxu0 0.0
      %5638 = vmatprep.subr.mxu0 0.0
      %5639 = vmatpush1.xpose.msra.mxu0 0.0
      %5640 = vmatprep.subr.mxu0 0.0
      %5641 = vmatpush1.xpose.msra.mxu0 0.0
      %5642 = vmatprep.subr.mxu0 0.0
      %5643 = vmatpush1.xpose.msra.mxu0 0.0
      %5644 = vmatprep.subr.mxu0 0.0
      %5645 = vmatpush1.xpose.msra.mxu0 0.0
      %5646 = vmatprep.subr.mxu0 0.0
      %5647 = vmatpush1.xpose.msra.mxu0 0.0
      %5648 = vmatprep.subr.mxu0 0.0
      %5649 = vmatpush1.xpose.msra.mxu0 0.0
      %5650 = vmatprep.subr.mxu0 0.0
      %5651 = vmatpush1.xpose.msra.mxu0 0.0
      %5652 = vmatprep.subr.mxu0 0.0
      %5653 = vmatpush1.xpose.msra.mxu0 0.0
      %5654 = vmatprep.subr.mxu0 0.0
      %5655 = vmatpush1.xpose.msra.mxu0 0.0
      %5656 = vmatprep.subr.mxu0 0.0
      %5657 = vmatpush1.xpose.msra.mxu0 0.0
      %5658 = vmatprep.subr.mxu0 0.0
      %5659 = vmatpush1.xpose.msra.mxu0 0.0
      %5660 = vmatprep.subr.mxu0 0.0
      %5661 = vmatpush1.xpose.msra.mxu0 %v5630
      %5662 = vmatprep.subr.mxu0 0.0
      %5663 = vmatpush1.xpose.msra.mxu0 %v5628
      %5664 = vmatprep.subr.mxu0 0.0
      %5665 = vmatpush2.xpose.msra.mxu0 0.0
      %5666 = vmatprep.subr.mxu0 0.0
      %5667 = vmatpush2.xpose.msra.mxu0 0.0
      %5668 = vmatprep.subr.mxu0 0.0
      %5669 = vmatpush2.xpose.msra.mxu0 0.0
      %5670 = vmatprep.subr.mxu0 0.0
      %5671 = vmatpush2.xpose.msra.mxu0 0.0
      %5672 = vmatprep.subr.mxu0 0.0
      %5673 = vmatpush2.xpose.msra.mxu0 0.0
      %5674 = vmatprep.subr.mxu0 0.0
      %5675 = vmatpush2.xpose.msra.mxu0 0.0
      %5676 = vmatprep.subr.mxu0 0.0
      %5677 = vmatpush2.xpose.msra.mxu0 0.0
      %5678 = vmatprep.subr.mxu0 0.0
      %5679 = vmatpush2.xpose.msra.mxu0 0.0
      %5680 = vmatprep.subr.mxu0 0.0
      %5681 = vmatpush2.xpose.msra.mxu0 0.0
      %5682 = vmatprep.subr.mxu0 0.0
      %5683 = vmatpush2.xpose.msra.mxu0 0.0
      %5684 = vmatprep.subr.mxu0 0.0
      %5685 = vmatpush2.xpose.msra.mxu0 0.0
      %5686 = vmatprep.subr.mxu0 0.0
      %5687 = vmatpush2.xpose.msra.mxu0 0.0
      %5688 = vmatprep.subr.mxu0 0.0
      %5689 = vmatpush2.xpose.msra.mxu0 0.0
      %5690 = vmatprep.subr.mxu0 0.0
      %5691 = vmatpush2.xpose.msra.mxu0 0.0
      %5692 = vmatprep.subr.mxu0 0.0
      %5693 = vmatpush2.xpose.msra.mxu0 0.0
      %5694 = vmatprep.subr.mxu0 0.0
      %5695 = vmatpush2.xpose.msra.mxu0 0.0
      %5696 = vmatprep.mubr.f32.mxu0 0.0
      %5697 = vmatmul.mubr.f32.gmra.mxu0 %v5624
      %v5698 = vpop.f32.mrf.mxu0
      %v5699 = vadd.f32 0.0, %v5698
      %v5700 = vpop.f32.mrf.mxu0
      %5701 = vmatprep.mubr.f32.mxu0 0.0
      %5702 = vmatmul.mubr.f32.gmra.mxu0 %v5626
      %v5703 = vpop.f32.mrf.mxu0
      %v5704 = vadd.f32 0.0, %v5703
      %v5705 = vpop.f32.mrf.mxu0
      %5706 = vdwg.mxu0
      %5707 = vrot.lane.b32.xlu0 %v1169, 120
      %v5708 = vpop.permute.xlu0 %5707
      %5709 = vrot.lane.b32.xlu0 %v1170, 120
      %v5710 = vpop.permute.xlu0 %5709
      %5711 = vrot.lane.b32.xlu0 %v1169, 104
      %v5712 = vpop.permute.xlu0 %5711
      %5713 = vrot.lane.b32.xlu0 %v1170, 104
      %v5714 = vpop.permute.xlu0 %5713
      %v5715 = vsel %vm1179, %v5708, 0
      %v5717 = vsel %vm1179, %v5710, 0
      %v5719 = vsel %vm1179, %v5712, 0
      %v5721 = vsel %vm1179, %v5714, 0
      %5723 = vmatprep.subr.mxu0 0.0
      %5724 = vmatpush1.xpose.msra.mxu0 0.0
      %5725 = vmatprep.subr.mxu0 0.0
      %5726 = vmatpush1.xpose.msra.mxu0 0.0
      %5727 = vmatprep.subr.mxu0 0.0
      %5728 = vmatpush1.xpose.msra.mxu0 0.0
      %5729 = vmatprep.subr.mxu0 0.0
      %5730 = vmatpush1.xpose.msra.mxu0 0.0
      %5731 = vmatprep.subr.mxu0 0.0
      %5732 = vmatpush1.xpose.msra.mxu0 0.0
      %5733 = vmatprep.subr.mxu0 0.0
      %5734 = vmatpush1.xpose.msra.mxu0 0.0
      %5735 = vmatprep.subr.mxu0 0.0
      %5736 = vmatpush1.xpose.msra.mxu0 0.0
      %5737 = vmatprep.subr.mxu0 0.0
      %5738 = vmatpush1.xpose.msra.mxu0 0.0
      %5739 = vmatprep.subr.mxu0 0.0
      %5740 = vmatpush1.xpose.msra.mxu0 0.0
      %5741 = vmatprep.subr.mxu0 0.0
      %5742 = vmatpush1.xpose.msra.mxu0 0.0
      %5743 = vmatprep.subr.mxu0 0.0
      %5744 = vmatpush1.xpose.msra.mxu0 0.0
      %5745 = vmatprep.subr.mxu0 0.0
      %5746 = vmatpush1.xpose.msra.mxu0 0.0
      %5747 = vmatprep.subr.mxu0 0.0
      %5748 = vmatpush1.xpose.msra.mxu0 0.0
      %5749 = vmatprep.subr.mxu0 0.0
      %5750 = vmatpush1.xpose.msra.mxu0 0.0
      %5751 = vmatprep.subr.mxu0 0.0
      %5752 = vmatpush1.xpose.msra.mxu0 %v5721
      %5753 = vmatprep.subr.mxu0 0.0
      %5754 = vmatpush1.xpose.msra.mxu0 %v5719
      %5755 = vmatprep.subr.mxu0 0.0
      %5756 = vmatpush2.xpose.msra.mxu0 0.0
      %5757 = vmatprep.subr.mxu0 0.0
      %5758 = vmatpush2.xpose.msra.mxu0 0.0
      %5759 = vmatprep.subr.mxu0 0.0
      %5760 = vmatpush2.xpose.msra.mxu0 0.0
      %5761 = vmatprep.subr.mxu0 0.0
      %5762 = vmatpush2.xpose.msra.mxu0 0.0
      %5763 = vmatprep.subr.mxu0 0.0
      %5764 = vmatpush2.xpose.msra.mxu0 0.0
      %5765 = vmatprep.subr.mxu0 0.0
      %5766 = vmatpush2.xpose.msra.mxu0 0.0
      %5767 = vmatprep.subr.mxu0 0.0
      %5768 = vmatpush2.xpose.msra.mxu0 0.0
      %5769 = vmatprep.subr.mxu0 0.0
      %5770 = vmatpush2.xpose.msra.mxu0 0.0
      %5771 = vmatprep.subr.mxu0 0.0
      %5772 = vmatpush2.xpose.msra.mxu0 0.0
      %5773 = vmatprep.subr.mxu0 0.0
      %5774 = vmatpush2.xpose.msra.mxu0 0.0
      %5775 = vmatprep.subr.mxu0 0.0
      %5776 = vmatpush2.xpose.msra.mxu0 0.0
      %5777 = vmatprep.subr.mxu0 0.0
      %5778 = vmatpush2.xpose.msra.mxu0 0.0
      %5779 = vmatprep.subr.mxu0 0.0
      %5780 = vmatpush2.xpose.msra.mxu0 0.0
      %5781 = vmatprep.subr.mxu0 0.0
      %5782 = vmatpush2.xpose.msra.mxu0 0.0
      %5783 = vmatprep.subr.mxu0 0.0
      %5784 = vmatpush2.xpose.msra.mxu0 0.0
      %5785 = vmatprep.subr.mxu0 0.0
      %5786 = vmatpush2.xpose.msra.mxu0 0.0
      %5787 = vmatprep.mubr.f32.mxu0 0.0
      %5788 = vmatmul.mubr.f32.gmra.mxu0 %v5715
      %v5789 = vpop.f32.mrf.mxu0
      %v5790 = vadd.f32 0.0, %v5789
      %v5791 = vpop.f32.mrf.mxu0
      %5792 = vmatprep.mubr.f32.mxu0 0.0
      %5793 = vmatmul.mubr.f32.gmra.mxu0 %v5717
      %v5794 = vpop.f32.mrf.mxu0
      %v5795 = vadd.f32 0.0, %v5794
      %v5796 = vpop.f32.mrf.mxu0
      %5797 = vdwg.mxu0
      %v5798 = vsel %vm457, %v4425, -inf
      %5799 = vmax.xlane.f32.xlu0 %v5798
      %v5800 = vpop.xlane.xlu0 %5799
      %v5801 = vsel %vm457, %v4430, -inf
      %5802 = vmax.xlane.f32.xlu0 %v5801
      %v5803 = vpop.xlane.xlu0 %5802
      %v5804 = vsel %vm457, %v4516, -inf
      %5805 = vmax.xlane.f32.xlu0 %v5804
      %v5806 = vpop.xlane.xlu0 %5805
      %v5807 = vsel %vm457, %v4521, -inf
      %5808 = vmax.xlane.f32.xlu0 %v5807
      %v5809 = vpop.xlane.xlu0 %5808
      %v5810 = vsel %vm457, %v4607, -inf
      %5811 = vmax.xlane.f32.xlu0 %v5810
      %v5812 = vpop.xlane.xlu0 %5811
      %v5813 = vsel %vm457, %v4612, -inf
      %5814 = vmax.xlane.f32.xlu0 %v5813
      %v5815 = vpop.xlane.xlu0 %5814
      %v5816 = vsel %vm457, %v4698, -inf
      %5817 = vmax.xlane.f32.xlu0 %v5816
      %v5818 = vpop.xlane.xlu0 %5817
      %v5819 = vsel %vm457, %v4703, -inf
      %5820 = vmax.xlane.f32.xlu0 %v5819
      %v5821 = vpop.xlane.xlu0 %5820
      %v5822 = vsel %vm457, %v4789, -inf
      %5823 = vmax.xlane.f32.xlu0 %v5822
      %v5824 = vpop.xlane.xlu0 %5823
      %v5825 = vsel %vm457, %v4794, -inf
      %5826 = vmax.xlane.f32.xlu0 %v5825
      %v5827 = vpop.xlane.xlu0 %5826
      %v5828 = vsel %vm457, %v4880, -inf
      %5829 = vmax.xlane.f32.xlu0 %v5828
      %v5830 = vpop.xlane.xlu0 %5829
      %v5831 = vsel %vm457, %v4885, -inf
      %5832 = vmax.xlane.f32.xlu0 %v5831
      %v5833 = vpop.xlane.xlu0 %5832
      %v5834 = vsel %vm457, %v4971, -inf
      %5835 = vmax.xlane.f32.xlu0 %v5834
      %v5836 = vpop.xlane.xlu0 %5835
      %v5837 = vsel %vm457, %v4976, -inf
      %5838 = vmax.xlane.f32.xlu0 %v5837
      %v5839 = vpop.xlane.xlu0 %5838
      %v5840 = vsel %vm457, %v5062, -inf
      %5841 = vmax.xlane.f32.xlu0 %v5840
      %v5842 = vpop.xlane.xlu0 %5841
      %v5843 = vsel %vm457, %v5067, -inf
      %5844 = vmax.xlane.f32.xlu0 %v5843
      %v5845 = vpop.xlane.xlu0 %5844
      %v5846 = vsel %vm457, %v5153, -inf
      %5847 = vmax.xlane.f32.xlu0 %v5846
      %v5848 = vpop.xlane.xlu0 %5847
      %v5849 = vsel %vm457, %v5158, -inf
      %5850 = vmax.xlane.f32.xlu0 %v5849
      %v5851 = vpop.xlane.xlu0 %5850
      %v5852 = vsel %vm457, %v5244, -inf
      %5853 = vmax.xlane.f32.xlu0 %v5852
      %v5854 = vpop.xlane.xlu0 %5853
      %v5855 = vsel %vm457, %v5249, -inf
      %5856 = vmax.xlane.f32.xlu0 %v5855
      %v5857 = vpop.xlane.xlu0 %5856
      %v5858 = vsel %vm457, %v5335, -inf
      %5859 = vmax.xlane.f32.xlu0 %v5858
      %v5860 = vpop.xlane.xlu0 %5859
      %v5861 = vsel %vm457, %v5340, -inf
      %5862 = vmax.xlane.f32.xlu0 %v5861
      %v5863 = vpop.xlane.xlu0 %5862
      %v5864 = vsel %vm457, %v5426, -inf
      %5865 = vmax.xlane.f32.xlu0 %v5864
      %v5866 = vpop.xlane.xlu0 %5865
      %v5867 = vsel %vm457, %v5431, -inf
      %5868 = vmax.xlane.f32.xlu0 %v5867
      %v5869 = vpop.xlane.xlu0 %5868
      %v5870 = vsel %vm457, %v5517, -inf
      %5871 = vmax.xlane.f32.xlu0 %v5870
      %v5872 = vpop.xlane.xlu0 %5871
      %v5873 = vsel %vm457, %v5522, -inf
      %5874 = vmax.xlane.f32.xlu0 %v5873
      %v5875 = vpop.xlane.xlu0 %5874
      %v5876 = vsel %vm457, %v5608, -inf
      %5877 = vmax.xlane.f32.xlu0 %v5876
      %v5878 = vpop.xlane.xlu0 %5877
      %v5879 = vsel %vm457, %v5613, -inf
      %5880 = vmax.xlane.f32.xlu0 %v5879
      %v5881 = vpop.xlane.xlu0 %5880
      %v5882 = vsel %vm457, %v5699, -inf
      %5883 = vmax.xlane.f32.xlu0 %v5882
      %v5884 = vpop.xlane.xlu0 %5883
      %v5885 = vsel %vm457, %v5704, -inf
      %5886 = vmax.xlane.f32.xlu0 %v5885
      %v5887 = vpop.xlane.xlu0 %5886
      %v5888 = vsel %vm457, %v5790, -inf
      %5889 = vmax.xlane.f32.xlu0 %v5888
      %v5890 = vpop.xlane.xlu0 %5889
      %v5891 = vsel %vm457, %v5795, -inf
      %5892 = vmax.xlane.f32.xlu0 %v5891
      %v5893 = vpop.xlane.xlu0 %5892
      %v5894 = vsub.f32 %v4425, %v5800
      %v5895 = vsub.f32 %v4430, %v5803
      %v5896 = vsub.f32 %v4516, %v5806
      %v5897 = vsub.f32 %v4521, %v5809
      %v5898 = vsub.f32 %v4607, %v5812
      %v5899 = vsub.f32 %v4612, %v5815
      %v5900 = vsub.f32 %v4698, %v5818
      %v5901 = vsub.f32 %v4703, %v5821
      %v5902 = vsub.f32 %v4789, %v5824
      %v5903 = vsub.f32 %v4794, %v5827
      %v5904 = vsub.f32 %v4880, %v5830
      %v5905 = vsub.f32 %v4885, %v5833
      %v5906 = vsub.f32 %v4971, %v5836
      %v5907 = vsub.f32 %v4976, %v5839
      %v5908 = vsub.f32 %v5062, %v5842
      %v5909 = vsub.f32 %v5067, %v5845
      %v5910 = vsub.f32 %v5153, %v5848
      %v5911 = vsub.f32 %v5158, %v5851
      %v5912 = vsub.f32 %v5244, %v5854
      %v5913 = vsub.f32 %v5249, %v5857
      %v5914 = vsub.f32 %v5335, %v5860
      %v5915 = vsub.f32 %v5340, %v5863
      %v5916 = vsub.f32 %v5426, %v5866
      %v5917 = vsub.f32 %v5431, %v5869
      %v5918 = vsub.f32 %v5517, %v5872
      %v5919 = vsub.f32 %v5522, %v5875
      %v5920 = vsub.f32 %v5608, %v5878
      %v5921 = vsub.f32 %v5613, %v5881
      %v5922 = vsub.f32 %v5699, %v5884
      %v5923 = vsub.f32 %v5704, %v5887
      %v5924 = vsub.f32 %v5790, %v5890
      %v5925 = vsub.f32 %v5795, %v5893
      %v5926 = vmul.f32 %v5894, 1.442695
      %v5927 = vpow.pop %v5926
      %v5928 = vmul.f32 %v5895, 1.442695
      %v5929 = vpow.pop %v5928
      %v5930 = vmul.f32 %v5896, 1.442695
      %v5931 = vpow.pop %v5930
      %v5932 = vmul.f32 %v5897, 1.442695
      %v5933 = vpow.pop %v5932
      %v5934 = vmul.f32 %v5898, 1.442695
      %v5935 = vpow.pop %v5934
      %v5936 = vmul.f32 %v5899, 1.442695
      %v5937 = vpow.pop %v5936
      %v5938 = vmul.f32 %v5900, 1.442695
      %v5939 = vpow.pop %v5938
      %v5940 = vmul.f32 %v5901, 1.442695
      %v5941 = vpow.pop %v5940
      %v5942 = vmul.f32 %v5902, 1.442695
      %v5943 = vpow.pop %v5942
      %v5944 = vmul.f32 %v5903, 1.442695
      %v5945 = vpow.pop %v5944
      %v5946 = vmul.f32 %v5904, 1.442695
      %v5947 = vpow.pop %v5946
      %v5948 = vmul.f32 %v5905, 1.442695
      %v5949 = vpow.pop %v5948
      %v5950 = vmul.f32 %v5906, 1.442695
      %v5951 = vpow.pop %v5950
      %v5952 = vmul.f32 %v5907, 1.442695
      %v5953 = vpow.pop %v5952
      %v5954 = vmul.f32 %v5908, 1.442695
      %v5955 = vpow.pop %v5954
      %v5956 = vmul.f32 %v5909, 1.442695
      %v5957 = vpow.pop %v5956
      %v5958 = vmul.f32 %v5910, 1.442695
      %v5959 = vpow.pop %v5958
      %v5960 = vmul.f32 %v5911, 1.442695
      %v5961 = vpow.pop %v5960
      %v5962 = vmul.f32 %v5912, 1.442695
      %v5963 = vpow.pop %v5962
      %v5964 = vmul.f32 %v5913, 1.442695
      %v5965 = vpow.pop %v5964
      %v5966 = vmul.f32 %v5914, 1.442695
      %v5967 = vpow.pop %v5966
      %v5968 = vmul.f32 %v5915, 1.442695
      %v5969 = vpow.pop %v5968
      %v5970 = vmul.f32 %v5916, 1.442695
      %v5971 = vpow.pop %v5970
      %v5972 = vmul.f32 %v5917, 1.442695
      %v5973 = vpow.pop %v5972
      %v5974 = vmul.f32 %v5918, 1.442695
      %v5975 = vpow.pop %v5974
      %v5976 = vmul.f32 %v5919, 1.442695
      %v5977 = vpow.pop %v5976
      %v5978 = vmul.f32 %v5920, 1.442695
      %v5979 = vpow.pop %v5978
      %v5980 = vmul.f32 %v5921, 1.442695
      %v5981 = vpow.pop %v5980
      %v5982 = vmul.f32 %v5922, 1.442695
      %v5983 = vpow.pop %v5982
      %v5984 = vmul.f32 %v5923, 1.442695
      %v5985 = vpow.pop %v5984
      %v5986 = vmul.f32 %v5924, 1.442695
      %v5987 = vpow.pop %v5986
      %v5988 = vmul.f32 %v5925, 1.442695
      %v5989 = vpow.pop %v5988
      %v5990 = vsel %vm457, %v5927, 0.0
      %5991 = vadd.xlane.f32.xlu0 %v5990
      %v5992 = vpop.xlane.xlu0 %5991
      %v5993 = vsel %vm457, %v5929, 0.0
      %5994 = vadd.xlane.f32.xlu0 %v5993
      %v5995 = vpop.xlane.xlu0 %5994
      %v5996 = vsel %vm457, %v5931, 0.0
      %5997 = vadd.xlane.f32.xlu0 %v5996
      %v5998 = vpop.xlane.xlu0 %5997
      %v5999 = vsel %vm457, %v5933, 0.0
      %6000 = vadd.xlane.f32.xlu0 %v5999
      %v6001 = vpop.xlane.xlu0 %6000
      %v6002 = vsel %vm457, %v5935, 0.0
      %6003 = vadd.xlane.f32.xlu0 %v6002
      %v6004 = vpop.xlane.xlu0 %6003
      %v6005 = vsel %vm457, %v5937, 0.0
      %6006 = vadd.xlane.f32.xlu0 %v6005
      %v6007 = vpop.xlane.xlu0 %6006
      %v6008 = vsel %vm457, %v5939, 0.0
      %6009 = vadd.xlane.f32.xlu0 %v6008
      %v6010 = vpop.xlane.xlu0 %6009
      %v6011 = vsel %vm457, %v5941, 0.0
      %6012 = vadd.xlane.f32.xlu0 %v6011
      %v6013 = vpop.xlane.xlu0 %6012
      %v6014 = vsel %vm457, %v5943, 0.0
      %6015 = vadd.xlane.f32.xlu0 %v6014
      %v6016 = vpop.xlane.xlu0 %6015
      %v6017 = vsel %vm457, %v5945, 0.0
      %6018 = vadd.xlane.f32.xlu0 %v6017
      %v6019 = vpop.xlane.xlu0 %6018
      %v6020 = vsel %vm457, %v5947, 0.0
      %6021 = vadd.xlane.f32.xlu0 %v6020
      %v6022 = vpop.xlane.xlu0 %6021
      %v6023 = vsel %vm457, %v5949, 0.0
      %6024 = vadd.xlane.f32.xlu0 %v6023
      %v6025 = vpop.xlane.xlu0 %6024
      %v6026 = vsel %vm457, %v5951, 0.0
      %6027 = vadd.xlane.f32.xlu0 %v6026
      %v6028 = vpop.xlane.xlu0 %6027
      %v6029 = vsel %vm457, %v5953, 0.0
      %6030 = vadd.xlane.f32.xlu0 %v6029
      %v6031 = vpop.xlane.xlu0 %6030
      %v6032 = vsel %vm457, %v5955, 0.0
      %6033 = vadd.xlane.f32.xlu0 %v6032
      %v6034 = vpop.xlane.xlu0 %6033
      %v6035 = vsel %vm457, %v5957, 0.0
      %6036 = vadd.xlane.f32.xlu0 %v6035
      %v6037 = vpop.xlane.xlu0 %6036
      %v6038 = vsel %vm457, %v5959, 0.0
      %6039 = vadd.xlane.f32.xlu0 %v6038
      %v6040 = vpop.xlane.xlu0 %6039
      %v6041 = vsel %vm457, %v5961, 0.0
      %6042 = vadd.xlane.f32.xlu0 %v6041
      %v6043 = vpop.xlane.xlu0 %6042
      %v6044 = vsel %vm457, %v5963, 0.0
      %6045 = vadd.xlane.f32.xlu0 %v6044
      %v6046 = vpop.xlane.xlu0 %6045
      %v6047 = vsel %vm457, %v5965, 0.0
      %6048 = vadd.xlane.f32.xlu0 %v6047
      %v6049 = vpop.xlane.xlu0 %6048
      %v6050 = vsel %vm457, %v5967, 0.0
      %6051 = vadd.xlane.f32.xlu0 %v6050
      %v6052 = vpop.xlane.xlu0 %6051
      %v6053 = vsel %vm457, %v5969, 0.0
      %6054 = vadd.xlane.f32.xlu0 %v6053
      %v6055 = vpop.xlane.xlu0 %6054
      %v6056 = vsel %vm457, %v5971, 0.0
      %6057 = vadd.xlane.f32.xlu0 %v6056
      %v6058 = vpop.xlane.xlu0 %6057
      %v6059 = vsel %vm457, %v5973, 0.0
      %6060 = vadd.xlane.f32.xlu0 %v6059
      %v6061 = vpop.xlane.xlu0 %6060
      %v6062 = vsel %vm457, %v5975, 0.0
      %6063 = vadd.xlane.f32.xlu0 %v6062
      %v6064 = vpop.xlane.xlu0 %6063
      %v6065 = vsel %vm457, %v5977, 0.0
      %6066 = vadd.xlane.f32.xlu0 %v6065
      %v6067 = vpop.xlane.xlu0 %6066
      %v6068 = vsel %vm457, %v5979, 0.0
      %6069 = vadd.xlane.f32.xlu0 %v6068
      %v6070 = vpop.xlane.xlu0 %6069
      %v6071 = vsel %vm457, %v5981, 0.0
      %6072 = vadd.xlane.f32.xlu0 %v6071
      %v6073 = vpop.xlane.xlu0 %6072
      %v6074 = vsel %vm457, %v5983, 0.0
      %6075 = vadd.xlane.f32.xlu0 %v6074
      %v6076 = vpop.xlane.xlu0 %6075
      %v6077 = vsel %vm457, %v5985, 0.0
      %6078 = vadd.xlane.f32.xlu0 %v6077
      %v6079 = vpop.xlane.xlu0 %6078
      %v6080 = vsel %vm457, %v5987, 0.0
      %6081 = vadd.xlane.f32.xlu0 %v6080
      %v6082 = vpop.xlane.xlu0 %6081
      %v6083 = vsel %vm457, %v5989, 0.0
      %6084 = vadd.xlane.f32.xlu0 %v6083
      %v6085 = vpop.xlane.xlu0 %6084
      %v6086 = vrcp.pop %v5992
      %v6087 = vrcp.pop %v5995
      %v6088 = vrcp.pop %v5998
      %v6089 = vrcp.pop %v6001
      %v6090 = vrcp.pop %v6004
      %v6091 = vrcp.pop %v6007
      %v6092 = vrcp.pop %v6010
      %v6093 = vrcp.pop %v6013
      %v6094 = vrcp.pop %v6016
      %v6095 = vrcp.pop %v6019
      %v6096 = vrcp.pop %v6022
      %v6097 = vrcp.pop %v6025
      %v6098 = vrcp.pop %v6028
      %v6099 = vrcp.pop %v6031
      %v6100 = vrcp.pop %v6034
      %v6101 = vrcp.pop %v6037
      %v6102 = vrcp.pop %v6040
      %v6103 = vrcp.pop %v6043
      %v6104 = vrcp.pop %v6046
      %v6105 = vrcp.pop %v6049
      %v6106 = vrcp.pop %v6052
      %v6107 = vrcp.pop %v6055
      %v6108 = vrcp.pop %v6058
      %v6109 = vrcp.pop %v6061
      %v6110 = vrcp.pop %v6064
      %v6111 = vrcp.pop %v6067
      %v6112 = vrcp.pop %v6070
      %v6113 = vrcp.pop %v6073
      %v6114 = vrcp.pop %v6076
      %v6115 = vrcp.pop %v6079
      %v6116 = vrcp.pop %v6082
      %v6117 = vrcp.pop %v6085
      %v6118 = vmul.f32 %v5927, %v6086
      %v6119 = vmul.f32 %v5929, %v6087
      %v6120 = vmul.f32 %v5931, %v6088
      %v6121 = vmul.f32 %v5933, %v6089
      %v6122 = vmul.f32 %v5935, %v6090
      %v6123 = vmul.f32 %v5937, %v6091
      %v6124 = vmul.f32 %v5939, %v6092
      %v6125 = vmul.f32 %v5941, %v6093
      %v6126 = vmul.f32 %v5943, %v6094
      %v6127 = vmul.f32 %v5945, %v6095
      %v6128 = vmul.f32 %v5947, %v6096
      %v6129 = vmul.f32 %v5949, %v6097
      %v6130 = vmul.f32 %v5951, %v6098
      %v6131 = vmul.f32 %v5953, %v6099
      %v6132 = vmul.f32 %v5955, %v6100
      %v6133 = vmul.f32 %v5957, %v6101
      %v6134 = vmul.f32 %v5959, %v6102
      %v6135 = vmul.f32 %v5961, %v6103
      %v6136 = vmul.f32 %v5963, %v6104
      %v6137 = vmul.f32 %v5965, %v6105
      %v6138 = vmul.f32 %v5967, %v6106
      %v6139 = vmul.f32 %v5969, %v6107
      %v6140 = vmul.f32 %v5971, %v6108
      %v6141 = vmul.f32 %v5973, %v6109
      %v6142 = vmul.f32 %v5975, %v6110
      %v6143 = vmul.f32 %v5977, %v6111
      %v6144 = vmul.f32 %v5979, %v6112
      %v6145 = vmul.f32 %v5981, %v6113
      %v6146 = vmul.f32 %v5983, %v6114
      %v6147 = vmul.f32 %v5985, %v6115
      %v6148 = vmul.f32 %v5987, %v6116
      %v6149 = vmul.f32 %v5989, %v6117
      %6150 = vrot.lane.b32.xlu0 %v1139, 88
      %v6151 = vpop.permute.xlu0 %6150
      %6152 = vrot.lane.b32.xlu0 %v1140, 88
      %v6153 = vpop.permute.xlu0 %6152
      %v6157 = vsel %vm457, %v6118, 0
      %v6160 = vsel %vm457, %v6119, 0
      %6162 = vmatprep.subr.mxu0 0.0
      %6163 = vmatpush1.msra.mxu0 0.0
      %6164 = vmatprep.subr.mxu0 0.0
      %6165 = vmatpush1.msra.mxu0 0.0
      %6166 = vmatprep.subr.mxu0 0.0
      %6167 = vmatpush1.msra.mxu0 0.0
      %6168 = vmatprep.subr.mxu0 0.0
      %6169 = vmatpush1.msra.mxu0 0.0
      %6170 = vmatprep.subr.mxu0 0.0
      %6171 = vmatpush1.msra.mxu0 0.0
      %6172 = vmatprep.subr.mxu0 0.0
      %6173 = vmatpush1.msra.mxu0 0.0
      %6174 = vmatprep.subr.mxu0 0.0
      %6175 = vmatpush1.msra.mxu0 0.0
      %6176 = vmatprep.subr.mxu0 0.0
      %6177 = vmatpush1.msra.mxu0 0.0
      %6178 = vmatprep.subr.mxu0 0.0
      %6179 = vmatpush1.msra.mxu0 0.0
      %6180 = vmatprep.subr.mxu0 0.0
      %6181 = vmatpush1.msra.mxu0 0.0
      %6182 = vmatprep.subr.mxu0 0.0
      %6183 = vmatpush1.msra.mxu0 0.0
      %6184 = vmatprep.subr.mxu0 0.0
      %6185 = vmatpush1.msra.mxu0 0.0
      %6186 = vmatprep.subr.mxu0 0.0
      %6187 = vmatpush1.msra.mxu0 0.0
      %6188 = vmatprep.subr.mxu0 0.0
      %6189 = vmatpush1.msra.mxu0 0.0
      %6190 = vmatprep.subr.mxu0 0.0
      %6191 = vmatpush1.msra.mxu0 %v6153
      %6192 = vmatprep.subr.mxu0 0.0
      %6193 = vmatpush1.msra.mxu0 %v6151
      %6194 = vmatprep.subr.mxu0 0.0
      %6195 = vmatpush2.msra.mxu0 0.0
      %6196 = vmatprep.subr.mxu0 0.0
      %6197 = vmatpush2.msra.mxu0 0.0
      %6198 = vmatprep.subr.mxu0 0.0
      %6199 = vmatpush2.msra.mxu0 0.0
      %6200 = vmatprep.subr.mxu0 0.0
      %6201 = vmatpush2.msra.mxu0 0.0
      %6202 = vmatprep.subr.mxu0 0.0
      %6203 = vmatpush2.msra.mxu0 0.0
      %6204 = vmatprep.subr.mxu0 0.0
      %6205 = vmatpush2.msra.mxu0 0.0
      %6206 = vmatprep.subr.mxu0 0.0
      %6207 = vmatpush2.msra.mxu0 0.0
      %6208 = vmatprep.subr.mxu0 0.0
      %6209 = vmatpush2.msra.mxu0 0.0
      %6210 = vmatprep.subr.mxu0 0.0
      %6211 = vmatpush2.msra.mxu0 0.0
      %6212 = vmatprep.subr.mxu0 0.0
      %6213 = vmatpush2.msra.mxu0 0.0
      %6214 = vmatprep.subr.mxu0 0.0
      %6215 = vmatpush2.msra.mxu0 0.0
      %6216 = vmatprep.subr.mxu0 0.0
      %6217 = vmatpush2.msra.mxu0 0.0
      %6218 = vmatprep.subr.mxu0 0.0
      %6219 = vmatpush2.msra.mxu0 0.0
      %6220 = vmatprep.subr.mxu0 0.0
      %6221 = vmatpush2.msra.mxu0 0.0
      %6222 = vmatprep.subr.mxu0 0.0
      %6223 = vmatpush2.msra.mxu0 0.0
      %6224 = vmatprep.subr.mxu0 0.0
      %6225 = vmatpush2.msra.mxu0 0.0
      %6226 = vmatprep.mubr.f32.mxu0 0.0
      %6227 = vmatmul.mubr.f32.gmra.mxu0 %v6157
      %v6228 = vpop.f32.mrf.mxu0
      %v6229 = vadd.f32 0.0, %v6228
      %v6230 = vpop.f32.mrf.mxu0
      %6231 = vmatprep.mubr.f32.mxu0 0.0
      %6232 = vmatmul.mubr.f32.gmra.mxu0 %v6160
      %v6233 = vpop.f32.mrf.mxu0
      %v6234 = vadd.f32 0.0, %v6233
      %v6235 = vpop.f32.mrf.mxu0
      %6236 = vdwg.mxu0
      %6237 = vrot.lane.b32.xlu0 %v1141, 88
      %v6238 = vpop.permute.xlu0 %6237
      %6239 = vrot.lane.b32.xlu0 %v1142, 88
      %v6240 = vpop.permute.xlu0 %6239
      %v6244 = vsel %vm457, %v6120, 0
      %v6247 = vsel %vm457, %v6121, 0
      %6249 = vmatprep.subr.mxu0 0.0
      %6250 = vmatpush1.msra.mxu0 0.0
      %6251 = vmatprep.subr.mxu0 0.0
      %6252 = vmatpush1.msra.mxu0 0.0
      %6253 = vmatprep.subr.mxu0 0.0
      %6254 = vmatpush1.msra.mxu0 0.0
      %6255 = vmatprep.subr.mxu0 0.0
      %6256 = vmatpush1.msra.mxu0 0.0
      %6257 = vmatprep.subr.mxu0 0.0
      %6258 = vmatpush1.msra.mxu0 0.0
      %6259 = vmatprep.subr.mxu0 0.0
      %6260 = vmatpush1.msra.mxu0 0.0
      %6261 = vmatprep.subr.mxu0 0.0
      %6262 = vmatpush1.msra.mxu0 0.0
      %6263 = vmatprep.subr.mxu0 0.0
      %6264 = vmatpush1.msra.mxu0 0.0
      %6265 = vmatprep.subr.mxu0 0.0
      %6266 = vmatpush1.msra.mxu0 0.0
      %6267 = vmatprep.subr.mxu0 0.0
      %6268 = vmatpush1.msra.mxu0 0.0
      %6269 = vmatprep.subr.mxu0 0.0
      %6270 = vmatpush1.msra.mxu0 0.0
      %6271 = vmatprep.subr.mxu0 0.0
      %6272 = vmatpush1.msra.mxu0 0.0
      %6273 = vmatprep.subr.mxu0 0.0
      %6274 = vmatpush1.msra.mxu0 0.0
      %6275 = vmatprep.subr.mxu0 0.0
      %6276 = vmatpush1.msra.mxu0 0.0
      %6277 = vmatprep.subr.mxu0 0.0
      %6278 = vmatpush1.msra.mxu0 %v6240
      %6279 = vmatprep.subr.mxu0 0.0
      %6280 = vmatpush1.msra.mxu0 %v6238
      %6281 = vmatprep.subr.mxu0 0.0
      %6282 = vmatpush2.msra.mxu0 0.0
      %6283 = vmatprep.subr.mxu0 0.0
      %6284 = vmatpush2.msra.mxu0 0.0
      %6285 = vmatprep.subr.mxu0 0.0
      %6286 = vmatpush2.msra.mxu0 0.0
      %6287 = vmatprep.subr.mxu0 0.0
      %6288 = vmatpush2.msra.mxu0 0.0
      %6289 = vmatprep.subr.mxu0 0.0
      %6290 = vmatpush2.msra.mxu0 0.0
      %6291 = vmatprep.subr.mxu0 0.0
      %6292 = vmatpush2.msra.mxu0 0.0
      %6293 = vmatprep.subr.mxu0 0.0
      %6294 = vmatpush2.msra.mxu0 0.0
      %6295 = vmatprep.subr.mxu0 0.0
      %6296 = vmatpush2.msra.mxu0 0.0
      %6297 = vmatprep.subr.mxu0 0.0
      %6298 = vmatpush2.msra.mxu0 0.0
      %6299 = vmatprep.subr.mxu0 0.0
      %6300 = vmatpush2.msra.mxu0 0.0
      %6301 = vmatprep.subr.mxu0 0.0
      %6302 = vmatpush2.msra.mxu0 0.0
      %6303 = vmatprep.subr.mxu0 0.0
      %6304 = vmatpush2.msra.mxu0 0.0
      %6305 = vmatprep.subr.mxu0 0.0
      %6306 = vmatpush2.msra.mxu0 0.0
      %6307 = vmatprep.subr.mxu0 0.0
      %6308 = vmatpush2.msra.mxu0 0.0
      %6309 = vmatprep.subr.mxu0 0.0
      %6310 = vmatpush2.msra.mxu0 0.0
      %6311 = vmatprep.subr.mxu0 0.0
      %6312 = vmatpush2.msra.mxu0 0.0
      %6313 = vmatprep.mubr.f32.mxu0 0.0
      %6314 = vmatmul.mubr.f32.gmra.mxu0 %v6244
      %v6315 = vpop.f32.mrf.mxu0
      %v6316 = vadd.f32 0.0, %v6315
      %v6317 = vpop.f32.mrf.mxu0
      %6318 = vmatprep.mubr.f32.mxu0 0.0
      %6319 = vmatmul.mubr.f32.gmra.mxu0 %v6247
      %v6320 = vpop.f32.mrf.mxu0
      %v6321 = vadd.f32 0.0, %v6320
      %v6322 = vpop.f32.mrf.mxu0
      %6323 = vdwg.mxu0
      %6324 = vrot.lane.b32.xlu0 %v1143, 88
      %v6325 = vpop.permute.xlu0 %6324
      %6326 = vrot.lane.b32.xlu0 %v1144, 88
      %v6327 = vpop.permute.xlu0 %6326
      %v6331 = vsel %vm457, %v6122, 0
      %v6334 = vsel %vm457, %v6123, 0
      %6336 = vmatprep.subr.mxu0 0.0
      %6337 = vmatpush1.msra.mxu0 0.0
      %6338 = vmatprep.subr.mxu0 0.0
      %6339 = vmatpush1.msra.mxu0 0.0
      %6340 = vmatprep.subr.mxu0 0.0
      %6341 = vmatpush1.msra.mxu0 0.0
      %6342 = vmatprep.subr.mxu0 0.0
      %6343 = vmatpush1.msra.mxu0 0.0
      %6344 = vmatprep.subr.mxu0 0.0
      %6345 = vmatpush1.msra.mxu0 0.0
      %6346 = vmatprep.subr.mxu0 0.0
      %6347 = vmatpush1.msra.mxu0 0.0
      %6348 = vmatprep.subr.mxu0 0.0
      %6349 = vmatpush1.msra.mxu0 0.0
      %6350 = vmatprep.subr.mxu0 0.0
      %6351 = vmatpush1.msra.mxu0 0.0
      %6352 = vmatprep.subr.mxu0 0.0
      %6353 = vmatpush1.msra.mxu0 0.0
      %6354 = vmatprep.subr.mxu0 0.0
      %6355 = vmatpush1.msra.mxu0 0.0
      %6356 = vmatprep.subr.mxu0 0.0
      %6357 = vmatpush1.msra.mxu0 0.0
      %6358 = vmatprep.subr.mxu0 0.0
      %6359 = vmatpush1.msra.mxu0 0.0
      %6360 = vmatprep.subr.mxu0 0.0
      %6361 = vmatpush1.msra.mxu0 0.0
      %6362 = vmatprep.subr.mxu0 0.0
      %6363 = vmatpush1.msra.mxu0 0.0
      %6364 = vmatprep.subr.mxu0 0.0
      %6365 = vmatpush1.msra.mxu0 %v6327
      %6366 = vmatprep.subr.mxu0 0.0
      %6367 = vmatpush1.msra.mxu0 %v6325
      %6368 = vmatprep.subr.mxu0 0.0
      %6369 = vmatpush2.msra.mxu0 0.0
      %6370 = vmatprep.subr.mxu0 0.0
      %6371 = vmatpush2.msra.mxu0 0.0
      %6372 = vmatprep.subr.mxu0 0.0
      %6373 = vmatpush2.msra.mxu0 0.0
      %6374 = vmatprep.subr.mxu0 0.0
      %6375 = vmatpush2.msra.mxu0 0.0
      %6376 = vmatprep.subr.mxu0 0.0
      %6377 = vmatpush2.msra.mxu0 0.0
      %6378 = vmatprep.subr.mxu0 0.0
      %6379 = vmatpush2.msra.mxu0 0.0
      %6380 = vmatprep.subr.mxu0 0.0
      %6381 = vmatpush2.msra.mxu0 0.0
      %6382 = vmatprep.subr.mxu0 0.0
      %6383 = vmatpush2.msra.mxu0 0.0
      %6384 = vmatprep.subr.mxu0 0.0
      %6385 = vmatpush2.msra.mxu0 0.0
      %6386 = vmatprep.subr.mxu0 0.0
      %6387 = vmatpush2.msra.mxu0 0.0
      %6388 = vmatprep.subr.mxu0 0.0
      %6389 = vmatpush2.msra.mxu0 0.0
      %6390 = vmatprep.subr.mxu0 0.0
      %6391 = vmatpush2.msra.mxu0 0.0
      %6392 = vmatprep.subr.mxu0 0.0
      %6393 = vmatpush2.msra.mxu0 0.0
      %6394 = vmatprep.subr.mxu0 0.0
      %6395 = vmatpush2.msra.mxu0 0.0
      %6396 = vmatprep.subr.mxu0 0.0
      %6397 = vmatpush2.msra.mxu0 0.0
      %6398 = vmatprep.subr.mxu0 0.0
      %6399 = vmatpush2.msra.mxu0 0.0
      %6400 = vmatprep.mubr.f32.mxu0 0.0
      %6401 = vmatmul.mubr.f32.gmra.mxu0 %v6331
      %v6402 = vpop.f32.mrf.mxu0
      %v6403 = vadd.f32 0.0, %v6402
      %v6404 = vpop.f32.mrf.mxu0
      %6405 = vmatprep.mubr.f32.mxu0 0.0
      %6406 = vmatmul.mubr.f32.gmra.mxu0 %v6334
      %v6407 = vpop.f32.mrf.mxu0
      %v6408 = vadd.f32 0.0, %v6407
      %v6409 = vpop.f32.mrf.mxu0
      %6410 = vdwg.mxu0
      %6411 = vrot.lane.b32.xlu0 %v1145, 88
      %v6412 = vpop.permute.xlu0 %6411
      %6413 = vrot.lane.b32.xlu0 %v1146, 88
      %v6414 = vpop.permute.xlu0 %6413
      %v6418 = vsel %vm457, %v6124, 0
      %v6421 = vsel %vm457, %v6125, 0
      %6423 = vmatprep.subr.mxu0 0.0
      %6424 = vmatpush1.msra.mxu0 0.0
      %6425 = vmatprep.subr.mxu0 0.0
      %6426 = vmatpush1.msra.mxu0 0.0
      %6427 = vmatprep.subr.mxu0 0.0
      %6428 = vmatpush1.msra.mxu0 0.0
      %6429 = vmatprep.subr.mxu0 0.0
      %6430 = vmatpush1.msra.mxu0 0.0
      %6431 = vmatprep.subr.mxu0 0.0
      %6432 = vmatpush1.msra.mxu0 0.0
      %6433 = vmatprep.subr.mxu0 0.0
      %6434 = vmatpush1.msra.mxu0 0.0
      %6435 = vmatprep.subr.mxu0 0.0
      %6436 = vmatpush1.msra.mxu0 0.0
      %6437 = vmatprep.subr.mxu0 0.0
      %6438 = vmatpush1.msra.mxu0 0.0
      %6439 = vmatprep.subr.mxu0 0.0
      %6440 = vmatpush1.msra.mxu0 0.0
      %6441 = vmatprep.subr.mxu0 0.0
      %6442 = vmatpush1.msra.mxu0 0.0
      %6443 = vmatprep.subr.mxu0 0.0
      %6444 = vmatpush1.msra.mxu0 0.0
      %6445 = vmatprep.subr.mxu0 0.0
      %6446 = vmatpush1.msra.mxu0 0.0
      %6447 = vmatprep.subr.mxu0 0.0
      %6448 = vmatpush1.msra.mxu0 0.0
      %6449 = vmatprep.subr.mxu0 0.0
      %6450 = vmatpush1.msra.mxu0 0.0
      %6451 = vmatprep.subr.mxu0 0.0
      %6452 = vmatpush1.msra.mxu0 %v6414
      %6453 = vmatprep.subr.mxu0 0.0
      %6454 = vmatpush1.msra.mxu0 %v6412
      %6455 = vmatprep.subr.mxu0 0.0
      %6456 = vmatpush2.msra.mxu0 0.0
      %6457 = vmatprep.subr.mxu0 0.0
      %6458 = vmatpush2.msra.mxu0 0.0
      %6459 = vmatprep.subr.mxu0 0.0
      %6460 = vmatpush2.msra.mxu0 0.0
      %6461 = vmatprep.subr.mxu0 0.0
      %6462 = vmatpush2.msra.mxu0 0.0
      %6463 = vmatprep.subr.mxu0 0.0
      %6464 = vmatpush2.msra.mxu0 0.0
      %6465 = vmatprep.subr.mxu0 0.0
      %6466 = vmatpush2.msra.mxu0 0.0
      %6467 = vmatprep.subr.mxu0 0.0
      %6468 = vmatpush2.msra.mxu0 0.0
      %6469 = vmatprep.subr.mxu0 0.0
      %6470 = vmatpush2.msra.mxu0 0.0
      %6471 = vmatprep.subr.mxu0 0.0
      %6472 = vmatpush2.msra.mxu0 0.0
      %6473 = vmatprep.subr.mxu0 0.0
      %6474 = vmatpush2.msra.mxu0 0.0
      %6475 = vmatprep.subr.mxu0 0.0
      %6476 = vmatpush2.msra.mxu0 0.0
      %6477 = vmatprep.subr.mxu0 0.0
      %6478 = vmatpush2.msra.mxu0 0.0
      %6479 = vmatprep.subr.mxu0 0.0
      %6480 = vmatpush2.msra.mxu0 0.0
      %6481 = vmatprep.subr.mxu0 0.0
      %6482 = vmatpush2.msra.mxu0 0.0
      %6483 = vmatprep.subr.mxu0 0.0
      %6484 = vmatpush2.msra.mxu0 0.0
      %6485 = vmatprep.subr.mxu0 0.0
      %6486 = vmatpush2.msra.mxu0 0.0
      %6487 = vmatprep.mubr.f32.mxu0 0.0
      %6488 = vmatmul.mubr.f32.gmra.mxu0 %v6418
      %v6489 = vpop.f32.mrf.mxu0
      %v6490 = vadd.f32 0.0, %v6489
      %v6491 = vpop.f32.mrf.mxu0
      %6492 = vmatprep.mubr.f32.mxu0 0.0
      %6493 = vmatmul.mubr.f32.gmra.mxu0 %v6421
      %v6494 = vpop.f32.mrf.mxu0
      %v6495 = vadd.f32 0.0, %v6494
      %v6496 = vpop.f32.mrf.mxu0
      %6497 = vdwg.mxu0
      %6498 = vrot.lane.b32.xlu0 %v1147, 88
      %v6499 = vpop.permute.xlu0 %6498
      %6500 = vrot.lane.b32.xlu0 %v1148, 88
      %v6501 = vpop.permute.xlu0 %6500
      %v6505 = vsel %vm457, %v6126, 0
      %v6508 = vsel %vm457, %v6127, 0
      %6510 = vmatprep.subr.mxu0 0.0
      %6511 = vmatpush1.msra.mxu0 0.0
      %6512 = vmatprep.subr.mxu0 0.0
      %6513 = vmatpush1.msra.mxu0 0.0
      %6514 = vmatprep.subr.mxu0 0.0
      %6515 = vmatpush1.msra.mxu0 0.0
      %6516 = vmatprep.subr.mxu0 0.0
      %6517 = vmatpush1.msra.mxu0 0.0
      %6518 = vmatprep.subr.mxu0 0.0
      %6519 = vmatpush1.msra.mxu0 0.0
      %6520 = vmatprep.subr.mxu0 0.0
      %6521 = vmatpush1.msra.mxu0 0.0
      %6522 = vmatprep.subr.mxu0 0.0
      %6523 = vmatpush1.msra.mxu0 0.0
      %6524 = vmatprep.subr.mxu0 0.0
      %6525 = vmatpush1.msra.mxu0 0.0
      %6526 = vmatprep.subr.mxu0 0.0
      %6527 = vmatpush1.msra.mxu0 0.0
      %6528 = vmatprep.subr.mxu0 0.0
      %6529 = vmatpush1.msra.mxu0 0.0
      %6530 = vmatprep.subr.mxu0 0.0
      %6531 = vmatpush1.msra.mxu0 0.0
      %6532 = vmatprep.subr.mxu0 0.0
      %6533 = vmatpush1.msra.mxu0 0.0
      %6534 = vmatprep.subr.mxu0 0.0
      %6535 = vmatpush1.msra.mxu0 0.0
      %6536 = vmatprep.subr.mxu0 0.0
      %6537 = vmatpush1.msra.mxu0 0.0
      %6538 = vmatprep.subr.mxu0 0.0
      %6539 = vmatpush1.msra.mxu0 %v6501
      %6540 = vmatprep.subr.mxu0 0.0
      %6541 = vmatpush1.msra.mxu0 %v6499
      %6542 = vmatprep.subr.mxu0 0.0
      %6543 = vmatpush2.msra.mxu0 0.0
      %6544 = vmatprep.subr.mxu0 0.0
      %6545 = vmatpush2.msra.mxu0 0.0
      %6546 = vmatprep.subr.mxu0 0.0
      %6547 = vmatpush2.msra.mxu0 0.0
      %6548 = vmatprep.subr.mxu0 0.0
      %6549 = vmatpush2.msra.mxu0 0.0
      %6550 = vmatprep.subr.mxu0 0.0
      %6551 = vmatpush2.msra.mxu0 0.0
      %6552 = vmatprep.subr.mxu0 0.0
      %6553 = vmatpush2.msra.mxu0 0.0
      %6554 = vmatprep.subr.mxu0 0.0
      %6555 = vmatpush2.msra.mxu0 0.0
      %6556 = vmatprep.subr.mxu0 0.0
      %6557 = vmatpush2.msra.mxu0 0.0
      %6558 = vmatprep.subr.mxu0 0.0
      %6559 = vmatpush2.msra.mxu0 0.0
      %6560 = vmatprep.subr.mxu0 0.0
      %6561 = vmatpush2.msra.mxu0 0.0
      %6562 = vmatprep.subr.mxu0 0.0
      %6563 = vmatpush2.msra.mxu0 0.0
      %6564 = vmatprep.subr.mxu0 0.0
      %6565 = vmatpush2.msra.mxu0 0.0
      %6566 = vmatprep.subr.mxu0 0.0
      %6567 = vmatpush2.msra.mxu0 0.0
      %6568 = vmatprep.subr.mxu0 0.0
      %6569 = vmatpush2.msra.mxu0 0.0
      %6570 = vmatprep.subr.mxu0 0.0
      %6571 = vmatpush2.msra.mxu0 0.0
      %6572 = vmatprep.subr.mxu0 0.0
      %6573 = vmatpush2.msra.mxu0 0.0
      %6574 = vmatprep.mubr.f32.mxu0 0.0
      %6575 = vmatmul.mubr.f32.gmra.mxu0 %v6505
      %v6576 = vpop.f32.mrf.mxu0
      %v6577 = vadd.f32 0.0, %v6576
      %v6578 = vpop.f32.mrf.mxu0
      %6579 = vmatprep.mubr.f32.mxu0 0.0
      %6580 = vmatmul.mubr.f32.gmra.mxu0 %v6508
      %v6581 = vpop.f32.mrf.mxu0
      %v6582 = vadd.f32 0.0, %v6581
      %v6583 = vpop.f32.mrf.mxu0
      %6584 = vdwg.mxu0
      %6585 = vrot.lane.b32.xlu0 %v1149, 88
      %v6586 = vpop.permute.xlu0 %6585
      %6587 = vrot.lane.b32.xlu0 %v1150, 88
      %v6588 = vpop.permute.xlu0 %6587
      %v6592 = vsel %vm457, %v6128, 0
      %v6595 = vsel %vm457, %v6129, 0
      %6597 = vmatprep.subr.mxu0 0.0
      %6598 = vmatpush1.msra.mxu0 0.0
      %6599 = vmatprep.subr.mxu0 0.0
      %6600 = vmatpush1.msra.mxu0 0.0
      %6601 = vmatprep.subr.mxu0 0.0
      %6602 = vmatpush1.msra.mxu0 0.0
      %6603 = vmatprep.subr.mxu0 0.0
      %6604 = vmatpush1.msra.mxu0 0.0
      %6605 = vmatprep.subr.mxu0 0.0
      %6606 = vmatpush1.msra.mxu0 0.0
      %6607 = vmatprep.subr.mxu0 0.0
      %6608 = vmatpush1.msra.mxu0 0.0
      %6609 = vmatprep.subr.mxu0 0.0
      %6610 = vmatpush1.msra.mxu0 0.0
      %6611 = vmatprep.subr.mxu0 0.0
      %6612 = vmatpush1.msra.mxu0 0.0
      %6613 = vmatprep.subr.mxu0 0.0
      %6614 = vmatpush1.msra.mxu0 0.0
      %6615 = vmatprep.subr.mxu0 0.0
      %6616 = vmatpush1.msra.mxu0 0.0
      %6617 = vmatprep.subr.mxu0 0.0
      %6618 = vmatpush1.msra.mxu0 0.0
      %6619 = vmatprep.subr.mxu0 0.0
      %6620 = vmatpush1.msra.mxu0 0.0
      %6621 = vmatprep.subr.mxu0 0.0
      %6622 = vmatpush1.msra.mxu0 0.0
      %6623 = vmatprep.subr.mxu0 0.0
      %6624 = vmatpush1.msra.mxu0 0.0
      %6625 = vmatprep.subr.mxu0 0.0
      %6626 = vmatpush1.msra.mxu0 %v6588
      %6627 = vmatprep.subr.mxu0 0.0
      %6628 = vmatpush1.msra.mxu0 %v6586
      %6629 = vmatprep.subr.mxu0 0.0
      %6630 = vmatpush2.msra.mxu0 0.0
      %6631 = vmatprep.subr.mxu0 0.0
      %6632 = vmatpush2.msra.mxu0 0.0
      %6633 = vmatprep.subr.mxu0 0.0
      %6634 = vmatpush2.msra.mxu0 0.0
      %6635 = vmatprep.subr.mxu0 0.0
      %6636 = vmatpush2.msra.mxu0 0.0
      %6637 = vmatprep.subr.mxu0 0.0
      %6638 = vmatpush2.msra.mxu0 0.0
      %6639 = vmatprep.subr.mxu0 0.0
      %6640 = vmatpush2.msra.mxu0 0.0
      %6641 = vmatprep.subr.mxu0 0.0
      %6642 = vmatpush2.msra.mxu0 0.0
      %6643 = vmatprep.subr.mxu0 0.0
      %6644 = vmatpush2.msra.mxu0 0.0
      %6645 = vmatprep.subr.mxu0 0.0
      %6646 = vmatpush2.msra.mxu0 0.0
      %6647 = vmatprep.subr.mxu0 0.0
      %6648 = vmatpush2.msra.mxu0 0.0
      %6649 = vmatprep.subr.mxu0 0.0
      %6650 = vmatpush2.msra.mxu0 0.0
      %6651 = vmatprep.subr.mxu0 0.0
      %6652 = vmatpush2.msra.mxu0 0.0
      %6653 = vmatprep.subr.mxu0 0.0
      %6654 = vmatpush2.msra.mxu0 0.0
      %6655 = vmatprep.subr.mxu0 0.0
      %6656 = vmatpush2.msra.mxu0 0.0
      %6657 = vmatprep.subr.mxu0 0.0
      %6658 = vmatpush2.msra.mxu0 0.0
      %6659 = vmatprep.subr.mxu0 0.0
      %6660 = vmatpush2.msra.mxu0 0.0
      %6661 = vmatprep.mubr.f32.mxu0 0.0
      %6662 = vmatmul.mubr.f32.gmra.mxu0 %v6592
      %v6663 = vpop.f32.mrf.mxu0
      %v6664 = vadd.f32 0.0, %v6663
      %v6665 = vpop.f32.mrf.mxu0
      %6666 = vmatprep.mubr.f32.mxu0 0.0
      %6667 = vmatmul.mubr.f32.gmra.mxu0 %v6595
      %v6668 = vpop.f32.mrf.mxu0
      %v6669 = vadd.f32 0.0, %v6668
      %v6670 = vpop.f32.mrf.mxu0
      %6671 = vdwg.mxu0
      %6672 = vrot.lane.b32.xlu0 %v1151, 88
      %v6673 = vpop.permute.xlu0 %6672
      %6674 = vrot.lane.b32.xlu0 %v1152, 88
      %v6675 = vpop.permute.xlu0 %6674
      %v6679 = vsel %vm457, %v6130, 0
      %v6682 = vsel %vm457, %v6131, 0
      %6684 = vmatprep.subr.mxu0 0.0
      %6685 = vmatpush1.msra.mxu0 0.0
      %6686 = vmatprep.subr.mxu0 0.0
      %6687 = vmatpush1.msra.mxu0 0.0
      %6688 = vmatprep.subr.mxu0 0.0
      %6689 = vmatpush1.msra.mxu0 0.0
      %6690 = vmatprep.subr.mxu0 0.0
      %6691 = vmatpush1.msra.mxu0 0.0
      %6692 = vmatprep.subr.mxu0 0.0
      %6693 = vmatpush1.msra.mxu0 0.0
      %6694 = vmatprep.subr.mxu0 0.0
      %6695 = vmatpush1.msra.mxu0 0.0
      %6696 = vmatprep.subr.mxu0 0.0
      %6697 = vmatpush1.msra.mxu0 0.0
      %6698 = vmatprep.subr.mxu0 0.0
      %6699 = vmatpush1.msra.mxu0 0.0
      %6700 = vmatprep.subr.mxu0 0.0
      %6701 = vmatpush1.msra.mxu0 0.0
      %6702 = vmatprep.subr.mxu0 0.0
      %6703 = vmatpush1.msra.mxu0 0.0
      %6704 = vmatprep.subr.mxu0 0.0
      %6705 = vmatpush1.msra.mxu0 0.0
      %6706 = vmatprep.subr.mxu0 0.0
      %6707 = vmatpush1.msra.mxu0 0.0
      %6708 = vmatprep.subr.mxu0 0.0
      %6709 = vmatpush1.msra.mxu0 0.0
      %6710 = vmatprep.subr.mxu0 0.0
      %6711 = vmatpush1.msra.mxu0 0.0
      %6712 = vmatprep.subr.mxu0 0.0
      %6713 = vmatpush1.msra.mxu0 %v6675
      %6714 = vmatprep.subr.mxu0 0.0
      %6715 = vmatpush1.msra.mxu0 %v6673
      %6716 = vmatprep.subr.mxu0 0.0
      %6717 = vmatpush2.msra.mxu0 0.0
      %6718 = vmatprep.subr.mxu0 0.0
      %6719 = vmatpush2.msra.mxu0 0.0
      %6720 = vmatprep.subr.mxu0 0.0
      %6721 = vmatpush2.msra.mxu0 0.0
      %6722 = vmatprep.subr.mxu0 0.0
      %6723 = vmatpush2.msra.mxu0 0.0
      %6724 = vmatprep.subr.mxu0 0.0
      %6725 = vmatpush2.msra.mxu0 0.0
      %6726 = vmatprep.subr.mxu0 0.0
      %6727 = vmatpush2.msra.mxu0 0.0
      %6728 = vmatprep.subr.mxu0 0.0
      %6729 = vmatpush2.msra.mxu0 0.0
      %6730 = vmatprep.subr.mxu0 0.0
      %6731 = vmatpush2.msra.mxu0 0.0
      %6732 = vmatprep.subr.mxu0 0.0
      %6733 = vmatpush2.msra.mxu0 0.0
      %6734 = vmatprep.subr.mxu0 0.0
      %6735 = vmatpush2.msra.mxu0 0.0
      %6736 = vmatprep.subr.mxu0 0.0
      %6737 = vmatpush2.msra.mxu0 0.0
      %6738 = vmatprep.subr.mxu0 0.0
      %6739 = vmatpush2.msra.mxu0 0.0
      %6740 = vmatprep.subr.mxu0 0.0
      %6741 = vmatpush2.msra.mxu0 0.0
      %6742 = vmatprep.subr.mxu0 0.0
      %6743 = vmatpush2.msra.mxu0 0.0
      %6744 = vmatprep.subr.mxu0 0.0
      %6745 = vmatpush2.msra.mxu0 0.0
      %6746 = vmatprep.subr.mxu0 0.0
      %6747 = vmatpush2.msra.mxu0 0.0
      %6748 = vmatprep.mubr.f32.mxu0 0.0
      %6749 = vmatmul.mubr.f32.gmra.mxu0 %v6679
      %v6750 = vpop.f32.mrf.mxu0
      %v6751 = vadd.f32 0.0, %v6750
      %v6752 = vpop.f32.mrf.mxu0
      %6753 = vmatprep.mubr.f32.mxu0 0.0
      %6754 = vmatmul.mubr.f32.gmra.mxu0 %v6682
      %v6755 = vpop.f32.mrf.mxu0
      %v6756 = vadd.f32 0.0, %v6755
      %v6757 = vpop.f32.mrf.mxu0
      %6758 = vdwg.mxu0
      %6759 = vrot.lane.b32.xlu0 %v1153, 88
      %v6760 = vpop.permute.xlu0 %6759
      %6761 = vrot.lane.b32.xlu0 %v1154, 88
      %v6762 = vpop.permute.xlu0 %6761
      %v6766 = vsel %vm457, %v6132, 0
      %v6769 = vsel %vm457, %v6133, 0
      %6771 = vmatprep.subr.mxu0 0.0
      %6772 = vmatpush1.msra.mxu0 0.0
      %6773 = vmatprep.subr.mxu0 0.0
      %6774 = vmatpush1.msra.mxu0 0.0
      %6775 = vmatprep.subr.mxu0 0.0
      %6776 = vmatpush1.msra.mxu0 0.0
      %6777 = vmatprep.subr.mxu0 0.0
      %6778 = vmatpush1.msra.mxu0 0.0
      %6779 = vmatprep.subr.mxu0 0.0
      %6780 = vmatpush1.msra.mxu0 0.0
      %6781 = vmatprep.subr.mxu0 0.0
      %6782 = vmatpush1.msra.mxu0 0.0
      %6783 = vmatprep.subr.mxu0 0.0
      %6784 = vmatpush1.msra.mxu0 0.0
      %6785 = vmatprep.subr.mxu0 0.0
      %6786 = vmatpush1.msra.mxu0 0.0
      %6787 = vmatprep.subr.mxu0 0.0
      %6788 = vmatpush1.msra.mxu0 0.0
      %6789 = vmatprep.subr.mxu0 0.0
      %6790 = vmatpush1.msra.mxu0 0.0
      %6791 = vmatprep.subr.mxu0 0.0
      %6792 = vmatpush1.msra.mxu0 0.0
      %6793 = vmatprep.subr.mxu0 0.0
      %6794 = vmatpush1.msra.mxu0 0.0
      %6795 = vmatprep.subr.mxu0 0.0
      %6796 = vmatpush1.msra.mxu0 0.0
      %6797 = vmatprep.subr.mxu0 0.0
      %6798 = vmatpush1.msra.mxu0 0.0
      %6799 = vmatprep.subr.mxu0 0.0
      %6800 = vmatpush1.msra.mxu0 %v6762
      %6801 = vmatprep.subr.mxu0 0.0
      %6802 = vmatpush1.msra.mxu0 %v6760
      %6803 = vmatprep.subr.mxu0 0.0
      %6804 = vmatpush2.msra.mxu0 0.0
      %6805 = vmatprep.subr.mxu0 0.0
      %6806 = vmatpush2.msra.mxu0 0.0
      %6807 = vmatprep.subr.mxu0 0.0
      %6808 = vmatpush2.msra.mxu0 0.0
      %6809 = vmatprep.subr.mxu0 0.0
      %6810 = vmatpush2.msra.mxu0 0.0
      %6811 = vmatprep.subr.mxu0 0.0
      %6812 = vmatpush2.msra.mxu0 0.0
      %6813 = vmatprep.subr.mxu0 0.0
      %6814 = vmatpush2.msra.mxu0 0.0
      %6815 = vmatprep.subr.mxu0 0.0
      %6816 = vmatpush2.msra.mxu0 0.0
      %6817 = vmatprep.subr.mxu0 0.0
      %6818 = vmatpush2.msra.mxu0 0.0
      %6819 = vmatprep.subr.mxu0 0.0
      %6820 = vmatpush2.msra.mxu0 0.0
      %6821 = vmatprep.subr.mxu0 0.0
      %6822 = vmatpush2.msra.mxu0 0.0
      %6823 = vmatprep.subr.mxu0 0.0
      %6824 = vmatpush2.msra.mxu0 0.0
      %6825 = vmatprep.subr.mxu0 0.0
      %6826 = vmatpush2.msra.mxu0 0.0
      %6827 = vmatprep.subr.mxu0 0.0
      %6828 = vmatpush2.msra.mxu0 0.0
      %6829 = vmatprep.subr.mxu0 0.0
      %6830 = vmatpush2.msra.mxu0 0.0
      %6831 = vmatprep.subr.mxu0 0.0
      %6832 = vmatpush2.msra.mxu0 0.0
      %6833 = vmatprep.subr.mxu0 0.0
      %6834 = vmatpush2.msra.mxu0 0.0
      %6835 = vmatprep.mubr.f32.mxu0 0.0
      %6836 = vmatmul.mubr.f32.gmra.mxu0 %v6766
      %v6837 = vpop.f32.mrf.mxu0
      %v6838 = vadd.f32 0.0, %v6837
      %v6839 = vpop.f32.mrf.mxu0
      %6840 = vmatprep.mubr.f32.mxu0 0.0
      %6841 = vmatmul.mubr.f32.gmra.mxu0 %v6769
      %v6842 = vpop.f32.mrf.mxu0
      %v6843 = vadd.f32 0.0, %v6842
      %v6844 = vpop.f32.mrf.mxu0
      %6845 = vdwg.mxu0
      %6846 = vrot.lane.b32.xlu0 %v1155, 88
      %v6847 = vpop.permute.xlu0 %6846
      %6848 = vrot.lane.b32.xlu0 %v1156, 88
      %v6849 = vpop.permute.xlu0 %6848
      %v6853 = vsel %vm457, %v6134, 0
      %v6856 = vsel %vm457, %v6135, 0
      %6858 = vmatprep.subr.mxu0 0.0
      %6859 = vmatpush1.msra.mxu0 0.0
      %6860 = vmatprep.subr.mxu0 0.0
      %6861 = vmatpush1.msra.mxu0 0.0
      %6862 = vmatprep.subr.mxu0 0.0
      %6863 = vmatpush1.msra.mxu0 0.0
      %6864 = vmatprep.subr.mxu0 0.0
      %6865 = vmatpush1.msra.mxu0 0.0
      %6866 = vmatprep.subr.mxu0 0.0
      %6867 = vmatpush1.msra.mxu0 0.0
      %6868 = vmatprep.subr.mxu0 0.0
      %6869 = vmatpush1.msra.mxu0 0.0
      %6870 = vmatprep.subr.mxu0 0.0
      %6871 = vmatpush1.msra.mxu0 0.0
      %6872 = vmatprep.subr.mxu0 0.0
      %6873 = vmatpush1.msra.mxu0 0.0
      %6874 = vmatprep.subr.mxu0 0.0
      %6875 = vmatpush1.msra.mxu0 0.0
      %6876 = vmatprep.subr.mxu0 0.0
      %6877 = vmatpush1.msra.mxu0 0.0
      %6878 = vmatprep.subr.mxu0 0.0
      %6879 = vmatpush1.msra.mxu0 0.0
      %6880 = vmatprep.subr.mxu0 0.0
      %6881 = vmatpush1.msra.mxu0 0.0
      %6882 = vmatprep.subr.mxu0 0.0
      %6883 = vmatpush1.msra.mxu0 0.0
      %6884 = vmatprep.subr.mxu0 0.0
      %6885 = vmatpush1.msra.mxu0 0.0
      %6886 = vmatprep.subr.mxu0 0.0
      %6887 = vmatpush1.msra.mxu0 %v6849
      %6888 = vmatprep.subr.mxu0 0.0
      %6889 = vmatpush1.msra.mxu0 %v6847
      %6890 = vmatprep.subr.mxu0 0.0
      %6891 = vmatpush2.msra.mxu0 0.0
      %6892 = vmatprep.subr.mxu0 0.0
      %6893 = vmatpush2.msra.mxu0 0.0
      %6894 = vmatprep.subr.mxu0 0.0
      %6895 = vmatpush2.msra.mxu0 0.0
      %6896 = vmatprep.subr.mxu0 0.0
      %6897 = vmatpush2.msra.mxu0 0.0
      %6898 = vmatprep.subr.mxu0 0.0
      %6899 = vmatpush2.msra.mxu0 0.0
      %6900 = vmatprep.subr.mxu0 0.0
      %6901 = vmatpush2.msra.mxu0 0.0
      %6902 = vmatprep.subr.mxu0 0.0
      %6903 = vmatpush2.msra.mxu0 0.0
      %6904 = vmatprep.subr.mxu0 0.0
      %6905 = vmatpush2.msra.mxu0 0.0
      %6906 = vmatprep.subr.mxu0 0.0
      %6907 = vmatpush2.msra.mxu0 0.0
      %6908 = vmatprep.subr.mxu0 0.0
      %6909 = vmatpush2.msra.mxu0 0.0
      %6910 = vmatprep.subr.mxu0 0.0
      %6911 = vmatpush2.msra.mxu0 0.0
      %6912 = vmatprep.subr.mxu0 0.0
      %6913 = vmatpush2.msra.mxu0 0.0
      %6914 = vmatprep.subr.mxu0 0.0
      %6915 = vmatpush2.msra.mxu0 0.0
      %6916 = vmatprep.subr.mxu0 0.0
      %6917 = vmatpush2.msra.mxu0 0.0
      %6918 = vmatprep.subr.mxu0 0.0
      %6919 = vmatpush2.msra.mxu0 0.0
      %6920 = vmatprep.subr.mxu0 0.0
      %6921 = vmatpush2.msra.mxu0 0.0
      %6922 = vmatprep.mubr.f32.mxu0 0.0
      %6923 = vmatmul.mubr.f32.gmra.mxu0 %v6853
      %v6924 = vpop.f32.mrf.mxu0
      %v6925 = vadd.f32 0.0, %v6924
      %v6926 = vpop.f32.mrf.mxu0
      %6927 = vmatprep.mubr.f32.mxu0 0.0
      %6928 = vmatmul.mubr.f32.gmra.mxu0 %v6856
      %v6929 = vpop.f32.mrf.mxu0
      %v6930 = vadd.f32 0.0, %v6929
      %v6931 = vpop.f32.mrf.mxu0
      %6932 = vdwg.mxu0
      %6933 = vrot.lane.b32.xlu0 %v1157, 88
      %v6934 = vpop.permute.xlu0 %6933
      %6935 = vrot.lane.b32.xlu0 %v1158, 88
      %v6936 = vpop.permute.xlu0 %6935
      %v6940 = vsel %vm457, %v6136, 0
      %v6943 = vsel %vm457, %v6137, 0
      %6945 = vmatprep.subr.mxu0 0.0
      %6946 = vmatpush1.msra.mxu0 0.0
      %6947 = vmatprep.subr.mxu0 0.0
      %6948 = vmatpush1.msra.mxu0 0.0
      %6949 = vmatprep.subr.mxu0 0.0
      %6950 = vmatpush1.msra.mxu0 0.0
      %6951 = vmatprep.subr.mxu0 0.0
      %6952 = vmatpush1.msra.mxu0 0.0
      %6953 = vmatprep.subr.mxu0 0.0
      %6954 = vmatpush1.msra.mxu0 0.0
      %6955 = vmatprep.subr.mxu0 0.0
      %6956 = vmatpush1.msra.mxu0 0.0
      %6957 = vmatprep.subr.mxu0 0.0
      %6958 = vmatpush1.msra.mxu0 0.0
      %6959 = vmatprep.subr.mxu0 0.0
      %6960 = vmatpush1.msra.mxu0 0.0
      %6961 = vmatprep.subr.mxu0 0.0
      %6962 = vmatpush1.msra.mxu0 0.0
      %6963 = vmatprep.subr.mxu0 0.0
      %6964 = vmatpush1.msra.mxu0 0.0
      %6965 = vmatprep.subr.mxu0 0.0
      %6966 = vmatpush1.msra.mxu0 0.0
      %6967 = vmatprep.subr.mxu0 0.0
      %6968 = vmatpush1.msra.mxu0 0.0
      %6969 = vmatprep.subr.mxu0 0.0
      %6970 = vmatpush1.msra.mxu0 0.0
      %6971 = vmatprep.subr.mxu0 0.0
      %6972 = vmatpush1.msra.mxu0 0.0
      %6973 = vmatprep.subr.mxu0 0.0
      %6974 = vmatpush1.msra.mxu0 %v6936
      %6975 = vmatprep.subr.mxu0 0.0
      %6976 = vmatpush1.msra.mxu0 %v6934
      %6977 = vmatprep.subr.mxu0 0.0
      %6978 = vmatpush2.msra.mxu0 0.0
      %6979 = vmatprep.subr.mxu0 0.0
      %6980 = vmatpush2.msra.mxu0 0.0
      %6981 = vmatprep.subr.mxu0 0.0
      %6982 = vmatpush2.msra.mxu0 0.0
      %6983 = vmatprep.subr.mxu0 0.0
      %6984 = vmatpush2.msra.mxu0 0.0
      %6985 = vmatprep.subr.mxu0 0.0
      %6986 = vmatpush2.msra.mxu0 0.0
      %6987 = vmatprep.subr.mxu0 0.0
      %6988 = vmatpush2.msra.mxu0 0.0
      %6989 = vmatprep.subr.mxu0 0.0
      %6990 = vmatpush2.msra.mxu0 0.0
      %6991 = vmatprep.subr.mxu0 0.0
      %6992 = vmatpush2.msra.mxu0 0.0
      %6993 = vmatprep.subr.mxu0 0.0
      %6994 = vmatpush2.msra.mxu0 0.0
      %6995 = vmatprep.subr.mxu0 0.0
      %6996 = vmatpush2.msra.mxu0 0.0
      %6997 = vmatprep.subr.mxu0 0.0
      %6998 = vmatpush2.msra.mxu0 0.0
      %6999 = vmatprep.subr.mxu0 0.0
      %7000 = vmatpush2.msra.mxu0 0.0
      %7001 = vmatprep.subr.mxu0 0.0
      %7002 = vmatpush2.msra.mxu0 0.0
      %7003 = vmatprep.subr.mxu0 0.0
      %7004 = vmatpush2.msra.mxu0 0.0
      %7005 = vmatprep.subr.mxu0 0.0
      %7006 = vmatpush2.msra.mxu0 0.0
      %7007 = vmatprep.subr.mxu0 0.0
      %7008 = vmatpush2.msra.mxu0 0.0
      %7009 = vmatprep.mubr.f32.mxu0 0.0
      %7010 = vmatmul.mubr.f32.gmra.mxu0 %v6940
      %v7011 = vpop.f32.mrf.mxu0
      %v7012 = vadd.f32 0.0, %v7011
      %v7013 = vpop.f32.mrf.mxu0
      %7014 = vmatprep.mubr.f32.mxu0 0.0
      %7015 = vmatmul.mubr.f32.gmra.mxu0 %v6943
      %v7016 = vpop.f32.mrf.mxu0
      %v7017 = vadd.f32 0.0, %v7016
      %v7018 = vpop.f32.mrf.mxu0
      %7019 = vdwg.mxu0
      %7020 = vrot.lane.b32.xlu0 %v1159, 88
      %v7021 = vpop.permute.xlu0 %7020
      %7022 = vrot.lane.b32.xlu0 %v1160, 88
      %v7023 = vpop.permute.xlu0 %7022
      %v7027 = vsel %vm457, %v6138, 0
      %v7030 = vsel %vm457, %v6139, 0
      %7032 = vmatprep.subr.mxu0 0.0
      %7033 = vmatpush1.msra.mxu0 0.0
      %7034 = vmatprep.subr.mxu0 0.0
      %7035 = vmatpush1.msra.mxu0 0.0
      %7036 = vmatprep.subr.mxu0 0.0
      %7037 = vmatpush1.msra.mxu0 0.0
      %7038 = vmatprep.subr.mxu0 0.0
      %7039 = vmatpush1.msra.mxu0 0.0
      %7040 = vmatprep.subr.mxu0 0.0
      %7041 = vmatpush1.msra.mxu0 0.0
      %7042 = vmatprep.subr.mxu0 0.0
      %7043 = vmatpush1.msra.mxu0 0.0
      %7044 = vmatprep.subr.mxu0 0.0
      %7045 = vmatpush1.msra.mxu0 0.0
      %7046 = vmatprep.subr.mxu0 0.0
      %7047 = vmatpush1.msra.mxu0 0.0
      %7048 = vmatprep.subr.mxu0 0.0
      %7049 = vmatpush1.msra.mxu0 0.0
      %7050 = vmatprep.subr.mxu0 0.0
      %7051 = vmatpush1.msra.mxu0 0.0
      %7052 = vmatprep.subr.mxu0 0.0
      %7053 = vmatpush1.msra.mxu0 0.0
      %7054 = vmatprep.subr.mxu0 0.0
      %7055 = vmatpush1.msra.mxu0 0.0
      %7056 = vmatprep.subr.mxu0 0.0
      %7057 = vmatpush1.msra.mxu0 0.0
      %7058 = vmatprep.subr.mxu0 0.0
      %7059 = vmatpush1.msra.mxu0 0.0
      %7060 = vmatprep.subr.mxu0 0.0
      %7061 = vmatpush1.msra.mxu0 %v7023
      %7062 = vmatprep.subr.mxu0 0.0
      %7063 = vmatpush1.msra.mxu0 %v7021
      %7064 = vmatprep.subr.mxu0 0.0
      %7065 = vmatpush2.msra.mxu0 0.0
      %7066 = vmatprep.subr.mxu0 0.0
      %7067 = vmatpush2.msra.mxu0 0.0
      %7068 = vmatprep.subr.mxu0 0.0
      %7069 = vmatpush2.msra.mxu0 0.0
      %7070 = vmatprep.subr.mxu0 0.0
      %7071 = vmatpush2.msra.mxu0 0.0
      %7072 = vmatprep.subr.mxu0 0.0
      %7073 = vmatpush2.msra.mxu0 0.0
      %7074 = vmatprep.subr.mxu0 0.0
      %7075 = vmatpush2.msra.mxu0 0.0
      %7076 = vmatprep.subr.mxu0 0.0
      %7077 = vmatpush2.msra.mxu0 0.0
      %7078 = vmatprep.subr.mxu0 0.0
      %7079 = vmatpush2.msra.mxu0 0.0
      %7080 = vmatprep.subr.mxu0 0.0
      %7081 = vmatpush2.msra.mxu0 0.0
      %7082 = vmatprep.subr.mxu0 0.0
      %7083 = vmatpush2.msra.mxu0 0.0
      %7084 = vmatprep.subr.mxu0 0.0
      %7085 = vmatpush2.msra.mxu0 0.0
      %7086 = vmatprep.subr.mxu0 0.0
      %7087 = vmatpush2.msra.mxu0 0.0
      %7088 = vmatprep.subr.mxu0 0.0
      %7089 = vmatpush2.msra.mxu0 0.0
      %7090 = vmatprep.subr.mxu0 0.0
      %7091 = vmatpush2.msra.mxu0 0.0
      %7092 = vmatprep.subr.mxu0 0.0
      %7093 = vmatpush2.msra.mxu0 0.0
      %7094 = vmatprep.subr.mxu0 0.0
      %7095 = vmatpush2.msra.mxu0 0.0
      %7096 = vmatprep.mubr.f32.mxu0 0.0
      %7097 = vmatmul.mubr.f32.gmra.mxu0 %v7027
      %v7098 = vpop.f32.mrf.mxu0
      %v7099 = vadd.f32 0.0, %v7098
      %v7100 = vpop.f32.mrf.mxu0
      %7101 = vmatprep.mubr.f32.mxu0 0.0
      %7102 = vmatmul.mubr.f32.gmra.mxu0 %v7030
      %v7103 = vpop.f32.mrf.mxu0
      %v7104 = vadd.f32 0.0, %v7103
      %v7105 = vpop.f32.mrf.mxu0
      %7106 = vdwg.mxu0
      %7107 = vrot.lane.b32.xlu0 %v1161, 88
      %v7108 = vpop.permute.xlu0 %7107
      %7109 = vrot.lane.b32.xlu0 %v1162, 88
      %v7110 = vpop.permute.xlu0 %7109
      %v7114 = vsel %vm457, %v6140, 0
      %v7117 = vsel %vm457, %v6141, 0
      %7119 = vmatprep.subr.mxu0 0.0
      %7120 = vmatpush1.msra.mxu0 0.0
      %7121 = vmatprep.subr.mxu0 0.0
      %7122 = vmatpush1.msra.mxu0 0.0
      %7123 = vmatprep.subr.mxu0 0.0
      %7124 = vmatpush1.msra.mxu0 0.0
      %7125 = vmatprep.subr.mxu0 0.0
      %7126 = vmatpush1.msra.mxu0 0.0
      %7127 = vmatprep.subr.mxu0 0.0
      %7128 = vmatpush1.msra.mxu0 0.0
      %7129 = vmatprep.subr.mxu0 0.0
      %7130 = vmatpush1.msra.mxu0 0.0
      %7131 = vmatprep.subr.mxu0 0.0
      %7132 = vmatpush1.msra.mxu0 0.0
      %7133 = vmatprep.subr.mxu0 0.0
      %7134 = vmatpush1.msra.mxu0 0.0
      %7135 = vmatprep.subr.mxu0 0.0
      %7136 = vmatpush1.msra.mxu0 0.0
      %7137 = vmatprep.subr.mxu0 0.0
      %7138 = vmatpush1.msra.mxu0 0.0
      %7139 = vmatprep.subr.mxu0 0.0
      %7140 = vmatpush1.msra.mxu0 0.0
      %7141 = vmatprep.subr.mxu0 0.0
      %7142 = vmatpush1.msra.mxu0 0.0
      %7143 = vmatprep.subr.mxu0 0.0
      %7144 = vmatpush1.msra.mxu0 0.0
      %7145 = vmatprep.subr.mxu0 0.0
      %7146 = vmatpush1.msra.mxu0 0.0
      %7147 = vmatprep.subr.mxu0 0.0
      %7148 = vmatpush1.msra.mxu0 %v7110
      %7149 = vmatprep.subr.mxu0 0.0
      %7150 = vmatpush1.msra.mxu0 %v7108
      %7151 = vmatprep.subr.mxu0 0.0
      %7152 = vmatpush2.msra.mxu0 0.0
      %7153 = vmatprep.subr.mxu0 0.0
      %7154 = vmatpush2.msra.mxu0 0.0
      %7155 = vmatprep.subr.mxu0 0.0
      %7156 = vmatpush2.msra.mxu0 0.0
      %7157 = vmatprep.subr.mxu0 0.0
      %7158 = vmatpush2.msra.mxu0 0.0
      %7159 = vmatprep.subr.mxu0 0.0
      %7160 = vmatpush2.msra.mxu0 0.0
      %7161 = vmatprep.subr.mxu0 0.0
      %7162 = vmatpush2.msra.mxu0 0.0
      %7163 = vmatprep.subr.mxu0 0.0
      %7164 = vmatpush2.msra.mxu0 0.0
      %7165 = vmatprep.subr.mxu0 0.0
      %7166 = vmatpush2.msra.mxu0 0.0
      %7167 = vmatprep.subr.mxu0 0.0
      %7168 = vmatpush2.msra.mxu0 0.0
      %7169 = vmatprep.subr.mxu0 0.0
      %7170 = vmatpush2.msra.mxu0 0.0
      %7171 = vmatprep.subr.mxu0 0.0
      %7172 = vmatpush2.msra.mxu0 0.0
      %7173 = vmatprep.subr.mxu0 0.0
      %7174 = vmatpush2.msra.mxu0 0.0
      %7175 = vmatprep.subr.mxu0 0.0
      %7176 = vmatpush2.msra.mxu0 0.0
      %7177 = vmatprep.subr.mxu0 0.0
      %7178 = vmatpush2.msra.mxu0 0.0
      %7179 = vmatprep.subr.mxu0 0.0
      %7180 = vmatpush2.msra.mxu0 0.0
      %7181 = vmatprep.subr.mxu0 0.0
      %7182 = vmatpush2.msra.mxu0 0.0
      %7183 = vmatprep.mubr.f32.mxu0 0.0
      %7184 = vmatmul.mubr.f32.gmra.mxu0 %v7114
      %v7185 = vpop.f32.mrf.mxu0
      %v7186 = vadd.f32 0.0, %v7185
      %v7187 = vpop.f32.mrf.mxu0
      %7188 = vmatprep.mubr.f32.mxu0 0.0
      %7189 = vmatmul.mubr.f32.gmra.mxu0 %v7117
      %v7190 = vpop.f32.mrf.mxu0
      %v7191 = vadd.f32 0.0, %v7190
      %v7192 = vpop.f32.mrf.mxu0
      %7193 = vdwg.mxu0
      %7194 = vrot.lane.b32.xlu0 %v1163, 88
      %v7195 = vpop.permute.xlu0 %7194
      %7196 = vrot.lane.b32.xlu0 %v1164, 88
      %v7197 = vpop.permute.xlu0 %7196
      %v7201 = vsel %vm457, %v6142, 0
      %v7204 = vsel %vm457, %v6143, 0
      %7206 = vmatprep.subr.mxu0 0.0
      %7207 = vmatpush1.msra.mxu0 0.0
      %7208 = vmatprep.subr.mxu0 0.0
      %7209 = vmatpush1.msra.mxu0 0.0
      %7210 = vmatprep.subr.mxu0 0.0
      %7211 = vmatpush1.msra.mxu0 0.0
      %7212 = vmatprep.subr.mxu0 0.0
      %7213 = vmatpush1.msra.mxu0 0.0
      %7214 = vmatprep.subr.mxu0 0.0
      %7215 = vmatpush1.msra.mxu0 0.0
      %7216 = vmatprep.subr.mxu0 0.0
      %7217 = vmatpush1.msra.mxu0 0.0
      %7218 = vmatprep.subr.mxu0 0.0
      %7219 = vmatpush1.msra.mxu0 0.0
      %7220 = vmatprep.subr.mxu0 0.0
      %7221 = vmatpush1.msra.mxu0 0.0
      %7222 = vmatprep.subr.mxu0 0.0
      %7223 = vmatpush1.msra.mxu0 0.0
      %7224 = vmatprep.subr.mxu0 0.0
      %7225 = vmatpush1.msra.mxu0 0.0
      %7226 = vmatprep.subr.mxu0 0.0
      %7227 = vmatpush1.msra.mxu0 0.0
      %7228 = vmatprep.subr.mxu0 0.0
      %7229 = vmatpush1.msra.mxu0 0.0
      %7230 = vmatprep.subr.mxu0 0.0
      %7231 = vmatpush1.msra.mxu0 0.0
      %7232 = vmatprep.subr.mxu0 0.0
      %7233 = vmatpush1.msra.mxu0 0.0
      %7234 = vmatprep.subr.mxu0 0.0
      %7235 = vmatpush1.msra.mxu0 %v7197
      %7236 = vmatprep.subr.mxu0 0.0
      %7237 = vmatpush1.msra.mxu0 %v7195
      %7238 = vmatprep.subr.mxu0 0.0
      %7239 = vmatpush2.msra.mxu0 0.0
      %7240 = vmatprep.subr.mxu0 0.0
      %7241 = vmatpush2.msra.mxu0 0.0
      %7242 = vmatprep.subr.mxu0 0.0
      %7243 = vmatpush2.msra.mxu0 0.0
      %7244 = vmatprep.subr.mxu0 0.0
      %7245 = vmatpush2.msra.mxu0 0.0
      %7246 = vmatprep.subr.mxu0 0.0
      %7247 = vmatpush2.msra.mxu0 0.0
      %7248 = vmatprep.subr.mxu0 0.0
      %7249 = vmatpush2.msra.mxu0 0.0
      %7250 = vmatprep.subr.mxu0 0.0
      %7251 = vmatpush2.msra.mxu0 0.0
      %7252 = vmatprep.subr.mxu0 0.0
      %7253 = vmatpush2.msra.mxu0 0.0
      %7254 = vmatprep.subr.mxu0 0.0
      %7255 = vmatpush2.msra.mxu0 0.0
      %7256 = vmatprep.subr.mxu0 0.0
      %7257 = vmatpush2.msra.mxu0 0.0
      %7258 = vmatprep.subr.mxu0 0.0
      %7259 = vmatpush2.msra.mxu0 0.0
      %7260 = vmatprep.subr.mxu0 0.0
      %7261 = vmatpush2.msra.mxu0 0.0
      %7262 = vmatprep.subr.mxu0 0.0
      %7263 = vmatpush2.msra.mxu0 0.0
      %7264 = vmatprep.subr.mxu0 0.0
      %7265 = vmatpush2.msra.mxu0 0.0
      %7266 = vmatprep.subr.mxu0 0.0
      %7267 = vmatpush2.msra.mxu0 0.0
      %7268 = vmatprep.subr.mxu0 0.0
      %7269 = vmatpush2.msra.mxu0 0.0
      %7270 = vmatprep.mubr.f32.mxu0 0.0
      %7271 = vmatmul.mubr.f32.gmra.mxu0 %v7201
      %v7272 = vpop.f32.mrf.mxu0
      %v7273 = vadd.f32 0.0, %v7272
      %v7274 = vpop.f32.mrf.mxu0
      %7275 = vmatprep.mubr.f32.mxu0 0.0
      %7276 = vmatmul.mubr.f32.gmra.mxu0 %v7204
      %v7277 = vpop.f32.mrf.mxu0
      %v7278 = vadd.f32 0.0, %v7277
      %v7279 = vpop.f32.mrf.mxu0
      %7280 = vdwg.mxu0
      %7281 = vrot.lane.b32.xlu0 %v1165, 88
      %v7282 = vpop.permute.xlu0 %7281
      %7283 = vrot.lane.b32.xlu0 %v1166, 88
      %v7284 = vpop.permute.xlu0 %7283
      %v7288 = vsel %vm457, %v6144, 0
      %v7291 = vsel %vm457, %v6145, 0
      %7293 = vmatprep.subr.mxu0 0.0
      %7294 = vmatpush1.msra.mxu0 0.0
      %7295 = vmatprep.subr.mxu0 0.0
      %7296 = vmatpush1.msra.mxu0 0.0
      %7297 = vmatprep.subr.mxu0 0.0
      %7298 = vmatpush1.msra.mxu0 0.0
      %7299 = vmatprep.subr.mxu0 0.0
      %7300 = vmatpush1.msra.mxu0 0.0
      %7301 = vmatprep.subr.mxu0 0.0
      %7302 = vmatpush1.msra.mxu0 0.0
      %7303 = vmatprep.subr.mxu0 0.0
      %7304 = vmatpush1.msra.mxu0 0.0
      %7305 = vmatprep.subr.mxu0 0.0
      %7306 = vmatpush1.msra.mxu0 0.0
      %7307 = vmatprep.subr.mxu0 0.0
      %7308 = vmatpush1.msra.mxu0 0.0
      %7309 = vmatprep.subr.mxu0 0.0
      %7310 = vmatpush1.msra.mxu0 0.0
      %7311 = vmatprep.subr.mxu0 0.0
      %7312 = vmatpush1.msra.mxu0 0.0
      %7313 = vmatprep.subr.mxu0 0.0
      %7314 = vmatpush1.msra.mxu0 0.0
      %7315 = vmatprep.subr.mxu0 0.0
      %7316 = vmatpush1.msra.mxu0 0.0
      %7317 = vmatprep.subr.mxu0 0.0
      %7318 = vmatpush1.msra.mxu0 0.0
      %7319 = vmatprep.subr.mxu0 0.0
      %7320 = vmatpush1.msra.mxu0 0.0
      %7321 = vmatprep.subr.mxu0 0.0
      %7322 = vmatpush1.msra.mxu0 %v7284
      %7323 = vmatprep.subr.mxu0 0.0
      %7324 = vmatpush1.msra.mxu0 %v7282
      %7325 = vmatprep.subr.mxu0 0.0
      %7326 = vmatpush2.msra.mxu0 0.0
      %7327 = vmatprep.subr.mxu0 0.0
      %7328 = vmatpush2.msra.mxu0 0.0
      %7329 = vmatprep.subr.mxu0 0.0
      %7330 = vmatpush2.msra.mxu0 0.0
      %7331 = vmatprep.subr.mxu0 0.0
      %7332 = vmatpush2.msra.mxu0 0.0
      %7333 = vmatprep.subr.mxu0 0.0
      %7334 = vmatpush2.msra.mxu0 0.0
      %7335 = vmatprep.subr.mxu0 0.0
      %7336 = vmatpush2.msra.mxu0 0.0
      %7337 = vmatprep.subr.mxu0 0.0
      %7338 = vmatpush2.msra.mxu0 0.0
      %7339 = vmatprep.subr.mxu0 0.0
      %7340 = vmatpush2.msra.mxu0 0.0
      %7341 = vmatprep.subr.mxu0 0.0
      %7342 = vmatpush2.msra.mxu0 0.0
      %7343 = vmatprep.subr.mxu0 0.0
      %7344 = vmatpush2.msra.mxu0 0.0
      %7345 = vmatprep.subr.mxu0 0.0
      %7346 = vmatpush2.msra.mxu0 0.0
      %7347 = vmatprep.subr.mxu0 0.0
      %7348 = vmatpush2.msra.mxu0 0.0
      %7349 = vmatprep.subr.mxu0 0.0
      %7350 = vmatpush2.msra.mxu0 0.0
      %7351 = vmatprep.subr.mxu0 0.0
      %7352 = vmatpush2.msra.mxu0 0.0
      %7353 = vmatprep.subr.mxu0 0.0
      %7354 = vmatpush2.msra.mxu0 0.0
      %7355 = vmatprep.subr.mxu0 0.0
      %7356 = vmatpush2.msra.mxu0 0.0
      %7357 = vmatprep.mubr.f32.mxu0 0.0
      %7358 = vmatmul.mubr.f32.gmra.mxu0 %v7288
      %v7359 = vpop.f32.mrf.mxu0
      %v7360 = vadd.f32 0.0, %v7359
      %v7361 = vpop.f32.mrf.mxu0
      %7362 = vmatprep.mubr.f32.mxu0 0.0
      %7363 = vmatmul.mubr.f32.gmra.mxu0 %v7291
      %v7364 = vpop.f32.mrf.mxu0
      %v7365 = vadd.f32 0.0, %v7364
      %v7366 = vpop.f32.mrf.mxu0
      %7367 = vdwg.mxu0
      %7368 = vrot.lane.b32.xlu0 %v1167, 88
      %v7369 = vpop.permute.xlu0 %7368
      %7370 = vrot.lane.b32.xlu0 %v1168, 88
      %v7371 = vpop.permute.xlu0 %7370
      %v7375 = vsel %vm457, %v6146, 0
      %v7378 = vsel %vm457, %v6147, 0
      %7380 = vmatprep.subr.mxu0 0.0
      %7381 = vmatpush1.msra.mxu0 0.0
      %7382 = vmatprep.subr.mxu0 0.0
      %7383 = vmatpush1.msra.mxu0 0.0
      %7384 = vmatprep.subr.mxu0 0.0
      %7385 = vmatpush1.msra.mxu0 0.0
      %7386 = vmatprep.subr.mxu0 0.0
      %7387 = vmatpush1.msra.mxu0 0.0
      %7388 = vmatprep.subr.mxu0 0.0
      %7389 = vmatpush1.msra.mxu0 0.0
      %7390 = vmatprep.subr.mxu0 0.0
      %7391 = vmatpush1.msra.mxu0 0.0
      %7392 = vmatprep.subr.mxu0 0.0
      %7393 = vmatpush1.msra.mxu0 0.0
      %7394 = vmatprep.subr.mxu0 0.0
      %7395 = vmatpush1.msra.mxu0 0.0
      %7396 = vmatprep.subr.mxu0 0.0
      %7397 = vmatpush1.msra.mxu0 0.0
      %7398 = vmatprep.subr.mxu0 0.0
      %7399 = vmatpush1.msra.mxu0 0.0
      %7400 = vmatprep.subr.mxu0 0.0
      %7401 = vmatpush1.msra.mxu0 0.0
      %7402 = vmatprep.subr.mxu0 0.0
      %7403 = vmatpush1.msra.mxu0 0.0
      %7404 = vmatprep.subr.mxu0 0.0
      %7405 = vmatpush1.msra.mxu0 0.0
      %7406 = vmatprep.subr.mxu0 0.0
      %7407 = vmatpush1.msra.mxu0 0.0
      %7408 = vmatprep.subr.mxu0 0.0
      %7409 = vmatpush1.msra.mxu0 %v7371
      %7410 = vmatprep.subr.mxu0 0.0
      %7411 = vmatpush1.msra.mxu0 %v7369
      %7412 = vmatprep.subr.mxu0 0.0
      %7413 = vmatpush2.msra.mxu0 0.0
      %7414 = vmatprep.subr.mxu0 0.0
      %7415 = vmatpush2.msra.mxu0 0.0
      %7416 = vmatprep.subr.mxu0 0.0
      %7417 = vmatpush2.msra.mxu0 0.0
      %7418 = vmatprep.subr.mxu0 0.0
      %7419 = vmatpush2.msra.mxu0 0.0
      %7420 = vmatprep.subr.mxu0 0.0
      %7421 = vmatpush2.msra.mxu0 0.0
      %7422 = vmatprep.subr.mxu0 0.0
      %7423 = vmatpush2.msra.mxu0 0.0
      %7424 = vmatprep.subr.mxu0 0.0
      %7425 = vmatpush2.msra.mxu0 0.0
      %7426 = vmatprep.subr.mxu0 0.0
      %7427 = vmatpush2.msra.mxu0 0.0
      %7428 = vmatprep.subr.mxu0 0.0
      %7429 = vmatpush2.msra.mxu0 0.0
      %7430 = vmatprep.subr.mxu0 0.0
      %7431 = vmatpush2.msra.mxu0 0.0
      %7432 = vmatprep.subr.mxu0 0.0
      %7433 = vmatpush2.msra.mxu0 0.0
      %7434 = vmatprep.subr.mxu0 0.0
      %7435 = vmatpush2.msra.mxu0 0.0
      %7436 = vmatprep.subr.mxu0 0.0
      %7437 = vmatpush2.msra.mxu0 0.0
      %7438 = vmatprep.subr.mxu0 0.0
      %7439 = vmatpush2.msra.mxu0 0.0
      %7440 = vmatprep.subr.mxu0 0.0
      %7441 = vmatpush2.msra.mxu0 0.0
      %7442 = vmatprep.subr.mxu0 0.0
      %7443 = vmatpush2.msra.mxu0 0.0
      %7444 = vmatprep.mubr.f32.mxu0 0.0
      %7445 = vmatmul.mubr.f32.gmra.mxu0 %v7375
      %v7446 = vpop.f32.mrf.mxu0
      %v7447 = vadd.f32 0.0, %v7446
      %v7448 = vpop.f32.mrf.mxu0
      %7449 = vmatprep.mubr.f32.mxu0 0.0
      %7450 = vmatmul.mubr.f32.gmra.mxu0 %v7378
      %v7451 = vpop.f32.mrf.mxu0
      %v7452 = vadd.f32 0.0, %v7451
      %v7453 = vpop.f32.mrf.mxu0
      %7454 = vdwg.mxu0
      %7455 = vrot.lane.b32.xlu0 %v1169, 88
      %v7456 = vpop.permute.xlu0 %7455
      %7457 = vrot.lane.b32.xlu0 %v1170, 88
      %v7458 = vpop.permute.xlu0 %7457
      %v7462 = vsel %vm457, %v6148, 0
      %v7465 = vsel %vm457, %v6149, 0
      %7467 = vmatprep.subr.mxu0 0.0
      %7468 = vmatpush1.msra.mxu0 0.0
      %7469 = vmatprep.subr.mxu0 0.0
      %7470 = vmatpush1.msra.mxu0 0.0
      %7471 = vmatprep.subr.mxu0 0.0
      %7472 = vmatpush1.msra.mxu0 0.0
      %7473 = vmatprep.subr.mxu0 0.0
      %7474 = vmatpush1.msra.mxu0 0.0
      %7475 = vmatprep.subr.mxu0 0.0
      %7476 = vmatpush1.msra.mxu0 0.0
      %7477 = vmatprep.subr.mxu0 0.0
      %7478 = vmatpush1.msra.mxu0 0.0
      %7479 = vmatprep.subr.mxu0 0.0
      %7480 = vmatpush1.msra.mxu0 0.0
      %7481 = vmatprep.subr.mxu0 0.0
      %7482 = vmatpush1.msra.mxu0 0.0
      %7483 = vmatprep.subr.mxu0 0.0
      %7484 = vmatpush1.msra.mxu0 0.0
      %7485 = vmatprep.subr.mxu0 0.0
      %7486 = vmatpush1.msra.mxu0 0.0
      %7487 = vmatprep.subr.mxu0 0.0
      %7488 = vmatpush1.msra.mxu0 0.0
      %7489 = vmatprep.subr.mxu0 0.0
      %7490 = vmatpush1.msra.mxu0 0.0
      %7491 = vmatprep.subr.mxu0 0.0
      %7492 = vmatpush1.msra.mxu0 0.0
      %7493 = vmatprep.subr.mxu0 0.0
      %7494 = vmatpush1.msra.mxu0 0.0
      %7495 = vmatprep.subr.mxu0 0.0
      %7496 = vmatpush1.msra.mxu0 %v7458
      %7497 = vmatprep.subr.mxu0 0.0
      %7498 = vmatpush1.msra.mxu0 %v7456
      %7499 = vmatprep.subr.mxu0 0.0
      %7500 = vmatpush2.msra.mxu0 0.0
      %7501 = vmatprep.subr.mxu0 0.0
      %7502 = vmatpush2.msra.mxu0 0.0
      %7503 = vmatprep.subr.mxu0 0.0
      %7504 = vmatpush2.msra.mxu0 0.0
      %7505 = vmatprep.subr.mxu0 0.0
      %7506 = vmatpush2.msra.mxu0 0.0
      %7507 = vmatprep.subr.mxu0 0.0
      %7508 = vmatpush2.msra.mxu0 0.0
      %7509 = vmatprep.subr.mxu0 0.0
      %7510 = vmatpush2.msra.mxu0 0.0
      %7511 = vmatprep.subr.mxu0 0.0
      %7512 = vmatpush2.msra.mxu0 0.0
      %7513 = vmatprep.subr.mxu0 0.0
      %7514 = vmatpush2.msra.mxu0 0.0
      %7515 = vmatprep.subr.mxu0 0.0
      %7516 = vmatpush2.msra.mxu0 0.0
      %7517 = vmatprep.subr.mxu0 0.0
      %7518 = vmatpush2.msra.mxu0 0.0
      %7519 = vmatprep.subr.mxu0 0.0
      %7520 = vmatpush2.msra.mxu0 0.0
      %7521 = vmatprep.subr.mxu0 0.0
      %7522 = vmatpush2.msra.mxu0 0.0
      %7523 = vmatprep.subr.mxu0 0.0
      %7524 = vmatpush2.msra.mxu0 0.0
      %7525 = vmatprep.subr.mxu0 0.0
      %7526 = vmatpush2.msra.mxu0 0.0
      %7527 = vmatprep.subr.mxu0 0.0
      %7528 = vmatpush2.msra.mxu0 0.0
      %7529 = vmatprep.subr.mxu0 0.0
      %7530 = vmatpush2.msra.mxu0 0.0
      %7531 = vmatprep.mubr.f32.mxu0 0.0
      %7532 = vmatmul.mubr.f32.gmra.mxu0 %v7462
      %v7533 = vpop.f32.mrf.mxu0
      %v7534 = vadd.f32 0.0, %v7533
      %v7535 = vpop.f32.mrf.mxu0
      %7536 = vmatprep.mubr.f32.mxu0 0.0
      %7537 = vmatmul.mubr.f32.gmra.mxu0 %v7465
      %v7538 = vpop.f32.mrf.mxu0
      %v7539 = vadd.f32 0.0, %v7538
      %v7540 = vpop.f32.mrf.mxu0
      %7541 = vdwg.mxu0
      %v7543 = vsel %vm1179, %v6229, 0
      %v7546 = vsel %vm1179, %v6234, 0
      %v7549 = vsel %vm1179, %v6316, 0
      %v7552 = vsel %vm1179, %v6321, 0
      %v7555 = vsel %vm1179, %v6403, 0
      %v7558 = vsel %vm1179, %v6408, 0
      %v7561 = vsel %vm1179, %v6490, 0
      %v7564 = vsel %vm1179, %v6495, 0
      %v7567 = vsel %vm1179, %v6577, 0
      %v7570 = vsel %vm1179, %v6582, 0
      %v7573 = vsel %vm1179, %v6664, 0
      %v7576 = vsel %vm1179, %v6669, 0
      %v7579 = vsel %vm1179, %v6751, 0
      %v7582 = vsel %vm1179, %v6756, 0
      %v7585 = vsel %vm1179, %v6838, 0
      %v7588 = vsel %vm1179, %v6843, 0
      %v7591 = vsel %vm1179, %v6925, 0
      %v7594 = vsel %vm1179, %v6930, 0
      %v7597 = vsel %vm1179, %v7012, 0
      %v7600 = vsel %vm1179, %v7017, 0
      %v7603 = vsel %vm1179, %v7099, 0
      %v7606 = vsel %vm1179, %v7104, 0
      %v7609 = vsel %vm1179, %v7186, 0
      %v7612 = vsel %vm1179, %v7191, 0
      %v7615 = vsel %vm1179, %v7273, 0
      %v7618 = vsel %vm1179, %v7278, 0
      %v7621 = vsel %vm1179, %v7360, 0
      %v7624 = vsel %vm1179, %v7365, 0
      %v7627 = vsel %vm1179, %v7447, 0
      %v7630 = vsel %vm1179, %v7452, 0
      %v7633 = vsel %vm1179, %v7534, 0
      %v7636 = vsel %vm1179, %v7539, 0
      %7638 = vmatprep.subr.mxu0 0.0
      %7639 = vmatpush1.msra.mxu0 0.0
      %7640 = vmatprep.subr.mxu0 0.0
      %7641 = vmatpush1.msra.mxu0 0.0
      %7642 = vmatprep.subr.mxu0 0.0
      %7643 = vmatpush1.msra.mxu0 0.0
      %7644 = vmatprep.subr.mxu0 0.0
      %7645 = vmatpush1.msra.mxu0 0.0
      %7646 = vmatprep.subr.mxu0 0.0
      %7647 = vmatpush1.msra.mxu0 0.0
      %7648 = vmatprep.subr.mxu0 0.0
      %7649 = vmatpush1.msra.mxu0 0.0
      %7650 = vmatprep.subr.mxu0 0.0
      %7651 = vmatpush1.msra.mxu0 0.0
      %7652 = vmatprep.subr.mxu0 0.0
      %7653 = vmatpush1.msra.mxu0 0.0
      %7654 = vmatprep.subr.mxu0 0.0
      %7655 = vmatpush1.msra.mxu0 0.0
      %7656 = vmatprep.subr.mxu0 0.0
      %7657 = vmatpush1.msra.mxu0 0.0
      %7658 = vmatprep.subr.mxu0 0.0
      %7659 = vmatpush1.msra.mxu0 0.0
      %7660 = vmatprep.subr.mxu0 0.0
      %7661 = vmatpush1.msra.mxu0 0.0
      %7662 = vmatprep.subr.mxu0 0.0
      %7663 = vmatpush1.msra.mxu0 0.0
      %7664 = vmatprep.subr.mxu0 0.0
      %7665 = vmatpush1.msra.mxu0 0.0
      %7666 = vmatprep.subr.mxu0 0.0
      %7667 = vmatpush1.msra.mxu0 0.0
      %7668 = vmatprep.subr.mxu0 0.0
      %7669 = vmatpush1.msra.mxu0 %v1172
      %7670 = vmatprep.subr.mxu0 0.0
      %7671 = vmatpush2.msra.mxu0 0.0
      %7672 = vmatprep.subr.mxu0 0.0
      %7673 = vmatpush2.msra.mxu0 0.0
      %7674 = vmatprep.subr.mxu0 0.0
      %7675 = vmatpush2.msra.mxu0 0.0
      %7676 = vmatprep.subr.mxu0 0.0
      %7677 = vmatpush2.msra.mxu0 0.0
      %7678 = vmatprep.subr.mxu0 0.0
      %7679 = vmatpush2.msra.mxu0 0.0
      %7680 = vmatprep.subr.mxu0 0.0
      %7681 = vmatpush2.msra.mxu0 0.0
      %7682 = vmatprep.subr.mxu0 0.0
      %7683 = vmatpush2.msra.mxu0 0.0
      %7684 = vmatprep.subr.mxu0 0.0
      %7685 = vmatpush2.msra.mxu0 0.0
      %7686 = vmatprep.subr.mxu0 0.0
      %7687 = vmatpush2.msra.mxu0 0.0
      %7688 = vmatprep.subr.mxu0 0.0
      %7689 = vmatpush2.msra.mxu0 0.0
      %7690 = vmatprep.subr.mxu0 0.0
      %7691 = vmatpush2.msra.mxu0 0.0
      %7692 = vmatprep.subr.mxu0 0.0
      %7693 = vmatpush2.msra.mxu0 0.0
      %7694 = vmatprep.subr.mxu0 0.0
      %7695 = vmatpush2.msra.mxu0 0.0
      %7696 = vmatprep.subr.mxu0 0.0
      %7697 = vmatpush2.msra.mxu0 0.0
      %7698 = vmatprep.subr.mxu0 0.0
      %7699 = vmatpush2.msra.mxu0 0.0
      %7700 = vmatprep.subr.mxu0 0.0
      %7701 = vmatpush2.msra.mxu0 0.0
      %7702 = vmatprep.mubr.f32.mxu0 0.0
      %7703 = vmatmul.mubr.f32.gmra.mxu0 %v7543
      %v7704 = vpop.f32.mrf.mxu0
      %v7705 = vadd.f32 0.0, %v7704
      %v7706 = vpop.f32.mrf.mxu0
      %7707 = vmatprep.mubr.f32.mxu0 0.0
      %7708 = vmatmul.mubr.f32.gmra.mxu0 %v7546
      %v7709 = vpop.f32.mrf.mxu0
      %v7710 = vadd.f32 0.0, %v7709
      %v7711 = vpop.f32.mrf.mxu0
      %7712 = vmatprep.mubr.f32.mxu0 0.0
      %7713 = vmatmul.mubr.f32.gmra.mxu0 %v7549
      %v7714 = vpop.f32.mrf.mxu0
      %v7715 = vadd.f32 0.0, %v7714
      %v7716 = vpop.f32.mrf.mxu0
      %7717 = vmatprep.mubr.f32.mxu0 0.0
      %7718 = vmatmul.mubr.f32.gmra.mxu0 %v7552
      %v7719 = vpop.f32.mrf.mxu0
      %v7720 = vadd.f32 0.0, %v7719
      %v7721 = vpop.f32.mrf.mxu0
      %7722 = vmatprep.mubr.f32.mxu0 0.0
      %7723 = vmatmul.mubr.f32.gmra.mxu0 %v7555
      %v7724 = vpop.f32.mrf.mxu0
      %v7725 = vadd.f32 0.0, %v7724
      %v7726 = vpop.f32.mrf.mxu0
      %7727 = vmatprep.mubr.f32.mxu0 0.0
      %7728 = vmatmul.mubr.f32.gmra.mxu0 %v7558
      %v7729 = vpop.f32.mrf.mxu0
      %v7730 = vadd.f32 0.0, %v7729
      %v7731 = vpop.f32.mrf.mxu0
      %7732 = vmatprep.mubr.f32.mxu0 0.0
      %7733 = vmatmul.mubr.f32.gmra.mxu0 %v7561
      %v7734 = vpop.f32.mrf.mxu0
      %v7735 = vadd.f32 0.0, %v7734
      %v7736 = vpop.f32.mrf.mxu0
      %7737 = vmatprep.mubr.f32.mxu0 0.0
      %7738 = vmatmul.mubr.f32.gmra.mxu0 %v7564
      %v7739 = vpop.f32.mrf.mxu0
      %v7740 = vadd.f32 0.0, %v7739
      %v7741 = vpop.f32.mrf.mxu0
      %7742 = vmatprep.mubr.f32.mxu0 0.0
      %7743 = vmatmul.mubr.f32.gmra.mxu0 %v7567
      %v7744 = vpop.f32.mrf.mxu0
      %v7745 = vadd.f32 0.0, %v7744
      %v7746 = vpop.f32.mrf.mxu0
      %7747 = vmatprep.mubr.f32.mxu0 0.0
      %7748 = vmatmul.mubr.f32.gmra.mxu0 %v7570
      %v7749 = vpop.f32.mrf.mxu0
      %v7750 = vadd.f32 0.0, %v7749
      %v7751 = vpop.f32.mrf.mxu0
      %7752 = vmatprep.mubr.f32.mxu0 0.0
      %7753 = vmatmul.mubr.f32.gmra.mxu0 %v7573
      %v7754 = vpop.f32.mrf.mxu0
      %v7755 = vadd.f32 0.0, %v7754
      %v7756 = vpop.f32.mrf.mxu0
      %7757 = vmatprep.mubr.f32.mxu0 0.0
      %7758 = vmatmul.mubr.f32.gmra.mxu0 %v7576
      %v7759 = vpop.f32.mrf.mxu0
      %v7760 = vadd.f32 0.0, %v7759
      %v7761 = vpop.f32.mrf.mxu0
      %7762 = vmatprep.mubr.f32.mxu0 0.0
      %7763 = vmatmul.mubr.f32.gmra.mxu0 %v7579
      %v7764 = vpop.f32.mrf.mxu0
      %v7765 = vadd.f32 0.0, %v7764
      %v7766 = vpop.f32.mrf.mxu0
      %7767 = vmatprep.mubr.f32.mxu0 0.0
      %7768 = vmatmul.mubr.f32.gmra.mxu0 %v7582
      %v7769 = vpop.f32.mrf.mxu0
      %v7770 = vadd.f32 0.0, %v7769
      %v7771 = vpop.f32.mrf.mxu0
      %7772 = vmatprep.mubr.f32.mxu0 0.0
      %7773 = vmatmul.mubr.f32.gmra.mxu0 %v7585
      %v7774 = vpop.f32.mrf.mxu0
      %v7775 = vadd.f32 0.0, %v7774
      %v7776 = vpop.f32.mrf.mxu0
      %7777 = vmatprep.mubr.f32.mxu0 0.0
      %7778 = vmatmul.mubr.f32.gmra.mxu0 %v7588
      %v7779 = vpop.f32.mrf.mxu0
      %v7780 = vadd.f32 0.0, %v7779
      %v7781 = vpop.f32.mrf.mxu0
      %7782 = vmatprep.mubr.f32.mxu0 0.0
      %7783 = vmatmul.mubr.f32.gmra.mxu0 %v7591
      %v7784 = vpop.f32.mrf.mxu0
      %v7785 = vadd.f32 0.0, %v7784
      %v7786 = vpop.f32.mrf.mxu0
      %7787 = vmatprep.mubr.f32.mxu0 0.0
      %7788 = vmatmul.mubr.f32.gmra.mxu0 %v7594
      %v7789 = vpop.f32.mrf.mxu0
      %v7790 = vadd.f32 0.0, %v7789
      %v7791 = vpop.f32.mrf.mxu0
      %7792 = vmatprep.mubr.f32.mxu0 0.0
      %7793 = vmatmul.mubr.f32.gmra.mxu0 %v7597
      %v7794 = vpop.f32.mrf.mxu0
      %v7795 = vadd.f32 0.0, %v7794
      %v7796 = vpop.f32.mrf.mxu0
      %7797 = vmatprep.mubr.f32.mxu0 0.0
      %7798 = vmatmul.mubr.f32.gmra.mxu0 %v7600
      %v7799 = vpop.f32.mrf.mxu0
      %v7800 = vadd.f32 0.0, %v7799
      %v7801 = vpop.f32.mrf.mxu0
      %7802 = vmatprep.mubr.f32.mxu0 0.0
      %7803 = vmatmul.mubr.f32.gmra.mxu0 %v7603
      %v7804 = vpop.f32.mrf.mxu0
      %v7805 = vadd.f32 0.0, %v7804
      %v7806 = vpop.f32.mrf.mxu0
      %7807 = vmatprep.mubr.f32.mxu0 0.0
      %7808 = vmatmul.mubr.f32.gmra.mxu0 %v7606
      %v7809 = vpop.f32.mrf.mxu0
      %v7810 = vadd.f32 0.0, %v7809
      %v7811 = vpop.f32.mrf.mxu0
      %7812 = vmatprep.mubr.f32.mxu0 0.0
      %7813 = vmatmul.mubr.f32.gmra.mxu0 %v7609
      %v7814 = vpop.f32.mrf.mxu0
      %v7815 = vadd.f32 0.0, %v7814
      %v7816 = vpop.f32.mrf.mxu0
      %7817 = vmatprep.mubr.f32.mxu0 0.0
      %7818 = vmatmul.mubr.f32.gmra.mxu0 %v7612
      %v7819 = vpop.f32.mrf.mxu0
      %v7820 = vadd.f32 0.0, %v7819
      %v7821 = vpop.f32.mrf.mxu0
      %7822 = vmatprep.mubr.f32.mxu0 0.0
      %7823 = vmatmul.mubr.f32.gmra.mxu0 %v7615
      %v7824 = vpop.f32.mrf.mxu0
      %v7825 = vadd.f32 0.0, %v7824
      %v7826 = vpop.f32.mrf.mxu0
      %7827 = vmatprep.mubr.f32.mxu0 0.0
      %7828 = vmatmul.mubr.f32.gmra.mxu0 %v7618
      %v7829 = vpop.f32.mrf.mxu0
      %v7830 = vadd.f32 0.0, %v7829
      %v7831 = vpop.f32.mrf.mxu0
      %7832 = vmatprep.mubr.f32.mxu0 0.0
      %7833 = vmatmul.mubr.f32.gmra.mxu0 %v7621
      %v7834 = vpop.f32.mrf.mxu0
      %v7835 = vadd.f32 0.0, %v7834
      %v7836 = vpop.f32.mrf.mxu0
      %7837 = vmatprep.mubr.f32.mxu0 0.0
      %7838 = vmatmul.mubr.f32.gmra.mxu0 %v7624
      %v7839 = vpop.f32.mrf.mxu0
      %v7840 = vadd.f32 0.0, %v7839
      %v7841 = vpop.f32.mrf.mxu0
      %7842 = vmatprep.mubr.f32.mxu0 0.0
      %7843 = vmatmul.mubr.f32.gmra.mxu0 %v7627
      %v7844 = vpop.f32.mrf.mxu0
      %v7845 = vadd.f32 0.0, %v7844
      %v7846 = vpop.f32.mrf.mxu0
      %7847 = vmatprep.mubr.f32.mxu0 0.0
      %7848 = vmatmul.mubr.f32.gmra.mxu0 %v7630
      %v7849 = vpop.f32.mrf.mxu0
      %v7850 = vadd.f32 0.0, %v7849
      %v7851 = vpop.f32.mrf.mxu0
      %7852 = vmatprep.mubr.f32.mxu0 0.0
      %7853 = vmatmul.mubr.f32.gmra.mxu0 %v7633
      %v7854 = vpop.f32.mrf.mxu0
      %v7855 = vadd.f32 0.0, %v7854
      %v7856 = vpop.f32.mrf.mxu0
      %7857 = vmatprep.mubr.f32.mxu0 0.0
      %7858 = vmatmul.mubr.f32.gmra.mxu0 %v7636
      %v7859 = vpop.f32.mrf.mxu0
      %v7860 = vadd.f32 0.0, %v7859
      %v7861 = vpop.f32.mrf.mxu0
      %7862 = vdwg.mxu0
      %v7864 = vsel %vm1179, %v3029, 0
      %v7867 = vsel %vm1179, %v3034, 0
      %v7870 = vsel %vm1179, %v3116, 0
      %v7873 = vsel %vm1179, %v3121, 0
      %v7876 = vsel %vm1179, %v3203, 0
      %v7879 = vsel %vm1179, %v3208, 0
      %v7882 = vsel %vm1179, %v3290, 0
      %v7885 = vsel %vm1179, %v3295, 0
      %v7888 = vsel %vm1179, %v3377, 0
      %v7891 = vsel %vm1179, %v3382, 0
      %v7894 = vsel %vm1179, %v3464, 0
      %v7897 = vsel %vm1179, %v3469, 0
      %v7900 = vsel %vm1179, %v3551, 0
      %v7903 = vsel %vm1179, %v3556, 0
      %v7906 = vsel %vm1179, %v3638, 0
      %v7909 = vsel %vm1179, %v3643, 0
      %v7912 = vsel %vm1179, %v3725, 0
      %v7915 = vsel %vm1179, %v3730, 0
      %v7918 = vsel %vm1179, %v3812, 0
      %v7921 = vsel %vm1179, %v3817, 0
      %v7924 = vsel %vm1179, %v3899, 0
      %v7927 = vsel %vm1179, %v3904, 0
      %v7930 = vsel %vm1179, %v3986, 0
      %v7933 = vsel %vm1179, %v3991, 0
      %v7936 = vsel %vm1179, %v4073, 0
      %v7939 = vsel %vm1179, %v4078, 0
      %v7942 = vsel %vm1179, %v4160, 0
      %v7945 = vsel %vm1179, %v4165, 0
      %v7948 = vsel %vm1179, %v4247, 0
      %v7951 = vsel %vm1179, %v4252, 0
      %v7954 = vsel %vm1179, %v4334, 0
      %v7957 = vsel %vm1179, %v4339, 0
      %7959 = vmatprep.subr.mxu0 0.0
      %7960 = vmatpush1.msra.mxu0 0.0
      %7961 = vmatprep.subr.mxu0 0.0
      %7962 = vmatpush1.msra.mxu0 0.0
      %7963 = vmatprep.subr.mxu0 0.0
      %7964 = vmatpush1.msra.mxu0 0.0
      %7965 = vmatprep.subr.mxu0 0.0
      %7966 = vmatpush1.msra.mxu0 0.0
      %7967 = vmatprep.subr.mxu0 0.0
      %7968 = vmatpush1.msra.mxu0 0.0
      %7969 = vmatprep.subr.mxu0 0.0
      %7970 = vmatpush1.msra.mxu0 0.0
      %7971 = vmatprep.subr.mxu0 0.0
      %7972 = vmatpush1.msra.mxu0 0.0
      %7973 = vmatprep.subr.mxu0 0.0
      %7974 = vmatpush1.msra.mxu0 0.0
      %7975 = vmatprep.subr.mxu0 0.0
      %7976 = vmatpush1.msra.mxu0 0.0
      %7977 = vmatprep.subr.mxu0 0.0
      %7978 = vmatpush1.msra.mxu0 0.0
      %7979 = vmatprep.subr.mxu0 0.0
      %7980 = vmatpush1.msra.mxu0 0.0
      %7981 = vmatprep.subr.mxu0 0.0
      %7982 = vmatpush1.msra.mxu0 0.0
      %7983 = vmatprep.subr.mxu0 0.0
      %7984 = vmatpush1.msra.mxu0 0.0
      %7985 = vmatprep.subr.mxu0 0.0
      %7986 = vmatpush1.msra.mxu0 0.0
      %7987 = vmatprep.subr.mxu0 0.0
      %7988 = vmatpush1.msra.mxu0 0.0
      %7989 = vmatprep.subr.mxu0 0.0
      %7990 = vmatpush1.msra.mxu0 %v1171
      %7991 = vmatprep.subr.mxu0 0.0
      %7992 = vmatpush2.msra.mxu0 0.0
      %7993 = vmatprep.subr.mxu0 0.0
      %7994 = vmatpush2.msra.mxu0 0.0
      %7995 = vmatprep.subr.mxu0 0.0
      %7996 = vmatpush2.msra.mxu0 0.0
      %7997 = vmatprep.subr.mxu0 0.0
      %7998 = vmatpush2.msra.mxu0 0.0
      %7999 = vmatprep.subr.mxu0 0.0
      %8000 = vmatpush2.msra.mxu0 0.0
      %8001 = vmatprep.subr.mxu0 0.0
      %8002 = vmatpush2.msra.mxu0 0.0
      %8003 = vmatprep.subr.mxu0 0.0
      %8004 = vmatpush2.msra.mxu0 0.0
      %8005 = vmatprep.subr.mxu0 0.0
      %8006 = vmatpush2.msra.mxu0 0.0
      %8007 = vmatprep.subr.mxu0 0.0
      %8008 = vmatpush2.msra.mxu0 0.0
      %8009 = vmatprep.subr.mxu0 0.0
      %8010 = vmatpush2.msra.mxu0 0.0
      %8011 = vmatprep.subr.mxu0 0.0
      %8012 = vmatpush2.msra.mxu0 0.0
      %8013 = vmatprep.subr.mxu0 0.0
      %8014 = vmatpush2.msra.mxu0 0.0
      %8015 = vmatprep.subr.mxu0 0.0
      %8016 = vmatpush2.msra.mxu0 0.0
      %8017 = vmatprep.subr.mxu0 0.0
      %8018 = vmatpush2.msra.mxu0 0.0
      %8019 = vmatprep.subr.mxu0 0.0
      %8020 = vmatpush2.msra.mxu0 0.0
      %8021 = vmatprep.subr.mxu0 0.0
      %8022 = vmatpush2.msra.mxu0 0.0
      %8023 = vmatprep.mubr.f32.mxu0 0.0
      %8024 = vmatmul.mubr.f32.gmra.mxu0 %v7864
      %v8025 = vpop.f32.mrf.mxu0
      %v8026 = vadd.f32 %v7705, %v8025
      %v8027 = vpop.f32.mrf.mxu0
      %8028 = vmatprep.mubr.f32.mxu0 0.0
      %8029 = vmatmul.mubr.f32.gmra.mxu0 %v7867
      %v8030 = vpop.f32.mrf.mxu0
      %v8031 = vadd.f32 %v7710, %v8030
      %v8032 = vpop.f32.mrf.mxu0
      %8033 = vmatprep.mubr.f32.mxu0 0.0
      %8034 = vmatmul.mubr.f32.gmra.mxu0 %v7870
      %v8035 = vpop.f32.mrf.mxu0
      %v8036 = vadd.f32 %v7715, %v8035
      %v8037 = vpop.f32.mrf.mxu0
      %8038 = vmatprep.mubr.f32.mxu0 0.0
      %8039 = vmatmul.mubr.f32.gmra.mxu0 %v7873
      %v8040 = vpop.f32.mrf.mxu0
      %v8041 = vadd.f32 %v7720, %v8040
      %v8042 = vpop.f32.mrf.mxu0
      %8043 = vmatprep.mubr.f32.mxu0 0.0
      %8044 = vmatmul.mubr.f32.gmra.mxu0 %v7876
      %v8045 = vpop.f32.mrf.mxu0
      %v8046 = vadd.f32 %v7725, %v8045
      %v8047 = vpop.f32.mrf.mxu0
      %8048 = vmatprep.mubr.f32.mxu0 0.0
      %8049 = vmatmul.mubr.f32.gmra.mxu0 %v7879
      %v8050 = vpop.f32.mrf.mxu0
      %v8051 = vadd.f32 %v7730, %v8050
      %v8052 = vpop.f32.mrf.mxu0
      %8053 = vmatprep.mubr.f32.mxu0 0.0
      %8054 = vmatmul.mubr.f32.gmra.mxu0 %v7882
      %v8055 = vpop.f32.mrf.mxu0
      %v8056 = vadd.f32 %v7735, %v8055
      %v8057 = vpop.f32.mrf.mxu0
      %8058 = vmatprep.mubr.f32.mxu0 0.0
      %8059 = vmatmul.mubr.f32.gmra.mxu0 %v7885
      %v8060 = vpop.f32.mrf.mxu0
      %v8061 = vadd.f32 %v7740, %v8060
      %v8062 = vpop.f32.mrf.mxu0
      %8063 = vmatprep.mubr.f32.mxu0 0.0
      %8064 = vmatmul.mubr.f32.gmra.mxu0 %v7888
      %v8065 = vpop.f32.mrf.mxu0
      %v8066 = vadd.f32 %v7745, %v8065
      %v8067 = vpop.f32.mrf.mxu0
      %8068 = vmatprep.mubr.f32.mxu0 0.0
      %8069 = vmatmul.mubr.f32.gmra.mxu0 %v7891
      %v8070 = vpop.f32.mrf.mxu0
      %v8071 = vadd.f32 %v7750, %v8070
      %v8072 = vpop.f32.mrf.mxu0
      %8073 = vmatprep.mubr.f32.mxu0 0.0
      %8074 = vmatmul.mubr.f32.gmra.mxu0 %v7894
      %v8075 = vpop.f32.mrf.mxu0
      %v8076 = vadd.f32 %v7755, %v8075
      %v8077 = vpop.f32.mrf.mxu0
      %8078 = vmatprep.mubr.f32.mxu0 0.0
      %8079 = vmatmul.mubr.f32.gmra.mxu0 %v7897
      %v8080 = vpop.f32.mrf.mxu0
      %v8081 = vadd.f32 %v7760, %v8080
      %v8082 = vpop.f32.mrf.mxu0
      %8083 = vmatprep.mubr.f32.mxu0 0.0
      %8084 = vmatmul.mubr.f32.gmra.mxu0 %v7900
      %v8085 = vpop.f32.mrf.mxu0
      %v8086 = vadd.f32 %v7765, %v8085
      %v8087 = vpop.f32.mrf.mxu0
      %8088 = vmatprep.mubr.f32.mxu0 0.0
      %8089 = vmatmul.mubr.f32.gmra.mxu0 %v7903
      %v8090 = vpop.f32.mrf.mxu0
      %v8091 = vadd.f32 %v7770, %v8090
      %v8092 = vpop.f32.mrf.mxu0
      %8093 = vmatprep.mubr.f32.mxu0 0.0
      %8094 = vmatmul.mubr.f32.gmra.mxu0 %v7906
      %v8095 = vpop.f32.mrf.mxu0
      %v8096 = vadd.f32 %v7775, %v8095
      %v8097 = vpop.f32.mrf.mxu0
      %8098 = vmatprep.mubr.f32.mxu0 0.0
      %8099 = vmatmul.mubr.f32.gmra.mxu0 %v7909
      %v8100 = vpop.f32.mrf.mxu0
      %v8101 = vadd.f32 %v7780, %v8100
      %v8102 = vpop.f32.mrf.mxu0
      %8103 = vmatprep.mubr.f32.mxu0 0.0
      %8104 = vmatmul.mubr.f32.gmra.mxu0 %v7912
      %v8105 = vpop.f32.mrf.mxu0
      %v8106 = vadd.f32 %v7785, %v8105
      %v8107 = vpop.f32.mrf.mxu0
      %8108 = vmatprep.mubr.f32.mxu0 0.0
      %8109 = vmatmul.mubr.f32.gmra.mxu0 %v7915
      %v8110 = vpop.f32.mrf.mxu0
      %v8111 = vadd.f32 %v7790, %v8110
      %v8112 = vpop.f32.mrf.mxu0
      %8113 = vmatprep.mubr.f32.mxu0 0.0
      %8114 = vmatmul.mubr.f32.gmra.mxu0 %v7918
      %v8115 = vpop.f32.mrf.mxu0
      %v8116 = vadd.f32 %v7795, %v8115
      %v8117 = vpop.f32.mrf.mxu0
      %8118 = vmatprep.mubr.f32.mxu0 0.0
      %8119 = vmatmul.mubr.f32.gmra.mxu0 %v7921
      %v8120 = vpop.f32.mrf.mxu0
      %v8121 = vadd.f32 %v7800, %v8120
      %v8122 = vpop.f32.mrf.mxu0
      %8123 = vmatprep.mubr.f32.mxu0 0.0
      %8124 = vmatmul.mubr.f32.gmra.mxu0 %v7924
      %v8125 = vpop.f32.mrf.mxu0
      %v8126 = vadd.f32 %v7805, %v8125
      %v8127 = vpop.f32.mrf.mxu0
      %8128 = vmatprep.mubr.f32.mxu0 0.0
      %8129 = vmatmul.mubr.f32.gmra.mxu0 %v7927
      %v8130 = vpop.f32.mrf.mxu0
      %v8131 = vadd.f32 %v7810, %v8130
      %v8132 = vpop.f32.mrf.mxu0
      %8133 = vmatprep.mubr.f32.mxu0 0.0
      %8134 = vmatmul.mubr.f32.gmra.mxu0 %v7930
      %v8135 = vpop.f32.mrf.mxu0
      %v8136 = vadd.f32 %v7815, %v8135
      %v8137 = vpop.f32.mrf.mxu0
      %8138 = vmatprep.mubr.f32.mxu0 0.0
      %8139 = vmatmul.mubr.f32.gmra.mxu0 %v7933
      %v8140 = vpop.f32.mrf.mxu0
      %v8141 = vadd.f32 %v7820, %v8140
      %v8142 = vpop.f32.mrf.mxu0
      %8143 = vmatprep.mubr.f32.mxu0 0.0
      %8144 = vmatmul.mubr.f32.gmra.mxu0 %v7936
      %v8145 = vpop.f32.mrf.mxu0
      %v8146 = vadd.f32 %v7825, %v8145
      %v8147 = vpop.f32.mrf.mxu0
      %8148 = vmatprep.mubr.f32.mxu0 0.0
      %8149 = vmatmul.mubr.f32.gmra.mxu0 %v7939
      %v8150 = vpop.f32.mrf.mxu0
      %v8151 = vadd.f32 %v7830, %v8150
      %v8152 = vpop.f32.mrf.mxu0
      %8153 = vmatprep.mubr.f32.mxu0 0.0
      %8154 = vmatmul.mubr.f32.gmra.mxu0 %v7942
      %v8155 = vpop.f32.mrf.mxu0
      %v8156 = vadd.f32 %v7835, %v8155
      %v8157 = vpop.f32.mrf.mxu0
      %8158 = vmatprep.mubr.f32.mxu0 0.0
      %8159 = vmatmul.mubr.f32.gmra.mxu0 %v7945
      %v8160 = vpop.f32.mrf.mxu0
      %v8161 = vadd.f32 %v7840, %v8160
      %v8162 = vpop.f32.mrf.mxu0
      %8163 = vmatprep.mubr.f32.mxu0 0.0
      %8164 = vmatmul.mubr.f32.gmra.mxu0 %v7948
      %v8165 = vpop.f32.mrf.mxu0
      %v8166 = vadd.f32 %v7845, %v8165
      %v8167 = vpop.f32.mrf.mxu0
      %8168 = vmatprep.mubr.f32.mxu0 0.0
      %8169 = vmatmul.mubr.f32.gmra.mxu0 %v7951
      %v8170 = vpop.f32.mrf.mxu0
      %v8171 = vadd.f32 %v7850, %v8170
      %v8172 = vpop.f32.mrf.mxu0
      %8173 = vmatprep.mubr.f32.mxu0 0.0
      %8174 = vmatmul.mubr.f32.gmra.mxu0 %v7954
      %v8175 = vpop.f32.mrf.mxu0
      %v8176 = vadd.f32 %v7855, %v8175
      %v8177 = vpop.f32.mrf.mxu0
      %8178 = vmatprep.mubr.f32.mxu0 0.0
      %8179 = vmatmul.mubr.f32.gmra.mxu0 %v7957
      %v8180 = vpop.f32.mrf.mxu0
      %v8181 = vadd.f32 %v7860, %v8180
      %v8182 = vpop.f32.mrf.mxu0
      %8183 = vdwg.mxu0
      %v8184 = vld [vmem:[%s5] sm:$0x1]
      %v8186 = vlaneseq
      %v8187 = vshrl.u32 %v8186, 7
      %v8188 = vsub.s32 0, %v8187
      %v8189 = vrot.slane %v8184, %v8188
      %v8191 = vadd.f32 %v8026, %v8189
      %v8192 = vadd.f32 %v8031, %v8189
      %v8193 = vadd.f32 %v8036, %v8189
      %v8194 = vadd.f32 %v8041, %v8189
      %v8195 = vadd.f32 %v8046, %v8189
      %v8196 = vadd.f32 %v8051, %v8189
      %v8197 = vadd.f32 %v8056, %v8189
      %v8198 = vadd.f32 %v8061, %v8189
      %v8199 = vadd.f32 %v8066, %v8189
      %v8200 = vadd.f32 %v8071, %v8189
      %v8201 = vadd.f32 %v8076, %v8189
      %v8202 = vadd.f32 %v8081, %v8189
      %v8203 = vadd.f32 %v8086, %v8189
      %v8204 = vadd.f32 %v8091, %v8189
      %v8205 = vadd.f32 %v8096, %v8189
      %v8206 = vadd.f32 %v8101, %v8189
      %v8207 = vadd.f32 %v8106, %v8189
      %v8208 = vadd.f32 %v8111, %v8189
      %v8209 = vadd.f32 %v8116, %v8189
      %v8210 = vadd.f32 %v8121, %v8189
      %v8211 = vadd.f32 %v8126, %v8189
      %v8212 = vadd.f32 %v8131, %v8189
      %v8213 = vadd.f32 %v8136, %v8189
      %v8214 = vadd.f32 %v8141, %v8189
      %v8215 = vadd.f32 %v8146, %v8189
      %v8216 = vadd.f32 %v8151, %v8189
      %v8217 = vadd.f32 %v8156, %v8189
      %v8218 = vadd.f32 %v8161, %v8189
      %v8219 = vadd.f32 %v8166, %v8189
      %v8220 = vadd.f32 %v8171, %v8189
      %v8221 = vadd.f32 %v8176, %v8189
      %v8222 = vadd.f32 %v8181, %v8189
      %v8223 = vmax.f32 %v8191, 0.0
      %v8224 = vmax.f32 %v8192, 0.0
      %v8225 = vmax.f32 %v8193, 0.0
      %v8226 = vmax.f32 %v8194, 0.0
      %v8227 = vmax.f32 %v8195, 0.0
      %v8228 = vmax.f32 %v8196, 0.0
      %v8229 = vmax.f32 %v8197, 0.0
      %v8230 = vmax.f32 %v8198, 0.0
      %v8231 = vmax.f32 %v8199, 0.0
      %v8232 = vmax.f32 %v8200, 0.0
      %v8233 = vmax.f32 %v8201, 0.0
      %v8234 = vmax.f32 %v8202, 0.0
      %v8235 = vmax.f32 %v8203, 0.0
      %v8236 = vmax.f32 %v8204, 0.0
      %v8237 = vmax.f32 %v8205, 0.0
      %v8238 = vmax.f32 %v8206, 0.0
      %v8239 = vmax.f32 %v8207, 0.0
      %v8240 = vmax.f32 %v8208, 0.0
      %v8241 = vmax.f32 %v8209, 0.0
      %v8242 = vmax.f32 %v8210, 0.0
      %v8243 = vmax.f32 %v8211, 0.0
      %v8244 = vmax.f32 %v8212, 0.0
      %v8245 = vmax.f32 %v8213, 0.0
      %v8246 = vmax.f32 %v8214, 0.0
      %v8247 = vmax.f32 %v8215, 0.0
      %v8248 = vmax.f32 %v8216, 0.0
      %v8249 = vmax.f32 %v8217, 0.0
      %v8250 = vmax.f32 %v8218, 0.0
      %v8251 = vmax.f32 %v8219, 0.0
      %v8252 = vmax.f32 %v8220, 0.0
      %v8253 = vmax.f32 %v8221, 0.0
      %v8254 = vmax.f32 %v8222, 0.0
      %v8255 = vld [vmem:[%s6] sm:$0xff]
      %v8256 = vld [vmem:[%s6 + $0x8] sm:$0xff]
      %v8257 = vld [vmem:[%s7] sm:$0x1]
      %v8259 = vlaneseq
      %v8260 = vshrl.u32 %v8259, 7
      %v8261 = vsub.s32 0, %v8260
      %v8262 = vrot.slane %v8257, %v8261
      %v8265 = vsel %vm457, %v8223, 0
      %v8268 = vsel %vm457, %v8224, 0
      %v8271 = vsel %vm457, %v8225, 0
      %v8274 = vsel %vm457, %v8226, 0
      %v8277 = vsel %vm457, %v8227, 0
      %v8280 = vsel %vm457, %v8228, 0
      %v8283 = vsel %vm457, %v8229, 0
      %v8286 = vsel %vm457, %v8230, 0
      %v8289 = vsel %vm457, %v8231, 0
      %v8292 = vsel %vm457, %v8232, 0
      %v8295 = vsel %vm457, %v8233, 0
      %v8298 = vsel %vm457, %v8234, 0
      %v8301 = vsel %vm457, %v8235, 0
      %v8304 = vsel %vm457, %v8236, 0
      %v8307 = vsel %vm457, %v8237, 0
      %v8310 = vsel %vm457, %v8238, 0
      %v8313 = vsel %vm457, %v8239, 0
      %v8316 = vsel %vm457, %v8240, 0
      %v8319 = vsel %vm457, %v8241, 0
      %v8322 = vsel %vm457, %v8242, 0
      %v8325 = vsel %vm457, %v8243, 0
      %v8328 = vsel %vm457, %v8244, 0
      %v8331 = vsel %vm457, %v8245, 0
      %v8334 = vsel %vm457, %v8246, 0
      %v8337 = vsel %vm457, %v8247, 0
      %v8340 = vsel %vm457, %v8248, 0
      %v8343 = vsel %vm457, %v8249, 0
      %v8346 = vsel %vm457, %v8250, 0
      %v8349 = vsel %vm457, %v8251, 0
      %v8352 = vsel %vm457, %v8252, 0
      %v8355 = vsel %vm457, %v8253, 0
      %v8358 = vsel %vm457, %v8254, 0
      %8360 = vmatprep.subr.mxu0 0.0
      %8361 = vmatpush1.msra.mxu0 0.0
      %8362 = vmatprep.subr.mxu0 0.0
      %8363 = vmatpush1.msra.mxu0 0.0
      %8364 = vmatprep.subr.mxu0 0.0
      %8365 = vmatpush1.msra.mxu0 0.0
      %8366 = vmatprep.subr.mxu0 0.0
      %8367 = vmatpush1.msra.mxu0 0.0
      %8368 = vmatprep.subr.mxu0 0.0
      %8369 = vmatpush1.msra.mxu0 0.0
      %8370 = vmatprep.subr.mxu0 0.0
      %8371 = vmatpush1.msra.mxu0 0.0
      %8372 = vmatprep.subr.mxu0 0.0
      %8373 = vmatpush1.msra.mxu0 0.0
      %8374 = vmatprep.subr.mxu0 0.0
      %8375 = vmatpush1.msra.mxu0 0.0
      %8376 = vmatprep.subr.mxu0 0.0
      %8377 = vmatpush1.msra.mxu0 0.0
      %8378 = vmatprep.subr.mxu0 0.0
      %8379 = vmatpush1.msra.mxu0 0.0
      %8380 = vmatprep.subr.mxu0 0.0
      %8381 = vmatpush1.msra.mxu0 0.0
      %8382 = vmatprep.subr.mxu0 0.0
      %8383 = vmatpush1.msra.mxu0 0.0
      %8384 = vmatprep.subr.mxu0 0.0
      %8385 = vmatpush1.msra.mxu0 0.0
      %8386 = vmatprep.subr.mxu0 0.0
      %8387 = vmatpush1.msra.mxu0 0.0
      %8388 = vmatprep.subr.mxu0 0.0
      %8389 = vmatpush1.msra.mxu0 %v8256
      %8390 = vmatprep.subr.mxu0 0.0
      %8391 = vmatpush1.msra.mxu0 %v8255
      %8392 = vmatprep.subr.mxu0 0.0
      %8393 = vmatpush2.msra.mxu0 0.0
      %8394 = vmatprep.subr.mxu0 0.0
      %8395 = vmatpush2.msra.mxu0 0.0
      %8396 = vmatprep.subr.mxu0 0.0
      %8397 = vmatpush2.msra.mxu0 0.0
      %8398 = vmatprep.subr.mxu0 0.0
      %8399 = vmatpush2.msra.mxu0 0.0
      %8400 = vmatprep.subr.mxu0 0.0
      %8401 = vmatpush2.msra.mxu0 0.0
      %8402 = vmatprep.subr.mxu0 0.0
      %8403 = vmatpush2.msra.mxu0 0.0
      %8404 = vmatprep.subr.mxu0 0.0
      %8405 = vmatpush2.msra.mxu0 0.0
      %8406 = vmatprep.subr.mxu0 0.0
      %8407 = vmatpush2.msra.mxu0 0.0
      %8408 = vmatprep.subr.mxu0 0.0
      %8409 = vmatpush2.msra.mxu0 0.0
      %8410 = vmatprep.subr.mxu0 0.0
      %8411 = vmatpush2.msra.mxu0 0.0
      %8412 = vmatprep.subr.mxu0 0.0
      %8413 = vmatpush2.msra.mxu0 0.0
      %8414 = vmatprep.subr.mxu0 0.0
      %8415 = vmatpush2.msra.mxu0 0.0
      %8416 = vmatprep.subr.mxu0 0.0
      %8417 = vmatpush2.msra.mxu0 0.0
      %8418 = vmatprep.subr.mxu0 0.0
      %8419 = vmatpush2.msra.mxu0 0.0
      %8420 = vmatprep.subr.mxu0 0.0
      %8421 = vmatpush2.msra.mxu0 0.0
      %8422 = vmatprep.subr.mxu0 0.0
      %8423 = vmatpush2.msra.mxu0 0.0
      %8424 = vmatprep.mubr.f32.mxu0 0.0
      %8425 = vmatmul.mubr.f32.gmra.mxu0 %v8265
      %v8426 = vpop.f32.mrf.mxu0
      %v8427 = vadd.f32 %v8262, %v8426
      %v8428 = vpop.f32.mrf.mxu0
      %8429 = vmatprep.mubr.f32.mxu0 0.0
      %8430 = vmatmul.mubr.f32.gmra.mxu0 %v8268
      %v8431 = vpop.f32.mrf.mxu0
      %v8432 = vadd.f32 %v8262, %v8431
      %v8433 = vpop.f32.mrf.mxu0
      %8434 = vmatprep.mubr.f32.mxu0 0.0
      %8435 = vmatmul.mubr.f32.gmra.mxu0 %v8271
      %v8436 = vpop.f32.mrf.mxu0
      %v8437 = vadd.f32 %v8262, %v8436
      %v8438 = vpop.f32.mrf.mxu0
      %8439 = vmatprep.mubr.f32.mxu0 0.0
      %8440 = vmatmul.mubr.f32.gmra.mxu0 %v8274
      %v8441 = vpop.f32.mrf.mxu0
      %v8442 = vadd.f32 %v8262, %v8441
      %v8443 = vpop.f32.mrf.mxu0
      %8444 = vmatprep.mubr.f32.mxu0 0.0
      %8445 = vmatmul.mubr.f32.gmra.mxu0 %v8277
      %v8446 = vpop.f32.mrf.mxu0
      %v8447 = vadd.f32 %v8262, %v8446
      %v8448 = vpop.f32.mrf.mxu0
      %8449 = vmatprep.mubr.f32.mxu0 0.0
      %8450 = vmatmul.mubr.f32.gmra.mxu0 %v8280
      %v8451 = vpop.f32.mrf.mxu0
      %v8452 = vadd.f32 %v8262, %v8451
      %v8453 = vpop.f32.mrf.mxu0
      %8454 = vmatprep.mubr.f32.mxu0 0.0
      %8455 = vmatmul.mubr.f32.gmra.mxu0 %v8283
      %v8456 = vpop.f32.mrf.mxu0
      %v8457 = vadd.f32 %v8262, %v8456
      %v8458 = vpop.f32.mrf.mxu0
      %8459 = vmatprep.mubr.f32.mxu0 0.0
      %8460 = vmatmul.mubr.f32.gmra.mxu0 %v8286
      %v8461 = vpop.f32.mrf.mxu0
      %v8462 = vadd.f32 %v8262, %v8461
      %v8463 = vpop.f32.mrf.mxu0
      %8464 = vmatprep.mubr.f32.mxu0 0.0
      %8465 = vmatmul.mubr.f32.gmra.mxu0 %v8289
      %v8466 = vpop.f32.mrf.mxu0
      %v8467 = vadd.f32 %v8262, %v8466
      %v8468 = vpop.f32.mrf.mxu0
      %8469 = vmatprep.mubr.f32.mxu0 0.0
      %8470 = vmatmul.mubr.f32.gmra.mxu0 %v8292
      %v8471 = vpop.f32.mrf.mxu0
      %v8472 = vadd.f32 %v8262, %v8471
      %v8473 = vpop.f32.mrf.mxu0
      %8474 = vmatprep.mubr.f32.mxu0 0.0
      %8475 = vmatmul.mubr.f32.gmra.mxu0 %v8295
      %v8476 = vpop.f32.mrf.mxu0
      %v8477 = vadd.f32 %v8262, %v8476
      %v8478 = vpop.f32.mrf.mxu0
      %8479 = vmatprep.mubr.f32.mxu0 0.0
      %8480 = vmatmul.mubr.f32.gmra.mxu0 %v8298
      %v8481 = vpop.f32.mrf.mxu0
      %v8482 = vadd.f32 %v8262, %v8481
      %v8483 = vpop.f32.mrf.mxu0
      %8484 = vmatprep.mubr.f32.mxu0 0.0
      %8485 = vmatmul.mubr.f32.gmra.mxu0 %v8301
      %v8486 = vpop.f32.mrf.mxu0
      %v8487 = vadd.f32 %v8262, %v8486
      %v8488 = vpop.f32.mrf.mxu0
      %8489 = vmatprep.mubr.f32.mxu0 0.0
      %8490 = vmatmul.mubr.f32.gmra.mxu0 %v8304
      %v8491 = vpop.f32.mrf.mxu0
      %v8492 = vadd.f32 %v8262, %v8491
      %v8493 = vpop.f32.mrf.mxu0
      %8494 = vmatprep.mubr.f32.mxu0 0.0
      %8495 = vmatmul.mubr.f32.gmra.mxu0 %v8307
      %v8496 = vpop.f32.mrf.mxu0
      %v8497 = vadd.f32 %v8262, %v8496
      %v8498 = vpop.f32.mrf.mxu0
      %8499 = vmatprep.mubr.f32.mxu0 0.0
      %8500 = vmatmul.mubr.f32.gmra.mxu0 %v8310
      %v8501 = vpop.f32.mrf.mxu0
      %v8502 = vadd.f32 %v8262, %v8501
      %v8503 = vpop.f32.mrf.mxu0
      %8504 = vmatprep.mubr.f32.mxu0 0.0
      %8505 = vmatmul.mubr.f32.gmra.mxu0 %v8313
      %v8506 = vpop.f32.mrf.mxu0
      %v8507 = vadd.f32 %v8262, %v8506
      %v8508 = vpop.f32.mrf.mxu0
      %8509 = vmatprep.mubr.f32.mxu0 0.0
      %8510 = vmatmul.mubr.f32.gmra.mxu0 %v8316
      %v8511 = vpop.f32.mrf.mxu0
      %v8512 = vadd.f32 %v8262, %v8511
      %v8513 = vpop.f32.mrf.mxu0
      %8514 = vmatprep.mubr.f32.mxu0 0.0
      %8515 = vmatmul.mubr.f32.gmra.mxu0 %v8319
      %v8516 = vpop.f32.mrf.mxu0
      %v8517 = vadd.f32 %v8262, %v8516
      %v8518 = vpop.f32.mrf.mxu0
      %8519 = vmatprep.mubr.f32.mxu0 0.0
      %8520 = vmatmul.mubr.f32.gmra.mxu0 %v8322
      %v8521 = vpop.f32.mrf.mxu0
      %v8522 = vadd.f32 %v8262, %v8521
      %v8523 = vpop.f32.mrf.mxu0
      %8524 = vmatprep.mubr.f32.mxu0 0.0
      %8525 = vmatmul.mubr.f32.gmra.mxu0 %v8325
      %v8526 = vpop.f32.mrf.mxu0
      %v8527 = vadd.f32 %v8262, %v8526
      %v8528 = vpop.f32.mrf.mxu0
      %8529 = vmatprep.mubr.f32.mxu0 0.0
      %8530 = vmatmul.mubr.f32.gmra.mxu0 %v8328
      %v8531 = vpop.f32.mrf.mxu0
      %v8532 = vadd.f32 %v8262, %v8531
      %v8533 = vpop.f32.mrf.mxu0
      %8534 = vmatprep.mubr.f32.mxu0 0.0
      %8535 = vmatmul.mubr.f32.gmra.mxu0 %v8331
      %v8536 = vpop.f32.mrf.mxu0
      %v8537 = vadd.f32 %v8262, %v8536
      %v8538 = vpop.f32.mrf.mxu0
      %8539 = vmatprep.mubr.f32.mxu0 0.0
      %8540 = vmatmul.mubr.f32.gmra.mxu0 %v8334
      %v8541 = vpop.f32.mrf.mxu0
      %v8542 = vadd.f32 %v8262, %v8541
      %v8543 = vpop.f32.mrf.mxu0
      %8544 = vmatprep.mubr.f32.mxu0 0.0
      %8545 = vmatmul.mubr.f32.gmra.mxu0 %v8337
      %v8546 = vpop.f32.mrf.mxu0
      %v8547 = vadd.f32 %v8262, %v8546
      %v8548 = vpop.f32.mrf.mxu0
      %8549 = vmatprep.mubr.f32.mxu0 0.0
      %8550 = vmatmul.mubr.f32.gmra.mxu0 %v8340
      %v8551 = vpop.f32.mrf.mxu0
      %v8552 = vadd.f32 %v8262, %v8551
      %v8553 = vpop.f32.mrf.mxu0
      %8554 = vmatprep.mubr.f32.mxu0 0.0
      %8555 = vmatmul.mubr.f32.gmra.mxu0 %v8343
      %v8556 = vpop.f32.mrf.mxu0
      %v8557 = vadd.f32 %v8262, %v8556
      %v8558 = vpop.f32.mrf.mxu0
      %8559 = vmatprep.mubr.f32.mxu0 0.0
      %8560 = vmatmul.mubr.f32.gmra.mxu0 %v8346
      %v8561 = vpop.f32.mrf.mxu0
      %v8562 = vadd.f32 %v8262, %v8561
      %v8563 = vpop.f32.mrf.mxu0
      %8564 = vmatprep.mubr.f32.mxu0 0.0
      %8565 = vmatmul.mubr.f32.gmra.mxu0 %v8349
      %v8566 = vpop.f32.mrf.mxu0
      %v8567 = vadd.f32 %v8262, %v8566
      %v8568 = vpop.f32.mrf.mxu0
      %8569 = vmatprep.mubr.f32.mxu0 0.0
      %8570 = vmatmul.mubr.f32.gmra.mxu0 %v8352
      %v8571 = vpop.f32.mrf.mxu0
      %v8572 = vadd.f32 %v8262, %v8571
      %v8573 = vpop.f32.mrf.mxu0
      %8574 = vmatprep.mubr.f32.mxu0 0.0
      %8575 = vmatmul.mubr.f32.gmra.mxu0 %v8355
      %v8576 = vpop.f32.mrf.mxu0
      %v8577 = vadd.f32 %v8262, %v8576
      %v8578 = vpop.f32.mrf.mxu0
      %8579 = vmatprep.mubr.f32.mxu0 0.0
      %8580 = vmatmul.mubr.f32.gmra.mxu0 %v8358
      %v8581 = vpop.f32.mrf.mxu0
      %v8582 = vadd.f32 %v8262, %v8581
      %v8583 = vpop.f32.mrf.mxu0
      %8584 = vdwg.mxu0
      %8585 = vst.msk [vmem:[%s387] sm:$0xff] %vm457, %v8427
      %8586 = vst.msk [vmem:[%s387 + $0x8] sm:$0xff] %vm457, %v8432
      %8587 = vst.msk [vmem:[%s387 + $0x10] sm:$0xff] %vm457, %v8437
      %8588 = vst.msk [vmem:[%s387 + $0x18] sm:$0xff] %vm457, %v8442
      %8589 = vst.msk [vmem:[%s387 + $0x20] sm:$0xff] %vm457, %v8447
      %8590 = vst.msk [vmem:[%s387 + $0x28] sm:$0xff] %vm457, %v8452
      %8591 = vst.msk [vmem:[%s387 + $0x30] sm:$0xff] %vm457, %v8457
      %8592 = vst.msk [vmem:[%s387 + $0x38] sm:$0xff] %vm457, %v8462
      %8593 = vst.msk [vmem:[%s387 + $0x40] sm:$0xff] %vm457, %v8467
      %8594 = vst.msk [vmem:[%s387 + $0x48] sm:$0xff] %vm457, %v8472
      %8595 = vst.msk [vmem:[%s387 + $0x50] sm:$0xff] %vm457, %v8477
      %8596 = vst.msk [vmem:[%s387 + $0x58] sm:$0xff] %vm457, %v8482
      %8597 = vst.msk [vmem:[%s387 + $0x60] sm:$0xff] %vm457, %v8487
      %8598 = vst.msk [vmem:[%s387 + $0x68] sm:$0xff] %vm457, %v8492
      %8599 = vst.msk [vmem:[%s387 + $0x70] sm:$0xff] %vm457, %v8497
      %8600 = vst.msk [vmem:[%s387 + $0x78] sm:$0xff] %vm457, %v8502
      %8601 = vst.msk [vmem:[%s387 + $0x80] sm:$0xff] %vm457, %v8507
      %8602 = vst.msk [vmem:[%s387 + $0x88] sm:$0xff] %vm457, %v8512
      %8603 = vst.msk [vmem:[%s387 + $0x90] sm:$0xff] %vm457, %v8517
      %8604 = vst.msk [vmem:[%s387 + $0x98] sm:$0xff] %vm457, %v8522
      %8605 = vst.msk [vmem:[%s387 + $0xa0] sm:$0xff] %vm457, %v8527
      %8606 = vst.msk [vmem:[%s387 + $0xa8] sm:$0xff] %vm457, %v8532
      %8607 = vst.msk [vmem:[%s387 + $0xb0] sm:$0xff] %vm457, %v8537
      %8608 = vst.msk [vmem:[%s387 + $0xb8] sm:$0xff] %vm457, %v8542
      %8609 = vst.msk [vmem:[%s387 + $0xc0] sm:$0xff] %vm457, %v8547
      %8610 = vst.msk [vmem:[%s387 + $0xc8] sm:$0xff] %vm457, %v8552
      %8611 = vst.msk [vmem:[%s387 + $0xd0] sm:$0xff] %vm457, %v8557
      %8612 = vst.msk [vmem:[%s387 + $0xd8] sm:$0xff] %vm457, %v8562
      %8613 = vst.msk [vmem:[%s387 + $0xe0] sm:$0xff] %vm457, %v8567
      %8614 = vst.msk [vmem:[%s387 + $0xe8] sm:$0xff] %vm457, %v8572
      %8615 = vst.msk [vmem:[%s387 + $0xf0] sm:$0xff] %vm457, %v8577
      %8616 = vst.msk [vmem:[%s387 + $0xf8] sm:$0xff] %vm457, %v8582
      %s8617 = smul.u32 16, %s24
      %p8618 = scmp.lt.s32.totalorder %s23, 1
      %s8619 = scalar_select %p8618, %s23, 1
      %p8620 = scmp.lt.s32.totalorder %s8617, 15
      %s8621 = scalar_select %p8620, %s8617, 15
      %s8622 = smul.addr %s8621, 2
      %s8623 = smul.addr %s8619, 32
      %s8624 = sadd.s32 %s8622, %s8623
      %s8625 = smul.addr %s8624, 8
      %s8626 = scalar_lea.vmem %s8, %s8625
      // Predicated region
      $region53: #{st_att_block.4} parent=51 // pred_check
        %p8627 = pneg %p233
      $region54: #{st_att_block.4} parent=51 // pred_check_branch
        %8629 = sbr.rel (%p8627) target = $region56
      $region55: #{st_att_block.4} parent=51 // pred_region
        %s8630 = smul.u32 16, %s24
      $region56: #{st_att_block.4} parent=51 // pred_fallthru
        _
    $region52: #{st_att_block.4} parent=5 // pred_fallthru
      _
    %p8631 = scmp.le.s32.totalorder 2, %s14
    // Predicated region
    $region57: #{st_att_block.4} parent=5 // pred_check
      %p8632 = pneg %p8631
    $region58: #{st_att_block.4} parent=5 // pred_check_branch
      %8634 = sbr.rel (%p8632) target = $region60
    $region59: #{st_att_block.4} parent=5 // pred_region
      %s8635 = ssub.s32 %s14, 2
      // Predicated region
      $region61: #{st_att_block.4} parent=59 // pred_check
        %p8636 = pneg %p239
      $region62: #{st_att_block.4} parent=59 // pred_check_branch
        %8638 = sbr.rel (%p8636) target = $region64
      $region63: #{st_att_block.4} parent=59 // pred_region
        %s8639 = smul.u32 16, %s26
        %p8640 = scmp.lt.s32.totalorder %s25, 1
        %s8641 = scalar_select %p8640, %s25, 1
        %p8642 = scmp.lt.s32.totalorder %s8639, 15
        %s8643 = scalar_select %p8642, %s8639, 15
        %s8644 = smul.addr %s8643, 2
        %s8645 = smul.addr %s8641, 32
        %s8646 = sadd.s32 %s8644, %s8645
        %s8647 = smul.addr %s8646, 8
        %s8648 = scalar_lea.vmem %s8, %s8647
      $region64: #{st_att_block.4} parent=59 // pred_fallthru
        _
    $region60: #{st_att_block.4} parent=5 // pred_fallthru
      _
  $region6: #{st_att_block.4} parent=0 // loop_footer
    %s18 = sadd.s32 1, %s14
  $region7: #{st_att_block.4} parent=0 // loop_footer_branch
    %13 = sbr.rel target = $region3
  $region8: #{st_att_block.4} parent=0 // loop_exit
    _

</llo_original>
